<compile_context>
chip_gen: v6e
topology: v6e:2x2x1
jax: 0.10.0
libtpu: 0.0.40
codegen_flags: <defaults>
</compile_context>

<pallas_src>
import numpy as np
import jax
import jax.numpy as jnp
from jax import lax
from jax.experimental import pallas as pl
from jax.experimental.pallas import tpu as pltpu

# ---------------- constants (module hyper-params) ----------------
DIM = 32          # dim  (== dim_head * heads so that mask_attn broadcast works)
DIM_HEAD = 16
HEADS = 2
SW_HEADS = 2      # HSA(stage=1) -> SwinTransformerBlock num_heads = 2
WINDOW_SIZE = 8

MXU_DTYPE = jnp.bfloat16            # matmul-operand dtype (f32 accumulate everywhere)
_VMEM_TILE_BUDGET = 6 * 1024 * 1024  # per-block budget; conservative for v7x (64 MiB VMEM)


def gelu(x):
    # TODO(synk): exact-erf GELU kept in XLA (erf lowering inside Mosaic unverified);
    # fusing it into the fused_linear epilogues would save two dispatches.
    return jax.nn.gelu(x, approximate=False)


def depthwise_conv_nhwc(x, w_hwio, bias=None, pad=0):
    """Depthwise (groups=C) conv in NHWC; w_hwio: (kh, kw, 1, C)."""
    C = x.shape[-1]
    y = lax.conv_general_dilated(
        x, w_hwio, window_strides=(1, 1), padding=[(pad, pad), (pad, pad)],
        dimension_numbers=("NHWC", "HWIO", "NHWC"), feature_group_count=C)
    if bias is not None:
        y = y + bias
    return y


# ---------------- Pallas kernel: fused linear (1x1 conv / Linear) ----------------
# y = [LN(x * mul)] @ w  (+ bias) (+ add)
def _make_linear_kernel(has_mul, has_ln, has_bias, has_add):
    def kernel(*refs):
        i = 0
        x = refs[i][...].astype(jnp.float32); i += 1
        if has_mul:
            x = x * refs[i][...].astype(jnp.float32); i += 1
        if has_ln:
            g = refs[i][...]
            bta = refs[i + 1][...]
            i += 2
            mu = jnp.mean(x, axis=-1, keepdims=True)
            var = jnp.mean((x - mu) ** 2, axis=-1, keepdims=True)
            x = (x - mu) * lax.rsqrt(var + 1e-5) * g + bta
        w = refs[i][...]; i += 1
        acc = jnp.dot(x.astype(MXU_DTYPE), w.astype(MXU_DTYPE),
                      preferred_element_type=jnp.float32)
        if has_bias:
            acc = acc + refs[i][...]; i += 1
        if has_add:
            acc = acc + refs[i][...].astype(jnp.float32); i += 1
        o_ref = refs[-1]
        o_ref[...] = acc.astype(o_ref.dtype)
    return kernel


def _row_tile(M, row_bytes):
    """Largest row tile whose double-buffered block fits the VMEM budget."""
    tm = M
    while (tm % 2 == 0 and (tm // 2) % 8 == 0
           and tm * row_bytes * 2 > _VMEM_TILE_BUDGET):
        tm //= 2
    return tm


def fused_linear(x, w, bias=None, mul=None, ln=None, add=None):
    """x: [M, K]  w: [K, N]  -> [M, N] with optional fused epilogues/prologues."""
    M, K = x.shape
    N = w.shape[1]
    row_bytes = 4 * (K * (2 if mul is not None else 1) + N * (2 if add is not None else 1))
    tm = _row_tile(M, row_bytes)     # grid=(1,) at this problem size (single-TC friendly)
    grid = (M // tm,)

    in_specs = [pl.BlockSpec((tm, K), lambda i: (i, 0))]
    args = [x]
    if mul is not None:
        in_specs.append(pl.BlockSpec((tm, K), lambda i: (i, 0)))
        args.append(mul)
    if ln is not None:
        in_specs.append(pl.BlockSpec((1, K), lambda i: (0, 0)))
        in_specs.append(pl.BlockSpec((1, K), lambda i: (0, 0)))
        args.extend([ln[0].reshape(1, K), ln[1].reshape(1, K)])
    in_specs.append(pl.BlockSpec((K, N), lambda i: (0, 0)))
    args.append(w)
    if bias is not None:
        in_specs.append(pl.BlockSpec((1, N), lambda i: (0, 0)))
        args.append(bias.reshape(1, N))
    if add is not None:
        in_specs.append(pl.BlockSpec((tm, N), lambda i: (i, 0)))
        args.append(add)

    cost = pl.CostEstimate(
        flops=2 * M * K * N,
        transcendentals=0,
        bytes_accessed=4 * (M * K * (2 if mul is not None else 1)
                            + K * N + M * N * (2 if add is not None else 1)))

    kern = _make_linear_kernel(mul is not None, ln is not None,
                               bias is not None, add is not None)
    return pl.pallas_call(
        kern,
        out_shape=jax.ShapeDtypeStruct((M, N), x.dtype),
        grid=grid,
        in_specs=in_specs,
        out_specs=pl.BlockSpec((tm, N), lambda i: (i, 0)),
        compiler_params=pltpu.CompilerParams(dimension_semantics=("parallel",)),
        cost_estimate=cost,
    )(*args)


# ---------------- Pallas kernel: Swin window attention (batched windows) ---------
def _make_window_attn_kernel(n_win, N, C, num_heads, head_dim):
    def kernel(x_ref, lng_ref, lnb_ref, wqkv_ref, bqkv_ref, bias_ref,
               wproj_ref, bproj_ref, o_ref):
        x = x_ref[...].astype(jnp.float32)                      # [n_win*N, C]
        # LayerNorm (per-token -> commutes with roll / window partition)
        mu = jnp.mean(x, axis=-1, keepdims=True)
        var = jnp.mean((x - mu) ** 2, axis=-1, keepdims=True)
        xn = (x - mu) * lax.rsqrt(var + 1e-5) * lng_ref[...] + lnb_ref[...]

        # ONE fused QKV projection (q-scale + bias folded into the weights)
        qkv = jnp.dot(xn.astype(MXU_DTYPE), wqkv_ref[...].astype(MXU_DTYPE),
                      preferred_element_type=jnp.float32) + bqkv_ref[...]  # [tm, 3C]

        y = jnp.zeros((n_win * N, C), jnp.float32)
        for hh in range(num_heads):           # static unroll (2); tiny live ranges here
            q = qkv[:, (0 * num_heads + hh) * head_dim:(0 * num_heads + hh + 1) * head_dim]
            k = qkv[:, (1 * num_heads + hh) * head_dim:(1 * num_heads + hh + 1) * head_dim]
            v = qkv[:, (2 * num_heads + hh) * head_dim:(2 * num_heads + hh + 1) * head_dim]
            q = q.reshape(n_win, N, head_dim)
            k = k.reshape(n_win, N, head_dim)
            v = v.reshape(n_win, N, head_dim)
            s = jnp.einsum('bnd,bmd->bnm', q.astype(MXU_DTYPE), k.astype(MXU_DTYPE),
                           preferred_element_type=jnp.float32)   # [n_win, N, N]
            s = s + bias_ref[hh]
            s = s - jnp.max(s, axis=-1, keepdims=True)
            p = jnp.exp(s)
            p = p / jnp.sum(p, axis=-1, keepdims=True)
            o_h = jnp.einsum('bnm,bmd->bnd', p.astype(MXU_DTYPE), v.astype(MXU_DTYPE),
                             preferred_element_type=jnp.float32)
            # per-head output projection, accumulated (replaces concat + proj)
            y = y + jnp.dot(o_h.reshape(n_win * N, head_dim).astype(MXU_DTYPE),
                            wproj_ref[hh].astype(MXU_DTYPE),
                            preferred_element_type=jnp.float32)
        o_ref[...] = (y + bproj_ref[...] + x).astype(o_ref.dtype)
    return kernel


def _window_batch(n_windows, N, C):
    # cap the per-step window batch so per-head [wb, N, N] scores + qkv stay in VMEM
    wb = n_windows
    per_win = 4 * (N * N + 6 * N * C)
    while wb % 2 == 0 and wb > 1 and wb * per_win > _VMEM_TILE_BUDGET:
        wb //= 2
    return wb


def window_attention(xw_flat, p, n_windows, N, C):
    """xw_flat: [n_windows*N, C] -> [n_windows*N, C] (residual already added)."""
    num_heads = SW_HEADS
    head_dim = C // num_heads
    wb = _window_batch(n_windows, N, C)          # all 8 windows in one step at this size
    tm = wb * N
    kern = _make_window_attn_kernel(wb, N, C, num_heads, head_dim)
    flops = (2 * n_windows * N * C * 3 * C
             + num_heads * 4 * n_windows * N * N * head_dim
             + num_heads * 2 * n_windows * N * head_dim * C)
    cost = pl.CostEstimate(
        flops=flops,
        transcendentals=num_heads * n_windows * N * N,
        bytes_accessed=4 * (2 * n_windows * N * C + 4 * C * C + num_heads * N * N))
    return pl.pallas_call(
        kern,
        out_shape=jax.ShapeDtypeStruct((n_windows * N, C), xw_flat.dtype),
        grid=(n_windows // wb,),
        in_specs=[
            pl.BlockSpec((tm, C), lambda i: (i, 0)),
            pl.BlockSpec((1, C), lambda i: (0, 0)),                        # ln gamma
            pl.BlockSpec((1, C), lambda i: (0, 0)),                        # ln beta
            pl.BlockSpec((C, 3 * C), lambda i: (0, 0)),                    # fused qkv W
            pl.BlockSpec((1, 3 * C), lambda i: (0, 0)),                    # fused qkv b
            pl.BlockSpec((num_heads, N, N), lambda i: (0, 0, 0)),          # rel bias
            pl.BlockSpec((num_heads, head_dim, C), lambda i: (0, 0, 0)),   # per-head proj
            pl.BlockSpec((1, C), lambda i: (0, 0)),                        # proj bias
        ],
        out_specs=pl.BlockSpec((tm, C), lambda i: (i, 0)),
        compiler_params=pltpu.CompilerParams(dimension_semantics=("parallel",)),
        cost_estimate=cost,
    )(xw_flat, p["ln_g"].reshape(1, C), p["ln_b"].reshape(1, C),
      p["wqkv"], p["bqkv"], p["rel_bias"], p["wproj_h"], p["bproj"].reshape(1, C))


# ---------------- Pallas kernel: SSM_AB channel (spectral) attention -------------
def _make_channel_attn_kernel(heads, d, n, c):
    def kernel(qkv_ref, m_ref, cm_ref, r_ref, o_ref):
        qkv = qkv_ref[0]                                          # [n, 3c] f32
        m0 = m_ref[0]
        # MA module fused: mask_attn = m * sigmoid(depthwise_conv(m)) + m
        mask_attn = m0 * jax.nn.sigmoid(cm_ref[0]) + m0
        # one transposed [2c, n] view of q|k so the L2 norms become lane reductions
        qkt = jnp.transpose(qkv[:, 0:2 * c])                      # [2c, n]
        outs = []
        for hh in range(heads):                                   # static unroll (heads=2)
            qt = qkt[hh * d:(hh + 1) * d]                         # [d, n]
            kt = qkt[c + hh * d:c + (hh + 1) * d]                 # [d, n]
            vh = (qkv[:, 2 * c + hh * d:2 * c + (hh + 1) * d]
                  * mask_attn[:, hh * d:(hh + 1) * d])            # [n, d], mask fused
            # F.normalize over n (clamped at eps); per-head rescale folded into q's factor
            inv_q = lax.rsqrt(jnp.maximum(jnp.sum(qt * qt, axis=-1, keepdims=True), 1e-24))
            inv_k = lax.rsqrt(jnp.maximum(jnp.sum(kt * kt, axis=-1, keepdims=True), 1e-24))
            qn = qt * (inv_q * r_ref[hh * d:(hh + 1) * d, :])
            kn = kt * inv_k
            # attn[i, j] = sum_n k[n, i] * q[n, j]   (== reference k @ q^T)
            a = jnp.einsum('in,jn->ij', kn.astype(MXU_DTYPE), qn.astype(MXU_DTYPE),
                           preferred_element_type=jnp.float32)    # [d, d]
            a = a - jnp.max(a, axis=-1, keepdims=True)
            a = jnp.exp(a)
            a = a / jnp.sum(a, axis=-1, keepdims=True)
            # out[n, i] = sum_j attn[i, j] * v[n, j]
            outs.append(jnp.einsum('nj,ij->ni', vh.astype(MXU_DTYPE), a.astype(MXU_DTYPE),
                                   preferred_element_type=jnp.float32))   # [n, d]
        o_ref[0] = jnp.concatenate(outs, axis=-1).astype(o_ref.dtype)     # [n, c] head-major
    return kernel


def channel_attention(qkv3, m0_flat, cm_flat, rescale_lane):
    """qkv3: [b, n, 3c]; m0_flat/cm_flat: [1, n, c]; rescale_lane: [c, 1] -> [b, n, c]."""
    b, n, c3 = qkv3.shape
    c = c3 // 3
    heads = HEADS
    d = c // heads
    kern = _make_channel_attn_kernel(heads, d, n, c)
    spec_qkv = pl.BlockSpec((1, n, c3), lambda i: (i, 0, 0))
    spec_m = pl.BlockSpec((1, n, c), lambda i: (0, 0, 0))    # batch-0 broadcast
    cost = pl.CostEstimate(
        flops=b * heads * 4 * d * d * n,
        transcendentals=b * (n * c + heads * d * d),
        bytes_accessed=4 * b * (n * c3 + 3 * n * c))
    return pl.pallas_call(
        kern,
        out_shape=jax.ShapeDtypeStruct((b, n, c), qkv3.dtype),
        grid=(b,),
        in_specs=[spec_qkv, spec_m, spec_m,
                  pl.BlockSpec((c, 1), lambda i: (0, 0))],       # per-channel rescale
        out_specs=pl.BlockSpec((1, n, c), lambda i: (i, 0, 0)),
        compiler_params=pltpu.CompilerParams(dimension_semantics=("parallel",)),
        cost_estimate=cost,
    )(qkv3, m0_flat, cm_flat, rescale_lane)


# ---------------- Swin / HSA glue ----------------
def relative_position_index(ws):
    coords = np.stack(np.meshgrid(np.arange(ws), np.arange(ws), indexing="ij"))
    coords_flatten = coords.reshape(2, -1)
    rel = coords_flatten[:, :, None] - coords_flatten[:, None, :]
    rel = rel.transpose(1, 2, 0).copy()
    rel[:, :, 0] += ws - 1
    rel[:, :, 1] += ws - 1
    rel[:, :, 0] *= 2 * ws - 1
    return rel.sum(-1)  # (ws*ws, ws*ws)


def window_partition_jax(x, ws):
    B, H, W, C = x.shape
    x = x.reshape(B, H // ws, ws, W // ws, ws, C)
    return x.transpose(0, 1, 3, 2, 4, 5).reshape(-1, ws, ws, C)


def window_reverse_jax(windows, ws, H, W):
    B = windows.shape[0] // (H * W // ws // ws)
    x = windows.reshape(B, H // ws, W // ws, ws, ws, -1)
    return x.transpose(0, 1, 3, 2, 4, 5).reshape(B, H, W, -1)


def swin_block(p, x, shift):
    # LayerNorm, attention, proj and the residual are all fused inside the kernel.
    # NOTE: WindowAttention.forward in the reference never uses its `mask` argument.
    ws = WINDOW_SIZE
    B, Hh, Ww, C = x.shape
    xs = jnp.roll(x, shift=(-shift, -shift), axis=(1, 2)) if shift > 0 else x
    xw = window_partition_jax(xs, ws)                    # [nw, ws, ws, C]
    nw = xw.shape[0]
    yw = window_attention(xw.reshape(nw * ws * ws, C), p, nw, ws * ws, C)
    y = window_reverse_jax(yw.reshape(nw, ws, ws, C), ws, Hh, Ww)
    if shift > 0:
        y = jnp.roll(y, shift=(shift, shift), axis=(1, 2))
    return y


def prenorm_ff(p, x):
    # FeedForward(LN(x)) + x  (LN fused into the first linear, residual into the last)
    b, h, w, c = x.shape
    xf = x.reshape(b * h * w, c)
    y = fused_linear(xf, p["w1_t"], ln=(p["ln_g"], p["ln_b"]))       # LN + 1x1 conv
    y = gelu(y).reshape(b, h, w, 4 * c)
    y = gelu(depthwise_conv_nhwc(y, p["dw_w"], pad=1))               # depthwise 3x3 (NHWC)
    out = fused_linear(y.reshape(b * h * w, 4 * c), p["w2_t"], add=xf)
    return out.reshape(b, h, w, c)


def hsa_forward(p, x_nhwc):
    # NHWC end-to-end (the reference's NCHW<->NHWC permutes cancel out)
    x = swin_block(p["wa"], x_nhwc, shift=0)     # residual added inside the kernel
    x = swin_block(p["swa"], x, shift=4)
    x = prenorm_ff(p["pn"], x)
    return x


# ---------------- SSM_AB forward ----------------
def ssm_ab_forward(params, x_in, spa_g, mask):
    b, h, w, c = x_in.shape
    n = h * w

    # ---- spatial branch: HSA (Swin x2 + PreNorm FF) ----
    x_sa = hsa_forward(params["sa"], x_in)                            # [b,h,w,c] NHWC

    # sa_conv gating (5x5 depthwise + residual); spa_g arrives NCHW like the module's Conv2d
    spa_g_nhwc = jnp.transpose(spa_g, (0, 2, 3, 1))
    gate = depthwise_conv_nhwc(spa_g_nhwc, params["sa_conv_w"], pad=2) + spa_g_nhwc
    # TODO(synk): shift_back path (only when width != height after dispersion) not exercised.
    gate_flat = gate.reshape(b * n, c)

    # ---- fused q|k|v projection with the HSA gating multiply folded into the kernel ----
    qkv = fused_linear(x_sa.reshape(b * n, c), params["wqkv"], mul=gate_flat)   # [b*n, 3c]

    # ---- mask (MA) branch: 5x5 depthwise conv in XLA; sigmoid*m+m fused in-kernel ----
    m0 = mask[0:1]                                                    # reference broadcasts batch 0
    cm = depthwise_conv_nhwc(m0, params["ma_w"], params["ma_b"], pad=2)

    # ---- channel / spectral attention ([b,n,3c] in, [b,n,c] out; no XLA transposes) ----
    xc = channel_attention(qkv.reshape(b, n, 3 * c), m0.reshape(1, n, c),
                           cm.reshape(1, n, c), params["rescale_lane"])

    # ---- positional embedding branch (from v, pre-mask), NHWC depthwise convs ----
    v_img = qkv[:, 2 * c:3 * c].reshape(b, h, w, c)
    p1 = gelu(depthwise_conv_nhwc(v_img, params["pos_w1"], pad=1))
    out_p = depthwise_conv_nhwc(p1, params["pos_w2"], pad=1).reshape(b * n, c)

    # ---- output projection with fused bias + out_p epilogue ----
    out = fused_linear(xc.reshape(b * n, c), params["proj_w"],
                       bias=params["proj_b"], add=out_p)
    return out.reshape(b, h, w, c)


# ---------------- deterministic parameter init ----------------
def init_params(key, dim, dim_head, heads):
    keys = iter(jax.random.split(key, 64))

    def nrm(shape, s=0.05):
        return jax.random.normal(next(keys), shape, jnp.float32) * s

    def swin_params():
        ws = WINDOW_SIZE
        N = ws * ws
        hd = dim // SW_HEADS
        scale = hd ** (-0.5)
        table = nrm(((2 * ws - 1) * (2 * ws - 1), SW_HEADS), 0.02)
        idx = np.asarray(relative_position_index(ws)).reshape(-1)
        rel_bias = jnp.transpose(table[idx].reshape(N, N, SW_HEADS), (2, 0, 1))
        wq, wk, wv = (nrm((SW_HEADS, dim, hd)) for _ in range(3))
        bq, bk, bv = (nrm((SW_HEADS, hd), 0.02) for _ in range(3))
        # fused QKV weight, column order [q_h0|q_h1|k_h0|k_h1|v_h0|v_h1]; q-scale folded in
        wqkv = jnp.concatenate([wq[hh] * scale for hh in range(SW_HEADS)]
                               + [wk[hh] for hh in range(SW_HEADS)]
                               + [wv[hh] for hh in range(SW_HEADS)], axis=1)
        bqkv = jnp.concatenate([bq[hh] * scale for hh in range(SW_HEADS)]
                               + [bk[hh] for hh in range(SW_HEADS)]
                               + [bv[hh] for hh in range(SW_HEADS)], axis=0).reshape(1, 3 * dim)
        return dict(
            ln_g=jnp.ones((dim,), jnp.float32), ln_b=jnp.zeros((dim,), jnp.float32),
            wqkv=wqkv, bqkv=bqkv, rel_bias=rel_bias,
            wproj_h=nrm((SW_HEADS, hd, dim)),                     # per-head proj weights
            bproj=nrm((dim,), 0.02),
        )

    sa = dict(
        wa=swin_params(),
        swa=swin_params(),
        pn=dict(
            ln_g=jnp.ones((dim,), jnp.float32), ln_b=jnp.zeros((dim,), jnp.float32),
            w1_t=nrm((dim, 4 * dim)),
            dw_w=nrm((3, 3, 1, 4 * dim)),                         # HWIO depthwise
            w2_t=nrm((4 * dim, dim)),
        ),
    )
    c = dim_head * heads
    rescale = jnp.ones((heads,), jnp.float32)                     # nn.Parameter(ones(heads,1,1))
    return dict(
        wqkv=jnp.concatenate([nrm((dim, c)), nrm((dim, c)), nrm((dim, c))], axis=1),
        rescale_lane=jnp.repeat(rescale, dim_head).reshape(c, 1),  # head-major per-channel copy
        proj_w=nrm((c, dim)),
        proj_b=nrm((dim,), 0.02),
        pos_w1=nrm((3, 3, 1, dim)),
        pos_w2=nrm((3, 3, 1, dim)),
        ma_w=nrm((5, 5, 1, dim)),
        ma_b=nrm((dim,), 0.02),
        sa_conv_w=nrm((5, 5, 1, dim)),
        sa=sa,
    )


if __name__ == "__main__":
    b, h, w = 2, 16, 16
    key = jax.random.PRNGKey(0)
    kp, kx, ks, km = jax.random.split(key, 4)
    params = init_params(kp, DIM, DIM_HEAD, HEADS)
    x_in = jax.random.normal(kx, (b, h, w, DIM), jnp.float32)
    spa_g = jax.random.normal(ks, (b, DIM, h, w), jnp.float32)   # NCHW, as the module's Conv2d expects
    mask = jax.random.normal(km, (b, h, w, DIM), jnp.float32)

    fwd = jax.jit(ssm_ab_forward)
    out = fwd(params, x_in, spa_g, mask)
    jax.block_until_ready(out)
    assert out.shape == (b, h, w, DIM) and out.dtype == jnp.float32
    assert bool(jnp.all(jnp.isfinite(out)))
    print("KERNEL_OK")
</pallas_src>

<mosaic_0001>
module attributes {stable_mosaic.version = 11 : i64} {
  func.func @kernel(%arg0: i32, %arg1: memref<512x32xf32, #tpu.memory_space<vmem>>, %arg2: memref<1x32xf32, #tpu.memory_space<vmem>>, %arg3: memref<1x32xf32, #tpu.memory_space<vmem>>, %arg4: memref<32x96xf32, #tpu.memory_space<vmem>>, %arg5: memref<1x96xf32, #tpu.memory_space<vmem>>, %arg6: memref<2x64x64xf32, #tpu.memory_space<vmem>>, %arg7: memref<2x16x32xf32, #tpu.memory_space<vmem>>, %arg8: memref<1x32xf32, #tpu.memory_space<vmem>>, %arg9: memref<512x32xf32, #tpu.memory_space<vmem>>) attributes {dimension_semantics = [#tpu.dimension_semantics<parallel>], iteration_bounds = array<i64: 1>, scalar_prefetch = 0 : i64, scratch_operands = 0 : i64, tpu.core_type = #tpu.core_type<tc>, window_params = [{transform_indices = @transform_0, window_bounds = array<i64: 512, 32>}, {pipeline_mode = #tpu.pipeline_mode<synchronous>, transform_indices = @transform_1, window_bounds = array<i64: 1, 32>}, {pipeline_mode = #tpu.pipeline_mode<synchronous>, transform_indices = @transform_2, window_bounds = array<i64: 1, 32>}, {pipeline_mode = #tpu.pipeline_mode<synchronous>, transform_indices = @transform_3, window_bounds = array<i64: 32, 96>}, {pipeline_mode = #tpu.pipeline_mode<synchronous>, transform_indices = @transform_4, window_bounds = array<i64: 1, 96>}, {pipeline_mode = #tpu.pipeline_mode<synchronous>, transform_indices = @transform_5, window_bounds = array<i64: 2, 64, 64>}, {pipeline_mode = #tpu.pipeline_mode<synchronous>, transform_indices = @transform_6, window_bounds = array<i64: 2, 16, 32>}, {pipeline_mode = #tpu.pipeline_mode<synchronous>, transform_indices = @transform_7, window_bounds = array<i64: 1, 32>}, {transform_indices = @transform_8, window_bounds = array<i64: 512, 32>}]} {
    %c0 = arith.constant 0 : index
    %c0_0 = arith.constant 0 : index
    %0 = vector.load %arg1[%c0, %c0_0] : memref<512x32xf32, #tpu.memory_space<vmem>>, vector<512x32xf32>
    %cst = arith.constant dense<0.000000e+00> : vector<512xf32>
    %1 = vector.multi_reduction <add>, %0, %cst [1] : vector<512x32xf32> to vector<512xf32>
    %2 = vector.shape_cast %1 : vector<512xf32> to vector<512x1xf32>
    %cst_1 = arith.constant 3.200000e+01 : f32
    %3 = vector.broadcast %cst_1 : f32 to vector<512x1xf32>
    %4 = arith.divf %2, %3 : vector<512x1xf32>
    %5 = vector.broadcast %4 : vector<512x1xf32> to vector<512x32xf32>
    %6 = arith.subf %0, %5 : vector<512x32xf32>
    %7 = arith.mulf %6, %6 : vector<512x32xf32>
    %cst_2 = arith.constant dense<0.000000e+00> : vector<512xf32>
    %8 = vector.multi_reduction <add>, %7, %cst_2 [1] : vector<512x32xf32> to vector<512xf32>
    %9 = vector.shape_cast %8 : vector<512xf32> to vector<512x1xf32>
    %cst_3 = arith.constant 3.200000e+01 : f32
    %10 = vector.broadcast %cst_3 : f32 to vector<512x1xf32>
    %11 = arith.divf %9, %10 : vector<512x1xf32>
    %12 = vector.broadcast %4 : vector<512x1xf32> to vector<512x32xf32>
    %13 = arith.subf %0, %12 : vector<512x32xf32>
    %cst_4 = arith.constant 9.99999974E-6 : f32
    %14 = vector.broadcast %cst_4 : f32 to vector<512x1xf32>
    %15 = arith.addf %11, %14 : vector<512x1xf32>
    %16 = math.rsqrt %15 : vector<512x1xf32>
    %17 = vector.broadcast %16 : vector<512x1xf32> to vector<512x32xf32>
    %18 = arith.mulf %13, %17 : vector<512x32xf32>
    %c0_5 = arith.constant 0 : index
    %c0_6 = arith.constant 0 : index
    %19 = vector.load %arg2[%c0_5, %c0_6] : memref<1x32xf32, #tpu.memory_space<vmem>>, vector<1x32xf32>
    %20 = vector.broadcast %19 : vector<1x32xf32> to vector<512x32xf32>
    %21 = arith.mulf %18, %20 : vector<512x32xf32>
    %c0_7 = arith.constant 0 : index
    %c0_8 = arith.constant 0 : index
    %22 = vector.load %arg3[%c0_7, %c0_8] : memref<1x32xf32, #tpu.memory_space<vmem>>, vector<1x32xf32>
    %23 = vector.broadcast %22 : vector<1x32xf32> to vector<512x32xf32>
    %24 = arith.addf %21, %23 : vector<512x32xf32>
    %25 = arith.truncf %24 : vector<512x32xf32> to vector<512x32xbf16>
    %c0_9 = arith.constant 0 : index
    %c0_10 = arith.constant 0 : index
    %26 = vector.load %arg4[%c0_9, %c0_10] : memref<32x96xf32, #tpu.memory_space<vmem>>, vector<32x96xf32>
    %27 = arith.truncf %26 : vector<32x96xf32> to vector<32x96xbf16>
    %cst_11 = arith.constant dense<0.000000e+00> : vector<512x96xf32>
    %28 = tpu.matmul %25, %27, %cst_11 {dimension_numbers = #tpu.dot_dimension_numbers<[1], [0], [0], [1], [0, 0, 1, 1], [], []>} : vector<512x32xbf16>, vector<32x96xbf16>, vector<512x96xf32> -> vector<512x96xf32>
    %c0_12 = arith.constant 0 : index
    %c0_13 = arith.constant 0 : index
    %29 = vector.load %arg5[%c0_12, %c0_13] : memref<1x96xf32, #tpu.memory_space<vmem>>, vector<1x96xf32>
    %30 = vector.broadcast %29 : vector<1x96xf32> to vector<512x96xf32>
    %31 = arith.addf %28, %30 : vector<512x96xf32>
    %cst_14 = arith.constant 0.000000e+00 : f32
    %32 = vector.broadcast %cst_14 : f32 to vector<512x32xf32>
    %33 = vector.extract_strided_slice %31 {offsets = [0, 0], sizes = [512, 16], strides = [1, 1]} : vector<512x96xf32> to vector<512x16xf32>
    %34 = vector.extract_strided_slice %31 {offsets = [0, 32], sizes = [512, 16], strides = [1, 1]} : vector<512x96xf32> to vector<512x16xf32>
    %35 = vector.extract_strided_slice %31 {offsets = [0, 64], sizes = [512, 16], strides = [1, 1]} : vector<512x96xf32> to vector<512x16xf32>
    %36 = vector.shape_cast %33 : vector<512x16xf32> to vector<8x64x16xf32>
    %37 = vector.shape_cast %34 : vector<512x16xf32> to vector<8x64x16xf32>
    %38 = vector.shape_cast %35 : vector<512x16xf32> to vector<8x64x16xf32>
    %39 = arith.truncf %36 : vector<8x64x16xf32> to vector<8x64x16xbf16>
    %40 = arith.truncf %37 : vector<8x64x16xf32> to vector<8x64x16xbf16>
    "tpu.trace_start"() <{level = 10 : i32, message = "bnd,bmd->bnm"}> : () -> ()
    %cst_15 = arith.constant dense<0.000000e+00> : vector<8x64x64xf32>
    %41 = tpu.matmul %39, %40, %cst_15 {dimension_numbers = #tpu.dot_dimension_numbers<[2], [2], [1], [1], [0, 0, 0, 1, 1, 1], [0], [0]>} : vector<8x64x16xbf16>, vector<8x64x16xbf16>, vector<8x64x64xf32> -> vector<8x64x64xf32>
    "tpu.trace_stop"() : () -> ()
    %c0_16 = arith.constant 0 : index
    %c0_17 = arith.constant 0 : index
    %c0_18 = arith.constant 0 : index
    %42 = vector.load %arg6[%c0_16, %c0_17, %c0_18] : memref<2x64x64xf32, #tpu.memory_space<vmem>>, vector<1x64x64xf32>
    %43 = vector.shape_cast %42 : vector<1x64x64xf32> to vector<64x64xf32>
    %44 = vector.shape_cast %43 : vector<64x64xf32> to vector<1x64x64xf32>
    %45 = vector.broadcast %44 : vector<1x64x64xf32> to vector<8x64x64xf32>
    %46 = arith.addf %41, %45 : vector<8x64x64xf32>
    %cst_19 = arith.constant dense<0xFF800000> : vector<8x64xf32>
    %47 = vector.multi_reduction <maximumf>, %46, %cst_19 [2] : vector<8x64x64xf32> to vector<8x64xf32>
    %48 = vector.shape_cast %47 : vector<8x64xf32> to vector<8x64x1xf32>
    %49 = vector.broadcast %48 : vector<8x64x1xf32> to vector<8x64x64xf32>
    %50 = arith.subf %46, %49 : vector<8x64x64xf32>
    %51 = math.exp %50 : vector<8x64x64xf32>
    %cst_20 = arith.constant dense<0.000000e+00> : vector<8x64xf32>
    %52 = vector.multi_reduction <add>, %51, %cst_20 [2] : vector<8x64x64xf32> to vector<8x64xf32>
    %53 = vector.shape_cast %52 : vector<8x64xf32> to vector<8x64x1xf32>
    %54 = vector.broadcast %53 : vector<8x64x1xf32> to vector<8x64x64xf32>
    %55 = arith.divf %51, %54 : vector<8x64x64xf32>
    %56 = arith.truncf %55 : vector<8x64x64xf32> to vector<8x64x64xbf16>
    %57 = arith.truncf %38 : vector<8x64x16xf32> to vector<8x64x16xbf16>
    "tpu.trace_start"() <{level = 10 : i32, message = "bnm,bmd->bnd"}> : () -> ()
    %cst_21 = arith.constant dense<0.000000e+00> : vector<8x64x16xf32>
    %58 = tpu.matmul %56, %57, %cst_21 {dimension_numbers = #tpu.dot_dimension_numbers<[2], [1], [1], [2], [0, 0, 0, 1, 1, 2], [0], [0]>} : vector<8x64x64xbf16>, vector<8x64x16xbf16>, vector<8x64x16xf32> -> vector<8x64x16xf32>
    "tpu.trace_stop"() : () -> ()
    %59 = vector.shape_cast %58 : vector<8x64x16xf32> to vector<512x16xf32>
    %60 = arith.truncf %59 : vector<512x16xf32> to vector<512x16xbf16>
    %c0_22 = arith.constant 0 : index
    %c0_23 = arith.constant 0 : index
    %c0_24 = arith.constant 0 : index
    %61 = vector.load %arg7[%c0_22, %c0_23, %c0_24] : memref<2x16x32xf32, #tpu.memory_space<vmem>>, vector<1x16x32xf32>
    %62 = vector.shape_cast %61 : vector<1x16x32xf32> to vector<16x32xf32>
    %63 = arith.truncf %62 : vector<16x32xf32> to vector<16x32xbf16>
    %cst_25 = arith.constant dense<0.000000e+00> : vector<512x32xf32>
    %64 = tpu.matmul %60, %63, %cst_25 {dimension_numbers = #tpu.dot_dimension_numbers<[1], [0], [0], [1], [0, 0, 1, 1], [], []>} : vector<512x16xbf16>, vector<16x32xbf16>, vector<512x32xf32> -> vector<512x32xf32>
    %65 = arith.addf %32, %64 : vector<512x32xf32>
    %66 = vector.extract_strided_slice %31 {offsets = [0, 16], sizes = [512, 16], strides = [1, 1]} : vector<512x96xf32> to vector<512x16xf32>
    %67 = vector.extract_strided_slice %31 {offsets = [0, 48], sizes = [512, 16], strides = [1, 1]} : vector<512x96xf32> to vector<512x16xf32>
    %68 = vector.extract_strided_slice %31 {offsets = [0, 80], sizes = [512, 16], strides = [1, 1]} : vector<512x96xf32> to vector<512x16xf32>
    %69 = vector.shape_cast %66 : vector<512x16xf32> to vector<8x64x16xf32>
    %70 = vector.shape_cast %67 : vector<512x16xf32> to vector<8x64x16xf32>
    %71 = vector.shape_cast %68 : vector<512x16xf32> to vector<8x64x16xf32>
    %72 = arith.truncf %69 : vector<8x64x16xf32> to vector<8x64x16xbf16>
    %73 = arith.truncf %70 : vector<8x64x16xf32> to vector<8x64x16xbf16>
    "tpu.trace_start"() <{level = 10 : i32, message = "bnd,bmd->bnm"}> : () -> ()
    %cst_26 = arith.constant dense<0.000000e+00> : vector<8x64x64xf32>
    %74 = tpu.matmul %72, %73, %cst_26 {dimension_numbers = #tpu.dot_dimension_numbers<[2], [2], [1], [1], [0, 0, 0, 1, 1, 1], [0], [0]>} : vector<8x64x16xbf16>, vector<8x64x16xbf16>, vector<8x64x64xf32> -> vector<8x64x64xf32>
    "tpu.trace_stop"() : () -> ()
    %c1 = arith.constant 1 : index
    %c0_27 = arith.constant 0 : index
    %c0_28 = arith.constant 0 : index
    %75 = vector.load %arg6[%c1, %c0_27, %c0_28] : memref<2x64x64xf32, #tpu.memory_space<vmem>>, vector<1x64x64xf32>
    %76 = vector.shape_cast %75 : vector<1x64x64xf32> to vector<64x64xf32>
    %77 = vector.shape_cast %76 : vector<64x64xf32> to vector<1x64x64xf32>
    %78 = vector.broadcast %77 : vector<1x64x64xf32> to vector<8x64x64xf32>
    %79 = arith.addf %74, %78 : vector<8x64x64xf32>
    %cst_29 = arith.constant dense<0xFF800000> : vector<8x64xf32>
    %80 = vector.multi_reduction <maximumf>, %79, %cst_29 [2] : vector<8x64x64xf32> to vector<8x64xf32>
    %81 = vector.shape_cast %80 : vector<8x64xf32> to vector<8x64x1xf32>
    %82 = vector.broadcast %81 : vector<8x64x1xf32> to vector<8x64x64xf32>
    %83 = arith.subf %79, %82 : vector<8x64x64xf32>
    %84 = math.exp %83 : vector<8x64x64xf32>
    %cst_30 = arith.constant dense<0.000000e+00> : vector<8x64xf32>
    %85 = vector.multi_reduction <add>, %84, %cst_30 [2] : vector<8x64x64xf32> to vector<8x64xf32>
    %86 = vector.shape_cast %85 : vector<8x64xf32> to vector<8x64x1xf32>
    %87 = vector.broadcast %86 : vector<8x64x1xf32> to vector<8x64x64xf32>
    %88 = arith.divf %84, %87 : vector<8x64x64xf32>
    %89 = arith.truncf %88 : vector<8x64x64xf32> to vector<8x64x64xbf16>
    %90 = arith.truncf %71 : vector<8x64x16xf32> to vector<8x64x16xbf16>
    "tpu.trace_start"() <{level = 10 : i32, message = "bnm,bmd->bnd"}> : () -> ()
    %cst_31 = arith.constant dense<0.000000e+00> : vector<8x64x16xf32>
    %91 = tpu.matmul %89, %90, %cst_31 {dimension_numbers = #tpu.dot_dimension_numbers<[2], [1], [1], [2], [0, 0, 0, 1, 1, 2], [0], [0]>} : vector<8x64x64xbf16>, vector<8x64x16xbf16>, vector<8x64x16xf32> -> vector<8x64x16xf32>
    "tpu.trace_stop"() : () -> ()
    %92 = vector.shape_cast %91 : vector<8x64x16xf32> to vector<512x16xf32>
    %93 = arith.truncf %92 : vector<512x16xf32> to vector<512x16xbf16>
    %c1_32 = arith.constant 1 : index
    %c0_33 = arith.constant 0 : index
    %c0_34 = arith.constant 0 : index
    %94 = vector.load %arg7[%c1_32, %c0_33, %c0_34] : memref<2x16x32xf32, #tpu.memory_space<vmem>>, vector<1x16x32xf32>
    %95 = vector.shape_cast %94 : vector<1x16x32xf32> to vector<16x32xf32>
    %96 = arith.truncf %95 : vector<16x32xf32> to vector<16x32xbf16>
    %cst_35 = arith.constant dense<0.000000e+00> : vector<512x32xf32>
    %97 = tpu.matmul %93, %96, %cst_35 {dimension_numbers = #tpu.dot_dimension_numbers<[1], [0], [0], [1], [0, 0, 1, 1], [], []>} : vector<512x16xbf16>, vector<16x32xbf16>, vector<512x32xf32> -> vector<512x32xf32>
    %98 = arith.addf %65, %97 : vector<512x32xf32>
    %c0_36 = arith.constant 0 : index
    %c0_37 = arith.constant 0 : index
    %99 = vector.load %arg8[%c0_36, %c0_37] : memref<1x32xf32, #tpu.memory_space<vmem>>, vector<1x32xf32>
    %100 = vector.broadcast %99 : vector<1x32xf32> to vector<512x32xf32>
    %101 = arith.addf %98, %100 : vector<512x32xf32>
    %102 = arith.addf %101, %0 : vector<512x32xf32>
    %c0_38 = arith.constant 0 : index
    %c0_39 = arith.constant 0 : index
    %103 = vector.load %arg9[%c0_38, %c0_39] : memref<512x32xf32, #tpu.memory_space<vmem>>, vector<512x32xf32>
    tpu.vector_store %arg9[%c0_38, %c0_39], %102 {strides = array<i32>} : memref<512x32xf32, #tpu.memory_space<vmem>>, vector<512x32xf32>,
    return
  }
  func.func @transform_0(%arg0: i32) -> (i32, i32) {
    %c0_i32 = arith.constant 0 : i32
    %c0_i32_0 = arith.constant 0 : i32
    return %arg0, %c0_i32 : i32, i32
  }
  func.func @transform_1(%arg0: i32) -> (i32, i32) {
    %c0_i32 = arith.constant 0 : i32
    %c0_i32_0 = arith.constant 0 : i32
    %c0_i32_1 = arith.constant 0 : i32
    return %c0_i32, %c0_i32_0 : i32, i32
  }
  func.func @transform_2(%arg0: i32) -> (i32, i32) {
    %c0_i32 = arith.constant 0 : i32
    %c0_i32_0 = arith.constant 0 : i32
    %c0_i32_1 = arith.constant 0 : i32
    return %c0_i32, %c0_i32_0 : i32, i32
  }
  func.func @transform_3(%arg0: i32) -> (i32, i32) {
    %c0_i32 = arith.constant 0 : i32
    %c0_i32_0 = arith.constant 0 : i32
    %c0_i32_1 = arith.constant 0 : i32
    return %c0_i32, %c0_i32_0 : i32, i32
  }
  func.func @transform_4(%arg0: i32) -> (i32, i32) {
    %c0_i32 = arith.constant 0 : i32
    %c0_i32_0 = arith.constant 0 : i32
    %c0_i32_1 = arith.constant 0 : i32
    return %c0_i32, %c0_i32_0 : i32, i32
  }
  func.func @transform_5(%arg0: i32) -> (i32, i32, i32) {
    %c0_i32 = arith.constant 0 : i32
    %c0_i32_0 = arith.constant 0 : i32
    %c0_i32_1 = arith.constant 0 : i32
    %c0_i32_2 = arith.constant 0 : i32
    return %c0_i32, %c0_i32_0, %c0_i32_1 : i32, i32, i32
  }
  func.func @transform_6(%arg0: i32) -> (i32, i32, i32) {
    %c0_i32 = arith.constant 0 : i32
    %c0_i32_0 = arith.constant 0 : i32
    %c0_i32_1 = arith.constant 0 : i32
    %c0_i32_2 = arith.constant 0 : i32
    return %c0_i32, %c0_i32_0, %c0_i32_1 : i32, i32, i32
  }
  func.func @transform_7(%arg0: i32) -> (i32, i32) {
    %c0_i32 = arith.constant 0 : i32
    %c0_i32_0 = arith.constant 0 : i32
    %c0_i32_1 = arith.constant 0 : i32
    return %c0_i32, %c0_i32_0 : i32, i32
  }
  func.func @transform_8(%arg0: i32) -> (i32, i32) {
    %c0_i32 = arith.constant 0 : i32
    %c0_i32_0 = arith.constant 0 : i32
    return %arg0, %c0_i32 : i32, i32
  }
}

module attributes {stable_mosaic.version = 11 : i64} {
  func.func @kernel(%arg0: i32, %arg1: memref<512x32xf32, #tpu.memory_space<vmem>>, %arg2: memref<1x32xf32, #tpu.memory_space<vmem>>, %arg3: memref<1x32xf32, #tpu.memory_space<vmem>>, %arg4: memref<32x128xf32, #tpu.memory_space<vmem>>, %arg5: memref<512x128xf32, #tpu.memory_space<vmem>>) attributes {dimension_semantics = [#tpu.dimension_semantics<parallel>], iteration_bounds = array<i64: 1>, scalar_prefetch = 0 : i64, scratch_operands = 0 : i64, tpu.core_type = #tpu.core_type<tc>, window_params = [{transform_indices = @transform_0, window_bounds = array<i64: 512, 32>}, {pipeline_mode = #tpu.pipeline_mode<synchronous>, transform_indices = @transform_1, window_bounds = array<i64: 1, 32>}, {pipeline_mode = #tpu.pipeline_mode<synchronous>, transform_indices = @transform_2, window_bounds = array<i64: 1, 32>}, {pipeline_mode = #tpu.pipeline_mode<synchronous>, transform_indices = @transform_3, window_bounds = array<i64: 32, 128>}, {transform_indices = @transform_4, window_bounds = array<i64: 512, 128>}]} {
    %c0 = arith.constant 0 : index
    %c0_0 = arith.constant 0 : index
    %0 = vector.load %arg1[%c0, %c0_0] : memref<512x32xf32, #tpu.memory_space<vmem>>, vector<512x32xf32>
    %c0_1 = arith.constant 0 : index
    %c0_2 = arith.constant 0 : index
    %1 = vector.load %arg2[%c0_1, %c0_2] : memref<1x32xf32, #tpu.memory_space<vmem>>, vector<1x32xf32>
    %c0_3 = arith.constant 0 : index
    %c0_4 = arith.constant 0 : index
    %2 = vector.load %arg3[%c0_3, %c0_4] : memref<1x32xf32, #tpu.memory_space<vmem>>, vector<1x32xf32>
    %cst = arith.constant dense<0.000000e+00> : vector<512xf32>
    %3 = vector.multi_reduction <add>, %0, %cst [1] : vector<512x32xf32> to vector<512xf32>
    %4 = vector.shape_cast %3 : vector<512xf32> to vector<512x1xf32>
    %cst_5 = arith.constant 3.200000e+01 : f32
    %5 = vector.broadcast %cst_5 : f32 to vector<512x1xf32>
    %6 = arith.divf %4, %5 : vector<512x1xf32>
    %7 = vector.broadcast %6 : vector<512x1xf32> to vector<512x32xf32>
    %8 = arith.subf %0, %7 : vector<512x32xf32>
    %9 = arith.mulf %8, %8 : vector<512x32xf32>
    %cst_6 = arith.constant dense<0.000000e+00> : vector<512xf32>
    %10 = vector.multi_reduction <add>, %9, %cst_6 [1] : vector<512x32xf32> to vector<512xf32>
    %11 = vector.shape_cast %10 : vector<512xf32> to vector<512x1xf32>
    %cst_7 = arith.constant 3.200000e+01 : f32
    %12 = vector.broadcast %cst_7 : f32 to vector<512x1xf32>
    %13 = arith.divf %11, %12 : vector<512x1xf32>
    %14 = vector.broadcast %6 : vector<512x1xf32> to vector<512x32xf32>
    %15 = arith.subf %0, %14 : vector<512x32xf32>
    %cst_8 = arith.constant 9.99999974E-6 : f32
    %16 = vector.broadcast %cst_8 : f32 to vector<512x1xf32>
    %17 = arith.addf %13, %16 : vector<512x1xf32>
    %18 = math.rsqrt %17 : vector<512x1xf32>
    %19 = vector.broadcast %18 : vector<512x1xf32> to vector<512x32xf32>
    %20 = arith.mulf %15, %19 : vector<512x32xf32>
    %21 = vector.broadcast %1 : vector<1x32xf32> to vector<512x32xf32>
    %22 = arith.mulf %20, %21 : vector<512x32xf32>
    %23 = vector.broadcast %2 : vector<1x32xf32> to vector<512x32xf32>
    %24 = arith.addf %22, %23 : vector<512x32xf32>
    %c0_9 = arith.constant 0 : index
    %c0_10 = arith.constant 0 : index
    %25 = vector.load %arg4[%c0_9, %c0_10] : memref<32x128xf32, #tpu.memory_space<vmem>>, vector<32x128xf32>
    %26 = arith.truncf %24 : vector<512x32xf32> to vector<512x32xbf16>
    %27 = arith.truncf %25 : vector<32x128xf32> to vector<32x128xbf16>
    %cst_11 = arith.constant dense<0.000000e+00> : vector<512x128xf32>
    %28 = tpu.matmul %26, %27, %cst_11 {dimension_numbers = #tpu.dot_dimension_numbers<[1], [0], [0], [1], [0, 0, 1, 1], [], []>} : vector<512x32xbf16>, vector<32x128xbf16>, vector<512x128xf32> -> vector<512x128xf32>
    %c0_12 = arith.constant 0 : index
    %c0_13 = arith.constant 0 : index
    %29 = vector.load %arg5[%c0_12, %c0_13] : memref<512x128xf32, #tpu.memory_space<vmem>>, vector<512x128xf32>
    tpu.vector_store %arg5[%c0_12, %c0_13], %28 {strides = array<i32>} : memref<512x128xf32, #tpu.memory_space<vmem>>, vector<512x128xf32>,
    return
  }
  func.func @transform_0(%arg0: i32) -> (i32, i32) {
    %c0_i32 = arith.constant 0 : i32
    %c0_i32_0 = arith.constant 0 : i32
    return %arg0, %c0_i32 : i32, i32
  }
  func.func @transform_1(%arg0: i32) -> (i32, i32) {
    %c0_i32 = arith.constant 0 : i32
    %c0_i32_0 = arith.constant 0 : i32
    %c0_i32_1 = arith.constant 0 : i32
    return %c0_i32, %c0_i32_0 : i32, i32
  }
  func.func @transform_2(%arg0: i32) -> (i32, i32) {
    %c0_i32 = arith.constant 0 : i32
    %c0_i32_0 = arith.constant 0 : i32
    %c0_i32_1 = arith.constant 0 : i32
    return %c0_i32, %c0_i32_0 : i32, i32
  }
  func.func @transform_3(%arg0: i32) -> (i32, i32) {
    %c0_i32 = arith.constant 0 : i32
    %c0_i32_0 = arith.constant 0 : i32
    %c0_i32_1 = arith.constant 0 : i32
    return %c0_i32, %c0_i32_0 : i32, i32
  }
  func.func @transform_4(%arg0: i32) -> (i32, i32) {
    %c0_i32 = arith.constant 0 : i32
    %c0_i32_0 = arith.constant 0 : i32
    return %arg0, %c0_i32 : i32, i32
  }
}

module attributes {stable_mosaic.version = 11 : i64} {
  func.func @kernel(%arg0: i32, %arg1: memref<512x128xf32, #tpu.memory_space<vmem>>, %arg2: memref<128x32xf32, #tpu.memory_space<vmem>>, %arg3: memref<512x32xf32, #tpu.memory_space<vmem>>, %arg4: memref<512x32xf32, #tpu.memory_space<vmem>>) attributes {dimension_semantics = [#tpu.dimension_semantics<parallel>], iteration_bounds = array<i64: 1>, scalar_prefetch = 0 : i64, scratch_operands = 0 : i64, tpu.core_type = #tpu.core_type<tc>, window_params = [{transform_indices = @transform_0, window_bounds = array<i64: 512, 128>}, {pipeline_mode = #tpu.pipeline_mode<synchronous>, transform_indices = @transform_1, window_bounds = array<i64: 128, 32>}, {transform_indices = @transform_2, window_bounds = array<i64: 512, 32>}, {transform_indices = @transform_3, window_bounds = array<i64: 512, 32>}]} {
    %c0 = arith.constant 0 : index
    %c0_0 = arith.constant 0 : index
    %0 = vector.load %arg1[%c0, %c0_0] : memref<512x128xf32, #tpu.memory_space<vmem>>, vector<512x128xf32>
    %c0_1 = arith.constant 0 : index
    %c0_2 = arith.constant 0 : index
    %1 = vector.load %arg2[%c0_1, %c0_2] : memref<128x32xf32, #tpu.memory_space<vmem>>, vector<128x32xf32>
    %2 = arith.truncf %0 : vector<512x128xf32> to vector<512x128xbf16>
    %3 = arith.truncf %1 : vector<128x32xf32> to vector<128x32xbf16>
    %cst = arith.constant dense<0.000000e+00> : vector<512x32xf32>
    %4 = tpu.matmul %2, %3, %cst {dimension_numbers = #tpu.dot_dimension_numbers<[1], [0], [0], [1], [0, 0, 1, 1], [], []>} : vector<512x128xbf16>, vector<128x32xbf16>, vector<512x32xf32> -> vector<512x32xf32>
    %c0_3 = arith.constant 0 : index
    %c0_4 = arith.constant 0 : index
    %5 = vector.load %arg3[%c0_3, %c0_4] : memref<512x32xf32, #tpu.memory_space<vmem>>, vector<512x32xf32>
    %6 = arith.addf %4, %5 : vector<512x32xf32>
    %c0_5 = arith.constant 0 : index
    %c0_6 = arith.constant 0 : index
    %7 = vector.load %arg4[%c0_5, %c0_6] : memref<512x32xf32, #tpu.memory_space<vmem>>, vector<512x32xf32>
    tpu.vector_store %arg4[%c0_5, %c0_6], %6 {strides = array<i32>} : memref<512x32xf32, #tpu.memory_space<vmem>>, vector<512x32xf32>,
    return
  }
  func.func @transform_0(%arg0: i32) -> (i32, i32) {
    %c0_i32 = arith.constant 0 : i32
    %c0_i32_0 = arith.constant 0 : i32
    return %arg0, %c0_i32 : i32, i32
  }
  func.func @transform_1(%arg0: i32) -> (i32, i32) {
    %c0_i32 = arith.constant 0 : i32
    %c0_i32_0 = arith.constant 0 : i32
    %c0_i32_1 = arith.constant 0 : i32
    return %c0_i32, %c0_i32_0 : i32, i32
  }
  func.func @transform_2(%arg0: i32) -> (i32, i32) {
    %c0_i32 = arith.constant 0 : i32
    %c0_i32_0 = arith.constant 0 : i32
    return %arg0, %c0_i32 : i32, i32
  }
  func.func @transform_3(%arg0: i32) -> (i32, i32) {
    %c0_i32 = arith.constant 0 : i32
    %c0_i32_0 = arith.constant 0 : i32
    return %arg0, %c0_i32 : i32, i32
  }
}

module attributes {stable_mosaic.version = 11 : i64} {
  func.func @kernel(%arg0: i32, %arg1: memref<512x32xf32, #tpu.memory_space<vmem>>, %arg2: memref<512x32xf32, #tpu.memory_space<vmem>>, %arg3: memref<32x96xf32, #tpu.memory_space<vmem>>, %arg4: memref<512x96xf32, #tpu.memory_space<vmem>>) attributes {dimension_semantics = [#tpu.dimension_semantics<parallel>], iteration_bounds = array<i64: 1>, scalar_prefetch = 0 : i64, scratch_operands = 0 : i64, tpu.core_type = #tpu.core_type<tc>, window_params = [{transform_indices = @transform_0, window_bounds = array<i64: 512, 32>}, {transform_indices = @transform_1, window_bounds = array<i64: 512, 32>}, {pipeline_mode = #tpu.pipeline_mode<synchronous>, transform_indices = @transform_2, window_bounds = array<i64: 32, 96>}, {transform_indices = @transform_3, window_bounds = array<i64: 512, 96>}]} {
    %c0 = arith.constant 0 : index
    %c0_0 = arith.constant 0 : index
    %0 = vector.load %arg1[%c0, %c0_0] : memref<512x32xf32, #tpu.memory_space<vmem>>, vector<512x32xf32>
    %c0_1 = arith.constant 0 : index
    %c0_2 = arith.constant 0 : index
    %1 = vector.load %arg2[%c0_1, %c0_2] : memref<512x32xf32, #tpu.memory_space<vmem>>, vector<512x32xf32>
    %2 = arith.mulf %0, %1 : vector<512x32xf32>
    %c0_3 = arith.constant 0 : index
    %c0_4 = arith.constant 0 : index
    %3 = vector.load %arg3[%c0_3, %c0_4] : memref<32x96xf32, #tpu.memory_space<vmem>>, vector<32x96xf32>
    %4 = arith.truncf %2 : vector<512x32xf32> to vector<512x32xbf16>
    %5 = arith.truncf %3 : vector<32x96xf32> to vector<32x96xbf16>
    %cst = arith.constant dense<0.000000e+00> : vector<512x96xf32>
    %6 = tpu.matmul %4, %5, %cst {dimension_numbers = #tpu.dot_dimension_numbers<[1], [0], [0], [1], [0, 0, 1, 1], [], []>} : vector<512x32xbf16>, vector<32x96xbf16>, vector<512x96xf32> -> vector<512x96xf32>
    %c0_5 = arith.constant 0 : index
    %c0_6 = arith.constant 0 : index
    %7 = vector.load %arg4[%c0_5, %c0_6] : memref<512x96xf32, #tpu.memory_space<vmem>>, vector<512x96xf32>
    tpu.vector_store %arg4[%c0_5, %c0_6], %6 {strides = array<i32>} : memref<512x96xf32, #tpu.memory_space<vmem>>, vector<512x96xf32>,
    return
  }
  func.func @transform_0(%arg0: i32) -> (i32, i32) {
    %c0_i32 = arith.constant 0 : i32
    %c0_i32_0 = arith.constant 0 : i32
    return %arg0, %c0_i32 : i32, i32
  }
  func.func @transform_1(%arg0: i32) -> (i32, i32) {
    %c0_i32 = arith.constant 0 : i32
    %c0_i32_0 = arith.constant 0 : i32
    return %arg0, %c0_i32 : i32, i32
  }
  func.func @transform_2(%arg0: i32) -> (i32, i32) {
    %c0_i32 = arith.constant 0 : i32
    %c0_i32_0 = arith.constant 0 : i32
    %c0_i32_1 = arith.constant 0 : i32
    return %c0_i32, %c0_i32_0 : i32, i32
  }
  func.func @transform_3(%arg0: i32) -> (i32, i32) {
    %c0_i32 = arith.constant 0 : i32
    %c0_i32_0 = arith.constant 0 : i32
    return %arg0, %c0_i32 : i32, i32
  }
}

module attributes {stable_mosaic.version = 11 : i64} {
  func.func @kernel(%arg0: i32, %arg1: memref<1x256x96xf32, #tpu.memory_space<vmem>>, %arg2: memref<1x256x32xf32, #tpu.memory_space<vmem>>, %arg3: memref<1x256x32xf32, #tpu.memory_space<vmem>>, %arg4: memref<32x1xf32, #tpu.memory_space<vmem>>, %arg5: memref<1x256x32xf32, #tpu.memory_space<vmem>>) attributes {dimension_semantics = [#tpu.dimension_semantics<parallel>], iteration_bounds = array<i64: 2>, scalar_prefetch = 0 : i64, scratch_operands = 0 : i64, tpu.core_type = #tpu.core_type<tc>, window_params = [{transform_indices = @transform_0, window_bounds = array<i64: 1, 256, 96>}, {pipeline_mode = #tpu.pipeline_mode<synchronous>, transform_indices = @transform_1, window_bounds = array<i64: 1, 256, 32>}, {pipeline_mode = #tpu.pipeline_mode<synchronous>, transform_indices = @transform_2, window_bounds = array<i64: 1, 256, 32>}, {pipeline_mode = #tpu.pipeline_mode<synchronous>, transform_indices = @transform_3, window_bounds = array<i64: 32, 1>}, {transform_indices = @transform_4, window_bounds = array<i64: 1, 256, 32>}]} {
    %c0 = arith.constant 0 : index
    %c0_0 = arith.constant 0 : index
    %c0_1 = arith.constant 0 : index
    %0 = vector.load %arg1[%c0, %c0_0, %c0_1] : memref<1x256x96xf32, #tpu.memory_space<vmem>>, vector<1x256x96xf32>
    %1 = vector.shape_cast %0 : vector<1x256x96xf32> to vector<256x96xf32>
    %c0_2 = arith.constant 0 : index
    %c0_3 = arith.constant 0 : index
    %c0_4 = arith.constant 0 : index
    %2 = vector.load %arg2[%c0_2, %c0_3, %c0_4] : memref<1x256x32xf32, #tpu.memory_space<vmem>>, vector<1x256x32xf32>
    %3 = vector.shape_cast %2 : vector<1x256x32xf32> to vector<256x32xf32>
    %c0_5 = arith.constant 0 : index
    %c0_6 = arith.constant 0 : index
    %c0_7 = arith.constant 0 : index
    %4 = vector.load %arg3[%c0_5, %c0_6, %c0_7] : memref<1x256x32xf32, #tpu.memory_space<vmem>>, vector<1x256x32xf32>
    %5 = vector.shape_cast %4 : vector<1x256x32xf32> to vector<256x32xf32>
    %6 = arith.negf %5 : vector<256x32xf32>
    %7 = math.exp %6 : vector<256x32xf32>
    %cst = arith.constant 1.000000e+00 : f32
    %8 = vector.broadcast %cst : f32 to vector<256x32xf32>
    %9 = arith.addf %8, %7 : vector<256x32xf32>
    %10 = arith.divf %8, %9 : vector<256x32xf32>
    %11 = arith.mulf %3, %10 : vector<256x32xf32>
    %12 = arith.addf %11, %3 : vector<256x32xf32>
    %13 = vector.extract_strided_slice %1 {offsets = [0, 0], sizes = [256, 64], strides = [1, 1]} : vector<256x96xf32> to vector<256x64xf32>
    %14 = tpu.transpose %13, [1, 0] : vector<256x64xf32> -> vector<64x256xf32>
    %15 = vector.extract_strided_slice %14 {offsets = [0, 0], sizes = [16, 256], strides = [1, 1]} : vector<64x256xf32> to vector<16x256xf32>
    %16 = vector.extract_strided_slice %14 {offsets = [32, 0], sizes = [16, 256], strides = [1, 1]} : vector<64x256xf32> to vector<16x256xf32>
    %17 = vector.extract_strided_slice %1 {offsets = [0, 64], sizes = [256, 16], strides = [1, 1]} : vector<256x96xf32> to vector<256x16xf32>
    %18 = vector.extract_strided_slice %12 {offsets = [0, 0], sizes = [256, 16], strides = [1, 1]} : vector<256x32xf32> to vector<256x16xf32>
    %19 = arith.mulf %17, %18 : vector<256x16xf32>
    %20 = arith.mulf %15, %15 : vector<16x256xf32>
    %cst_8 = arith.constant dense<0.000000e+00> : vector<16xf32>
    %21 = vector.multi_reduction <add>, %20, %cst_8 [1] : vector<16x256xf32> to vector<16xf32>
    %22 = vector.shape_cast %21 : vector<16xf32> to vector<16x1xf32>
    %cst_9 = arith.constant 1.000000e-24 : f32
    %23 = vector.broadcast %cst_9 : f32 to vector<16x1xf32>
    %24 = arith.maximumf %22, %23 : vector<16x1xf32>
    %25 = math.rsqrt %24 : vector<16x1xf32>
    %26 = arith.mulf %16, %16 : vector<16x256xf32>
    %cst_10 = arith.constant dense<0.000000e+00> : vector<16xf32>
    %27 = vector.multi_reduction <add>, %26, %cst_10 [1] : vector<16x256xf32> to vector<16xf32>
    %28 = vector.shape_cast %27 : vector<16xf32> to vector<16x1xf32>
    %cst_11 = arith.constant 1.000000e-24 : f32
    %29 = vector.broadcast %cst_11 : f32 to vector<16x1xf32>
    %30 = arith.maximumf %28, %29 : vector<16x1xf32>
    %31 = math.rsqrt %30 : vector<16x1xf32>
    %c0_12 = arith.constant 0 : index
    %c0_13 = arith.constant 0 : index
    %32 = vector.load %arg4[%c0_12, %c0_13] : memref<32x1xf32, #tpu.memory_space<vmem>>, vector<16x1xf32>
    %33 = arith.mulf %25, %32 : vector<16x1xf32>
    %34 = vector.broadcast %33 : vector<16x1xf32> to vector<16x256xf32>
    %35 = arith.mulf %15, %34 : vector<16x256xf32>
    %36 = vector.broadcast %31 : vector<16x1xf32> to vector<16x256xf32>
    %37 = arith.mulf %16, %36 : vector<16x256xf32>
    %38 = arith.truncf %37 : vector<16x256xf32> to vector<16x256xbf16>
    %39 = arith.truncf %35 : vector<16x256xf32> to vector<16x256xbf16>
    "tpu.trace_start"() <{level = 10 : i32, message = "in,jn->ij"}> : () -> ()
    %cst_14 = arith.constant dense<0.000000e+00> : vector<16x16xf32>
    %40 = tpu.matmul %38, %39, %cst_14 {dimension_numbers = #tpu.dot_dimension_numbers<[1], [1], [0], [0], [0, 0, 1, 0], [], []>} : vector<16x256xbf16>, vector<16x256xbf16>, vector<16x16xf32> -> vector<16x16xf32>
    "tpu.trace_stop"() : () -> ()
    %cst_15 = arith.constant dense<0xFF800000> : vector<16xf32>
    %41 = vector.multi_reduction <maximumf>, %40, %cst_15 [1] : vector<16x16xf32> to vector<16xf32>
    %42 = vector.shape_cast %41 : vector<16xf32> to vector<16x1xf32>
    %43 = vector.broadcast %42 : vector<16x1xf32> to vector<16x16xf32>
    %44 = arith.subf %40, %43 : vector<16x16xf32>
    %45 = math.exp %44 : vector<16x16xf32>
    %cst_16 = arith.constant dense<0.000000e+00> : vector<16xf32>
    %46 = vector.multi_reduction <add>, %45, %cst_16 [1] : vector<16x16xf32> to vector<16xf32>
    %47 = vector.shape_cast %46 : vector<16xf32> to vector<16x1xf32>
    %48 = vector.broadcast %47 : vector<16x1xf32> to vector<16x16xf32>
    %49 = arith.divf %45, %48 : vector<16x16xf32>
    %50 = arith.truncf %19 : vector<256x16xf32> to vector<256x16xbf16>
    %51 = arith.truncf %49 : vector<16x16xf32> to vector<16x16xbf16>
    "tpu.trace_start"() <{level = 10 : i32, message = "nj,ij->ni"}> : () -> ()
    %cst_17 = arith.constant dense<0.000000e+00> : vector<256x16xf32>
    %52 = tpu.matmul %50, %51, %cst_17 {dimension_numbers = #tpu.dot_dimension_numbers<[1], [1], [0], [0], [0, 0, 1, 0], [], []>} : vector<256x16xbf16>, vector<16x16xbf16>, vector<256x16xf32> -> vector<256x16xf32>
    "tpu.trace_stop"() : () -> ()
    %53 = vector.extract_strided_slice %14 {offsets = [16, 0], sizes = [16, 256], strides = [1, 1]} : vector<64x256xf32> to vector<16x256xf32>
    %54 = vector.extract_strided_slice %14 {offsets = [48, 0], sizes = [16, 256], strides = [1, 1]} : vector<64x256xf32> to vector<16x256xf32>
    %55 = vector.extract_strided_slice %1 {offsets = [0, 80], sizes = [256, 16], strides = [1, 1]} : vector<256x96xf32> to vector<256x16xf32>
    %56 = vector.extract_strided_slice %12 {offsets = [0, 16], sizes = [256, 16], strides = [1, 1]} : vector<256x32xf32> to vector<256x16xf32>
    %57 = arith.mulf %55, %56 : vector<256x16xf32>
    %58 = arith.mulf %53, %53 : vector<16x256xf32>
    %cst_18 = arith.constant dense<0.000000e+00> : vector<16xf32>
    %59 = vector.multi_reduction <add>, %58, %cst_18 [1] : vector<16x256xf32> to vector<16xf32>
    %60 = vector.shape_cast %59 : vector<16xf32> to vector<16x1xf32>
    %cst_19 = arith.constant 1.000000e-24 : f32
    %61 = vector.broadcast %cst_19 : f32 to vector<16x1xf32>
    %62 = arith.maximumf %60, %61 : vector<16x1xf32>
    %63 = math.rsqrt %62 : vector<16x1xf32>
    %64 = arith.mulf %54, %54 : vector<16x256xf32>
    %cst_20 = arith.constant dense<0.000000e+00> : vector<16xf32>
    %65 = vector.multi_reduction <add>, %64, %cst_20 [1] : vector<16x256xf32> to vector<16xf32>
    %66 = vector.shape_cast %65 : vector<16xf32> to vector<16x1xf32>
    %cst_21 = arith.constant 1.000000e-24 : f32
    %67 = vector.broadcast %cst_21 : f32 to vector<16x1xf32>
    %68 = arith.maximumf %66, %67 : vector<16x1xf32>
    %69 = math.rsqrt %68 : vector<16x1xf32>
    %c16 = arith.constant 16 : index
    %c0_22 = arith.constant 0 : index
    %70 = vector.load %arg4[%c16, %c0_22] : memref<32x1xf32, #tpu.memory_space<vmem>>, vector<16x1xf32>
    %71 = arith.mulf %63, %70 : vector<16x1xf32>
    %72 = vector.broadcast %71 : vector<16x1xf32> to vector<16x256xf32>
    %73 = arith.mulf %53, %72 : vector<16x256xf32>
    %74 = vector.broadcast %69 : vector<16x1xf32> to vector<16x256xf32>
    %75 = arith.mulf %54, %74 : vector<16x256xf32>
    %76 = arith.truncf %75 : vector<16x256xf32> to vector<16x256xbf16>
    %77 = arith.truncf %73 : vector<16x256xf32> to vector<16x256xbf16>
    "tpu.trace_start"() <{level = 10 : i32, message = "in,jn->ij"}> : () -> ()
    %cst_23 = arith.constant dense<0.000000e+00> : vector<16x16xf32>
    %78 = tpu.matmul %76, %77, %cst_23 {dimension_numbers = #tpu.dot_dimension_numbers<[1], [1], [0], [0], [0, 0, 1, 0], [], []>} : vector<16x256xbf16>, vector<16x256xbf16>, vector<16x16xf32> -> vector<16x16xf32>
    "tpu.trace_stop"() : () -> ()
    %cst_24 = arith.constant dense<0xFF800000> : vector<16xf32>
    %79 = vector.multi_reduction <maximumf>, %78, %cst_24 [1] : vector<16x16xf32> to vector<16xf32>
    %80 = vector.shape_cast %79 : vector<16xf32> to vector<16x1xf32>
    %81 = vector.broadcast %80 : vector<16x1xf32> to vector<16x16xf32>
    %82 = arith.subf %78, %81 : vector<16x16xf32>
    %83 = math.exp %82 : vector<16x16xf32>
    %cst_25 = arith.constant dense<0.000000e+00> : vector<16xf32>
    %84 = vector.multi_reduction <add>, %83, %cst_25 [1] : vector<16x16xf32> to vector<16xf32>
    %85 = vector.shape_cast %84 : vector<16xf32> to vector<16x1xf32>
    %86 = vector.broadcast %85 : vector<16x1xf32> to vector<16x16xf32>
    %87 = arith.divf %83, %86 : vector<16x16xf32>
    %88 = arith.truncf %57 : vector<256x16xf32> to vector<256x16xbf16>
    %89 = arith.truncf %87 : vector<16x16xf32> to vector<16x16xbf16>
    "tpu.trace_start"() <{level = 10 : i32, message = "nj,ij->ni"}> : () -> ()
    %cst_26 = arith.constant dense<0.000000e+00> : vector<256x16xf32>
    %90 = tpu.matmul %88, %89, %cst_26 {dimension_numbers = #tpu.dot_dimension_numbers<[1], [1], [0], [0], [0, 0, 1, 0], [], []>} : vector<256x16xbf16>, vector<16x16xbf16>, vector<256x16xf32> -> vector<256x16xf32>
    "tpu.trace_stop"() : () -> ()
    %91 = tpu.concatenate %52, %90 in 1 : vector<256x16xf32>, vector<256x16xf32> -> vector<256x32xf32>
    %c0_27 = arith.constant 0 : index
    %c0_28 = arith.constant 0 : index
    %c0_29 = arith.constant 0 : index
    %92 = vector.load %arg5[%c0_27, %c0_28, %c0_29] : memref<1x256x32xf32, #tpu.memory_space<vmem>>, vector<1x256x32xf32>
    %93 = vector.shape_cast %92 : vector<1x256x32xf32> to vector<256x32xf32>
    %94 = vector.shape_cast %91 : vector<256x32xf32> to vector<1x256x32xf32>
    tpu.vector_store %arg5[%c0_27, %c0_28, %c0_29], %94 {strides = array<i32>} : memref<1x256x32xf32, #tpu.memory_space<vmem>>, vector<1x256x32xf32>,
    return
  }
  func.func @transform_0(%arg0: i32) -> (i32, i32, i32) {
    %c0_i32 = arith.constant 0 : i32
    %c0_i32_0 = arith.constant 0 : i32
    %c0_i32_1 = arith.constant 0 : i32
    return %arg0, %c0_i32, %c0_i32_0 : i32, i32, i32
  }
  func.func @transform_1(%arg0: i32) -> (i32, i32, i32) {
    %c0_i32 = arith.constant 0 : i32
    %c0_i32_0 = arith.constant 0 : i32
    %c0_i32_1 = arith.constant 0 : i32
    %c0_i32_2 = arith.constant 0 : i32
    return %c0_i32, %c0_i32_0, %c0_i32_1 : i32, i32, i32
  }
  func.func @transform_2(%arg0: i32) -> (i32, i32, i32) {
    %c0_i32 = arith.constant 0 : i32
    %c0_i32_0 = arith.constant 0 : i32
    %c0_i32_1 = arith.constant 0 : i32
    %c0_i32_2 = arith.constant 0 : i32
    return %c0_i32, %c0_i32_0, %c0_i32_1 : i32, i32, i32
  }
  func.func @transform_3(%arg0: i32) -> (i32, i32) {
    %c0_i32 = arith.constant 0 : i32
    %c0_i32_0 = arith.constant 0 : i32
    %c0_i32_1 = arith.constant 0 : i32
    return %c0_i32, %c0_i32_0 : i32, i32
  }
  func.func @transform_4(%arg0: i32) -> (i32, i32, i32) {
    %c0_i32 = arith.constant 0 : i32
    %c0_i32_0 = arith.constant 0 : i32
    %c0_i32_1 = arith.constant 0 : i32
    return %arg0, %c0_i32, %c0_i32_0 : i32, i32, i32
  }
}

module attributes {stable_mosaic.version = 11 : i64} {
  func.func @kernel(%arg0: i32, %arg1: memref<512x32xf32, #tpu.memory_space<vmem>>, %arg2: memref<32x32xf32, #tpu.memory_space<vmem>>, %arg3: memref<1x32xf32, #tpu.memory_space<vmem>>, %arg4: memref<512x32xf32, #tpu.memory_space<vmem>>, %arg5: memref<512x32xf32, #tpu.memory_space<vmem>>) attributes {dimension_semantics = [#tpu.dimension_semantics<parallel>], iteration_bounds = array<i64: 1>, scalar_prefetch = 0 : i64, scratch_operands = 0 : i64, tpu.core_type = #tpu.core_type<tc>, window_params = [{transform_indices = @transform_0, window_bounds = array<i64: 512, 32>}, {pipeline_mode = #tpu.pipeline_mode<synchronous>, transform_indices = @transform_1, window_bounds = array<i64: 32, 32>}, {pipeline_mode = #tpu.pipeline_mode<synchronous>, transform_indices = @transform_2, window_bounds = array<i64: 1, 32>}, {transform_indices = @transform_3, window_bounds = array<i64: 512, 32>}, {transform_indices = @transform_4, window_bounds = array<i64: 512, 32>}]} {
    %c0 = arith.constant 0 : index
    %c0_0 = arith.constant 0 : index
    %0 = vector.load %arg1[%c0, %c0_0] : memref<512x32xf32, #tpu.memory_space<vmem>>, vector<512x32xf32>
    %c0_1 = arith.constant 0 : index
    %c0_2 = arith.constant 0 : index
    %1 = vector.load %arg2[%c0_1, %c0_2] : memref<32x32xf32, #tpu.memory_space<vmem>>, vector<32x32xf32>
    %2 = arith.truncf %0 : vector<512x32xf32> to vector<512x32xbf16>
    %3 = arith.truncf %1 : vector<32x32xf32> to vector<32x32xbf16>
    %cst = arith.constant dense<0.000000e+00> : vector<512x32xf32>
    %4 = tpu.matmul %2, %3, %cst {dimension_numbers = #tpu.dot_dimension_numbers<[1], [0], [0], [1], [0, 0, 1, 1], [], []>} : vector<512x32xbf16>, vector<32x32xbf16>, vector<512x32xf32> -> vector<512x32xf32>
    %c0_3 = arith.constant 0 : index
    %c0_4 = arith.constant 0 : index
    %5 = vector.load %arg3[%c0_3, %c0_4] : memref<1x32xf32, #tpu.memory_space<vmem>>, vector<1x32xf32>
    %6 = vector.broadcast %5 : vector<1x32xf32> to vector<512x32xf32>
    %7 = arith.addf %4, %6 : vector<512x32xf32>
    %c0_5 = arith.constant 0 : index
    %c0_6 = arith.constant 0 : index
    %8 = vector.load %arg4[%c0_5, %c0_6] : memref<512x32xf32, #tpu.memory_space<vmem>>, vector<512x32xf32>
    %9 = arith.addf %7, %8 : vector<512x32xf32>
    %c0_7 = arith.constant 0 : index
    %c0_8 = arith.constant 0 : index
    %10 = vector.load %arg5[%c0_7, %c0_8] : memref<512x32xf32, #tpu.memory_space<vmem>>, vector<512x32xf32>
    tpu.vector_store %arg5[%c0_7, %c0_8], %9 {strides = array<i32>} : memref<512x32xf32, #tpu.memory_space<vmem>>, vector<512x32xf32>,
    return
  }
  func.func @transform_0(%arg0: i32) -> (i32, i32) {
    %c0_i32 = arith.constant 0 : i32
    %c0_i32_0 = arith.constant 0 : i32
    return %arg0, %c0_i32 : i32, i32
  }
  func.func @transform_1(%arg0: i32) -> (i32, i32) {
    %c0_i32 = arith.constant 0 : i32
    %c0_i32_0 = arith.constant 0 : i32
    %c0_i32_1 = arith.constant 0 : i32
    return %c0_i32, %c0_i32_0 : i32, i32
  }
  func.func @transform_2(%arg0: i32) -> (i32, i32) {
    %c0_i32 = arith.constant 0 : i32
    %c0_i32_0 = arith.constant 0 : i32
    %c0_i32_1 = arith.constant 0 : i32
    return %c0_i32, %c0_i32_0 : i32, i32
  }
  func.func @transform_3(%arg0: i32) -> (i32, i32) {
    %c0_i32 = arith.constant 0 : i32
    %c0_i32_0 = arith.constant 0 : i32
    return %arg0, %c0_i32 : i32, i32
  }
  func.func @transform_4(%arg0: i32) -> (i32, i32) {
    %c0_i32 = arith.constant 0 : i32
    %c0_i32_0 = arith.constant 0 : i32
    return %arg0, %c0_i32 : i32, i32
  }
}

</mosaic_0001>

<llo_original>
// kernel: ssm_ab_forward.9
$region0: #{ssm_ab_forward.9}
  #allocation0 [shape = 'u32[]', space=smem, size = 0x4, offset = 0x4, fixed_abs, tag = 'smem constant byte address 0x4 - core index']
  #allocation1 [shape = 'u32[144,128]{1,0:T(1,128)}', space=vmem, size = 0x12000, scoped, tag = 'internal scratch']
  %s0 = inlined_call_operand.vmem [shape: f32[512,32], index: 0, kind: input, shape index: {}]
  %s1 = inlined_call_operand.vmem [shape: f32[1,32], index: 1, kind: input, shape index: {}]
  %s2 = inlined_call_operand.vmem [shape: f32[1,32], index: 2, kind: input, shape index: {}]
  %s3 = inlined_call_operand.vmem [shape: f32[32,128], index: 3, kind: input, shape index: {}]
  %s4 = inlined_call_operand.vmem [shape: f32[512,128], index: 4, kind: output, shape index: {}]
  %s5 = sld [smem:[#allocation0]]
  $region26: #{ssm_ab_forward.9} parent=0
    _
  %s7 = ssub.s32 1, %s5
  %s8 = scalar_select 0, %s7, %s5
  // Predicated region
  $region2: #{ssm_ab_forward.9} parent=0 // pred_check
    _
  $region3: #{ssm_ab_forward.9} parent=0 // pred_check_branch
    %10 = sbr.rel (0) target = $region5
  $region4: #{ssm_ab_forward.9} parent=0 // pred_region
    _
  $region5: #{ssm_ab_forward.9} parent=0 // pred_fallthru
    _
  // Predicated region
  $region6: #{ssm_ab_forward.9} parent=0 // pred_check
    _
  $region7: #{ssm_ab_forward.9} parent=0 // pred_check_branch
    %12 = sbr.rel (0) target = $region9
  $region8: #{ssm_ab_forward.9} parent=0 // pred_region
    _
  $region9: #{ssm_ab_forward.9} parent=0 // pred_fallthru
    _
  // Predicated region
  $region10: #{ssm_ab_forward.9} parent=0 // pred_check
    _
  $region11: #{ssm_ab_forward.9} parent=0 // pred_check_branch
    %14 = sbr.rel (0) target = $region13
  $region12: #{ssm_ab_forward.9} parent=0 // pred_region
    _
  $region13: #{ssm_ab_forward.9} parent=0 // pred_fallthru
    _
  // Predicated region
  $region14: #{ssm_ab_forward.9} parent=0 // pred_check
    _
  $region15: #{ssm_ab_forward.9} parent=0 // pred_check_branch
    %16 = sbr.rel (0) target = $region17
  $region16: #{ssm_ab_forward.9} parent=0 // pred_region
    _
  $region17: #{ssm_ab_forward.9} parent=0 // pred_fallthru
    _
  %v18 = vld [vmem:[%s0] sm:$0xff]
  %v19 = vld [vmem:[%s0 + $0x8] sm:$0xff]
  %v20 = vld [vmem:[%s0 + $0x10] sm:$0xff]
  %v21 = vld [vmem:[%s0 + $0x18] sm:$0xff]
  %v22 = vld [vmem:[%s0 + $0x20] sm:$0xff]
  %v23 = vld [vmem:[%s0 + $0x28] sm:$0xff]
  %v24 = vld [vmem:[%s0 + $0x30] sm:$0xff]
  %v25 = vld [vmem:[%s0 + $0x38] sm:$0xff]
  %v26 = vld [vmem:[%s0 + $0x40] sm:$0xff]
  %v27 = vld [vmem:[%s0 + $0x48] sm:$0xff]
  %v28 = vld [vmem:[%s0 + $0x50] sm:$0xff]
  %v29 = vld [vmem:[%s0 + $0x58] sm:$0xff]
  %v30 = vld [vmem:[%s0 + $0x60] sm:$0xff]
  %v31 = vld [vmem:[%s0 + $0x68] sm:$0xff]
  %v32 = vld [vmem:[%s0 + $0x70] sm:$0xff]
  %v33 = vld [vmem:[%s0 + $0x78] sm:$0xff]
  %v34 = vld [vmem:[%s0 + $0x80] sm:$0xff]
  %v35 = vld [vmem:[%s0 + $0x88] sm:$0xff]
  %v36 = vld [vmem:[%s0 + $0x90] sm:$0xff]
  %v37 = vld [vmem:[%s0 + $0x98] sm:$0xff]
  %v38 = vld [vmem:[%s0 + $0xa0] sm:$0xff]
  %v39 = vld [vmem:[%s0 + $0xa8] sm:$0xff]
  %v40 = vld [vmem:[%s0 + $0xb0] sm:$0xff]
  %v41 = vld [vmem:[%s0 + $0xb8] sm:$0xff]
  %v42 = vld [vmem:[%s0 + $0xc0] sm:$0xff]
  %v43 = vld [vmem:[%s0 + $0xc8] sm:$0xff]
  %v44 = vld [vmem:[%s0 + $0xd0] sm:$0xff]
  %v45 = vld [vmem:[%s0 + $0xd8] sm:$0xff]
  %v46 = vld [vmem:[%s0 + $0xe0] sm:$0xff]
  %v47 = vld [vmem:[%s0 + $0xe8] sm:$0xff]
  %v48 = vld [vmem:[%s0 + $0xf0] sm:$0xff]
  %v49 = vld [vmem:[%s0 + $0xf8] sm:$0xff]
  %v50 = vld [vmem:[%s0 + $0x100] sm:$0xff]
  %v51 = vld [vmem:[%s0 + $0x108] sm:$0xff]
  %v52 = vld [vmem:[%s0 + $0x110] sm:$0xff]
  %v53 = vld [vmem:[%s0 + $0x118] sm:$0xff]
  %v54 = vld [vmem:[%s0 + $0x120] sm:$0xff]
  %v55 = vld [vmem:[%s0 + $0x128] sm:$0xff]
  %v56 = vld [vmem:[%s0 + $0x130] sm:$0xff]
  %v57 = vld [vmem:[%s0 + $0x138] sm:$0xff]
  %v58 = vld [vmem:[%s0 + $0x140] sm:$0xff]
  %v59 = vld [vmem:[%s0 + $0x148] sm:$0xff]
  %v60 = vld [vmem:[%s0 + $0x150] sm:$0xff]
  %v61 = vld [vmem:[%s0 + $0x158] sm:$0xff]
  %v62 = vld [vmem:[%s0 + $0x160] sm:$0xff]
  %v63 = vld [vmem:[%s0 + $0x168] sm:$0xff]
  %v64 = vld [vmem:[%s0 + $0x170] sm:$0xff]
  %v65 = vld [vmem:[%s0 + $0x178] sm:$0xff]
  %v66 = vld [vmem:[%s0 + $0x180] sm:$0xff]
  %v67 = vld [vmem:[%s0 + $0x188] sm:$0xff]
  %v68 = vld [vmem:[%s0 + $0x190] sm:$0xff]
  %v69 = vld [vmem:[%s0 + $0x198] sm:$0xff]
  %v70 = vld [vmem:[%s0 + $0x1a0] sm:$0xff]
  %v71 = vld [vmem:[%s0 + $0x1a8] sm:$0xff]
  %v72 = vld [vmem:[%s0 + $0x1b0] sm:$0xff]
  %v73 = vld [vmem:[%s0 + $0x1b8] sm:$0xff]
  %v74 = vld [vmem:[%s0 + $0x1c0] sm:$0xff]
  %v75 = vld [vmem:[%s0 + $0x1c8] sm:$0xff]
  %v76 = vld [vmem:[%s0 + $0x1d0] sm:$0xff]
  %v77 = vld [vmem:[%s0 + $0x1d8] sm:$0xff]
  %v78 = vld [vmem:[%s0 + $0x1e0] sm:$0xff]
  %v79 = vld [vmem:[%s0 + $0x1e8] sm:$0xff]
  %v80 = vld [vmem:[%s0 + $0x1f0] sm:$0xff]
  %v81 = vld [vmem:[%s0 + $0x1f8] sm:$0xff]
  %v82 = vld [vmem:[%s1] sm:$0x1]
  %v83 = vld [vmem:[%s2] sm:$0x1]
  %vm84 = vcmask 261120
  %v85 = vsel %vm84, %v18, 0.0
  %86 = vadd.xlane.f32.xlu0 %v85
  %v87 = vpop.xlane.xlu0 %86
  %v88 = vsel %vm84, %v19, 0.0
  %89 = vadd.xlane.f32.xlu0 %v88
  %v90 = vpop.xlane.xlu0 %89
  %v91 = vsel %vm84, %v20, 0.0
  %92 = vadd.xlane.f32.xlu0 %v91
  %v93 = vpop.xlane.xlu0 %92
  %v94 = vsel %vm84, %v21, 0.0
  %95 = vadd.xlane.f32.xlu0 %v94
  %v96 = vpop.xlane.xlu0 %95
  %v97 = vsel %vm84, %v22, 0.0
  %98 = vadd.xlane.f32.xlu0 %v97
  %v99 = vpop.xlane.xlu0 %98
  %v100 = vsel %vm84, %v23, 0.0
  %101 = vadd.xlane.f32.xlu0 %v100
  %v102 = vpop.xlane.xlu0 %101
  %v103 = vsel %vm84, %v24, 0.0
  %104 = vadd.xlane.f32.xlu0 %v103
  %v105 = vpop.xlane.xlu0 %104
  %v106 = vsel %vm84, %v25, 0.0
  %107 = vadd.xlane.f32.xlu0 %v106
  %v108 = vpop.xlane.xlu0 %107
  %v109 = vsel %vm84, %v26, 0.0
  %110 = vadd.xlane.f32.xlu0 %v109
  %v111 = vpop.xlane.xlu0 %110
  %v112 = vsel %vm84, %v27, 0.0
  %113 = vadd.xlane.f32.xlu0 %v112
  %v114 = vpop.xlane.xlu0 %113
  %v115 = vsel %vm84, %v28, 0.0
  %116 = vadd.xlane.f32.xlu0 %v115
  %v117 = vpop.xlane.xlu0 %116
  %v118 = vsel %vm84, %v29, 0.0
  %119 = vadd.xlane.f32.xlu0 %v118
  %v120 = vpop.xlane.xlu0 %119
  %v121 = vsel %vm84, %v30, 0.0
  %122 = vadd.xlane.f32.xlu0 %v121
  %v123 = vpop.xlane.xlu0 %122
  %v124 = vsel %vm84, %v31, 0.0
  %125 = vadd.xlane.f32.xlu0 %v124
  %v126 = vpop.xlane.xlu0 %125
  %v127 = vsel %vm84, %v32, 0.0
  %128 = vadd.xlane.f32.xlu0 %v127
  %v129 = vpop.xlane.xlu0 %128
  %v130 = vsel %vm84, %v33, 0.0
  %131 = vadd.xlane.f32.xlu0 %v130
  %v132 = vpop.xlane.xlu0 %131
  %v133 = vsel %vm84, %v34, 0.0
  %134 = vadd.xlane.f32.xlu0 %v133
  %v135 = vpop.xlane.xlu0 %134
  %v136 = vsel %vm84, %v35, 0.0
  %137 = vadd.xlane.f32.xlu0 %v136
  %v138 = vpop.xlane.xlu0 %137
  %v139 = vsel %vm84, %v36, 0.0
  %140 = vadd.xlane.f32.xlu0 %v139
  %v141 = vpop.xlane.xlu0 %140
  %v142 = vsel %vm84, %v37, 0.0
  %143 = vadd.xlane.f32.xlu0 %v142
  %v144 = vpop.xlane.xlu0 %143
  %v145 = vsel %vm84, %v38, 0.0
  %146 = vadd.xlane.f32.xlu0 %v145
  %v147 = vpop.xlane.xlu0 %146
  %v148 = vsel %vm84, %v39, 0.0
  %149 = vadd.xlane.f32.xlu0 %v148
  %v150 = vpop.xlane.xlu0 %149
  %v151 = vsel %vm84, %v40, 0.0
  %152 = vadd.xlane.f32.xlu0 %v151
  %v153 = vpop.xlane.xlu0 %152
  %v154 = vsel %vm84, %v41, 0.0
  %155 = vadd.xlane.f32.xlu0 %v154
  %v156 = vpop.xlane.xlu0 %155
  %v157 = vsel %vm84, %v42, 0.0
  %158 = vadd.xlane.f32.xlu0 %v157
  %v159 = vpop.xlane.xlu0 %158
  %v160 = vsel %vm84, %v43, 0.0
  %161 = vadd.xlane.f32.xlu0 %v160
  %v162 = vpop.xlane.xlu0 %161
  %v163 = vsel %vm84, %v44, 0.0
  %164 = vadd.xlane.f32.xlu0 %v163
  %v165 = vpop.xlane.xlu0 %164
  %v166 = vsel %vm84, %v45, 0.0
  %167 = vadd.xlane.f32.xlu0 %v166
  %v168 = vpop.xlane.xlu0 %167
  %v169 = vsel %vm84, %v46, 0.0
  %170 = vadd.xlane.f32.xlu0 %v169
  %v171 = vpop.xlane.xlu0 %170
  %v172 = vsel %vm84, %v47, 0.0
  %173 = vadd.xlane.f32.xlu0 %v172
  %v174 = vpop.xlane.xlu0 %173
  %v175 = vsel %vm84, %v48, 0.0
  %176 = vadd.xlane.f32.xlu0 %v175
  %v177 = vpop.xlane.xlu0 %176
  %v178 = vsel %vm84, %v49, 0.0
  %179 = vadd.xlane.f32.xlu0 %v178
  %v180 = vpop.xlane.xlu0 %179
  %v181 = vsel %vm84, %v50, 0.0
  %182 = vadd.xlane.f32.xlu0 %v181
  %v183 = vpop.xlane.xlu0 %182
  %v184 = vsel %vm84, %v51, 0.0
  %185 = vadd.xlane.f32.xlu0 %v184
  %v186 = vpop.xlane.xlu0 %185
  %v187 = vsel %vm84, %v52, 0.0
  %188 = vadd.xlane.f32.xlu0 %v187
  %v189 = vpop.xlane.xlu0 %188
  %v190 = vsel %vm84, %v53, 0.0
  %191 = vadd.xlane.f32.xlu0 %v190
  %v192 = vpop.xlane.xlu0 %191
  %v193 = vsel %vm84, %v54, 0.0
  %194 = vadd.xlane.f32.xlu0 %v193
  %v195 = vpop.xlane.xlu0 %194
  %v196 = vsel %vm84, %v55, 0.0
  %197 = vadd.xlane.f32.xlu0 %v196
  %v198 = vpop.xlane.xlu0 %197
  %v199 = vsel %vm84, %v56, 0.0
  %200 = vadd.xlane.f32.xlu0 %v199
  %v201 = vpop.xlane.xlu0 %200
  %v202 = vsel %vm84, %v57, 0.0
  %203 = vadd.xlane.f32.xlu0 %v202
  %v204 = vpop.xlane.xlu0 %203
  %v205 = vsel %vm84, %v58, 0.0
  %206 = vadd.xlane.f32.xlu0 %v205
  %v207 = vpop.xlane.xlu0 %206
  %v208 = vsel %vm84, %v59, 0.0
  %209 = vadd.xlane.f32.xlu0 %v208
  %v210 = vpop.xlane.xlu0 %209
  %v211 = vsel %vm84, %v60, 0.0
  %212 = vadd.xlane.f32.xlu0 %v211
  %v213 = vpop.xlane.xlu0 %212
  %v214 = vsel %vm84, %v61, 0.0
  %215 = vadd.xlane.f32.xlu0 %v214
  %v216 = vpop.xlane.xlu0 %215
  %v217 = vsel %vm84, %v62, 0.0
  %218 = vadd.xlane.f32.xlu0 %v217
  %v219 = vpop.xlane.xlu0 %218
  %v220 = vsel %vm84, %v63, 0.0
  %221 = vadd.xlane.f32.xlu0 %v220
  %v222 = vpop.xlane.xlu0 %221
  %v223 = vsel %vm84, %v64, 0.0
  %224 = vadd.xlane.f32.xlu0 %v223
  %v225 = vpop.xlane.xlu0 %224
  %v226 = vsel %vm84, %v65, 0.0
  %227 = vadd.xlane.f32.xlu0 %v226
  %v228 = vpop.xlane.xlu0 %227
  %v229 = vsel %vm84, %v66, 0.0
  %230 = vadd.xlane.f32.xlu0 %v229
  %v231 = vpop.xlane.xlu0 %230
  %v232 = vsel %vm84, %v67, 0.0
  %233 = vadd.xlane.f32.xlu0 %v232
  %v234 = vpop.xlane.xlu0 %233
  %v235 = vsel %vm84, %v68, 0.0
  %236 = vadd.xlane.f32.xlu0 %v235
  %v237 = vpop.xlane.xlu0 %236
  %v238 = vsel %vm84, %v69, 0.0
  %239 = vadd.xlane.f32.xlu0 %v238
  %v240 = vpop.xlane.xlu0 %239
  %v241 = vsel %vm84, %v70, 0.0
  %242 = vadd.xlane.f32.xlu0 %v241
  %v243 = vpop.xlane.xlu0 %242
  %v244 = vsel %vm84, %v71, 0.0
  %245 = vadd.xlane.f32.xlu0 %v244
  %v246 = vpop.xlane.xlu0 %245
  %v247 = vsel %vm84, %v72, 0.0
  %248 = vadd.xlane.f32.xlu0 %v247
  %v249 = vpop.xlane.xlu0 %248
  %v250 = vsel %vm84, %v73, 0.0
  %251 = vadd.xlane.f32.xlu0 %v250
  %v252 = vpop.xlane.xlu0 %251
  %v253 = vsel %vm84, %v74, 0.0
  %254 = vadd.xlane.f32.xlu0 %v253
  %v255 = vpop.xlane.xlu0 %254
  %v256 = vsel %vm84, %v75, 0.0
  %257 = vadd.xlane.f32.xlu0 %v256
  %v258 = vpop.xlane.xlu0 %257
  %v259 = vsel %vm84, %v76, 0.0
  %260 = vadd.xlane.f32.xlu0 %v259
  %v261 = vpop.xlane.xlu0 %260
  %v262 = vsel %vm84, %v77, 0.0
  %263 = vadd.xlane.f32.xlu0 %v262
  %v264 = vpop.xlane.xlu0 %263
  %v265 = vsel %vm84, %v78, 0.0
  %266 = vadd.xlane.f32.xlu0 %v265
  %v267 = vpop.xlane.xlu0 %266
  %v268 = vsel %vm84, %v79, 0.0
  %269 = vadd.xlane.f32.xlu0 %v268
  %v270 = vpop.xlane.xlu0 %269
  %v271 = vsel %vm84, %v80, 0.0
  %272 = vadd.xlane.f32.xlu0 %v271
  %v273 = vpop.xlane.xlu0 %272
  %v274 = vsel %vm84, %v81, 0.0
  %275 = vadd.xlane.f32.xlu0 %v274
  %v276 = vpop.xlane.xlu0 %275
  %v277 = vrcp.pop 32.0
  %v278 = vmul.f32 %v87, %v277
  %v279 = vmul.f32 %v90, %v277
  %v280 = vmul.f32 %v93, %v277
  %v281 = vmul.f32 %v96, %v277
  %v282 = vmul.f32 %v99, %v277
  %v283 = vmul.f32 %v102, %v277
  %v284 = vmul.f32 %v105, %v277
  %v285 = vmul.f32 %v108, %v277
  %v286 = vmul.f32 %v111, %v277
  %v287 = vmul.f32 %v114, %v277
  %v288 = vmul.f32 %v117, %v277
  %v289 = vmul.f32 %v120, %v277
  %v290 = vmul.f32 %v123, %v277
  %v291 = vmul.f32 %v126, %v277
  %v292 = vmul.f32 %v129, %v277
  %v293 = vmul.f32 %v132, %v277
  %v294 = vmul.f32 %v135, %v277
  %v295 = vmul.f32 %v138, %v277
  %v296 = vmul.f32 %v141, %v277
  %v297 = vmul.f32 %v144, %v277
  %v298 = vmul.f32 %v147, %v277
  %v299 = vmul.f32 %v150, %v277
  %v300 = vmul.f32 %v153, %v277
  %v301 = vmul.f32 %v156, %v277
  %v302 = vmul.f32 %v159, %v277
  %v303 = vmul.f32 %v162, %v277
  %v304 = vmul.f32 %v165, %v277
  %v305 = vmul.f32 %v168, %v277
  %v306 = vmul.f32 %v171, %v277
  %v307 = vmul.f32 %v174, %v277
  %v308 = vmul.f32 %v177, %v277
  %v309 = vmul.f32 %v180, %v277
  %v310 = vmul.f32 %v183, %v277
  %v311 = vmul.f32 %v186, %v277
  %v312 = vmul.f32 %v189, %v277
  %v313 = vmul.f32 %v192, %v277
  %v314 = vmul.f32 %v195, %v277
  %v315 = vmul.f32 %v198, %v277
  %v316 = vmul.f32 %v201, %v277
  %v317 = vmul.f32 %v204, %v277
  %v318 = vmul.f32 %v207, %v277
  %v319 = vmul.f32 %v210, %v277
  %v320 = vmul.f32 %v213, %v277
  %v321 = vmul.f32 %v216, %v277
  %v322 = vmul.f32 %v219, %v277
  %v323 = vmul.f32 %v222, %v277
  %v324 = vmul.f32 %v225, %v277
  %v325 = vmul.f32 %v228, %v277
  %v326 = vmul.f32 %v231, %v277
  %v327 = vmul.f32 %v234, %v277
  %v328 = vmul.f32 %v237, %v277
  %v329 = vmul.f32 %v240, %v277
  %v330 = vmul.f32 %v243, %v277
  %v331 = vmul.f32 %v246, %v277
  %v332 = vmul.f32 %v249, %v277
  %v333 = vmul.f32 %v252, %v277
  %v334 = vmul.f32 %v255, %v277
  %v335 = vmul.f32 %v258, %v277
  %v336 = vmul.f32 %v261, %v277
  %v337 = vmul.f32 %v264, %v277
  %v338 = vmul.f32 %v267, %v277
  %v339 = vmul.f32 %v270, %v277
  %v340 = vmul.f32 %v273, %v277
  %v341 = vmul.f32 %v276, %v277
  %v342 = vsub.f32 %v18, %v278
  %v343 = vsub.f32 %v19, %v279
  %v344 = vsub.f32 %v20, %v280
  %v345 = vsub.f32 %v21, %v281
  %v346 = vsub.f32 %v22, %v282
  %v347 = vsub.f32 %v23, %v283
  %v348 = vsub.f32 %v24, %v284
  %v349 = vsub.f32 %v25, %v285
  %v350 = vsub.f32 %v26, %v286
  %v351 = vsub.f32 %v27, %v287
  %v352 = vsub.f32 %v28, %v288
  %v353 = vsub.f32 %v29, %v289
  %v354 = vsub.f32 %v30, %v290
  %v355 = vsub.f32 %v31, %v291
  %v356 = vsub.f32 %v32, %v292
  %v357 = vsub.f32 %v33, %v293
  %v358 = vsub.f32 %v34, %v294
  %v359 = vsub.f32 %v35, %v295
  %v360 = vsub.f32 %v36, %v296
  %v361 = vsub.f32 %v37, %v297
  %v362 = vsub.f32 %v38, %v298
  %v363 = vsub.f32 %v39, %v299
  %v364 = vsub.f32 %v40, %v300
  %v365 = vsub.f32 %v41, %v301
  %v366 = vsub.f32 %v42, %v302
  %v367 = vsub.f32 %v43, %v303
  %v368 = vsub.f32 %v44, %v304
  %v369 = vsub.f32 %v45, %v305
  %v370 = vsub.f32 %v46, %v306
  %v371 = vsub.f32 %v47, %v307
  %v372 = vsub.f32 %v48, %v308
  %v373 = vsub.f32 %v49, %v309
  %v374 = vsub.f32 %v50, %v310
  %v375 = vsub.f32 %v51, %v311
  %v376 = vsub.f32 %v52, %v312
  %v377 = vsub.f32 %v53, %v313
  %v378 = vsub.f32 %v54, %v314
  %v379 = vsub.f32 %v55, %v315
  %v380 = vsub.f32 %v56, %v316
  %v381 = vsub.f32 %v57, %v317
  %v382 = vsub.f32 %v58, %v318
  %v383 = vsub.f32 %v59, %v319
  %v384 = vsub.f32 %v60, %v320
  %v385 = vsub.f32 %v61, %v321
  %v386 = vsub.f32 %v62, %v322
  %v387 = vsub.f32 %v63, %v323
  %v388 = vsub.f32 %v64, %v324
  %v389 = vsub.f32 %v65, %v325
  %v390 = vsub.f32 %v66, %v326
  %v391 = vsub.f32 %v67, %v327
  %v392 = vsub.f32 %v68, %v328
  %v393 = vsub.f32 %v69, %v329
  %v394 = vsub.f32 %v70, %v330
  %v395 = vsub.f32 %v71, %v331
  %v396 = vsub.f32 %v72, %v332
  %v397 = vsub.f32 %v73, %v333
  %v398 = vsub.f32 %v74, %v334
  %v399 = vsub.f32 %v75, %v335
  %v400 = vsub.f32 %v76, %v336
  %v401 = vsub.f32 %v77, %v337
  %v402 = vsub.f32 %v78, %v338
  %v403 = vsub.f32 %v79, %v339
  %v404 = vsub.f32 %v80, %v340
  %v405 = vsub.f32 %v81, %v341
  %v406 = vmul.f32 %v342, %v342
  %v407 = vmul.f32 %v343, %v343
  %v408 = vmul.f32 %v344, %v344
  %v409 = vmul.f32 %v345, %v345
  %v410 = vmul.f32 %v346, %v346
  %v411 = vmul.f32 %v347, %v347
  %v412 = vmul.f32 %v348, %v348
  %v413 = vmul.f32 %v349, %v349
  %v414 = vmul.f32 %v350, %v350
  %v415 = vmul.f32 %v351, %v351
  %v416 = vmul.f32 %v352, %v352
  %v417 = vmul.f32 %v353, %v353
  %v418 = vmul.f32 %v354, %v354
  %v419 = vmul.f32 %v355, %v355
  %v420 = vmul.f32 %v356, %v356
  %v421 = vmul.f32 %v357, %v357
  %v422 = vmul.f32 %v358, %v358
  %v423 = vmul.f32 %v359, %v359
  %v424 = vmul.f32 %v360, %v360
  %v425 = vmul.f32 %v361, %v361
  %v426 = vmul.f32 %v362, %v362
  %v427 = vmul.f32 %v363, %v363
  %v428 = vmul.f32 %v364, %v364
  %v429 = vmul.f32 %v365, %v365
  %v430 = vmul.f32 %v366, %v366
  %v431 = vmul.f32 %v367, %v367
  %v432 = vmul.f32 %v368, %v368
  %v433 = vmul.f32 %v369, %v369
  %v434 = vmul.f32 %v370, %v370
  %v435 = vmul.f32 %v371, %v371
  %v436 = vmul.f32 %v372, %v372
  %v437 = vmul.f32 %v373, %v373
  %v438 = vmul.f32 %v374, %v374
  %v439 = vmul.f32 %v375, %v375
  %v440 = vmul.f32 %v376, %v376
  %v441 = vmul.f32 %v377, %v377
  %v442 = vmul.f32 %v378, %v378
  %v443 = vmul.f32 %v379, %v379
  %v444 = vmul.f32 %v380, %v380
  %v445 = vmul.f32 %v381, %v381
  %v446 = vmul.f32 %v382, %v382
  %v447 = vmul.f32 %v383, %v383
  %v448 = vmul.f32 %v384, %v384
  %v449 = vmul.f32 %v385, %v385
  %v450 = vmul.f32 %v386, %v386
  %v451 = vmul.f32 %v387, %v387
  %v452 = vmul.f32 %v388, %v388
  %v453 = vmul.f32 %v389, %v389
  %v454 = vmul.f32 %v390, %v390
  %v455 = vmul.f32 %v391, %v391
  %v456 = vmul.f32 %v392, %v392
  %v457 = vmul.f32 %v393, %v393
  %v458 = vmul.f32 %v394, %v394
  %v459 = vmul.f32 %v395, %v395
  %v460 = vmul.f32 %v396, %v396
  %v461 = vmul.f32 %v397, %v397
  %v462 = vmul.f32 %v398, %v398
  %v463 = vmul.f32 %v399, %v399
  %v464 = vmul.f32 %v400, %v400
  %v465 = vmul.f32 %v401, %v401
  %v466 = vmul.f32 %v402, %v402
  %v467 = vmul.f32 %v403, %v403
  %v468 = vmul.f32 %v404, %v404
  %v469 = vmul.f32 %v405, %v405
  %v470 = vsel %vm84, %v406, 0.0
  %471 = vadd.xlane.f32.xlu0 %v470
  %v472 = vpop.xlane.xlu0 %471
  %v473 = vsel %vm84, %v407, 0.0
  %474 = vadd.xlane.f32.xlu0 %v473
  %v475 = vpop.xlane.xlu0 %474
  %v476 = vsel %vm84, %v408, 0.0
  %477 = vadd.xlane.f32.xlu0 %v476
  %v478 = vpop.xlane.xlu0 %477
  %v479 = vsel %vm84, %v409, 0.0
  %480 = vadd.xlane.f32.xlu0 %v479
  %v481 = vpop.xlane.xlu0 %480
  %v482 = vsel %vm84, %v410, 0.0
  %483 = vadd.xlane.f32.xlu0 %v482
  %v484 = vpop.xlane.xlu0 %483
  %v485 = vsel %vm84, %v411, 0.0
  %486 = vadd.xlane.f32.xlu0 %v485
  %v487 = vpop.xlane.xlu0 %486
  %v488 = vsel %vm84, %v412, 0.0
  %489 = vadd.xlane.f32.xlu0 %v488
  %v490 = vpop.xlane.xlu0 %489
  %v491 = vsel %vm84, %v413, 0.0
  %492 = vadd.xlane.f32.xlu0 %v491
  %v493 = vpop.xlane.xlu0 %492
  %v494 = vsel %vm84, %v414, 0.0
  %495 = vadd.xlane.f32.xlu0 %v494
  %v496 = vpop.xlane.xlu0 %495
  %v497 = vsel %vm84, %v415, 0.0
  %498 = vadd.xlane.f32.xlu0 %v497
  %v499 = vpop.xlane.xlu0 %498
  %v500 = vsel %vm84, %v416, 0.0
  %501 = vadd.xlane.f32.xlu0 %v500
  %v502 = vpop.xlane.xlu0 %501
  %v503 = vsel %vm84, %v417, 0.0
  %504 = vadd.xlane.f32.xlu0 %v503
  %v505 = vpop.xlane.xlu0 %504
  %v506 = vsel %vm84, %v418, 0.0
  %507 = vadd.xlane.f32.xlu0 %v506
  %v508 = vpop.xlane.xlu0 %507
  %v509 = vsel %vm84, %v419, 0.0
  %510 = vadd.xlane.f32.xlu0 %v509
  %v511 = vpop.xlane.xlu0 %510
  %v512 = vsel %vm84, %v420, 0.0
  %513 = vadd.xlane.f32.xlu0 %v512
  %v514 = vpop.xlane.xlu0 %513
  %v515 = vsel %vm84, %v421, 0.0
  %516 = vadd.xlane.f32.xlu0 %v515
  %v517 = vpop.xlane.xlu0 %516
  %v518 = vsel %vm84, %v422, 0.0
  %519 = vadd.xlane.f32.xlu0 %v518
  %v520 = vpop.xlane.xlu0 %519
  %v521 = vsel %vm84, %v423, 0.0
  %522 = vadd.xlane.f32.xlu0 %v521
  %v523 = vpop.xlane.xlu0 %522
  %v524 = vsel %vm84, %v424, 0.0
  %525 = vadd.xlane.f32.xlu0 %v524
  %v526 = vpop.xlane.xlu0 %525
  %v527 = vsel %vm84, %v425, 0.0
  %528 = vadd.xlane.f32.xlu0 %v527
  %v529 = vpop.xlane.xlu0 %528
  %v530 = vsel %vm84, %v426, 0.0
  %531 = vadd.xlane.f32.xlu0 %v530
  %v532 = vpop.xlane.xlu0 %531
  %v533 = vsel %vm84, %v427, 0.0
  %534 = vadd.xlane.f32.xlu0 %v533
  %v535 = vpop.xlane.xlu0 %534
  %v536 = vsel %vm84, %v428, 0.0
  %537 = vadd.xlane.f32.xlu0 %v536
  %v538 = vpop.xlane.xlu0 %537
  %v539 = vsel %vm84, %v429, 0.0
  %540 = vadd.xlane.f32.xlu0 %v539
  %v541 = vpop.xlane.xlu0 %540
  %v542 = vsel %vm84, %v430, 0.0
  %543 = vadd.xlane.f32.xlu0 %v542
  %v544 = vpop.xlane.xlu0 %543
  %v545 = vsel %vm84, %v431, 0.0
  %546 = vadd.xlane.f32.xlu0 %v545
  %v547 = vpop.xlane.xlu0 %546
  %v548 = vsel %vm84, %v432, 0.0
  %549 = vadd.xlane.f32.xlu0 %v548
  %v550 = vpop.xlane.xlu0 %549
  %v551 = vsel %vm84, %v433, 0.0
  %552 = vadd.xlane.f32.xlu0 %v551
  %v553 = vpop.xlane.xlu0 %552
  %v554 = vsel %vm84, %v434, 0.0
  %555 = vadd.xlane.f32.xlu0 %v554
  %v556 = vpop.xlane.xlu0 %555
  %v557 = vsel %vm84, %v435, 0.0
  %558 = vadd.xlane.f32.xlu0 %v557
  %v559 = vpop.xlane.xlu0 %558
  %v560 = vsel %vm84, %v436, 0.0
  %561 = vadd.xlane.f32.xlu0 %v560
  %v562 = vpop.xlane.xlu0 %561
  %v563 = vsel %vm84, %v437, 0.0
  %564 = vadd.xlane.f32.xlu0 %v563
  %v565 = vpop.xlane.xlu0 %564
  %v566 = vsel %vm84, %v438, 0.0
  %567 = vadd.xlane.f32.xlu0 %v566
  %v568 = vpop.xlane.xlu0 %567
  %v569 = vsel %vm84, %v439, 0.0
  %570 = vadd.xlane.f32.xlu0 %v569
  %v571 = vpop.xlane.xlu0 %570
  %v572 = vsel %vm84, %v440, 0.0
  %573 = vadd.xlane.f32.xlu0 %v572
  %v574 = vpop.xlane.xlu0 %573
  %v575 = vsel %vm84, %v441, 0.0
  %576 = vadd.xlane.f32.xlu0 %v575
  %v577 = vpop.xlane.xlu0 %576
  %v578 = vsel %vm84, %v442, 0.0
  %579 = vadd.xlane.f32.xlu0 %v578
  %v580 = vpop.xlane.xlu0 %579
  %v581 = vsel %vm84, %v443, 0.0
  %582 = vadd.xlane.f32.xlu0 %v581
  %v583 = vpop.xlane.xlu0 %582
  %v584 = vsel %vm84, %v444, 0.0
  %585 = vadd.xlane.f32.xlu0 %v584
  %v586 = vpop.xlane.xlu0 %585
  %v587 = vsel %vm84, %v445, 0.0
  %588 = vadd.xlane.f32.xlu0 %v587
  %v589 = vpop.xlane.xlu0 %588
  %v590 = vsel %vm84, %v446, 0.0
  %591 = vadd.xlane.f32.xlu0 %v590
  %v592 = vpop.xlane.xlu0 %591
  %v593 = vsel %vm84, %v447, 0.0
  %594 = vadd.xlane.f32.xlu0 %v593
  %v595 = vpop.xlane.xlu0 %594
  %v596 = vsel %vm84, %v448, 0.0
  %597 = vadd.xlane.f32.xlu0 %v596
  %v598 = vpop.xlane.xlu0 %597
  %v599 = vsel %vm84, %v449, 0.0
  %600 = vadd.xlane.f32.xlu0 %v599
  %v601 = vpop.xlane.xlu0 %600
  %v602 = vsel %vm84, %v450, 0.0
  %603 = vadd.xlane.f32.xlu0 %v602
  %v604 = vpop.xlane.xlu0 %603
  %v605 = vsel %vm84, %v451, 0.0
  %606 = vadd.xlane.f32.xlu0 %v605
  %v607 = vpop.xlane.xlu0 %606
  %v608 = vsel %vm84, %v452, 0.0
  %609 = vadd.xlane.f32.xlu0 %v608
  %v610 = vpop.xlane.xlu0 %609
  %v611 = vsel %vm84, %v453, 0.0
  %612 = vadd.xlane.f32.xlu0 %v611
  %v613 = vpop.xlane.xlu0 %612
  %v614 = vsel %vm84, %v454, 0.0
  %615 = vadd.xlane.f32.xlu0 %v614
  %v616 = vpop.xlane.xlu0 %615
  %v617 = vsel %vm84, %v455, 0.0
  %618 = vadd.xlane.f32.xlu0 %v617
  %v619 = vpop.xlane.xlu0 %618
  %v620 = vsel %vm84, %v456, 0.0
  %621 = vadd.xlane.f32.xlu0 %v620
  %v622 = vpop.xlane.xlu0 %621
  %v623 = vsel %vm84, %v457, 0.0
  %624 = vadd.xlane.f32.xlu0 %v623
  %v625 = vpop.xlane.xlu0 %624
  %v626 = vsel %vm84, %v458, 0.0
  %627 = vadd.xlane.f32.xlu0 %v626
  %v628 = vpop.xlane.xlu0 %627
  %v629 = vsel %vm84, %v459, 0.0
  %630 = vadd.xlane.f32.xlu0 %v629
  %v631 = vpop.xlane.xlu0 %630
  %v632 = vsel %vm84, %v460, 0.0
  %633 = vadd.xlane.f32.xlu0 %v632
  %v634 = vpop.xlane.xlu0 %633
  %v635 = vsel %vm84, %v461, 0.0
  %636 = vadd.xlane.f32.xlu0 %v635
  %v637 = vpop.xlane.xlu0 %636
  %v638 = vsel %vm84, %v462, 0.0
  %639 = vadd.xlane.f32.xlu0 %v638
  %v640 = vpop.xlane.xlu0 %639
  %v641 = vsel %vm84, %v463, 0.0
  %642 = vadd.xlane.f32.xlu0 %v641
  %v643 = vpop.xlane.xlu0 %642
  %v644 = vsel %vm84, %v464, 0.0
  %645 = vadd.xlane.f32.xlu0 %v644
  %v646 = vpop.xlane.xlu0 %645
  %v647 = vsel %vm84, %v465, 0.0
  %648 = vadd.xlane.f32.xlu0 %v647
  %v649 = vpop.xlane.xlu0 %648
  %v650 = vsel %vm84, %v466, 0.0
  %651 = vadd.xlane.f32.xlu0 %v650
  %v652 = vpop.xlane.xlu0 %651
  %v653 = vsel %vm84, %v467, 0.0
  %654 = vadd.xlane.f32.xlu0 %v653
  %v655 = vpop.xlane.xlu0 %654
  %v656 = vsel %vm84, %v468, 0.0
  %657 = vadd.xlane.f32.xlu0 %v656
  %v658 = vpop.xlane.xlu0 %657
  %v659 = vsel %vm84, %v469, 0.0
  %660 = vadd.xlane.f32.xlu0 %v659
  %v661 = vpop.xlane.xlu0 %660
  %v662 = vmul.f32 %v472, %v277
  %v663 = vmul.f32 %v475, %v277
  %v664 = vmul.f32 %v478, %v277
  %v665 = vmul.f32 %v481, %v277
  %v666 = vmul.f32 %v484, %v277
  %v667 = vmul.f32 %v487, %v277
  %v668 = vmul.f32 %v490, %v277
  %v669 = vmul.f32 %v493, %v277
  %v670 = vmul.f32 %v496, %v277
  %v671 = vmul.f32 %v499, %v277
  %v672 = vmul.f32 %v502, %v277
  %v673 = vmul.f32 %v505, %v277
  %v674 = vmul.f32 %v508, %v277
  %v675 = vmul.f32 %v511, %v277
  %v676 = vmul.f32 %v514, %v277
  %v677 = vmul.f32 %v517, %v277
  %v678 = vmul.f32 %v520, %v277
  %v679 = vmul.f32 %v523, %v277
  %v680 = vmul.f32 %v526, %v277
  %v681 = vmul.f32 %v529, %v277
  %v682 = vmul.f32 %v532, %v277
  %v683 = vmul.f32 %v535, %v277
  %v684 = vmul.f32 %v538, %v277
  %v685 = vmul.f32 %v541, %v277
  %v686 = vmul.f32 %v544, %v277
  %v687 = vmul.f32 %v547, %v277
  %v688 = vmul.f32 %v550, %v277
  %v689 = vmul.f32 %v553, %v277
  %v690 = vmul.f32 %v556, %v277
  %v691 = vmul.f32 %v559, %v277
  %v692 = vmul.f32 %v562, %v277
  %v693 = vmul.f32 %v565, %v277
  %v694 = vmul.f32 %v568, %v277
  %v695 = vmul.f32 %v571, %v277
  %v696 = vmul.f32 %v574, %v277
  %v697 = vmul.f32 %v577, %v277
  %v698 = vmul.f32 %v580, %v277
  %v699 = vmul.f32 %v583, %v277
  %v700 = vmul.f32 %v586, %v277
  %v701 = vmul.f32 %v589, %v277
  %v702 = vmul.f32 %v592, %v277
  %v703 = vmul.f32 %v595, %v277
  %v704 = vmul.f32 %v598, %v277
  %v705 = vmul.f32 %v601, %v277
  %v706 = vmul.f32 %v604, %v277
  %v707 = vmul.f32 %v607, %v277
  %v708 = vmul.f32 %v610, %v277
  %v709 = vmul.f32 %v613, %v277
  %v710 = vmul.f32 %v616, %v277
  %v711 = vmul.f32 %v619, %v277
  %v712 = vmul.f32 %v622, %v277
  %v713 = vmul.f32 %v625, %v277
  %v714 = vmul.f32 %v628, %v277
  %v715 = vmul.f32 %v631, %v277
  %v716 = vmul.f32 %v634, %v277
  %v717 = vmul.f32 %v637, %v277
  %v718 = vmul.f32 %v640, %v277
  %v719 = vmul.f32 %v643, %v277
  %v720 = vmul.f32 %v646, %v277
  %v721 = vmul.f32 %v649, %v277
  %v722 = vmul.f32 %v652, %v277
  %v723 = vmul.f32 %v655, %v277
  %v724 = vmul.f32 %v658, %v277
  %v725 = vmul.f32 %v661, %v277
  %v726 = vadd.f32 %v662, 1e-05
  %v727 = vadd.f32 %v663, 1e-05
  %v728 = vadd.f32 %v664, 1e-05
  %v729 = vadd.f32 %v665, 1e-05
  %v730 = vadd.f32 %v666, 1e-05
  %v731 = vadd.f32 %v667, 1e-05
  %v732 = vadd.f32 %v668, 1e-05
  %v733 = vadd.f32 %v669, 1e-05
  %v734 = vadd.f32 %v670, 1e-05
  %v735 = vadd.f32 %v671, 1e-05
  %v736 = vadd.f32 %v672, 1e-05
  %v737 = vadd.f32 %v673, 1e-05
  %v738 = vadd.f32 %v674, 1e-05
  %v739 = vadd.f32 %v675, 1e-05
  %v740 = vadd.f32 %v676, 1e-05
  %v741 = vadd.f32 %v677, 1e-05
  %v742 = vadd.f32 %v678, 1e-05
  %v743 = vadd.f32 %v679, 1e-05
  %v744 = vadd.f32 %v680, 1e-05
  %v745 = vadd.f32 %v681, 1e-05
  %v746 = vadd.f32 %v682, 1e-05
  %v747 = vadd.f32 %v683, 1e-05
  %v748 = vadd.f32 %v684, 1e-05
  %v749 = vadd.f32 %v685, 1e-05
  %v750 = vadd.f32 %v686, 1e-05
  %v751 = vadd.f32 %v687, 1e-05
  %v752 = vadd.f32 %v688, 1e-05
  %v753 = vadd.f32 %v689, 1e-05
  %v754 = vadd.f32 %v690, 1e-05
  %v755 = vadd.f32 %v691, 1e-05
  %v756 = vadd.f32 %v692, 1e-05
  %v757 = vadd.f32 %v693, 1e-05
  %v758 = vadd.f32 %v694, 1e-05
  %v759 = vadd.f32 %v695, 1e-05
  %v760 = vadd.f32 %v696, 1e-05
  %v761 = vadd.f32 %v697, 1e-05
  %v762 = vadd.f32 %v698, 1e-05
  %v763 = vadd.f32 %v699, 1e-05
  %v764 = vadd.f32 %v700, 1e-05
  %v765 = vadd.f32 %v701, 1e-05
  %v766 = vadd.f32 %v702, 1e-05
  %v767 = vadd.f32 %v703, 1e-05
  %v768 = vadd.f32 %v704, 1e-05
  %v769 = vadd.f32 %v705, 1e-05
  %v770 = vadd.f32 %v706, 1e-05
  %v771 = vadd.f32 %v707, 1e-05
  %v772 = vadd.f32 %v708, 1e-05
  %v773 = vadd.f32 %v709, 1e-05
  %v774 = vadd.f32 %v710, 1e-05
  %v775 = vadd.f32 %v711, 1e-05
  %v776 = vadd.f32 %v712, 1e-05
  %v777 = vadd.f32 %v713, 1e-05
  %v778 = vadd.f32 %v714, 1e-05
  %v779 = vadd.f32 %v715, 1e-05
  %v780 = vadd.f32 %v716, 1e-05
  %v781 = vadd.f32 %v717, 1e-05
  %v782 = vadd.f32 %v718, 1e-05
  %v783 = vadd.f32 %v719, 1e-05
  %v784 = vadd.f32 %v720, 1e-05
  %v785 = vadd.f32 %v721, 1e-05
  %v786 = vadd.f32 %v722, 1e-05
  %v787 = vadd.f32 %v723, 1e-05
  %v788 = vadd.f32 %v724, 1e-05
  %v789 = vadd.f32 %v725, 1e-05
  %v790 = vrsqrt.pop %v726
  %v791 = vrsqrt.pop %v727
  %v792 = vrsqrt.pop %v728
  %v793 = vrsqrt.pop %v729
  %v794 = vrsqrt.pop %v730
  %v795 = vrsqrt.pop %v731
  %v796 = vrsqrt.pop %v732
  %v797 = vrsqrt.pop %v733
  %v798 = vrsqrt.pop %v734
  %v799 = vrsqrt.pop %v735
  %v800 = vrsqrt.pop %v736
  %v801 = vrsqrt.pop %v737
  %v802 = vrsqrt.pop %v738
  %v803 = vrsqrt.pop %v739
  %v804 = vrsqrt.pop %v740
  %v805 = vrsqrt.pop %v741
  %v806 = vrsqrt.pop %v742
  %v807 = vrsqrt.pop %v743
  %v808 = vrsqrt.pop %v744
  %v809 = vrsqrt.pop %v745
  %v810 = vrsqrt.pop %v746
  %v811 = vrsqrt.pop %v747
  %v812 = vrsqrt.pop %v748
  %v813 = vrsqrt.pop %v749
  %v814 = vrsqrt.pop %v750
  %v815 = vrsqrt.pop %v751
  %v816 = vrsqrt.pop %v752
  %v817 = vrsqrt.pop %v753
  %v818 = vrsqrt.pop %v754
  %v819 = vrsqrt.pop %v755
  %v820 = vrsqrt.pop %v756
  %v821 = vrsqrt.pop %v757
  %v822 = vrsqrt.pop %v758
  %v823 = vrsqrt.pop %v759
  %v824 = vrsqrt.pop %v760
  %v825 = vrsqrt.pop %v761
  %v826 = vrsqrt.pop %v762
  %v827 = vrsqrt.pop %v763
  %v828 = vrsqrt.pop %v764
  %v829 = vrsqrt.pop %v765
  %v830 = vrsqrt.pop %v766
  %v831 = vrsqrt.pop %v767
  %v832 = vrsqrt.pop %v768
  %v833 = vrsqrt.pop %v769
  %v834 = vrsqrt.pop %v770
  %v835 = vrsqrt.pop %v771
  %v836 = vrsqrt.pop %v772
  %v837 = vrsqrt.pop %v773
  %v838 = vrsqrt.pop %v774
  %v839 = vrsqrt.pop %v775
  %v840 = vrsqrt.pop %v776
  %v841 = vrsqrt.pop %v777
  %v842 = vrsqrt.pop %v778
  %v843 = vrsqrt.pop %v779
  %v844 = vrsqrt.pop %v780
  %v845 = vrsqrt.pop %v781
  %v846 = vrsqrt.pop %v782
  %v847 = vrsqrt.pop %v783
  %v848 = vrsqrt.pop %v784
  %v849 = vrsqrt.pop %v785
  %v850 = vrsqrt.pop %v786
  %v851 = vrsqrt.pop %v787
  %v852 = vrsqrt.pop %v788
  %v853 = vrsqrt.pop %v789
  %v854 = vmul.f32 %v342, %v790
  %v855 = vmul.f32 %v343, %v791
  %v856 = vmul.f32 %v344, %v792
  %v857 = vmul.f32 %v345, %v793
  %v858 = vmul.f32 %v346, %v794
  %v859 = vmul.f32 %v347, %v795
  %v860 = vmul.f32 %v348, %v796
  %v861 = vmul.f32 %v349, %v797
  %v862 = vmul.f32 %v350, %v798
  %v863 = vmul.f32 %v351, %v799
  %v864 = vmul.f32 %v352, %v800
  %v865 = vmul.f32 %v353, %v801
  %v866 = vmul.f32 %v354, %v802
  %v867 = vmul.f32 %v355, %v803
  %v868 = vmul.f32 %v356, %v804
  %v869 = vmul.f32 %v357, %v805
  %v870 = vmul.f32 %v358, %v806
  %v871 = vmul.f32 %v359, %v807
  %v872 = vmul.f32 %v360, %v808
  %v873 = vmul.f32 %v361, %v809
  %v874 = vmul.f32 %v362, %v810
  %v875 = vmul.f32 %v363, %v811
  %v876 = vmul.f32 %v364, %v812
  %v877 = vmul.f32 %v365, %v813
  %v878 = vmul.f32 %v366, %v814
  %v879 = vmul.f32 %v367, %v815
  %v880 = vmul.f32 %v368, %v816
  %v881 = vmul.f32 %v369, %v817
  %v882 = vmul.f32 %v370, %v818
  %v883 = vmul.f32 %v371, %v819
  %v884 = vmul.f32 %v372, %v820
  %v885 = vmul.f32 %v373, %v821
  %v886 = vmul.f32 %v374, %v822
  %v887 = vmul.f32 %v375, %v823
  %v888 = vmul.f32 %v376, %v824
  %v889 = vmul.f32 %v377, %v825
  %v890 = vmul.f32 %v378, %v826
  %v891 = vmul.f32 %v379, %v827
  %v892 = vmul.f32 %v380, %v828
  %v893 = vmul.f32 %v381, %v829
  %v894 = vmul.f32 %v382, %v830
  %v895 = vmul.f32 %v383, %v831
  %v896 = vmul.f32 %v384, %v832
  %v897 = vmul.f32 %v385, %v833
  %v898 = vmul.f32 %v386, %v834
  %v899 = vmul.f32 %v387, %v835
  %v900 = vmul.f32 %v388, %v836
  %v901 = vmul.f32 %v389, %v837
  %v902 = vmul.f32 %v390, %v838
  %v903 = vmul.f32 %v391, %v839
  %v904 = vmul.f32 %v392, %v840
  %v905 = vmul.f32 %v393, %v841
  %v906 = vmul.f32 %v394, %v842
  %v907 = vmul.f32 %v395, %v843
  %v908 = vmul.f32 %v396, %v844
  %v909 = vmul.f32 %v397, %v845
  %v910 = vmul.f32 %v398, %v846
  %v911 = vmul.f32 %v399, %v847
  %v912 = vmul.f32 %v400, %v848
  %v913 = vmul.f32 %v401, %v849
  %v914 = vmul.f32 %v402, %v850
  %v915 = vmul.f32 %v403, %v851
  %v916 = vmul.f32 %v404, %v852
  %v917 = vmul.f32 %v405, %v853
  %v919 = vlaneseq
  %v920 = vshrl.u32 %v919, 7
  %v921 = vsub.s32 0, %v920
  %v922 = vrot.slane %v82, %v921
  %v924 = vmul.f32 %v854, %v922
  %v925 = vmul.f32 %v855, %v922
  %v926 = vmul.f32 %v856, %v922
  %v927 = vmul.f32 %v857, %v922
  %v928 = vmul.f32 %v858, %v922
  %v929 = vmul.f32 %v859, %v922
  %v930 = vmul.f32 %v860, %v922
  %v931 = vmul.f32 %v861, %v922
  %v932 = vmul.f32 %v862, %v922
  %v933 = vmul.f32 %v863, %v922
  %v934 = vmul.f32 %v864, %v922
  %v935 = vmul.f32 %v865, %v922
  %v936 = vmul.f32 %v866, %v922
  %v937 = vmul.f32 %v867, %v922
  %v938 = vmul.f32 %v868, %v922
  %v939 = vmul.f32 %v869, %v922
  %v940 = vmul.f32 %v870, %v922
  %v941 = vmul.f32 %v871, %v922
  %v942 = vmul.f32 %v872, %v922
  %v943 = vmul.f32 %v873, %v922
  %v944 = vmul.f32 %v874, %v922
  %v945 = vmul.f32 %v875, %v922
  %v946 = vmul.f32 %v876, %v922
  %v947 = vmul.f32 %v877, %v922
  %v948 = vmul.f32 %v878, %v922
  %v949 = vmul.f32 %v879, %v922
  %v950 = vmul.f32 %v880, %v922
  %v951 = vmul.f32 %v881, %v922
  %v952 = vmul.f32 %v882, %v922
  %v953 = vmul.f32 %v883, %v922
  %v954 = vmul.f32 %v884, %v922
  %v955 = vmul.f32 %v885, %v922
  %v956 = vmul.f32 %v886, %v922
  %v957 = vmul.f32 %v887, %v922
  %v958 = vmul.f32 %v888, %v922
  %v959 = vmul.f32 %v889, %v922
  %v960 = vmul.f32 %v890, %v922
  %v961 = vmul.f32 %v891, %v922
  %v962 = vmul.f32 %v892, %v922
  %v963 = vmul.f32 %v893, %v922
  %v964 = vmul.f32 %v894, %v922
  %v965 = vmul.f32 %v895, %v922
  %v966 = vmul.f32 %v896, %v922
  %v967 = vmul.f32 %v897, %v922
  %v968 = vmul.f32 %v898, %v922
  %v969 = vmul.f32 %v899, %v922
  %v970 = vmul.f32 %v900, %v922
  %v971 = vmul.f32 %v901, %v922
  %v972 = vmul.f32 %v902, %v922
  %v973 = vmul.f32 %v903, %v922
  %v974 = vmul.f32 %v904, %v922
  %v975 = vmul.f32 %v905, %v922
  %v976 = vmul.f32 %v906, %v922
  %v977 = vmul.f32 %v907, %v922
  %v978 = vmul.f32 %v908, %v922
  %v979 = vmul.f32 %v909, %v922
  %v980 = vmul.f32 %v910, %v922
  %v981 = vmul.f32 %v911, %v922
  %v982 = vmul.f32 %v912, %v922
  %v983 = vmul.f32 %v913, %v922
  %v984 = vmul.f32 %v914, %v922
  %v985 = vmul.f32 %v915, %v922
  %v986 = vmul.f32 %v916, %v922
  %v987 = vmul.f32 %v917, %v922
  %v989 = vlaneseq
  %v990 = vshrl.u32 %v989, 7
  %v991 = vsub.s32 0, %v990
  %v992 = vrot.slane %v83, %v991
  %v994 = vadd.f32 %v924, %v992
  %v995 = vadd.f32 %v925, %v992
  %v996 = vadd.f32 %v926, %v992
  %v997 = vadd.f32 %v927, %v992
  %v998 = vadd.f32 %v928, %v992
  %v999 = vadd.f32 %v929, %v992
  %v1000 = vadd.f32 %v930, %v992
  %v1001 = vadd.f32 %v931, %v992
  %v1002 = vadd.f32 %v932, %v992
  %v1003 = vadd.f32 %v933, %v992
  %v1004 = vadd.f32 %v934, %v992
  %v1005 = vadd.f32 %v935, %v992
  %v1006 = vadd.f32 %v936, %v992
  %v1007 = vadd.f32 %v937, %v992
  %v1008 = vadd.f32 %v938, %v992
  %v1009 = vadd.f32 %v939, %v992
  %v1010 = vadd.f32 %v940, %v992
  %v1011 = vadd.f32 %v941, %v992
  %v1012 = vadd.f32 %v942, %v992
  %v1013 = vadd.f32 %v943, %v992
  %v1014 = vadd.f32 %v944, %v992
  %v1015 = vadd.f32 %v945, %v992
  %v1016 = vadd.f32 %v946, %v992
  %v1017 = vadd.f32 %v947, %v992
  %v1018 = vadd.f32 %v948, %v992
  %v1019 = vadd.f32 %v949, %v992
  %v1020 = vadd.f32 %v950, %v992
  %v1021 = vadd.f32 %v951, %v992
  %v1022 = vadd.f32 %v952, %v992
  %v1023 = vadd.f32 %v953, %v992
  %v1024 = vadd.f32 %v954, %v992
  %v1025 = vadd.f32 %v955, %v992
  %v1026 = vadd.f32 %v956, %v992
  %v1027 = vadd.f32 %v957, %v992
  %v1028 = vadd.f32 %v958, %v992
  %v1029 = vadd.f32 %v959, %v992
  %v1030 = vadd.f32 %v960, %v992
  %v1031 = vadd.f32 %v961, %v992
  %v1032 = vadd.f32 %v962, %v992
  %v1033 = vadd.f32 %v963, %v992
  %v1034 = vadd.f32 %v964, %v992
  %v1035 = vadd.f32 %v965, %v992
  %v1036 = vadd.f32 %v966, %v992
  %v1037 = vadd.f32 %v967, %v992
  %v1038 = vadd.f32 %v968, %v992
  %v1039 = vadd.f32 %v969, %v992
  %v1040 = vadd.f32 %v970, %v992
  %v1041 = vadd.f32 %v971, %v992
  %v1042 = vadd.f32 %v972, %v992
  %v1043 = vadd.f32 %v973, %v992
  %v1044 = vadd.f32 %v974, %v992
  %v1045 = vadd.f32 %v975, %v992
  %v1046 = vadd.f32 %v976, %v992
  %v1047 = vadd.f32 %v977, %v992
  %v1048 = vadd.f32 %v978, %v992
  %v1049 = vadd.f32 %v979, %v992
  %v1050 = vadd.f32 %v980, %v992
  %v1051 = vadd.f32 %v981, %v992
  %v1052 = vadd.f32 %v982, %v992
  %v1053 = vadd.f32 %v983, %v992
  %v1054 = vadd.f32 %v984, %v992
  %v1055 = vadd.f32 %v985, %v992
  %v1056 = vadd.f32 %v986, %v992
  %v1057 = vadd.f32 %v987, %v992
  %v1058 = vld [vmem:[%s3] sm:$0xff]
  %v1059 = vld [vmem:[%s3 + $0x8] sm:$0xff]
  %v1060 = vld [vmem:[%s3 + $0x10] sm:$0xff]
  %v1061 = vld [vmem:[%s3 + $0x18] sm:$0xff]
  %v1062 = vpack.c.bf16 %v995, %v994
  %v1063 = vpack.c.bf16 %v997, %v996
  %v1064 = vpack.c.bf16 %v999, %v998
  %v1065 = vpack.c.bf16 %v1001, %v1000
  %v1066 = vpack.c.bf16 %v1003, %v1002
  %v1067 = vpack.c.bf16 %v1005, %v1004
  %v1068 = vpack.c.bf16 %v1007, %v1006
  %v1069 = vpack.c.bf16 %v1009, %v1008
  %v1070 = vpack.c.bf16 %v1011, %v1010
  %v1071 = vpack.c.bf16 %v1013, %v1012
  %v1072 = vpack.c.bf16 %v1015, %v1014
  %v1073 = vpack.c.bf16 %v1017, %v1016
  %v1074 = vpack.c.bf16 %v1019, %v1018
  %v1075 = vpack.c.bf16 %v1021, %v1020
  %v1076 = vpack.c.bf16 %v1023, %v1022
  %v1077 = vpack.c.bf16 %v1025, %v1024
  %v1078 = vpack.c.bf16 %v1027, %v1026
  %v1079 = vpack.c.bf16 %v1029, %v1028
  %v1080 = vpack.c.bf16 %v1031, %v1030
  %v1081 = vpack.c.bf16 %v1033, %v1032
  %v1082 = vpack.c.bf16 %v1035, %v1034
  %v1083 = vpack.c.bf16 %v1037, %v1036
  %v1084 = vpack.c.bf16 %v1039, %v1038
  %v1085 = vpack.c.bf16 %v1041, %v1040
  %v1086 = vpack.c.bf16 %v1043, %v1042
  %v1087 = vpack.c.bf16 %v1045, %v1044
  %v1088 = vpack.c.bf16 %v1047, %v1046
  %v1089 = vpack.c.bf16 %v1049, %v1048
  %v1090 = vpack.c.bf16 %v1051, %v1050
  %v1091 = vpack.c.bf16 %v1053, %v1052
  %v1092 = vpack.c.bf16 %v1055, %v1054
  %v1093 = vpack.c.bf16 %v1057, %v1056
  %v1094 = vpack.c.bf16 %v1059, %v1058
  %v1095 = vpack.c.bf16 %v1061, %v1060
  %v1097 = vsel %vm84, %v1062, 0
  %v1100 = vsel %vm84, %v1063, 0
  %v1103 = vsel %vm84, %v1064, 0
  %v1106 = vsel %vm84, %v1065, 0
  %v1109 = vsel %vm84, %v1066, 0
  %v1112 = vsel %vm84, %v1067, 0
  %v1115 = vsel %vm84, %v1068, 0
  %v1118 = vsel %vm84, %v1069, 0
  %v1121 = vsel %vm84, %v1070, 0
  %v1124 = vsel %vm84, %v1071, 0
  %v1127 = vsel %vm84, %v1072, 0
  %v1130 = vsel %vm84, %v1073, 0
  %v1133 = vsel %vm84, %v1074, 0
  %v1136 = vsel %vm84, %v1075, 0
  %v1139 = vsel %vm84, %v1076, 0
  %v1142 = vsel %vm84, %v1077, 0
  %v1145 = vsel %vm84, %v1078, 0
  %v1148 = vsel %vm84, %v1079, 0
  %v1151 = vsel %vm84, %v1080, 0
  %v1154 = vsel %vm84, %v1081, 0
  %v1157 = vsel %vm84, %v1082, 0
  %v1160 = vsel %vm84, %v1083, 0
  %v1163 = vsel %vm84, %v1084, 0
  %v1166 = vsel %vm84, %v1085, 0
  %v1169 = vsel %vm84, %v1086, 0
  %v1172 = vsel %vm84, %v1087, 0
  %v1175 = vsel %vm84, %v1088, 0
  %v1178 = vsel %vm84, %v1089, 0
  %v1181 = vsel %vm84, %v1090, 0
  %v1184 = vsel %vm84, %v1091, 0
  %v1187 = vsel %vm84, %v1092, 0
  %v1190 = vsel %vm84, %v1093, 0
  %1192 = vmatprep.subr.bf16.mxu0 0
  %1193 = vmatpush1.bf16.msra.mxu0 0
  %1194 = vmatprep.subr.bf16.mxu0 0
  %1195 = vmatpush1.bf16.msra.mxu0 0
  %1196 = vmatprep.subr.bf16.mxu0 0
  %1197 = vmatpush1.bf16.msra.mxu0 0
  %1198 = vmatprep.subr.bf16.mxu0 0
  %1199 = vmatpush1.bf16.msra.mxu0 0
  %1200 = vmatprep.subr.bf16.mxu0 0
  %1201 = vmatpush1.bf16.msra.mxu0 0
  %1202 = vmatprep.subr.bf16.mxu0 0
  %1203 = vmatpush1.bf16.msra.mxu0 0
  %1204 = vmatprep.subr.bf16.mxu0 0
  %1205 = vmatpush1.bf16.msra.mxu0 %v1095
  %1206 = vmatprep.subr.bf16.mxu0 0
  %1207 = vmatpush1.bf16.msra.mxu0 %v1094
  %1208 = vmatprep.subr.bf16.mxu0 0
  %1209 = vmatpush2.bf16.msra.mxu0 0
  %1210 = vmatprep.subr.bf16.mxu0 0
  %1211 = vmatpush2.bf16.msra.mxu0 0
  %1212 = vmatprep.subr.bf16.mxu0 0
  %1213 = vmatpush2.bf16.msra.mxu0 0
  %1214 = vmatprep.subr.bf16.mxu0 0
  %1215 = vmatpush2.bf16.msra.mxu0 0
  %1216 = vmatprep.subr.bf16.mxu0 0
  %1217 = vmatpush2.bf16.msra.mxu0 0
  %1218 = vmatprep.subr.bf16.mxu0 0
  %1219 = vmatpush2.bf16.msra.mxu0 0
  %1220 = vmatprep.subr.bf16.mxu0 0
  %1221 = vmatpush2.bf16.msra.mxu0 0
  %1222 = vmatprep.subr.bf16.mxu0 0
  %1223 = vmatpush2.bf16.msra.mxu0 0
  %1224 = vmatprep.mubr.bf16.mxu0 0
  %1225 = vmatmul.mubr.bf16.gmra.mxu0 %v1097
  %v1226 = vpop.f32.mrf.mxu0
  %v1227 = vadd.f32 0.0, %v1226
  %v1228 = vpop.f32.mrf.mxu0
  %v1229 = vpop.f32.mrf.mxu0
  %v1230 = vadd.f32 0.0, %v1229
  %v1231 = vpop.f32.mrf.mxu0
  %1232 = vmatprep.mubr.bf16.mxu0 0
  %1233 = vmatmul.mubr.bf16.gmra.mxu0 %v1100
  %v1234 = vpop.f32.mrf.mxu0
  %v1235 = vadd.f32 0.0, %v1234
  %v1236 = vpop.f32.mrf.mxu0
  %v1237 = vpop.f32.mrf.mxu0
  %v1238 = vadd.f32 0.0, %v1237
  %v1239 = vpop.f32.mrf.mxu0
  %1240 = vmatprep.mubr.bf16.mxu0 0
  %1241 = vmatmul.mubr.bf16.gmra.mxu0 %v1103
  %v1242 = vpop.f32.mrf.mxu0
  %v1243 = vadd.f32 0.0, %v1242
  %v1244 = vpop.f32.mrf.mxu0
  %v1245 = vpop.f32.mrf.mxu0
  %v1246 = vadd.f32 0.0, %v1245
  %v1247 = vpop.f32.mrf.mxu0
  %1248 = vmatprep.mubr.bf16.mxu0 0
  %1249 = vmatmul.mubr.bf16.gmra.mxu0 %v1106
  %v1250 = vpop.f32.mrf.mxu0
  %v1251 = vadd.f32 0.0, %v1250
  %v1252 = vpop.f32.mrf.mxu0
  %v1253 = vpop.f32.mrf.mxu0
  %v1254 = vadd.f32 0.0, %v1253
  %v1255 = vpop.f32.mrf.mxu0
  %1256 = vmatprep.mubr.bf16.mxu0 0
  %1257 = vmatmul.mubr.bf16.gmra.mxu0 %v1109
  %v1258 = vpop.f32.mrf.mxu0
  %v1259 = vadd.f32 0.0, %v1258
  %v1260 = vpop.f32.mrf.mxu0
  %v1261 = vpop.f32.mrf.mxu0
  %v1262 = vadd.f32 0.0, %v1261
  %v1263 = vpop.f32.mrf.mxu0
  %1264 = vmatprep.mubr.bf16.mxu0 0
  %1265 = vmatmul.mubr.bf16.gmra.mxu0 %v1112
  %v1266 = vpop.f32.mrf.mxu0
  %v1267 = vadd.f32 0.0, %v1266
  %v1268 = vpop.f32.mrf.mxu0
  %v1269 = vpop.f32.mrf.mxu0
  %v1270 = vadd.f32 0.0, %v1269
  %v1271 = vpop.f32.mrf.mxu0
  %1272 = vmatprep.mubr.bf16.mxu0 0
  %1273 = vmatmul.mubr.bf16.gmra.mxu0 %v1115
  %v1274 = vpop.f32.mrf.mxu0
  %v1275 = vadd.f32 0.0, %v1274
  %v1276 = vpop.f32.mrf.mxu0
  %v1277 = vpop.f32.mrf.mxu0
  %v1278 = vadd.f32 0.0, %v1277
  %v1279 = vpop.f32.mrf.mxu0
  %1280 = vmatprep.mubr.bf16.mxu0 0
  %1281 = vmatmul.mubr.bf16.gmra.mxu0 %v1118
  %v1282 = vpop.f32.mrf.mxu0
  %v1283 = vadd.f32 0.0, %v1282
  %v1284 = vpop.f32.mrf.mxu0
  %v1285 = vpop.f32.mrf.mxu0
  %v1286 = vadd.f32 0.0, %v1285
  %v1287 = vpop.f32.mrf.mxu0
  %1288 = vmatprep.mubr.bf16.mxu0 0
  %1289 = vmatmul.mubr.bf16.gmra.mxu0 %v1121
  %v1290 = vpop.f32.mrf.mxu0
  %v1291 = vadd.f32 0.0, %v1290
  %v1292 = vpop.f32.mrf.mxu0
  %v1293 = vpop.f32.mrf.mxu0
  %v1294 = vadd.f32 0.0, %v1293
  %v1295 = vpop.f32.mrf.mxu0
  %1296 = vmatprep.mubr.bf16.mxu0 0
  %1297 = vmatmul.mubr.bf16.gmra.mxu0 %v1124
  %v1298 = vpop.f32.mrf.mxu0
  %v1299 = vadd.f32 0.0, %v1298
  %v1300 = vpop.f32.mrf.mxu0
  %v1301 = vpop.f32.mrf.mxu0
  %v1302 = vadd.f32 0.0, %v1301
  %v1303 = vpop.f32.mrf.mxu0
  %1304 = vmatprep.mubr.bf16.mxu0 0
  %1305 = vmatmul.mubr.bf16.gmra.mxu0 %v1127
  %v1306 = vpop.f32.mrf.mxu0
  %v1307 = vadd.f32 0.0, %v1306
  %v1308 = vpop.f32.mrf.mxu0
  %v1309 = vpop.f32.mrf.mxu0
  %v1310 = vadd.f32 0.0, %v1309
  %v1311 = vpop.f32.mrf.mxu0
  %1312 = vmatprep.mubr.bf16.mxu0 0
  %1313 = vmatmul.mubr.bf16.gmra.mxu0 %v1130
  %v1314 = vpop.f32.mrf.mxu0
  %v1315 = vadd.f32 0.0, %v1314
  %v1316 = vpop.f32.mrf.mxu0
  %v1317 = vpop.f32.mrf.mxu0
  %v1318 = vadd.f32 0.0, %v1317
  %v1319 = vpop.f32.mrf.mxu0
  %1320 = vmatprep.mubr.bf16.mxu0 0
  %1321 = vmatmul.mubr.bf16.gmra.mxu0 %v1133
  %v1322 = vpop.f32.mrf.mxu0
  %v1323 = vadd.f32 0.0, %v1322
  %v1324 = vpop.f32.mrf.mxu0
  %v1325 = vpop.f32.mrf.mxu0
  %v1326 = vadd.f32 0.0, %v1325
  %v1327 = vpop.f32.mrf.mxu0
  %1328 = vmatprep.mubr.bf16.mxu0 0
  %1329 = vmatmul.mubr.bf16.gmra.mxu0 %v1136
  %v1330 = vpop.f32.mrf.mxu0
  %v1331 = vadd.f32 0.0, %v1330
  %v1332 = vpop.f32.mrf.mxu0
  %v1333 = vpop.f32.mrf.mxu0
  %v1334 = vadd.f32 0.0, %v1333
  %v1335 = vpop.f32.mrf.mxu0
  %1336 = vmatprep.mubr.bf16.mxu0 0
  %1337 = vmatmul.mubr.bf16.gmra.mxu0 %v1139
  %v1338 = vpop.f32.mrf.mxu0
  %v1339 = vadd.f32 0.0, %v1338
  %v1340 = vpop.f32.mrf.mxu0
  %v1341 = vpop.f32.mrf.mxu0
  %v1342 = vadd.f32 0.0, %v1341
  %v1343 = vpop.f32.mrf.mxu0
  %1344 = vmatprep.mubr.bf16.mxu0 0
  %1345 = vmatmul.mubr.bf16.gmra.mxu0 %v1142
  %v1346 = vpop.f32.mrf.mxu0
  %v1347 = vadd.f32 0.0, %v1346
  %v1348 = vpop.f32.mrf.mxu0
  %v1349 = vpop.f32.mrf.mxu0
  %v1350 = vadd.f32 0.0, %v1349
  %v1351 = vpop.f32.mrf.mxu0
  %1352 = vmatprep.mubr.bf16.mxu0 0
  %1353 = vmatmul.mubr.bf16.gmra.mxu0 %v1145
  %v1354 = vpop.f32.mrf.mxu0
  %v1355 = vadd.f32 0.0, %v1354
  %v1356 = vpop.f32.mrf.mxu0
  %v1357 = vpop.f32.mrf.mxu0
  %v1358 = vadd.f32 0.0, %v1357
  %v1359 = vpop.f32.mrf.mxu0
  %1360 = vmatprep.mubr.bf16.mxu0 0
  %1361 = vmatmul.mubr.bf16.gmra.mxu0 %v1148
  %v1362 = vpop.f32.mrf.mxu0
  %v1363 = vadd.f32 0.0, %v1362
  %v1364 = vpop.f32.mrf.mxu0
  %v1365 = vpop.f32.mrf.mxu0
  %v1366 = vadd.f32 0.0, %v1365
  %v1367 = vpop.f32.mrf.mxu0
  %1368 = vmatprep.mubr.bf16.mxu0 0
  %1369 = vmatmul.mubr.bf16.gmra.mxu0 %v1151
  %v1370 = vpop.f32.mrf.mxu0
  %v1371 = vadd.f32 0.0, %v1370
  %v1372 = vpop.f32.mrf.mxu0
  %v1373 = vpop.f32.mrf.mxu0
  %v1374 = vadd.f32 0.0, %v1373
  %v1375 = vpop.f32.mrf.mxu0
  %1376 = vmatprep.mubr.bf16.mxu0 0
  %1377 = vmatmul.mubr.bf16.gmra.mxu0 %v1154
  %v1378 = vpop.f32.mrf.mxu0
  %v1379 = vadd.f32 0.0, %v1378
  %v1380 = vpop.f32.mrf.mxu0
  %v1381 = vpop.f32.mrf.mxu0
  %v1382 = vadd.f32 0.0, %v1381
  %v1383 = vpop.f32.mrf.mxu0
  %1384 = vmatprep.mubr.bf16.mxu0 0
  %1385 = vmatmul.mubr.bf16.gmra.mxu0 %v1157
  %v1386 = vpop.f32.mrf.mxu0
  %v1387 = vadd.f32 0.0, %v1386
  %v1388 = vpop.f32.mrf.mxu0
  %v1389 = vpop.f32.mrf.mxu0
  %v1390 = vadd.f32 0.0, %v1389
  %v1391 = vpop.f32.mrf.mxu0
  %1392 = vmatprep.mubr.bf16.mxu0 0
  %1393 = vmatmul.mubr.bf16.gmra.mxu0 %v1160
  %v1394 = vpop.f32.mrf.mxu0
  %v1395 = vadd.f32 0.0, %v1394
  %v1396 = vpop.f32.mrf.mxu0
  %v1397 = vpop.f32.mrf.mxu0
  %v1398 = vadd.f32 0.0, %v1397
  %v1399 = vpop.f32.mrf.mxu0
  %1400 = vmatprep.mubr.bf16.mxu0 0
  %1401 = vmatmul.mubr.bf16.gmra.mxu0 %v1163
  %v1402 = vpop.f32.mrf.mxu0
  %v1403 = vadd.f32 0.0, %v1402
  %v1404 = vpop.f32.mrf.mxu0
  %v1405 = vpop.f32.mrf.mxu0
  %v1406 = vadd.f32 0.0, %v1405
  %v1407 = vpop.f32.mrf.mxu0
  %1408 = vmatprep.mubr.bf16.mxu0 0
  %1409 = vmatmul.mubr.bf16.gmra.mxu0 %v1166
  %v1410 = vpop.f32.mrf.mxu0
  %v1411 = vadd.f32 0.0, %v1410
  %v1412 = vpop.f32.mrf.mxu0
  %v1413 = vpop.f32.mrf.mxu0
  %v1414 = vadd.f32 0.0, %v1413
  %v1415 = vpop.f32.mrf.mxu0
  %1416 = vmatprep.mubr.bf16.mxu0 0
  %1417 = vmatmul.mubr.bf16.gmra.mxu0 %v1169
  %v1418 = vpop.f32.mrf.mxu0
  %v1419 = vadd.f32 0.0, %v1418
  %v1420 = vpop.f32.mrf.mxu0
  %v1421 = vpop.f32.mrf.mxu0
  %v1422 = vadd.f32 0.0, %v1421
  %v1423 = vpop.f32.mrf.mxu0
  %1424 = vmatprep.mubr.bf16.mxu0 0
  %1425 = vmatmul.mubr.bf16.gmra.mxu0 %v1172
  %v1426 = vpop.f32.mrf.mxu0
  %v1427 = vadd.f32 0.0, %v1426
  %v1428 = vpop.f32.mrf.mxu0
  %v1429 = vpop.f32.mrf.mxu0
  %v1430 = vadd.f32 0.0, %v1429
  %v1431 = vpop.f32.mrf.mxu0
  %1432 = vmatprep.mubr.bf16.mxu0 0
  %1433 = vmatmul.mubr.bf16.gmra.mxu0 %v1175
  %v1434 = vpop.f32.mrf.mxu0
  %v1435 = vadd.f32 0.0, %v1434
  %v1436 = vpop.f32.mrf.mxu0
  %v1437 = vpop.f32.mrf.mxu0
  %v1438 = vadd.f32 0.0, %v1437
  %v1439 = vpop.f32.mrf.mxu0
  %1440 = vmatprep.mubr.bf16.mxu0 0
  %1441 = vmatmul.mubr.bf16.gmra.mxu0 %v1178
  %v1442 = vpop.f32.mrf.mxu0
  %v1443 = vadd.f32 0.0, %v1442
  %v1444 = vpop.f32.mrf.mxu0
  %v1445 = vpop.f32.mrf.mxu0
  %v1446 = vadd.f32 0.0, %v1445
  %v1447 = vpop.f32.mrf.mxu0
  %1448 = vmatprep.mubr.bf16.mxu0 0
  %1449 = vmatmul.mubr.bf16.gmra.mxu0 %v1181
  %v1450 = vpop.f32.mrf.mxu0
  %v1451 = vadd.f32 0.0, %v1450
  %v1452 = vpop.f32.mrf.mxu0
  %v1453 = vpop.f32.mrf.mxu0
  %v1454 = vadd.f32 0.0, %v1453
  %v1455 = vpop.f32.mrf.mxu0
  %1456 = vmatprep.mubr.bf16.mxu0 0
  %1457 = vmatmul.mubr.bf16.gmra.mxu0 %v1184
  %v1458 = vpop.f32.mrf.mxu0
  %v1459 = vadd.f32 0.0, %v1458
  %v1460 = vpop.f32.mrf.mxu0
  %v1461 = vpop.f32.mrf.mxu0
  %v1462 = vadd.f32 0.0, %v1461
  %v1463 = vpop.f32.mrf.mxu0
  %1464 = vmatprep.mubr.bf16.mxu0 0
  %1465 = vmatmul.mubr.bf16.gmra.mxu0 %v1187
  %v1466 = vpop.f32.mrf.mxu0
  %v1467 = vadd.f32 0.0, %v1466
  %v1468 = vpop.f32.mrf.mxu0
  %v1469 = vpop.f32.mrf.mxu0
  %v1470 = vadd.f32 0.0, %v1469
  %v1471 = vpop.f32.mrf.mxu0
  %1472 = vmatprep.mubr.bf16.mxu0 0
  %1473 = vmatmul.mubr.bf16.gmra.mxu0 %v1190
  %v1474 = vpop.f32.mrf.mxu0
  %v1475 = vadd.f32 0.0, %v1474
  %v1476 = vpop.f32.mrf.mxu0
  %v1477 = vpop.f32.mrf.mxu0
  %v1478 = vadd.f32 0.0, %v1477
  %v1479 = vpop.f32.mrf.mxu0
  %1480 = vdwg.mxu0
  %1481 = vst [vmem:[%s4] sm:$0xff] %v1227
  %1482 = vst [vmem:[%s4 + $0x8] sm:$0xff] %v1230
  %1483 = vst [vmem:[%s4 + $0x10] sm:$0xff] %v1235
  %1484 = vst [vmem:[%s4 + $0x18] sm:$0xff] %v1238
  %1485 = vst [vmem:[%s4 + $0x20] sm:$0xff] %v1243
  %1486 = vst [vmem:[%s4 + $0x28] sm:$0xff] %v1246
  %1487 = vst [vmem:[%s4 + $0x30] sm:$0xff] %v1251
  %1488 = vst [vmem:[%s4 + $0x38] sm:$0xff] %v1254
  %1489 = vst [vmem:[%s4 + $0x40] sm:$0xff] %v1259
  %1490 = vst [vmem:[%s4 + $0x48] sm:$0xff] %v1262
  %1491 = vst [vmem:[%s4 + $0x50] sm:$0xff] %v1267
  %1492 = vst [vmem:[%s4 + $0x58] sm:$0xff] %v1270
  %1493 = vst [vmem:[%s4 + $0x60] sm:$0xff] %v1275
  %1494 = vst [vmem:[%s4 + $0x68] sm:$0xff] %v1278
  %1495 = vst [vmem:[%s4 + $0x70] sm:$0xff] %v1283
  %1496 = vst [vmem:[%s4 + $0x78] sm:$0xff] %v1286
  %1497 = vst [vmem:[%s4 + $0x80] sm:$0xff] %v1291
  %1498 = vst [vmem:[%s4 + $0x88] sm:$0xff] %v1294
  %1499 = vst [vmem:[%s4 + $0x90] sm:$0xff] %v1299
  %1500 = vst [vmem:[%s4 + $0x98] sm:$0xff] %v1302
  %1501 = vst [vmem:[%s4 + $0xa0] sm:$0xff] %v1307
  %1502 = vst [vmem:[%s4 + $0xa8] sm:$0xff] %v1310
  %1503 = vst [vmem:[%s4 + $0xb0] sm:$0xff] %v1315
  %1504 = vst [vmem:[%s4 + $0xb8] sm:$0xff] %v1318
  %1505 = vst [vmem:[%s4 + $0xc0] sm:$0xff] %v1323
  %1506 = vst [vmem:[%s4 + $0xc8] sm:$0xff] %v1326
  %1507 = vst [vmem:[%s4 + $0xd0] sm:$0xff] %v1331
  %1508 = vst [vmem:[%s4 + $0xd8] sm:$0xff] %v1334
  %1509 = vst [vmem:[%s4 + $0xe0] sm:$0xff] %v1339
  %1510 = vst [vmem:[%s4 + $0xe8] sm:$0xff] %v1342
  %1511 = vst [vmem:[%s4 + $0xf0] sm:$0xff] %v1347
  %1512 = vst [vmem:[%s4 + $0xf8] sm:$0xff] %v1350
  %1513 = vst [vmem:[%s4 + $0x100] sm:$0xff] %v1355
  %1514 = vst [vmem:[%s4 + $0x108] sm:$0xff] %v1358
  %1515 = vst [vmem:[%s4 + $0x110] sm:$0xff] %v1363
  %1516 = vst [vmem:[%s4 + $0x118] sm:$0xff] %v1366
  %1517 = vst [vmem:[%s4 + $0x120] sm:$0xff] %v1371
  %1518 = vst [vmem:[%s4 + $0x128] sm:$0xff] %v1374
  %1519 = vst [vmem:[%s4 + $0x130] sm:$0xff] %v1379
  %1520 = vst [vmem:[%s4 + $0x138] sm:$0xff] %v1382
  %1521 = vst [vmem:[%s4 + $0x140] sm:$0xff] %v1387
  %1522 = vst [vmem:[%s4 + $0x148] sm:$0xff] %v1390
  %1523 = vst [vmem:[%s4 + $0x150] sm:$0xff] %v1395
  %1524 = vst [vmem:[%s4 + $0x158] sm:$0xff] %v1398
  %1525 = vst [vmem:[%s4 + $0x160] sm:$0xff] %v1403
  %1526 = vst [vmem:[%s4 + $0x168] sm:$0xff] %v1406
  %1527 = vst [vmem:[%s4 + $0x170] sm:$0xff] %v1411
  %1528 = vst [vmem:[%s4 + $0x178] sm:$0xff] %v1414
  %1529 = vst [vmem:[%s4 + $0x180] sm:$0xff] %v1419
  %1530 = vst [vmem:[%s4 + $0x188] sm:$0xff] %v1422
  %1531 = vst [vmem:[%s4 + $0x190] sm:$0xff] %v1427
  %1532 = vst [vmem:[%s4 + $0x198] sm:$0xff] %v1430
  %1533 = vst [vmem:[%s4 + $0x1a0] sm:$0xff] %v1435
  %1534 = vst [vmem:[%s4 + $0x1a8] sm:$0xff] %v1438
  %1535 = vst [vmem:[%s4 + $0x1b0] sm:$0xff] %v1443
  %1536 = vst [vmem:[%s4 + $0x1b8] sm:$0xff] %v1446
  %1537 = vst [vmem:[%s4 + $0x1c0] sm:$0xff] %v1451
  %1538 = vst [vmem:[%s4 + $0x1c8] sm:$0xff] %v1454
  %1539 = vst [vmem:[%s4 + $0x1d0] sm:$0xff] %v1459
  %1540 = vst [vmem:[%s4 + $0x1d8] sm:$0xff] %v1462
  %1541 = vst [vmem:[%s4 + $0x1e0] sm:$0xff] %v1467
  %1542 = vst [vmem:[%s4 + $0x1e8] sm:$0xff] %v1470
  %1543 = vst [vmem:[%s4 + $0x1f0] sm:$0xff] %v1475
  %1544 = vst [vmem:[%s4 + $0x1f8] sm:$0xff] %v1478
  // Predicated region
  $region18: #{ssm_ab_forward.9} parent=0 // pred_check
    _
  $region19: #{ssm_ab_forward.9} parent=0 // pred_check_branch
    %1546 = sbr.rel (0) target = $region21
  $region20: #{ssm_ab_forward.9} parent=0 // pred_region
    _
  $region21: #{ssm_ab_forward.9} parent=0 // pred_fallthru
    _
  // Predicated region
  $region22: #{ssm_ab_forward.9} parent=0 // pred_check
    _
  $region23: #{ssm_ab_forward.9} parent=0 // pred_check_branch
    %1548 = sbr.rel (0) target = $region25
  $region24: #{ssm_ab_forward.9} parent=0 // pred_region
    _
  $region25: #{ssm_ab_forward.9} parent=0 // pred_fallthru
    _

// kernel: ssm_ab_forward.7
$region0: #{ssm_ab_forward.7}
  #allocation0 [shape = 'u32[]', space=smem, size = 0x4, offset = 0x4, fixed_abs, tag = 'smem constant byte address 0x4 - core index']
  #allocation1 [shape = 'u32[144,128]{1,0:T(1,128)}', space=vmem, size = 0x12000, scoped, tag = 'internal scratch']
  %s0 = inlined_call_operand.vmem [shape: f32[512,32], index: 0, kind: input, shape index: {}]
  %s1 = inlined_call_operand.vmem [shape: f32[1,32], index: 1, kind: input, shape index: {}]
  %s2 = inlined_call_operand.vmem [shape: f32[1,32], index: 2, kind: input, shape index: {}]
  %s3 = inlined_call_operand.vmem [shape: f32[32,96], index: 3, kind: input, shape index: {}]
  %s4 = inlined_call_operand.vmem [shape: f32[1,96], index: 4, kind: input, shape index: {}]
  %s5 = inlined_call_operand.vmem [shape: f32[2,64,64], index: 5, kind: input, shape index: {}]
  %s6 = inlined_call_operand.vmem [shape: f32[2,16,32], index: 6, kind: input, shape index: {}]
  %s7 = inlined_call_operand.vmem [shape: f32[1,32], index: 7, kind: input, shape index: {}]
  %s8 = inlined_call_operand.vmem [shape: f32[512,32], index: 8, kind: output, shape index: {}]
  %s9 = sld [smem:[#allocation0]]
  $region42: #{ssm_ab_forward.7} parent=0
    _
  %s11 = ssub.s32 1, %s9
  %s12 = scalar_select 0, %s11, %s9
  // Predicated region
  $region2: #{ssm_ab_forward.7} parent=0 // pred_check
    _
  $region3: #{ssm_ab_forward.7} parent=0 // pred_check_branch
    %14 = sbr.rel (0) target = $region5
  $region4: #{ssm_ab_forward.7} parent=0 // pred_region
    _
  $region5: #{ssm_ab_forward.7} parent=0 // pred_fallthru
    _
  // Predicated region
  $region6: #{ssm_ab_forward.7} parent=0 // pred_check
    _
  $region7: #{ssm_ab_forward.7} parent=0 // pred_check_branch
    %16 = sbr.rel (0) target = $region9
  $region8: #{ssm_ab_forward.7} parent=0 // pred_region
    _
  $region9: #{ssm_ab_forward.7} parent=0 // pred_fallthru
    _
  // Predicated region
  $region10: #{ssm_ab_forward.7} parent=0 // pred_check
    _
  $region11: #{ssm_ab_forward.7} parent=0 // pred_check_branch
    %18 = sbr.rel (0) target = $region13
  $region12: #{ssm_ab_forward.7} parent=0 // pred_region
    _
  $region13: #{ssm_ab_forward.7} parent=0 // pred_fallthru
    _
  // Predicated region
  $region14: #{ssm_ab_forward.7} parent=0 // pred_check
    _
  $region15: #{ssm_ab_forward.7} parent=0 // pred_check_branch
    %20 = sbr.rel (0) target = $region17
  $region16: #{ssm_ab_forward.7} parent=0 // pred_region
    _
  $region17: #{ssm_ab_forward.7} parent=0 // pred_fallthru
    _
  // Predicated region
  $region18: #{ssm_ab_forward.7} parent=0 // pred_check
    _
  $region19: #{ssm_ab_forward.7} parent=0 // pred_check_branch
    %22 = sbr.rel (0) target = $region21
  $region20: #{ssm_ab_forward.7} parent=0 // pred_region
    _
  $region21: #{ssm_ab_forward.7} parent=0 // pred_fallthru
    _
  // Predicated region
  $region22: #{ssm_ab_forward.7} parent=0 // pred_check
    _
  $region23: #{ssm_ab_forward.7} parent=0 // pred_check_branch
    %24 = sbr.rel (0) target = $region25
  $region24: #{ssm_ab_forward.7} parent=0 // pred_region
    _
  $region25: #{ssm_ab_forward.7} parent=0 // pred_fallthru
    _
  // Predicated region
  $region26: #{ssm_ab_forward.7} parent=0 // pred_check
    _
  $region27: #{ssm_ab_forward.7} parent=0 // pred_check_branch
    %26 = sbr.rel (0) target = $region29
  $region28: #{ssm_ab_forward.7} parent=0 // pred_region
    _
  $region29: #{ssm_ab_forward.7} parent=0 // pred_fallthru
    _
  // Predicated region
  $region30: #{ssm_ab_forward.7} parent=0 // pred_check
    _
  $region31: #{ssm_ab_forward.7} parent=0 // pred_check_branch
    %28 = sbr.rel (0) target = $region33
  $region32: #{ssm_ab_forward.7} parent=0 // pred_region
    _
  $region33: #{ssm_ab_forward.7} parent=0 // pred_fallthru
    _
  %v30 = vld [vmem:[%s0] sm:$0xff]
  %v31 = vld [vmem:[%s0 + $0x8] sm:$0xff]
  %v32 = vld [vmem:[%s0 + $0x10] sm:$0xff]
  %v33 = vld [vmem:[%s0 + $0x18] sm:$0xff]
  %v34 = vld [vmem:[%s0 + $0x20] sm:$0xff]
  %v35 = vld [vmem:[%s0 + $0x28] sm:$0xff]
  %v36 = vld [vmem:[%s0 + $0x30] sm:$0xff]
  %v37 = vld [vmem:[%s0 + $0x38] sm:$0xff]
  %v38 = vld [vmem:[%s0 + $0x40] sm:$0xff]
  %v39 = vld [vmem:[%s0 + $0x48] sm:$0xff]
  %v40 = vld [vmem:[%s0 + $0x50] sm:$0xff]
  %v41 = vld [vmem:[%s0 + $0x58] sm:$0xff]
  %v42 = vld [vmem:[%s0 + $0x60] sm:$0xff]
  %v43 = vld [vmem:[%s0 + $0x68] sm:$0xff]
  %v44 = vld [vmem:[%s0 + $0x70] sm:$0xff]
  %v45 = vld [vmem:[%s0 + $0x78] sm:$0xff]
  %v46 = vld [vmem:[%s0 + $0x80] sm:$0xff]
  %v47 = vld [vmem:[%s0 + $0x88] sm:$0xff]
  %v48 = vld [vmem:[%s0 + $0x90] sm:$0xff]
  %v49 = vld [vmem:[%s0 + $0x98] sm:$0xff]
  %v50 = vld [vmem:[%s0 + $0xa0] sm:$0xff]
  %v51 = vld [vmem:[%s0 + $0xa8] sm:$0xff]
  %v52 = vld [vmem:[%s0 + $0xb0] sm:$0xff]
  %v53 = vld [vmem:[%s0 + $0xb8] sm:$0xff]
  %v54 = vld [vmem:[%s0 + $0xc0] sm:$0xff]
  %v55 = vld [vmem:[%s0 + $0xc8] sm:$0xff]
  %v56 = vld [vmem:[%s0 + $0xd0] sm:$0xff]
  %v57 = vld [vmem:[%s0 + $0xd8] sm:$0xff]
  %v58 = vld [vmem:[%s0 + $0xe0] sm:$0xff]
  %v59 = vld [vmem:[%s0 + $0xe8] sm:$0xff]
  %v60 = vld [vmem:[%s0 + $0xf0] sm:$0xff]
  %v61 = vld [vmem:[%s0 + $0xf8] sm:$0xff]
  %v62 = vld [vmem:[%s0 + $0x100] sm:$0xff]
  %v63 = vld [vmem:[%s0 + $0x108] sm:$0xff]
  %v64 = vld [vmem:[%s0 + $0x110] sm:$0xff]
  %v65 = vld [vmem:[%s0 + $0x118] sm:$0xff]
  %v66 = vld [vmem:[%s0 + $0x120] sm:$0xff]
  %v67 = vld [vmem:[%s0 + $0x128] sm:$0xff]
  %v68 = vld [vmem:[%s0 + $0x130] sm:$0xff]
  %v69 = vld [vmem:[%s0 + $0x138] sm:$0xff]
  %v70 = vld [vmem:[%s0 + $0x140] sm:$0xff]
  %v71 = vld [vmem:[%s0 + $0x148] sm:$0xff]
  %v72 = vld [vmem:[%s0 + $0x150] sm:$0xff]
  %v73 = vld [vmem:[%s0 + $0x158] sm:$0xff]
  %v74 = vld [vmem:[%s0 + $0x160] sm:$0xff]
  %v75 = vld [vmem:[%s0 + $0x168] sm:$0xff]
  %v76 = vld [vmem:[%s0 + $0x170] sm:$0xff]
  %v77 = vld [vmem:[%s0 + $0x178] sm:$0xff]
  %v78 = vld [vmem:[%s0 + $0x180] sm:$0xff]
  %v79 = vld [vmem:[%s0 + $0x188] sm:$0xff]
  %v80 = vld [vmem:[%s0 + $0x190] sm:$0xff]
  %v81 = vld [vmem:[%s0 + $0x198] sm:$0xff]
  %v82 = vld [vmem:[%s0 + $0x1a0] sm:$0xff]
  %v83 = vld [vmem:[%s0 + $0x1a8] sm:$0xff]
  %v84 = vld [vmem:[%s0 + $0x1b0] sm:$0xff]
  %v85 = vld [vmem:[%s0 + $0x1b8] sm:$0xff]
  %v86 = vld [vmem:[%s0 + $0x1c0] sm:$0xff]
  %v87 = vld [vmem:[%s0 + $0x1c8] sm:$0xff]
  %v88 = vld [vmem:[%s0 + $0x1d0] sm:$0xff]
  %v89 = vld [vmem:[%s0 + $0x1d8] sm:$0xff]
  %v90 = vld [vmem:[%s0 + $0x1e0] sm:$0xff]
  %v91 = vld [vmem:[%s0 + $0x1e8] sm:$0xff]
  %v92 = vld [vmem:[%s0 + $0x1f0] sm:$0xff]
  %v93 = vld [vmem:[%s0 + $0x1f8] sm:$0xff]
  %vm94 = vcmask 261120
  %v95 = vsel %vm94, %v30, 0.0
  %96 = vadd.xlane.f32.xlu0 %v95
  %v97 = vpop.xlane.xlu0 %96
  %v98 = vsel %vm94, %v31, 0.0
  %99 = vadd.xlane.f32.xlu0 %v98
  %v100 = vpop.xlane.xlu0 %99
  %v101 = vsel %vm94, %v32, 0.0
  %102 = vadd.xlane.f32.xlu0 %v101
  %v103 = vpop.xlane.xlu0 %102
  %v104 = vsel %vm94, %v33, 0.0
  %105 = vadd.xlane.f32.xlu0 %v104
  %v106 = vpop.xlane.xlu0 %105
  %v107 = vsel %vm94, %v34, 0.0
  %108 = vadd.xlane.f32.xlu0 %v107
  %v109 = vpop.xlane.xlu0 %108
  %v110 = vsel %vm94, %v35, 0.0
  %111 = vadd.xlane.f32.xlu0 %v110
  %v112 = vpop.xlane.xlu0 %111
  %v113 = vsel %vm94, %v36, 0.0
  %114 = vadd.xlane.f32.xlu0 %v113
  %v115 = vpop.xlane.xlu0 %114
  %v116 = vsel %vm94, %v37, 0.0
  %117 = vadd.xlane.f32.xlu0 %v116
  %v118 = vpop.xlane.xlu0 %117
  %v119 = vsel %vm94, %v38, 0.0
  %120 = vadd.xlane.f32.xlu0 %v119
  %v121 = vpop.xlane.xlu0 %120
  %v122 = vsel %vm94, %v39, 0.0
  %123 = vadd.xlane.f32.xlu0 %v122
  %v124 = vpop.xlane.xlu0 %123
  %v125 = vsel %vm94, %v40, 0.0
  %126 = vadd.xlane.f32.xlu0 %v125
  %v127 = vpop.xlane.xlu0 %126
  %v128 = vsel %vm94, %v41, 0.0
  %129 = vadd.xlane.f32.xlu0 %v128
  %v130 = vpop.xlane.xlu0 %129
  %v131 = vsel %vm94, %v42, 0.0
  %132 = vadd.xlane.f32.xlu0 %v131
  %v133 = vpop.xlane.xlu0 %132
  %v134 = vsel %vm94, %v43, 0.0
  %135 = vadd.xlane.f32.xlu0 %v134
  %v136 = vpop.xlane.xlu0 %135
  %v137 = vsel %vm94, %v44, 0.0
  %138 = vadd.xlane.f32.xlu0 %v137
  %v139 = vpop.xlane.xlu0 %138
  %v140 = vsel %vm94, %v45, 0.0
  %141 = vadd.xlane.f32.xlu0 %v140
  %v142 = vpop.xlane.xlu0 %141
  %v143 = vsel %vm94, %v46, 0.0
  %144 = vadd.xlane.f32.xlu0 %v143
  %v145 = vpop.xlane.xlu0 %144
  %v146 = vsel %vm94, %v47, 0.0
  %147 = vadd.xlane.f32.xlu0 %v146
  %v148 = vpop.xlane.xlu0 %147
  %v149 = vsel %vm94, %v48, 0.0
  %150 = vadd.xlane.f32.xlu0 %v149
  %v151 = vpop.xlane.xlu0 %150
  %v152 = vsel %vm94, %v49, 0.0
  %153 = vadd.xlane.f32.xlu0 %v152
  %v154 = vpop.xlane.xlu0 %153
  %v155 = vsel %vm94, %v50, 0.0
  %156 = vadd.xlane.f32.xlu0 %v155
  %v157 = vpop.xlane.xlu0 %156
  %v158 = vsel %vm94, %v51, 0.0
  %159 = vadd.xlane.f32.xlu0 %v158
  %v160 = vpop.xlane.xlu0 %159
  %v161 = vsel %vm94, %v52, 0.0
  %162 = vadd.xlane.f32.xlu0 %v161
  %v163 = vpop.xlane.xlu0 %162
  %v164 = vsel %vm94, %v53, 0.0
  %165 = vadd.xlane.f32.xlu0 %v164
  %v166 = vpop.xlane.xlu0 %165
  %v167 = vsel %vm94, %v54, 0.0
  %168 = vadd.xlane.f32.xlu0 %v167
  %v169 = vpop.xlane.xlu0 %168
  %v170 = vsel %vm94, %v55, 0.0
  %171 = vadd.xlane.f32.xlu0 %v170
  %v172 = vpop.xlane.xlu0 %171
  %v173 = vsel %vm94, %v56, 0.0
  %174 = vadd.xlane.f32.xlu0 %v173
  %v175 = vpop.xlane.xlu0 %174
  %v176 = vsel %vm94, %v57, 0.0
  %177 = vadd.xlane.f32.xlu0 %v176
  %v178 = vpop.xlane.xlu0 %177
  %v179 = vsel %vm94, %v58, 0.0
  %180 = vadd.xlane.f32.xlu0 %v179
  %v181 = vpop.xlane.xlu0 %180
  %v182 = vsel %vm94, %v59, 0.0
  %183 = vadd.xlane.f32.xlu0 %v182
  %v184 = vpop.xlane.xlu0 %183
  %v185 = vsel %vm94, %v60, 0.0
  %186 = vadd.xlane.f32.xlu0 %v185
  %v187 = vpop.xlane.xlu0 %186
  %v188 = vsel %vm94, %v61, 0.0
  %189 = vadd.xlane.f32.xlu0 %v188
  %v190 = vpop.xlane.xlu0 %189
  %v191 = vsel %vm94, %v62, 0.0
  %192 = vadd.xlane.f32.xlu0 %v191
  %v193 = vpop.xlane.xlu0 %192
  %v194 = vsel %vm94, %v63, 0.0
  %195 = vadd.xlane.f32.xlu0 %v194
  %v196 = vpop.xlane.xlu0 %195
  %v197 = vsel %vm94, %v64, 0.0
  %198 = vadd.xlane.f32.xlu0 %v197
  %v199 = vpop.xlane.xlu0 %198
  %v200 = vsel %vm94, %v65, 0.0
  %201 = vadd.xlane.f32.xlu0 %v200
  %v202 = vpop.xlane.xlu0 %201
  %v203 = vsel %vm94, %v66, 0.0
  %204 = vadd.xlane.f32.xlu0 %v203
  %v205 = vpop.xlane.xlu0 %204
  %v206 = vsel %vm94, %v67, 0.0
  %207 = vadd.xlane.f32.xlu0 %v206
  %v208 = vpop.xlane.xlu0 %207
  %v209 = vsel %vm94, %v68, 0.0
  %210 = vadd.xlane.f32.xlu0 %v209
  %v211 = vpop.xlane.xlu0 %210
  %v212 = vsel %vm94, %v69, 0.0
  %213 = vadd.xlane.f32.xlu0 %v212
  %v214 = vpop.xlane.xlu0 %213
  %v215 = vsel %vm94, %v70, 0.0
  %216 = vadd.xlane.f32.xlu0 %v215
  %v217 = vpop.xlane.xlu0 %216
  %v218 = vsel %vm94, %v71, 0.0
  %219 = vadd.xlane.f32.xlu0 %v218
  %v220 = vpop.xlane.xlu0 %219
  %v221 = vsel %vm94, %v72, 0.0
  %222 = vadd.xlane.f32.xlu0 %v221
  %v223 = vpop.xlane.xlu0 %222
  %v224 = vsel %vm94, %v73, 0.0
  %225 = vadd.xlane.f32.xlu0 %v224
  %v226 = vpop.xlane.xlu0 %225
  %v227 = vsel %vm94, %v74, 0.0
  %228 = vadd.xlane.f32.xlu0 %v227
  %v229 = vpop.xlane.xlu0 %228
  %v230 = vsel %vm94, %v75, 0.0
  %231 = vadd.xlane.f32.xlu0 %v230
  %v232 = vpop.xlane.xlu0 %231
  %v233 = vsel %vm94, %v76, 0.0
  %234 = vadd.xlane.f32.xlu0 %v233
  %v235 = vpop.xlane.xlu0 %234
  %v236 = vsel %vm94, %v77, 0.0
  %237 = vadd.xlane.f32.xlu0 %v236
  %v238 = vpop.xlane.xlu0 %237
  %v239 = vsel %vm94, %v78, 0.0
  %240 = vadd.xlane.f32.xlu0 %v239
  %v241 = vpop.xlane.xlu0 %240
  %v242 = vsel %vm94, %v79, 0.0
  %243 = vadd.xlane.f32.xlu0 %v242
  %v244 = vpop.xlane.xlu0 %243
  %v245 = vsel %vm94, %v80, 0.0
  %246 = vadd.xlane.f32.xlu0 %v245
  %v247 = vpop.xlane.xlu0 %246
  %v248 = vsel %vm94, %v81, 0.0
  %249 = vadd.xlane.f32.xlu0 %v248
  %v250 = vpop.xlane.xlu0 %249
  %v251 = vsel %vm94, %v82, 0.0
  %252 = vadd.xlane.f32.xlu0 %v251
  %v253 = vpop.xlane.xlu0 %252
  %v254 = vsel %vm94, %v83, 0.0
  %255 = vadd.xlane.f32.xlu0 %v254
  %v256 = vpop.xlane.xlu0 %255
  %v257 = vsel %vm94, %v84, 0.0
  %258 = vadd.xlane.f32.xlu0 %v257
  %v259 = vpop.xlane.xlu0 %258
  %v260 = vsel %vm94, %v85, 0.0
  %261 = vadd.xlane.f32.xlu0 %v260
  %v262 = vpop.xlane.xlu0 %261
  %v263 = vsel %vm94, %v86, 0.0
  %264 = vadd.xlane.f32.xlu0 %v263
  %v265 = vpop.xlane.xlu0 %264
  %v266 = vsel %vm94, %v87, 0.0
  %267 = vadd.xlane.f32.xlu0 %v266
  %v268 = vpop.xlane.xlu0 %267
  %v269 = vsel %vm94, %v88, 0.0
  %270 = vadd.xlane.f32.xlu0 %v269
  %v271 = vpop.xlane.xlu0 %270
  %v272 = vsel %vm94, %v89, 0.0
  %273 = vadd.xlane.f32.xlu0 %v272
  %v274 = vpop.xlane.xlu0 %273
  %v275 = vsel %vm94, %v90, 0.0
  %276 = vadd.xlane.f32.xlu0 %v275
  %v277 = vpop.xlane.xlu0 %276
  %v278 = vsel %vm94, %v91, 0.0
  %279 = vadd.xlane.f32.xlu0 %v278
  %v280 = vpop.xlane.xlu0 %279
  %v281 = vsel %vm94, %v92, 0.0
  %282 = vadd.xlane.f32.xlu0 %v281
  %v283 = vpop.xlane.xlu0 %282
  %v284 = vsel %vm94, %v93, 0.0
  %285 = vadd.xlane.f32.xlu0 %v284
  %v286 = vpop.xlane.xlu0 %285
  %v287 = vrcp.pop 32.0
  %v288 = vmul.f32 %v97, %v287
  %v289 = vmul.f32 %v100, %v287
  %v290 = vmul.f32 %v103, %v287
  %v291 = vmul.f32 %v106, %v287
  %v292 = vmul.f32 %v109, %v287
  %v293 = vmul.f32 %v112, %v287
  %v294 = vmul.f32 %v115, %v287
  %v295 = vmul.f32 %v118, %v287
  %v296 = vmul.f32 %v121, %v287
  %v297 = vmul.f32 %v124, %v287
  %v298 = vmul.f32 %v127, %v287
  %v299 = vmul.f32 %v130, %v287
  %v300 = vmul.f32 %v133, %v287
  %v301 = vmul.f32 %v136, %v287
  %v302 = vmul.f32 %v139, %v287
  %v303 = vmul.f32 %v142, %v287
  %v304 = vmul.f32 %v145, %v287
  %v305 = vmul.f32 %v148, %v287
  %v306 = vmul.f32 %v151, %v287
  %v307 = vmul.f32 %v154, %v287
  %v308 = vmul.f32 %v157, %v287
  %v309 = vmul.f32 %v160, %v287
  %v310 = vmul.f32 %v163, %v287
  %v311 = vmul.f32 %v166, %v287
  %v312 = vmul.f32 %v169, %v287
  %v313 = vmul.f32 %v172, %v287
  %v314 = vmul.f32 %v175, %v287
  %v315 = vmul.f32 %v178, %v287
  %v316 = vmul.f32 %v181, %v287
  %v317 = vmul.f32 %v184, %v287
  %v318 = vmul.f32 %v187, %v287
  %v319 = vmul.f32 %v190, %v287
  %v320 = vmul.f32 %v193, %v287
  %v321 = vmul.f32 %v196, %v287
  %v322 = vmul.f32 %v199, %v287
  %v323 = vmul.f32 %v202, %v287
  %v324 = vmul.f32 %v205, %v287
  %v325 = vmul.f32 %v208, %v287
  %v326 = vmul.f32 %v211, %v287
  %v327 = vmul.f32 %v214, %v287
  %v328 = vmul.f32 %v217, %v287
  %v329 = vmul.f32 %v220, %v287
  %v330 = vmul.f32 %v223, %v287
  %v331 = vmul.f32 %v226, %v287
  %v332 = vmul.f32 %v229, %v287
  %v333 = vmul.f32 %v232, %v287
  %v334 = vmul.f32 %v235, %v287
  %v335 = vmul.f32 %v238, %v287
  %v336 = vmul.f32 %v241, %v287
  %v337 = vmul.f32 %v244, %v287
  %v338 = vmul.f32 %v247, %v287
  %v339 = vmul.f32 %v250, %v287
  %v340 = vmul.f32 %v253, %v287
  %v341 = vmul.f32 %v256, %v287
  %v342 = vmul.f32 %v259, %v287
  %v343 = vmul.f32 %v262, %v287
  %v344 = vmul.f32 %v265, %v287
  %v345 = vmul.f32 %v268, %v287
  %v346 = vmul.f32 %v271, %v287
  %v347 = vmul.f32 %v274, %v287
  %v348 = vmul.f32 %v277, %v287
  %v349 = vmul.f32 %v280, %v287
  %v350 = vmul.f32 %v283, %v287
  %v351 = vmul.f32 %v286, %v287
  %v352 = vsub.f32 %v30, %v288
  %v353 = vsub.f32 %v31, %v289
  %v354 = vsub.f32 %v32, %v290
  %v355 = vsub.f32 %v33, %v291
  %v356 = vsub.f32 %v34, %v292
  %v357 = vsub.f32 %v35, %v293
  %v358 = vsub.f32 %v36, %v294
  %v359 = vsub.f32 %v37, %v295
  %v360 = vsub.f32 %v38, %v296
  %v361 = vsub.f32 %v39, %v297
  %v362 = vsub.f32 %v40, %v298
  %v363 = vsub.f32 %v41, %v299
  %v364 = vsub.f32 %v42, %v300
  %v365 = vsub.f32 %v43, %v301
  %v366 = vsub.f32 %v44, %v302
  %v367 = vsub.f32 %v45, %v303
  %v368 = vsub.f32 %v46, %v304
  %v369 = vsub.f32 %v47, %v305
  %v370 = vsub.f32 %v48, %v306
  %v371 = vsub.f32 %v49, %v307
  %v372 = vsub.f32 %v50, %v308
  %v373 = vsub.f32 %v51, %v309
  %v374 = vsub.f32 %v52, %v310
  %v375 = vsub.f32 %v53, %v311
  %v376 = vsub.f32 %v54, %v312
  %v377 = vsub.f32 %v55, %v313
  %v378 = vsub.f32 %v56, %v314
  %v379 = vsub.f32 %v57, %v315
  %v380 = vsub.f32 %v58, %v316
  %v381 = vsub.f32 %v59, %v317
  %v382 = vsub.f32 %v60, %v318
  %v383 = vsub.f32 %v61, %v319
  %v384 = vsub.f32 %v62, %v320
  %v385 = vsub.f32 %v63, %v321
  %v386 = vsub.f32 %v64, %v322
  %v387 = vsub.f32 %v65, %v323
  %v388 = vsub.f32 %v66, %v324
  %v389 = vsub.f32 %v67, %v325
  %v390 = vsub.f32 %v68, %v326
  %v391 = vsub.f32 %v69, %v327
  %v392 = vsub.f32 %v70, %v328
  %v393 = vsub.f32 %v71, %v329
  %v394 = vsub.f32 %v72, %v330
  %v395 = vsub.f32 %v73, %v331
  %v396 = vsub.f32 %v74, %v332
  %v397 = vsub.f32 %v75, %v333
  %v398 = vsub.f32 %v76, %v334
  %v399 = vsub.f32 %v77, %v335
  %v400 = vsub.f32 %v78, %v336
  %v401 = vsub.f32 %v79, %v337
  %v402 = vsub.f32 %v80, %v338
  %v403 = vsub.f32 %v81, %v339
  %v404 = vsub.f32 %v82, %v340
  %v405 = vsub.f32 %v83, %v341
  %v406 = vsub.f32 %v84, %v342
  %v407 = vsub.f32 %v85, %v343
  %v408 = vsub.f32 %v86, %v344
  %v409 = vsub.f32 %v87, %v345
  %v410 = vsub.f32 %v88, %v346
  %v411 = vsub.f32 %v89, %v347
  %v412 = vsub.f32 %v90, %v348
  %v413 = vsub.f32 %v91, %v349
  %v414 = vsub.f32 %v92, %v350
  %v415 = vsub.f32 %v93, %v351
  %v416 = vmul.f32 %v352, %v352
  %v417 = vmul.f32 %v353, %v353
  %v418 = vmul.f32 %v354, %v354
  %v419 = vmul.f32 %v355, %v355
  %v420 = vmul.f32 %v356, %v356
  %v421 = vmul.f32 %v357, %v357
  %v422 = vmul.f32 %v358, %v358
  %v423 = vmul.f32 %v359, %v359
  %v424 = vmul.f32 %v360, %v360
  %v425 = vmul.f32 %v361, %v361
  %v426 = vmul.f32 %v362, %v362
  %v427 = vmul.f32 %v363, %v363
  %v428 = vmul.f32 %v364, %v364
  %v429 = vmul.f32 %v365, %v365
  %v430 = vmul.f32 %v366, %v366
  %v431 = vmul.f32 %v367, %v367
  %v432 = vmul.f32 %v368, %v368
  %v433 = vmul.f32 %v369, %v369
  %v434 = vmul.f32 %v370, %v370
  %v435 = vmul.f32 %v371, %v371
  %v436 = vmul.f32 %v372, %v372
  %v437 = vmul.f32 %v373, %v373
  %v438 = vmul.f32 %v374, %v374
  %v439 = vmul.f32 %v375, %v375
  %v440 = vmul.f32 %v376, %v376
  %v441 = vmul.f32 %v377, %v377
  %v442 = vmul.f32 %v378, %v378
  %v443 = vmul.f32 %v379, %v379
  %v444 = vmul.f32 %v380, %v380
  %v445 = vmul.f32 %v381, %v381
  %v446 = vmul.f32 %v382, %v382
  %v447 = vmul.f32 %v383, %v383
  %v448 = vmul.f32 %v384, %v384
  %v449 = vmul.f32 %v385, %v385
  %v450 = vmul.f32 %v386, %v386
  %v451 = vmul.f32 %v387, %v387
  %v452 = vmul.f32 %v388, %v388
  %v453 = vmul.f32 %v389, %v389
  %v454 = vmul.f32 %v390, %v390
  %v455 = vmul.f32 %v391, %v391
  %v456 = vmul.f32 %v392, %v392
  %v457 = vmul.f32 %v393, %v393
  %v458 = vmul.f32 %v394, %v394
  %v459 = vmul.f32 %v395, %v395
  %v460 = vmul.f32 %v396, %v396
  %v461 = vmul.f32 %v397, %v397
  %v462 = vmul.f32 %v398, %v398
  %v463 = vmul.f32 %v399, %v399
  %v464 = vmul.f32 %v400, %v400
  %v465 = vmul.f32 %v401, %v401
  %v466 = vmul.f32 %v402, %v402
  %v467 = vmul.f32 %v403, %v403
  %v468 = vmul.f32 %v404, %v404
  %v469 = vmul.f32 %v405, %v405
  %v470 = vmul.f32 %v406, %v406
  %v471 = vmul.f32 %v407, %v407
  %v472 = vmul.f32 %v408, %v408
  %v473 = vmul.f32 %v409, %v409
  %v474 = vmul.f32 %v410, %v410
  %v475 = vmul.f32 %v411, %v411
  %v476 = vmul.f32 %v412, %v412
  %v477 = vmul.f32 %v413, %v413
  %v478 = vmul.f32 %v414, %v414
  %v479 = vmul.f32 %v415, %v415
  %v480 = vsel %vm94, %v416, 0.0
  %481 = vadd.xlane.f32.xlu0 %v480
  %v482 = vpop.xlane.xlu0 %481
  %v483 = vsel %vm94, %v417, 0.0
  %484 = vadd.xlane.f32.xlu0 %v483
  %v485 = vpop.xlane.xlu0 %484
  %v486 = vsel %vm94, %v418, 0.0
  %487 = vadd.xlane.f32.xlu0 %v486
  %v488 = vpop.xlane.xlu0 %487
  %v489 = vsel %vm94, %v419, 0.0
  %490 = vadd.xlane.f32.xlu0 %v489
  %v491 = vpop.xlane.xlu0 %490
  %v492 = vsel %vm94, %v420, 0.0
  %493 = vadd.xlane.f32.xlu0 %v492
  %v494 = vpop.xlane.xlu0 %493
  %v495 = vsel %vm94, %v421, 0.0
  %496 = vadd.xlane.f32.xlu0 %v495
  %v497 = vpop.xlane.xlu0 %496
  %v498 = vsel %vm94, %v422, 0.0
  %499 = vadd.xlane.f32.xlu0 %v498
  %v500 = vpop.xlane.xlu0 %499
  %v501 = vsel %vm94, %v423, 0.0
  %502 = vadd.xlane.f32.xlu0 %v501
  %v503 = vpop.xlane.xlu0 %502
  %v504 = vsel %vm94, %v424, 0.0
  %505 = vadd.xlane.f32.xlu0 %v504
  %v506 = vpop.xlane.xlu0 %505
  %v507 = vsel %vm94, %v425, 0.0
  %508 = vadd.xlane.f32.xlu0 %v507
  %v509 = vpop.xlane.xlu0 %508
  %v510 = vsel %vm94, %v426, 0.0
  %511 = vadd.xlane.f32.xlu0 %v510
  %v512 = vpop.xlane.xlu0 %511
  %v513 = vsel %vm94, %v427, 0.0
  %514 = vadd.xlane.f32.xlu0 %v513
  %v515 = vpop.xlane.xlu0 %514
  %v516 = vsel %vm94, %v428, 0.0
  %517 = vadd.xlane.f32.xlu0 %v516
  %v518 = vpop.xlane.xlu0 %517
  %v519 = vsel %vm94, %v429, 0.0
  %520 = vadd.xlane.f32.xlu0 %v519
  %v521 = vpop.xlane.xlu0 %520
  %v522 = vsel %vm94, %v430, 0.0
  %523 = vadd.xlane.f32.xlu0 %v522
  %v524 = vpop.xlane.xlu0 %523
  %v525 = vsel %vm94, %v431, 0.0
  %526 = vadd.xlane.f32.xlu0 %v525
  %v527 = vpop.xlane.xlu0 %526
  %v528 = vsel %vm94, %v432, 0.0
  %529 = vadd.xlane.f32.xlu0 %v528
  %v530 = vpop.xlane.xlu0 %529
  %v531 = vsel %vm94, %v433, 0.0
  %532 = vadd.xlane.f32.xlu0 %v531
  %v533 = vpop.xlane.xlu0 %532
  %v534 = vsel %vm94, %v434, 0.0
  %535 = vadd.xlane.f32.xlu0 %v534
  %v536 = vpop.xlane.xlu0 %535
  %v537 = vsel %vm94, %v435, 0.0
  %538 = vadd.xlane.f32.xlu0 %v537
  %v539 = vpop.xlane.xlu0 %538
  %v540 = vsel %vm94, %v436, 0.0
  %541 = vadd.xlane.f32.xlu0 %v540
  %v542 = vpop.xlane.xlu0 %541
  %v543 = vsel %vm94, %v437, 0.0
  %544 = vadd.xlane.f32.xlu0 %v543
  %v545 = vpop.xlane.xlu0 %544
  %v546 = vsel %vm94, %v438, 0.0
  %547 = vadd.xlane.f32.xlu0 %v546
  %v548 = vpop.xlane.xlu0 %547
  %v549 = vsel %vm94, %v439, 0.0
  %550 = vadd.xlane.f32.xlu0 %v549
  %v551 = vpop.xlane.xlu0 %550
  %v552 = vsel %vm94, %v440, 0.0
  %553 = vadd.xlane.f32.xlu0 %v552
  %v554 = vpop.xlane.xlu0 %553
  %v555 = vsel %vm94, %v441, 0.0
  %556 = vadd.xlane.f32.xlu0 %v555
  %v557 = vpop.xlane.xlu0 %556
  %v558 = vsel %vm94, %v442, 0.0
  %559 = vadd.xlane.f32.xlu0 %v558
  %v560 = vpop.xlane.xlu0 %559
  %v561 = vsel %vm94, %v443, 0.0
  %562 = vadd.xlane.f32.xlu0 %v561
  %v563 = vpop.xlane.xlu0 %562
  %v564 = vsel %vm94, %v444, 0.0
  %565 = vadd.xlane.f32.xlu0 %v564
  %v566 = vpop.xlane.xlu0 %565
  %v567 = vsel %vm94, %v445, 0.0
  %568 = vadd.xlane.f32.xlu0 %v567
  %v569 = vpop.xlane.xlu0 %568
  %v570 = vsel %vm94, %v446, 0.0
  %571 = vadd.xlane.f32.xlu0 %v570
  %v572 = vpop.xlane.xlu0 %571
  %v573 = vsel %vm94, %v447, 0.0
  %574 = vadd.xlane.f32.xlu0 %v573
  %v575 = vpop.xlane.xlu0 %574
  %v576 = vsel %vm94, %v448, 0.0
  %577 = vadd.xlane.f32.xlu0 %v576
  %v578 = vpop.xlane.xlu0 %577
  %v579 = vsel %vm94, %v449, 0.0
  %580 = vadd.xlane.f32.xlu0 %v579
  %v581 = vpop.xlane.xlu0 %580
  %v582 = vsel %vm94, %v450, 0.0
  %583 = vadd.xlane.f32.xlu0 %v582
  %v584 = vpop.xlane.xlu0 %583
  %v585 = vsel %vm94, %v451, 0.0
  %586 = vadd.xlane.f32.xlu0 %v585
  %v587 = vpop.xlane.xlu0 %586
  %v588 = vsel %vm94, %v452, 0.0
  %589 = vadd.xlane.f32.xlu0 %v588
  %v590 = vpop.xlane.xlu0 %589
  %v591 = vsel %vm94, %v453, 0.0
  %592 = vadd.xlane.f32.xlu0 %v591
  %v593 = vpop.xlane.xlu0 %592
  %v594 = vsel %vm94, %v454, 0.0
  %595 = vadd.xlane.f32.xlu0 %v594
  %v596 = vpop.xlane.xlu0 %595
  %v597 = vsel %vm94, %v455, 0.0
  %598 = vadd.xlane.f32.xlu0 %v597
  %v599 = vpop.xlane.xlu0 %598
  %v600 = vsel %vm94, %v456, 0.0
  %601 = vadd.xlane.f32.xlu0 %v600
  %v602 = vpop.xlane.xlu0 %601
  %v603 = vsel %vm94, %v457, 0.0
  %604 = vadd.xlane.f32.xlu0 %v603
  %v605 = vpop.xlane.xlu0 %604
  %v606 = vsel %vm94, %v458, 0.0
  %607 = vadd.xlane.f32.xlu0 %v606
  %v608 = vpop.xlane.xlu0 %607
  %v609 = vsel %vm94, %v459, 0.0
  %610 = vadd.xlane.f32.xlu0 %v609
  %v611 = vpop.xlane.xlu0 %610
  %v612 = vsel %vm94, %v460, 0.0
  %613 = vadd.xlane.f32.xlu0 %v612
  %v614 = vpop.xlane.xlu0 %613
  %v615 = vsel %vm94, %v461, 0.0
  %616 = vadd.xlane.f32.xlu0 %v615
  %v617 = vpop.xlane.xlu0 %616
  %v618 = vsel %vm94, %v462, 0.0
  %619 = vadd.xlane.f32.xlu0 %v618
  %v620 = vpop.xlane.xlu0 %619
  %v621 = vsel %vm94, %v463, 0.0
  %622 = vadd.xlane.f32.xlu0 %v621
  %v623 = vpop.xlane.xlu0 %622
  %v624 = vsel %vm94, %v464, 0.0
  %625 = vadd.xlane.f32.xlu0 %v624
  %v626 = vpop.xlane.xlu0 %625
  %v627 = vsel %vm94, %v465, 0.0
  %628 = vadd.xlane.f32.xlu0 %v627
  %v629 = vpop.xlane.xlu0 %628
  %v630 = vsel %vm94, %v466, 0.0
  %631 = vadd.xlane.f32.xlu0 %v630
  %v632 = vpop.xlane.xlu0 %631
  %v633 = vsel %vm94, %v467, 0.0
  %634 = vadd.xlane.f32.xlu0 %v633
  %v635 = vpop.xlane.xlu0 %634
  %v636 = vsel %vm94, %v468, 0.0
  %637 = vadd.xlane.f32.xlu0 %v636
  %v638 = vpop.xlane.xlu0 %637
  %v639 = vsel %vm94, %v469, 0.0
  %640 = vadd.xlane.f32.xlu0 %v639
  %v641 = vpop.xlane.xlu0 %640
  %v642 = vsel %vm94, %v470, 0.0
  %643 = vadd.xlane.f32.xlu0 %v642
  %v644 = vpop.xlane.xlu0 %643
  %v645 = vsel %vm94, %v471, 0.0
  %646 = vadd.xlane.f32.xlu0 %v645
  %v647 = vpop.xlane.xlu0 %646
  %v648 = vsel %vm94, %v472, 0.0
  %649 = vadd.xlane.f32.xlu0 %v648
  %v650 = vpop.xlane.xlu0 %649
  %v651 = vsel %vm94, %v473, 0.0
  %652 = vadd.xlane.f32.xlu0 %v651
  %v653 = vpop.xlane.xlu0 %652
  %v654 = vsel %vm94, %v474, 0.0
  %655 = vadd.xlane.f32.xlu0 %v654
  %v656 = vpop.xlane.xlu0 %655
  %v657 = vsel %vm94, %v475, 0.0
  %658 = vadd.xlane.f32.xlu0 %v657
  %v659 = vpop.xlane.xlu0 %658
  %v660 = vsel %vm94, %v476, 0.0
  %661 = vadd.xlane.f32.xlu0 %v660
  %v662 = vpop.xlane.xlu0 %661
  %v663 = vsel %vm94, %v477, 0.0
  %664 = vadd.xlane.f32.xlu0 %v663
  %v665 = vpop.xlane.xlu0 %664
  %v666 = vsel %vm94, %v478, 0.0
  %667 = vadd.xlane.f32.xlu0 %v666
  %v668 = vpop.xlane.xlu0 %667
  %v669 = vsel %vm94, %v479, 0.0
  %670 = vadd.xlane.f32.xlu0 %v669
  %v671 = vpop.xlane.xlu0 %670
  %v672 = vmul.f32 %v482, %v287
  %v673 = vmul.f32 %v485, %v287
  %v674 = vmul.f32 %v488, %v287
  %v675 = vmul.f32 %v491, %v287
  %v676 = vmul.f32 %v494, %v287
  %v677 = vmul.f32 %v497, %v287
  %v678 = vmul.f32 %v500, %v287
  %v679 = vmul.f32 %v503, %v287
  %v680 = vmul.f32 %v506, %v287
  %v681 = vmul.f32 %v509, %v287
  %v682 = vmul.f32 %v512, %v287
  %v683 = vmul.f32 %v515, %v287
  %v684 = vmul.f32 %v518, %v287
  %v685 = vmul.f32 %v521, %v287
  %v686 = vmul.f32 %v524, %v287
  %v687 = vmul.f32 %v527, %v287
  %v688 = vmul.f32 %v530, %v287
  %v689 = vmul.f32 %v533, %v287
  %v690 = vmul.f32 %v536, %v287
  %v691 = vmul.f32 %v539, %v287
  %v692 = vmul.f32 %v542, %v287
  %v693 = vmul.f32 %v545, %v287
  %v694 = vmul.f32 %v548, %v287
  %v695 = vmul.f32 %v551, %v287
  %v696 = vmul.f32 %v554, %v287
  %v697 = vmul.f32 %v557, %v287
  %v698 = vmul.f32 %v560, %v287
  %v699 = vmul.f32 %v563, %v287
  %v700 = vmul.f32 %v566, %v287
  %v701 = vmul.f32 %v569, %v287
  %v702 = vmul.f32 %v572, %v287
  %v703 = vmul.f32 %v575, %v287
  %v704 = vmul.f32 %v578, %v287
  %v705 = vmul.f32 %v581, %v287
  %v706 = vmul.f32 %v584, %v287
  %v707 = vmul.f32 %v587, %v287
  %v708 = vmul.f32 %v590, %v287
  %v709 = vmul.f32 %v593, %v287
  %v710 = vmul.f32 %v596, %v287
  %v711 = vmul.f32 %v599, %v287
  %v712 = vmul.f32 %v602, %v287
  %v713 = vmul.f32 %v605, %v287
  %v714 = vmul.f32 %v608, %v287
  %v715 = vmul.f32 %v611, %v287
  %v716 = vmul.f32 %v614, %v287
  %v717 = vmul.f32 %v617, %v287
  %v718 = vmul.f32 %v620, %v287
  %v719 = vmul.f32 %v623, %v287
  %v720 = vmul.f32 %v626, %v287
  %v721 = vmul.f32 %v629, %v287
  %v722 = vmul.f32 %v632, %v287
  %v723 = vmul.f32 %v635, %v287
  %v724 = vmul.f32 %v638, %v287
  %v725 = vmul.f32 %v641, %v287
  %v726 = vmul.f32 %v644, %v287
  %v727 = vmul.f32 %v647, %v287
  %v728 = vmul.f32 %v650, %v287
  %v729 = vmul.f32 %v653, %v287
  %v730 = vmul.f32 %v656, %v287
  %v731 = vmul.f32 %v659, %v287
  %v732 = vmul.f32 %v662, %v287
  %v733 = vmul.f32 %v665, %v287
  %v734 = vmul.f32 %v668, %v287
  %v735 = vmul.f32 %v671, %v287
  %v736 = vadd.f32 %v672, 1e-05
  %v737 = vadd.f32 %v673, 1e-05
  %v738 = vadd.f32 %v674, 1e-05
  %v739 = vadd.f32 %v675, 1e-05
  %v740 = vadd.f32 %v676, 1e-05
  %v741 = vadd.f32 %v677, 1e-05
  %v742 = vadd.f32 %v678, 1e-05
  %v743 = vadd.f32 %v679, 1e-05
  %v744 = vadd.f32 %v680, 1e-05
  %v745 = vadd.f32 %v681, 1e-05
  %v746 = vadd.f32 %v682, 1e-05
  %v747 = vadd.f32 %v683, 1e-05
  %v748 = vadd.f32 %v684, 1e-05
  %v749 = vadd.f32 %v685, 1e-05
  %v750 = vadd.f32 %v686, 1e-05
  %v751 = vadd.f32 %v687, 1e-05
  %v752 = vadd.f32 %v688, 1e-05
  %v753 = vadd.f32 %v689, 1e-05
  %v754 = vadd.f32 %v690, 1e-05
  %v755 = vadd.f32 %v691, 1e-05
  %v756 = vadd.f32 %v692, 1e-05
  %v757 = vadd.f32 %v693, 1e-05
  %v758 = vadd.f32 %v694, 1e-05
  %v759 = vadd.f32 %v695, 1e-05
  %v760 = vadd.f32 %v696, 1e-05
  %v761 = vadd.f32 %v697, 1e-05
  %v762 = vadd.f32 %v698, 1e-05
  %v763 = vadd.f32 %v699, 1e-05
  %v764 = vadd.f32 %v700, 1e-05
  %v765 = vadd.f32 %v701, 1e-05
  %v766 = vadd.f32 %v702, 1e-05
  %v767 = vadd.f32 %v703, 1e-05
  %v768 = vadd.f32 %v704, 1e-05
  %v769 = vadd.f32 %v705, 1e-05
  %v770 = vadd.f32 %v706, 1e-05
  %v771 = vadd.f32 %v707, 1e-05
  %v772 = vadd.f32 %v708, 1e-05
  %v773 = vadd.f32 %v709, 1e-05
  %v774 = vadd.f32 %v710, 1e-05
  %v775 = vadd.f32 %v711, 1e-05
  %v776 = vadd.f32 %v712, 1e-05
  %v777 = vadd.f32 %v713, 1e-05
  %v778 = vadd.f32 %v714, 1e-05
  %v779 = vadd.f32 %v715, 1e-05
  %v780 = vadd.f32 %v716, 1e-05
  %v781 = vadd.f32 %v717, 1e-05
  %v782 = vadd.f32 %v718, 1e-05
  %v783 = vadd.f32 %v719, 1e-05
  %v784 = vadd.f32 %v720, 1e-05
  %v785 = vadd.f32 %v721, 1e-05
  %v786 = vadd.f32 %v722, 1e-05
  %v787 = vadd.f32 %v723, 1e-05
  %v788 = vadd.f32 %v724, 1e-05
  %v789 = vadd.f32 %v725, 1e-05
  %v790 = vadd.f32 %v726, 1e-05
  %v791 = vadd.f32 %v727, 1e-05
  %v792 = vadd.f32 %v728, 1e-05
  %v793 = vadd.f32 %v729, 1e-05
  %v794 = vadd.f32 %v730, 1e-05
  %v795 = vadd.f32 %v731, 1e-05
  %v796 = vadd.f32 %v732, 1e-05
  %v797 = vadd.f32 %v733, 1e-05
  %v798 = vadd.f32 %v734, 1e-05
  %v799 = vadd.f32 %v735, 1e-05
  %v800 = vrsqrt.pop %v736
  %v801 = vrsqrt.pop %v737
  %v802 = vrsqrt.pop %v738
  %v803 = vrsqrt.pop %v739
  %v804 = vrsqrt.pop %v740
  %v805 = vrsqrt.pop %v741
  %v806 = vrsqrt.pop %v742
  %v807 = vrsqrt.pop %v743
  %v808 = vrsqrt.pop %v744
  %v809 = vrsqrt.pop %v745
  %v810 = vrsqrt.pop %v746
  %v811 = vrsqrt.pop %v747
  %v812 = vrsqrt.pop %v748
  %v813 = vrsqrt.pop %v749
  %v814 = vrsqrt.pop %v750
  %v815 = vrsqrt.pop %v751
  %v816 = vrsqrt.pop %v752
  %v817 = vrsqrt.pop %v753
  %v818 = vrsqrt.pop %v754
  %v819 = vrsqrt.pop %v755
  %v820 = vrsqrt.pop %v756
  %v821 = vrsqrt.pop %v757
  %v822 = vrsqrt.pop %v758
  %v823 = vrsqrt.pop %v759
  %v824 = vrsqrt.pop %v760
  %v825 = vrsqrt.pop %v761
  %v826 = vrsqrt.pop %v762
  %v827 = vrsqrt.pop %v763
  %v828 = vrsqrt.pop %v764
  %v829 = vrsqrt.pop %v765
  %v830 = vrsqrt.pop %v766
  %v831 = vrsqrt.pop %v767
  %v832 = vrsqrt.pop %v768
  %v833 = vrsqrt.pop %v769
  %v834 = vrsqrt.pop %v770
  %v835 = vrsqrt.pop %v771
  %v836 = vrsqrt.pop %v772
  %v837 = vrsqrt.pop %v773
  %v838 = vrsqrt.pop %v774
  %v839 = vrsqrt.pop %v775
  %v840 = vrsqrt.pop %v776
  %v841 = vrsqrt.pop %v777
  %v842 = vrsqrt.pop %v778
  %v843 = vrsqrt.pop %v779
  %v844 = vrsqrt.pop %v780
  %v845 = vrsqrt.pop %v781
  %v846 = vrsqrt.pop %v782
  %v847 = vrsqrt.pop %v783
  %v848 = vrsqrt.pop %v784
  %v849 = vrsqrt.pop %v785
  %v850 = vrsqrt.pop %v786
  %v851 = vrsqrt.pop %v787
  %v852 = vrsqrt.pop %v788
  %v853 = vrsqrt.pop %v789
  %v854 = vrsqrt.pop %v790
  %v855 = vrsqrt.pop %v791
  %v856 = vrsqrt.pop %v792
  %v857 = vrsqrt.pop %v793
  %v858 = vrsqrt.pop %v794
  %v859 = vrsqrt.pop %v795
  %v860 = vrsqrt.pop %v796
  %v861 = vrsqrt.pop %v797
  %v862 = vrsqrt.pop %v798
  %v863 = vrsqrt.pop %v799
  %v864 = vmul.f32 %v352, %v800
  %v865 = vmul.f32 %v353, %v801
  %v866 = vmul.f32 %v354, %v802
  %v867 = vmul.f32 %v355, %v803
  %v868 = vmul.f32 %v356, %v804
  %v869 = vmul.f32 %v357, %v805
  %v870 = vmul.f32 %v358, %v806
  %v871 = vmul.f32 %v359, %v807
  %v872 = vmul.f32 %v360, %v808
  %v873 = vmul.f32 %v361, %v809
  %v874 = vmul.f32 %v362, %v810
  %v875 = vmul.f32 %v363, %v811
  %v876 = vmul.f32 %v364, %v812
  %v877 = vmul.f32 %v365, %v813
  %v878 = vmul.f32 %v366, %v814
  %v879 = vmul.f32 %v367, %v815
  %v880 = vmul.f32 %v368, %v816
  %v881 = vmul.f32 %v369, %v817
  %v882 = vmul.f32 %v370, %v818
  %v883 = vmul.f32 %v371, %v819
  %v884 = vmul.f32 %v372, %v820
  %v885 = vmul.f32 %v373, %v821
  %v886 = vmul.f32 %v374, %v822
  %v887 = vmul.f32 %v375, %v823
  %v888 = vmul.f32 %v376, %v824
  %v889 = vmul.f32 %v377, %v825
  %v890 = vmul.f32 %v378, %v826
  %v891 = vmul.f32 %v379, %v827
  %v892 = vmul.f32 %v380, %v828
  %v893 = vmul.f32 %v381, %v829
  %v894 = vmul.f32 %v382, %v830
  %v895 = vmul.f32 %v383, %v831
  %v896 = vmul.f32 %v384, %v832
  %v897 = vmul.f32 %v385, %v833
  %v898 = vmul.f32 %v386, %v834
  %v899 = vmul.f32 %v387, %v835
  %v900 = vmul.f32 %v388, %v836
  %v901 = vmul.f32 %v389, %v837
  %v902 = vmul.f32 %v390, %v838
  %v903 = vmul.f32 %v391, %v839
  %v904 = vmul.f32 %v392, %v840
  %v905 = vmul.f32 %v393, %v841
  %v906 = vmul.f32 %v394, %v842
  %v907 = vmul.f32 %v395, %v843
  %v908 = vmul.f32 %v396, %v844
  %v909 = vmul.f32 %v397, %v845
  %v910 = vmul.f32 %v398, %v846
  %v911 = vmul.f32 %v399, %v847
  %v912 = vmul.f32 %v400, %v848
  %v913 = vmul.f32 %v401, %v849
  %v914 = vmul.f32 %v402, %v850
  %v915 = vmul.f32 %v403, %v851
  %v916 = vmul.f32 %v404, %v852
  %v917 = vmul.f32 %v405, %v853
  %v918 = vmul.f32 %v406, %v854
  %v919 = vmul.f32 %v407, %v855
  %v920 = vmul.f32 %v408, %v856
  %v921 = vmul.f32 %v409, %v857
  %v922 = vmul.f32 %v410, %v858
  %v923 = vmul.f32 %v411, %v859
  %v924 = vmul.f32 %v412, %v860
  %v925 = vmul.f32 %v413, %v861
  %v926 = vmul.f32 %v414, %v862
  %v927 = vmul.f32 %v415, %v863
  %v928 = vld [vmem:[%s1] sm:$0x1]
  %v930 = vlaneseq
  %v931 = vshrl.u32 %v930, 7
  %v932 = vsub.s32 0, %v931
  %v933 = vrot.slane %v928, %v932
  %v935 = vmul.f32 %v864, %v933
  %v936 = vmul.f32 %v865, %v933
  %v937 = vmul.f32 %v866, %v933
  %v938 = vmul.f32 %v867, %v933
  %v939 = vmul.f32 %v868, %v933
  %v940 = vmul.f32 %v869, %v933
  %v941 = vmul.f32 %v870, %v933
  %v942 = vmul.f32 %v871, %v933
  %v943 = vmul.f32 %v872, %v933
  %v944 = vmul.f32 %v873, %v933
  %v945 = vmul.f32 %v874, %v933
  %v946 = vmul.f32 %v875, %v933
  %v947 = vmul.f32 %v876, %v933
  %v948 = vmul.f32 %v877, %v933
  %v949 = vmul.f32 %v878, %v933
  %v950 = vmul.f32 %v879, %v933
  %v951 = vmul.f32 %v880, %v933
  %v952 = vmul.f32 %v881, %v933
  %v953 = vmul.f32 %v882, %v933
  %v954 = vmul.f32 %v883, %v933
  %v955 = vmul.f32 %v884, %v933
  %v956 = vmul.f32 %v885, %v933
  %v957 = vmul.f32 %v886, %v933
  %v958 = vmul.f32 %v887, %v933
  %v959 = vmul.f32 %v888, %v933
  %v960 = vmul.f32 %v889, %v933
  %v961 = vmul.f32 %v890, %v933
  %v962 = vmul.f32 %v891, %v933
  %v963 = vmul.f32 %v892, %v933
  %v964 = vmul.f32 %v893, %v933
  %v965 = vmul.f32 %v894, %v933
  %v966 = vmul.f32 %v895, %v933
  %v967 = vmul.f32 %v896, %v933
  %v968 = vmul.f32 %v897, %v933
  %v969 = vmul.f32 %v898, %v933
  %v970 = vmul.f32 %v899, %v933
  %v971 = vmul.f32 %v900, %v933
  %v972 = vmul.f32 %v901, %v933
  %v973 = vmul.f32 %v902, %v933
  %v974 = vmul.f32 %v903, %v933
  %v975 = vmul.f32 %v904, %v933
  %v976 = vmul.f32 %v905, %v933
  %v977 = vmul.f32 %v906, %v933
  %v978 = vmul.f32 %v907, %v933
  %v979 = vmul.f32 %v908, %v933
  %v980 = vmul.f32 %v909, %v933
  %v981 = vmul.f32 %v910, %v933
  %v982 = vmul.f32 %v911, %v933
  %v983 = vmul.f32 %v912, %v933
  %v984 = vmul.f32 %v913, %v933
  %v985 = vmul.f32 %v914, %v933
  %v986 = vmul.f32 %v915, %v933
  %v987 = vmul.f32 %v916, %v933
  %v988 = vmul.f32 %v917, %v933
  %v989 = vmul.f32 %v918, %v933
  %v990 = vmul.f32 %v919, %v933
  %v991 = vmul.f32 %v920, %v933
  %v992 = vmul.f32 %v921, %v933
  %v993 = vmul.f32 %v922, %v933
  %v994 = vmul.f32 %v923, %v933
  %v995 = vmul.f32 %v924, %v933
  %v996 = vmul.f32 %v925, %v933
  %v997 = vmul.f32 %v926, %v933
  %v998 = vmul.f32 %v927, %v933
  %v999 = vld [vmem:[%s2] sm:$0x1]
  %v1001 = vlaneseq
  %v1002 = vshrl.u32 %v1001, 7
  %v1003 = vsub.s32 0, %v1002
  %v1004 = vrot.slane %v999, %v1003
  %v1006 = vadd.f32 %v935, %v1004
  %v1007 = vadd.f32 %v936, %v1004
  %v1008 = vadd.f32 %v937, %v1004
  %v1009 = vadd.f32 %v938, %v1004
  %v1010 = vadd.f32 %v939, %v1004
  %v1011 = vadd.f32 %v940, %v1004
  %v1012 = vadd.f32 %v941, %v1004
  %v1013 = vadd.f32 %v942, %v1004
  %v1014 = vadd.f32 %v943, %v1004
  %v1015 = vadd.f32 %v944, %v1004
  %v1016 = vadd.f32 %v945, %v1004
  %v1017 = vadd.f32 %v946, %v1004
  %v1018 = vadd.f32 %v947, %v1004
  %v1019 = vadd.f32 %v948, %v1004
  %v1020 = vadd.f32 %v949, %v1004
  %v1021 = vadd.f32 %v950, %v1004
  %v1022 = vadd.f32 %v951, %v1004
  %v1023 = vadd.f32 %v952, %v1004
  %v1024 = vadd.f32 %v953, %v1004
  %v1025 = vadd.f32 %v954, %v1004
  %v1026 = vadd.f32 %v955, %v1004
  %v1027 = vadd.f32 %v956, %v1004
  %v1028 = vadd.f32 %v957, %v1004
  %v1029 = vadd.f32 %v958, %v1004
  %v1030 = vadd.f32 %v959, %v1004
  %v1031 = vadd.f32 %v960, %v1004
  %v1032 = vadd.f32 %v961, %v1004
  %v1033 = vadd.f32 %v962, %v1004
  %v1034 = vadd.f32 %v963, %v1004
  %v1035 = vadd.f32 %v964, %v1004
  %v1036 = vadd.f32 %v965, %v1004
  %v1037 = vadd.f32 %v966, %v1004
  %v1038 = vadd.f32 %v967, %v1004
  %v1039 = vadd.f32 %v968, %v1004
  %v1040 = vadd.f32 %v969, %v1004
  %v1041 = vadd.f32 %v970, %v1004
  %v1042 = vadd.f32 %v971, %v1004
  %v1043 = vadd.f32 %v972, %v1004
  %v1044 = vadd.f32 %v973, %v1004
  %v1045 = vadd.f32 %v974, %v1004
  %v1046 = vadd.f32 %v975, %v1004
  %v1047 = vadd.f32 %v976, %v1004
  %v1048 = vadd.f32 %v977, %v1004
  %v1049 = vadd.f32 %v978, %v1004
  %v1050 = vadd.f32 %v979, %v1004
  %v1051 = vadd.f32 %v980, %v1004
  %v1052 = vadd.f32 %v981, %v1004
  %v1053 = vadd.f32 %v982, %v1004
  %v1054 = vadd.f32 %v983, %v1004
  %v1055 = vadd.f32 %v984, %v1004
  %v1056 = vadd.f32 %v985, %v1004
  %v1057 = vadd.f32 %v986, %v1004
  %v1058 = vadd.f32 %v987, %v1004
  %v1059 = vadd.f32 %v988, %v1004
  %v1060 = vadd.f32 %v989, %v1004
  %v1061 = vadd.f32 %v990, %v1004
  %v1062 = vadd.f32 %v991, %v1004
  %v1063 = vadd.f32 %v992, %v1004
  %v1064 = vadd.f32 %v993, %v1004
  %v1065 = vadd.f32 %v994, %v1004
  %v1066 = vadd.f32 %v995, %v1004
  %v1067 = vadd.f32 %v996, %v1004
  %v1068 = vadd.f32 %v997, %v1004
  %v1069 = vadd.f32 %v998, %v1004
  %v1070 = vpack.c.bf16 %v1007, %v1006
  %v1071 = vpack.c.bf16 %v1009, %v1008
  %v1072 = vpack.c.bf16 %v1011, %v1010
  %v1073 = vpack.c.bf16 %v1013, %v1012
  %v1074 = vpack.c.bf16 %v1015, %v1014
  %v1075 = vpack.c.bf16 %v1017, %v1016
  %v1076 = vpack.c.bf16 %v1019, %v1018
  %v1077 = vpack.c.bf16 %v1021, %v1020
  %v1078 = vpack.c.bf16 %v1023, %v1022
  %v1079 = vpack.c.bf16 %v1025, %v1024
  %v1080 = vpack.c.bf16 %v1027, %v1026
  %v1081 = vpack.c.bf16 %v1029, %v1028
  %v1082 = vpack.c.bf16 %v1031, %v1030
  %v1083 = vpack.c.bf16 %v1033, %v1032
  %v1084 = vpack.c.bf16 %v1035, %v1034
  %v1085 = vpack.c.bf16 %v1037, %v1036
  %v1086 = vpack.c.bf16 %v1039, %v1038
  %v1087 = vpack.c.bf16 %v1041, %v1040
  %v1088 = vpack.c.bf16 %v1043, %v1042
  %v1089 = vpack.c.bf16 %v1045, %v1044
  %v1090 = vpack.c.bf16 %v1047, %v1046
  %v1091 = vpack.c.bf16 %v1049, %v1048
  %v1092 = vpack.c.bf16 %v1051, %v1050
  %v1093 = vpack.c.bf16 %v1053, %v1052
  %v1094 = vpack.c.bf16 %v1055, %v1054
  %v1095 = vpack.c.bf16 %v1057, %v1056
  %v1096 = vpack.c.bf16 %v1059, %v1058
  %v1097 = vpack.c.bf16 %v1061, %v1060
  %v1098 = vpack.c.bf16 %v1063, %v1062
  %v1099 = vpack.c.bf16 %v1065, %v1064
  %v1100 = vpack.c.bf16 %v1067, %v1066
  %v1101 = vpack.c.bf16 %v1069, %v1068
  %v1102 = vld [vmem:[%s3] sm:$0xff]
  %v1103 = vld [vmem:[%s3 + $0x8] sm:$0xff]
  %v1104 = vld [vmem:[%s3 + $0x10] sm:$0xff]
  %v1105 = vld [vmem:[%s3 + $0x18] sm:$0xff]
  %v1106 = vpack.c.bf16 %v1103, %v1102
  %v1107 = vpack.c.bf16 %v1105, %v1104
  %v1108 = vld [vmem:[%s4] sm:$0x1]
  %v1110 = vlaneseq
  %v1111 = vshrl.u32 %v1110, 7
  %v1112 = vsub.s32 0, %v1111
  %v1113 = vrot.slane %v1108, %v1112
  %v1116 = vsel %vm94, %v1070, 0
  %v1119 = vsel %vm94, %v1071, 0
  %v1122 = vsel %vm94, %v1072, 0
  %v1125 = vsel %vm94, %v1073, 0
  %v1128 = vsel %vm94, %v1074, 0
  %v1131 = vsel %vm94, %v1075, 0
  %v1134 = vsel %vm94, %v1076, 0
  %v1137 = vsel %vm94, %v1077, 0
  %v1140 = vsel %vm94, %v1078, 0
  %v1143 = vsel %vm94, %v1079, 0
  %v1146 = vsel %vm94, %v1080, 0
  %v1149 = vsel %vm94, %v1081, 0
  %v1152 = vsel %vm94, %v1082, 0
  %v1155 = vsel %vm94, %v1083, 0
  %v1158 = vsel %vm94, %v1084, 0
  %v1161 = vsel %vm94, %v1085, 0
  %v1164 = vsel %vm94, %v1086, 0
  %v1167 = vsel %vm94, %v1087, 0
  %v1170 = vsel %vm94, %v1088, 0
  %v1173 = vsel %vm94, %v1089, 0
  %v1176 = vsel %vm94, %v1090, 0
  %v1179 = vsel %vm94, %v1091, 0
  %v1182 = vsel %vm94, %v1092, 0
  %v1185 = vsel %vm94, %v1093, 0
  %v1188 = vsel %vm94, %v1094, 0
  %v1191 = vsel %vm94, %v1095, 0
  %v1194 = vsel %vm94, %v1096, 0
  %v1197 = vsel %vm94, %v1097, 0
  %v1200 = vsel %vm94, %v1098, 0
  %v1203 = vsel %vm94, %v1099, 0
  %v1206 = vsel %vm94, %v1100, 0
  %v1209 = vsel %vm94, %v1101, 0
  %1211 = vmatprep.subr.bf16.mxu0 0
  %1212 = vmatpush1.bf16.msra.mxu0 0
  %1213 = vmatprep.subr.bf16.mxu0 0
  %1214 = vmatpush1.bf16.msra.mxu0 0
  %1215 = vmatprep.subr.bf16.mxu0 0
  %1216 = vmatpush1.bf16.msra.mxu0 0
  %1217 = vmatprep.subr.bf16.mxu0 0
  %1218 = vmatpush1.bf16.msra.mxu0 0
  %1219 = vmatprep.subr.bf16.mxu0 0
  %1220 = vmatpush1.bf16.msra.mxu0 0
  %1221 = vmatprep.subr.bf16.mxu0 0
  %1222 = vmatpush1.bf16.msra.mxu0 0
  %1223 = vmatprep.subr.bf16.mxu0 0
  %1224 = vmatpush1.bf16.msra.mxu0 %v1107
  %1225 = vmatprep.subr.bf16.mxu0 0
  %1226 = vmatpush1.bf16.msra.mxu0 %v1106
  %1227 = vmatprep.subr.bf16.mxu0 0
  %1228 = vmatpush2.bf16.msra.mxu0 0
  %1229 = vmatprep.subr.bf16.mxu0 0
  %1230 = vmatpush2.bf16.msra.mxu0 0
  %1231 = vmatprep.subr.bf16.mxu0 0
  %1232 = vmatpush2.bf16.msra.mxu0 0
  %1233 = vmatprep.subr.bf16.mxu0 0
  %1234 = vmatpush2.bf16.msra.mxu0 0
  %1235 = vmatprep.subr.bf16.mxu0 0
  %1236 = vmatpush2.bf16.msra.mxu0 0
  %1237 = vmatprep.subr.bf16.mxu0 0
  %1238 = vmatpush2.bf16.msra.mxu0 0
  %1239 = vmatprep.subr.bf16.mxu0 0
  %1240 = vmatpush2.bf16.msra.mxu0 0
  %1241 = vmatprep.subr.bf16.mxu0 0
  %1242 = vmatpush2.bf16.msra.mxu0 0
  %1243 = vmatprep.mubr.bf16.mxu0 0
  %1244 = vmatmul.mubr.bf16.gmra.mxu0 %v1116
  %v1245 = vpop.f32.mrf.mxu0
  %v1246 = vadd.f32 %v1113, %v1245
  %v1247 = vpop.f32.mrf.mxu0
  %v1248 = vpop.f32.mrf.mxu0
  %v1249 = vadd.f32 %v1113, %v1248
  %v1250 = vpop.f32.mrf.mxu0
  %1251 = vmatprep.mubr.bf16.mxu0 0
  %1252 = vmatmul.mubr.bf16.gmra.mxu0 %v1119
  %v1253 = vpop.f32.mrf.mxu0
  %v1254 = vadd.f32 %v1113, %v1253
  %v1255 = vpop.f32.mrf.mxu0
  %v1256 = vpop.f32.mrf.mxu0
  %v1257 = vadd.f32 %v1113, %v1256
  %v1258 = vpop.f32.mrf.mxu0
  %1259 = vmatprep.mubr.bf16.mxu0 0
  %1260 = vmatmul.mubr.bf16.gmra.mxu0 %v1122
  %v1261 = vpop.f32.mrf.mxu0
  %v1262 = vadd.f32 %v1113, %v1261
  %v1263 = vpop.f32.mrf.mxu0
  %v1264 = vpop.f32.mrf.mxu0
  %v1265 = vadd.f32 %v1113, %v1264
  %v1266 = vpop.f32.mrf.mxu0
  %1267 = vmatprep.mubr.bf16.mxu0 0
  %1268 = vmatmul.mubr.bf16.gmra.mxu0 %v1125
  %v1269 = vpop.f32.mrf.mxu0
  %v1270 = vadd.f32 %v1113, %v1269
  %v1271 = vpop.f32.mrf.mxu0
  %v1272 = vpop.f32.mrf.mxu0
  %v1273 = vadd.f32 %v1113, %v1272
  %v1274 = vpop.f32.mrf.mxu0
  %1275 = vmatprep.mubr.bf16.mxu0 0
  %1276 = vmatmul.mubr.bf16.gmra.mxu0 %v1128
  %v1277 = vpop.f32.mrf.mxu0
  %v1278 = vadd.f32 %v1113, %v1277
  %v1279 = vpop.f32.mrf.mxu0
  %v1280 = vpop.f32.mrf.mxu0
  %v1281 = vadd.f32 %v1113, %v1280
  %v1282 = vpop.f32.mrf.mxu0
  %1283 = vmatprep.mubr.bf16.mxu0 0
  %1284 = vmatmul.mubr.bf16.gmra.mxu0 %v1131
  %v1285 = vpop.f32.mrf.mxu0
  %v1286 = vadd.f32 %v1113, %v1285
  %v1287 = vpop.f32.mrf.mxu0
  %v1288 = vpop.f32.mrf.mxu0
  %v1289 = vadd.f32 %v1113, %v1288
  %v1290 = vpop.f32.mrf.mxu0
  %1291 = vmatprep.mubr.bf16.mxu0 0
  %1292 = vmatmul.mubr.bf16.gmra.mxu0 %v1134
  %v1293 = vpop.f32.mrf.mxu0
  %v1294 = vadd.f32 %v1113, %v1293
  %v1295 = vpop.f32.mrf.mxu0
  %v1296 = vpop.f32.mrf.mxu0
  %v1297 = vadd.f32 %v1113, %v1296
  %v1298 = vpop.f32.mrf.mxu0
  %1299 = vmatprep.mubr.bf16.mxu0 0
  %1300 = vmatmul.mubr.bf16.gmra.mxu0 %v1137
  %v1301 = vpop.f32.mrf.mxu0
  %v1302 = vadd.f32 %v1113, %v1301
  %v1303 = vpop.f32.mrf.mxu0
  %v1304 = vpop.f32.mrf.mxu0
  %v1305 = vadd.f32 %v1113, %v1304
  %v1306 = vpop.f32.mrf.mxu0
  %1307 = vmatprep.mubr.bf16.mxu0 0
  %1308 = vmatmul.mubr.bf16.gmra.mxu0 %v1140
  %v1309 = vpop.f32.mrf.mxu0
  %v1310 = vadd.f32 %v1113, %v1309
  %v1311 = vpop.f32.mrf.mxu0
  %v1312 = vpop.f32.mrf.mxu0
  %v1313 = vadd.f32 %v1113, %v1312
  %v1314 = vpop.f32.mrf.mxu0
  %1315 = vmatprep.mubr.bf16.mxu0 0
  %1316 = vmatmul.mubr.bf16.gmra.mxu0 %v1143
  %v1317 = vpop.f32.mrf.mxu0
  %v1318 = vadd.f32 %v1113, %v1317
  %v1319 = vpop.f32.mrf.mxu0
  %v1320 = vpop.f32.mrf.mxu0
  %v1321 = vadd.f32 %v1113, %v1320
  %v1322 = vpop.f32.mrf.mxu0
  %1323 = vmatprep.mubr.bf16.mxu0 0
  %1324 = vmatmul.mubr.bf16.gmra.mxu0 %v1146
  %v1325 = vpop.f32.mrf.mxu0
  %v1326 = vadd.f32 %v1113, %v1325
  %v1327 = vpop.f32.mrf.mxu0
  %v1328 = vpop.f32.mrf.mxu0
  %v1329 = vadd.f32 %v1113, %v1328
  %v1330 = vpop.f32.mrf.mxu0
  %1331 = vmatprep.mubr.bf16.mxu0 0
  %1332 = vmatmul.mubr.bf16.gmra.mxu0 %v1149
  %v1333 = vpop.f32.mrf.mxu0
  %v1334 = vadd.f32 %v1113, %v1333
  %v1335 = vpop.f32.mrf.mxu0
  %v1336 = vpop.f32.mrf.mxu0
  %v1337 = vadd.f32 %v1113, %v1336
  %v1338 = vpop.f32.mrf.mxu0
  %1339 = vmatprep.mubr.bf16.mxu0 0
  %1340 = vmatmul.mubr.bf16.gmra.mxu0 %v1152
  %v1341 = vpop.f32.mrf.mxu0
  %v1342 = vadd.f32 %v1113, %v1341
  %v1343 = vpop.f32.mrf.mxu0
  %v1344 = vpop.f32.mrf.mxu0
  %v1345 = vadd.f32 %v1113, %v1344
  %v1346 = vpop.f32.mrf.mxu0
  %1347 = vmatprep.mubr.bf16.mxu0 0
  %1348 = vmatmul.mubr.bf16.gmra.mxu0 %v1155
  %v1349 = vpop.f32.mrf.mxu0
  %v1350 = vadd.f32 %v1113, %v1349
  %v1351 = vpop.f32.mrf.mxu0
  %v1352 = vpop.f32.mrf.mxu0
  %v1353 = vadd.f32 %v1113, %v1352
  %v1354 = vpop.f32.mrf.mxu0
  %1355 = vmatprep.mubr.bf16.mxu0 0
  %1356 = vmatmul.mubr.bf16.gmra.mxu0 %v1158
  %v1357 = vpop.f32.mrf.mxu0
  %v1358 = vadd.f32 %v1113, %v1357
  %v1359 = vpop.f32.mrf.mxu0
  %v1360 = vpop.f32.mrf.mxu0
  %v1361 = vadd.f32 %v1113, %v1360
  %v1362 = vpop.f32.mrf.mxu0
  %1363 = vmatprep.mubr.bf16.mxu0 0
  %1364 = vmatmul.mubr.bf16.gmra.mxu0 %v1161
  %v1365 = vpop.f32.mrf.mxu0
  %v1366 = vadd.f32 %v1113, %v1365
  %v1367 = vpop.f32.mrf.mxu0
  %v1368 = vpop.f32.mrf.mxu0
  %v1369 = vadd.f32 %v1113, %v1368
  %v1370 = vpop.f32.mrf.mxu0
  %1371 = vmatprep.mubr.bf16.mxu0 0
  %1372 = vmatmul.mubr.bf16.gmra.mxu0 %v1164
  %v1373 = vpop.f32.mrf.mxu0
  %v1374 = vadd.f32 %v1113, %v1373
  %v1375 = vpop.f32.mrf.mxu0
  %v1376 = vpop.f32.mrf.mxu0
  %v1377 = vadd.f32 %v1113, %v1376
  %v1378 = vpop.f32.mrf.mxu0
  %1379 = vmatprep.mubr.bf16.mxu0 0
  %1380 = vmatmul.mubr.bf16.gmra.mxu0 %v1167
  %v1381 = vpop.f32.mrf.mxu0
  %v1382 = vadd.f32 %v1113, %v1381
  %v1383 = vpop.f32.mrf.mxu0
  %v1384 = vpop.f32.mrf.mxu0
  %v1385 = vadd.f32 %v1113, %v1384
  %v1386 = vpop.f32.mrf.mxu0
  %1387 = vmatprep.mubr.bf16.mxu0 0
  %1388 = vmatmul.mubr.bf16.gmra.mxu0 %v1170
  %v1389 = vpop.f32.mrf.mxu0
  %v1390 = vadd.f32 %v1113, %v1389
  %v1391 = vpop.f32.mrf.mxu0
  %v1392 = vpop.f32.mrf.mxu0
  %v1393 = vadd.f32 %v1113, %v1392
  %v1394 = vpop.f32.mrf.mxu0
  %1395 = vmatprep.mubr.bf16.mxu0 0
  %1396 = vmatmul.mubr.bf16.gmra.mxu0 %v1173
  %v1397 = vpop.f32.mrf.mxu0
  %v1398 = vadd.f32 %v1113, %v1397
  %v1399 = vpop.f32.mrf.mxu0
  %v1400 = vpop.f32.mrf.mxu0
  %v1401 = vadd.f32 %v1113, %v1400
  %v1402 = vpop.f32.mrf.mxu0
  %1403 = vmatprep.mubr.bf16.mxu0 0
  %1404 = vmatmul.mubr.bf16.gmra.mxu0 %v1176
  %v1405 = vpop.f32.mrf.mxu0
  %v1406 = vadd.f32 %v1113, %v1405
  %v1407 = vpop.f32.mrf.mxu0
  %v1408 = vpop.f32.mrf.mxu0
  %v1409 = vadd.f32 %v1113, %v1408
  %v1410 = vpop.f32.mrf.mxu0
  %1411 = vmatprep.mubr.bf16.mxu0 0
  %1412 = vmatmul.mubr.bf16.gmra.mxu0 %v1179
  %v1413 = vpop.f32.mrf.mxu0
  %v1414 = vadd.f32 %v1113, %v1413
  %v1415 = vpop.f32.mrf.mxu0
  %v1416 = vpop.f32.mrf.mxu0
  %v1417 = vadd.f32 %v1113, %v1416
  %v1418 = vpop.f32.mrf.mxu0
  %1419 = vmatprep.mubr.bf16.mxu0 0
  %1420 = vmatmul.mubr.bf16.gmra.mxu0 %v1182
  %v1421 = vpop.f32.mrf.mxu0
  %v1422 = vadd.f32 %v1113, %v1421
  %v1423 = vpop.f32.mrf.mxu0
  %v1424 = vpop.f32.mrf.mxu0
  %v1425 = vadd.f32 %v1113, %v1424
  %v1426 = vpop.f32.mrf.mxu0
  %1427 = vmatprep.mubr.bf16.mxu0 0
  %1428 = vmatmul.mubr.bf16.gmra.mxu0 %v1185
  %v1429 = vpop.f32.mrf.mxu0
  %v1430 = vadd.f32 %v1113, %v1429
  %v1431 = vpop.f32.mrf.mxu0
  %v1432 = vpop.f32.mrf.mxu0
  %v1433 = vadd.f32 %v1113, %v1432
  %v1434 = vpop.f32.mrf.mxu0
  %1435 = vmatprep.mubr.bf16.mxu0 0
  %1436 = vmatmul.mubr.bf16.gmra.mxu0 %v1188
  %v1437 = vpop.f32.mrf.mxu0
  %v1438 = vadd.f32 %v1113, %v1437
  %v1439 = vpop.f32.mrf.mxu0
  %v1440 = vpop.f32.mrf.mxu0
  %v1441 = vadd.f32 %v1113, %v1440
  %v1442 = vpop.f32.mrf.mxu0
  %1443 = vmatprep.mubr.bf16.mxu0 0
  %1444 = vmatmul.mubr.bf16.gmra.mxu0 %v1191
  %v1445 = vpop.f32.mrf.mxu0
  %v1446 = vadd.f32 %v1113, %v1445
  %v1447 = vpop.f32.mrf.mxu0
  %v1448 = vpop.f32.mrf.mxu0
  %v1449 = vadd.f32 %v1113, %v1448
  %v1450 = vpop.f32.mrf.mxu0
  %1451 = vmatprep.mubr.bf16.mxu0 0
  %1452 = vmatmul.mubr.bf16.gmra.mxu0 %v1194
  %v1453 = vpop.f32.mrf.mxu0
  %v1454 = vadd.f32 %v1113, %v1453
  %v1455 = vpop.f32.mrf.mxu0
  %v1456 = vpop.f32.mrf.mxu0
  %v1457 = vadd.f32 %v1113, %v1456
  %v1458 = vpop.f32.mrf.mxu0
  %1459 = vmatprep.mubr.bf16.mxu0 0
  %1460 = vmatmul.mubr.bf16.gmra.mxu0 %v1197
  %v1461 = vpop.f32.mrf.mxu0
  %v1462 = vadd.f32 %v1113, %v1461
  %v1463 = vpop.f32.mrf.mxu0
  %v1464 = vpop.f32.mrf.mxu0
  %v1465 = vadd.f32 %v1113, %v1464
  %v1466 = vpop.f32.mrf.mxu0
  %1467 = vmatprep.mubr.bf16.mxu0 0
  %1468 = vmatmul.mubr.bf16.gmra.mxu0 %v1200
  %v1469 = vpop.f32.mrf.mxu0
  %v1470 = vadd.f32 %v1113, %v1469
  %v1471 = vpop.f32.mrf.mxu0
  %v1472 = vpop.f32.mrf.mxu0
  %v1473 = vadd.f32 %v1113, %v1472
  %v1474 = vpop.f32.mrf.mxu0
  %1475 = vmatprep.mubr.bf16.mxu0 0
  %1476 = vmatmul.mubr.bf16.gmra.mxu0 %v1203
  %v1477 = vpop.f32.mrf.mxu0
  %v1478 = vadd.f32 %v1113, %v1477
  %v1479 = vpop.f32.mrf.mxu0
  %v1480 = vpop.f32.mrf.mxu0
  %v1481 = vadd.f32 %v1113, %v1480
  %v1482 = vpop.f32.mrf.mxu0
  %1483 = vmatprep.mubr.bf16.mxu0 0
  %1484 = vmatmul.mubr.bf16.gmra.mxu0 %v1206
  %v1485 = vpop.f32.mrf.mxu0
  %v1486 = vadd.f32 %v1113, %v1485
  %v1487 = vpop.f32.mrf.mxu0
  %v1488 = vpop.f32.mrf.mxu0
  %v1489 = vadd.f32 %v1113, %v1488
  %v1490 = vpop.f32.mrf.mxu0
  %1491 = vmatprep.mubr.bf16.mxu0 0
  %1492 = vmatmul.mubr.bf16.gmra.mxu0 %v1209
  %v1493 = vpop.f32.mrf.mxu0
  %v1494 = vadd.f32 %v1113, %v1493
  %v1495 = vpop.f32.mrf.mxu0
  %v1496 = vpop.f32.mrf.mxu0
  %v1497 = vadd.f32 %v1113, %v1496
  %v1498 = vpop.f32.mrf.mxu0
  %1499 = vdwg.mxu0
  %v1500 = vpack.c.bf16 %v1249, %v1246
  %v1501 = vpack.c.bf16 %v1257, %v1254
  %v1502 = vpack.c.bf16 %v1265, %v1262
  %v1503 = vpack.c.bf16 %v1273, %v1270
  %v1504 = vpack.c.bf16 %v1281, %v1278
  %v1505 = vpack.c.bf16 %v1289, %v1286
  %v1506 = vpack.c.bf16 %v1297, %v1294
  %v1507 = vpack.c.bf16 %v1305, %v1302
  %v1508 = vpack.c.bf16 %v1313, %v1310
  %v1509 = vpack.c.bf16 %v1321, %v1318
  %v1510 = vpack.c.bf16 %v1329, %v1326
  %v1511 = vpack.c.bf16 %v1337, %v1334
  %v1512 = vpack.c.bf16 %v1345, %v1342
  %v1513 = vpack.c.bf16 %v1353, %v1350
  %v1514 = vpack.c.bf16 %v1361, %v1358
  %v1515 = vpack.c.bf16 %v1369, %v1366
  %v1516 = vpack.c.bf16 %v1377, %v1374
  %v1517 = vpack.c.bf16 %v1385, %v1382
  %v1518 = vpack.c.bf16 %v1393, %v1390
  %v1519 = vpack.c.bf16 %v1401, %v1398
  %v1520 = vpack.c.bf16 %v1409, %v1406
  %v1521 = vpack.c.bf16 %v1417, %v1414
  %v1522 = vpack.c.bf16 %v1425, %v1422
  %v1523 = vpack.c.bf16 %v1433, %v1430
  %v1524 = vpack.c.bf16 %v1441, %v1438
  %v1525 = vpack.c.bf16 %v1449, %v1446
  %v1526 = vpack.c.bf16 %v1457, %v1454
  %v1527 = vpack.c.bf16 %v1465, %v1462
  %v1528 = vpack.c.bf16 %v1473, %v1470
  %v1529 = vpack.c.bf16 %v1481, %v1478
  %v1530 = vpack.c.bf16 %v1489, %v1486
  %v1531 = vpack.c.bf16 %v1497, %v1494
  %v1532 = vld [vmem:[%s5] sm:$0xff]
  %v1533 = vld [vmem:[%s5 + $0x8] sm:$0xff]
  %v1534 = vld [vmem:[%s5 + $0x10] sm:$0xff]
  %v1535 = vld [vmem:[%s5 + $0x18] sm:$0xff]
  %v1536 = vld [vmem:[%s5 + $0x20] sm:$0xff]
  %v1537 = vld [vmem:[%s5 + $0x28] sm:$0xff]
  %v1538 = vld [vmem:[%s5 + $0x30] sm:$0xff]
  %v1539 = vld [vmem:[%s5 + $0x38] sm:$0xff]
  %1544 = vrot.lane.b32.xlu0 %v1500, 96
  %v1545 = vpop.permute.xlu0 %1544
  %1546 = vrot.lane.b32.xlu0 %v1501, 96
  %v1547 = vpop.permute.xlu0 %1546
  %1548 = vrot.lane.b32.xlu0 %v1502, 96
  %v1549 = vpop.permute.xlu0 %1548
  %1550 = vrot.lane.b32.xlu0 %v1503, 96
  %v1551 = vpop.permute.xlu0 %1550
  %vm1552 = vcmask 130048
  %v1554 = vsel %vm1552, %v1500, 0
  %v1557 = vsel %vm1552, %v1501, 0
  %v1560 = vsel %vm1552, %v1502, 0
  %v1563 = vsel %vm1552, %v1503, 0
  %v1566 = vsel %vm1552, %v1545, 0
  %v1569 = vsel %vm1552, %v1547, 0
  %v1572 = vsel %vm1552, %v1549, 0
  %v1575 = vsel %vm1552, %v1551, 0
  %1577 = vmatprep.subr.bf16.mxu0 0
  %1578 = vmatpush1.bf16.xpose.msra.mxu0 0
  %1579 = vmatprep.subr.bf16.mxu0 0
  %1580 = vmatpush1.bf16.xpose.msra.mxu0 0
  %1581 = vmatprep.subr.bf16.mxu0 0
  %1582 = vmatpush1.bf16.xpose.msra.mxu0 0
  %1583 = vmatprep.subr.bf16.mxu0 0
  %1584 = vmatpush1.bf16.xpose.msra.mxu0 0
  %1585 = vmatprep.subr.bf16.mxu0 0
  %1586 = vmatpush1.bf16.xpose.msra.mxu0 %v1575
  %1587 = vmatprep.subr.bf16.mxu0 0
  %1588 = vmatpush1.bf16.xpose.msra.mxu0 %v1572
  %1589 = vmatprep.subr.bf16.mxu0 0
  %1590 = vmatpush1.bf16.xpose.msra.mxu0 %v1569
  %1591 = vmatprep.subr.bf16.mxu0 0
  %1592 = vmatpush1.bf16.xpose.msra.mxu0 %v1566
  %1593 = vmatprep.subr.bf16.mxu0 0
  %1594 = vmatpush2.bf16.xpose.msra.mxu0 0
  %1595 = vmatprep.subr.bf16.mxu0 0
  %1596 = vmatpush2.bf16.xpose.msra.mxu0 0
  %1597 = vmatprep.subr.bf16.mxu0 0
  %1598 = vmatpush2.bf16.xpose.msra.mxu0 0
  %1599 = vmatprep.subr.bf16.mxu0 0
  %1600 = vmatpush2.bf16.xpose.msra.mxu0 0
  %1601 = vmatprep.subr.bf16.mxu0 0
  %1602 = vmatpush2.bf16.xpose.msra.mxu0 0
  %1603 = vmatprep.subr.bf16.mxu0 0
  %1604 = vmatpush2.bf16.xpose.msra.mxu0 0
  %1605 = vmatprep.subr.bf16.mxu0 0
  %1606 = vmatpush2.bf16.xpose.msra.mxu0 0
  %1607 = vmatprep.subr.bf16.mxu0 0
  %1608 = vmatpush2.bf16.xpose.msra.mxu0 0
  %1609 = vmatprep.mubr.bf16.mxu0 0
  %1610 = vmatmul.mubr.bf16.gmra.mxu0 %v1554
  %v1611 = vpop.f32.mrf.mxu0
  %v1612 = vadd.f32 %v1532, %v1611
  %v1613 = vpop.f32.mrf.mxu0
  %v1614 = vpop.f32.mrf.mxu0
  %v1615 = vadd.f32 %v1533, %v1614
  %v1616 = vpop.f32.mrf.mxu0
  %1617 = vmatprep.mubr.bf16.mxu0 0
  %1618 = vmatmul.mubr.bf16.gmra.mxu0 %v1557
  %v1619 = vpop.f32.mrf.mxu0
  %v1620 = vadd.f32 %v1534, %v1619
  %v1621 = vpop.f32.mrf.mxu0
  %v1622 = vpop.f32.mrf.mxu0
  %v1623 = vadd.f32 %v1535, %v1622
  %v1624 = vpop.f32.mrf.mxu0
  %1625 = vmatprep.mubr.bf16.mxu0 0
  %1626 = vmatmul.mubr.bf16.gmra.mxu0 %v1560
  %v1627 = vpop.f32.mrf.mxu0
  %v1628 = vadd.f32 %v1536, %v1627
  %v1629 = vpop.f32.mrf.mxu0
  %v1630 = vpop.f32.mrf.mxu0
  %v1631 = vadd.f32 %v1537, %v1630
  %v1632 = vpop.f32.mrf.mxu0
  %1633 = vmatprep.mubr.bf16.mxu0 0
  %1634 = vmatmul.mubr.bf16.gmra.mxu0 %v1563
  %v1635 = vpop.f32.mrf.mxu0
  %v1636 = vadd.f32 %v1538, %v1635
  %v1637 = vpop.f32.mrf.mxu0
  %v1638 = vpop.f32.mrf.mxu0
  %v1639 = vadd.f32 %v1539, %v1638
  %v1640 = vpop.f32.mrf.mxu0
  %1641 = vdwg.mxu0
  %1646 = vrot.lane.b32.xlu0 %v1504, 96
  %v1647 = vpop.permute.xlu0 %1646
  %1648 = vrot.lane.b32.xlu0 %v1505, 96
  %v1649 = vpop.permute.xlu0 %1648
  %1650 = vrot.lane.b32.xlu0 %v1506, 96
  %v1651 = vpop.permute.xlu0 %1650
  %1652 = vrot.lane.b32.xlu0 %v1507, 96
  %v1653 = vpop.permute.xlu0 %1652
  %v1655 = vsel %vm1552, %v1504, 0
  %v1658 = vsel %vm1552, %v1505, 0
  %v1661 = vsel %vm1552, %v1506, 0
  %v1664 = vsel %vm1552, %v1507, 0
  %v1667 = vsel %vm1552, %v1647, 0
  %v1670 = vsel %vm1552, %v1649, 0
  %v1673 = vsel %vm1552, %v1651, 0
  %v1676 = vsel %vm1552, %v1653, 0
  %1678 = vmatprep.subr.bf16.mxu0 0
  %1679 = vmatpush1.bf16.xpose.msra.mxu0 0
  %1680 = vmatprep.subr.bf16.mxu0 0
  %1681 = vmatpush1.bf16.xpose.msra.mxu0 0
  %1682 = vmatprep.subr.bf16.mxu0 0
  %1683 = vmatpush1.bf16.xpose.msra.mxu0 0
  %1684 = vmatprep.subr.bf16.mxu0 0
  %1685 = vmatpush1.bf16.xpose.msra.mxu0 0
  %1686 = vmatprep.subr.bf16.mxu0 0
  %1687 = vmatpush1.bf16.xpose.msra.mxu0 %v1676
  %1688 = vmatprep.subr.bf16.mxu0 0
  %1689 = vmatpush1.bf16.xpose.msra.mxu0 %v1673
  %1690 = vmatprep.subr.bf16.mxu0 0
  %1691 = vmatpush1.bf16.xpose.msra.mxu0 %v1670
  %1692 = vmatprep.subr.bf16.mxu0 0
  %1693 = vmatpush1.bf16.xpose.msra.mxu0 %v1667
  %1694 = vmatprep.subr.bf16.mxu0 0
  %1695 = vmatpush2.bf16.xpose.msra.mxu0 0
  %1696 = vmatprep.subr.bf16.mxu0 0
  %1697 = vmatpush2.bf16.xpose.msra.mxu0 0
  %1698 = vmatprep.subr.bf16.mxu0 0
  %1699 = vmatpush2.bf16.xpose.msra.mxu0 0
  %1700 = vmatprep.subr.bf16.mxu0 0
  %1701 = vmatpush2.bf16.xpose.msra.mxu0 0
  %1702 = vmatprep.subr.bf16.mxu0 0
  %1703 = vmatpush2.bf16.xpose.msra.mxu0 0
  %1704 = vmatprep.subr.bf16.mxu0 0
  %1705 = vmatpush2.bf16.xpose.msra.mxu0 0
  %1706 = vmatprep.subr.bf16.mxu0 0
  %1707 = vmatpush2.bf16.xpose.msra.mxu0 0
  %1708 = vmatprep.subr.bf16.mxu0 0
  %1709 = vmatpush2.bf16.xpose.msra.mxu0 0
  %1710 = vmatprep.mubr.bf16.mxu0 0
  %1711 = vmatmul.mubr.bf16.gmra.mxu0 %v1655
  %v1712 = vpop.f32.mrf.mxu0
  %v1713 = vadd.f32 %v1532, %v1712
  %v1714 = vpop.f32.mrf.mxu0
  %v1715 = vpop.f32.mrf.mxu0
  %v1716 = vadd.f32 %v1533, %v1715
  %v1717 = vpop.f32.mrf.mxu0
  %1718 = vmatprep.mubr.bf16.mxu0 0
  %1719 = vmatmul.mubr.bf16.gmra.mxu0 %v1658
  %v1720 = vpop.f32.mrf.mxu0
  %v1721 = vadd.f32 %v1534, %v1720
  %v1722 = vpop.f32.mrf.mxu0
  %v1723 = vpop.f32.mrf.mxu0
  %v1724 = vadd.f32 %v1535, %v1723
  %v1725 = vpop.f32.mrf.mxu0
  %1726 = vmatprep.mubr.bf16.mxu0 0
  %1727 = vmatmul.mubr.bf16.gmra.mxu0 %v1661
  %v1728 = vpop.f32.mrf.mxu0
  %v1729 = vadd.f32 %v1536, %v1728
  %v1730 = vpop.f32.mrf.mxu0
  %v1731 = vpop.f32.mrf.mxu0
  %v1732 = vadd.f32 %v1537, %v1731
  %v1733 = vpop.f32.mrf.mxu0
  %1734 = vmatprep.mubr.bf16.mxu0 0
  %1735 = vmatmul.mubr.bf16.gmra.mxu0 %v1664
  %v1736 = vpop.f32.mrf.mxu0
  %v1737 = vadd.f32 %v1538, %v1736
  %v1738 = vpop.f32.mrf.mxu0
  %v1739 = vpop.f32.mrf.mxu0
  %v1740 = vadd.f32 %v1539, %v1739
  %v1741 = vpop.f32.mrf.mxu0
  %1742 = vdwg.mxu0
  %1747 = vrot.lane.b32.xlu0 %v1508, 96
  %v1748 = vpop.permute.xlu0 %1747
  %1749 = vrot.lane.b32.xlu0 %v1509, 96
  %v1750 = vpop.permute.xlu0 %1749
  %1751 = vrot.lane.b32.xlu0 %v1510, 96
  %v1752 = vpop.permute.xlu0 %1751
  %1753 = vrot.lane.b32.xlu0 %v1511, 96
  %v1754 = vpop.permute.xlu0 %1753
  %v1756 = vsel %vm1552, %v1508, 0
  %v1759 = vsel %vm1552, %v1509, 0
  %v1762 = vsel %vm1552, %v1510, 0
  %v1765 = vsel %vm1552, %v1511, 0
  %v1768 = vsel %vm1552, %v1748, 0
  %v1771 = vsel %vm1552, %v1750, 0
  %v1774 = vsel %vm1552, %v1752, 0
  %v1777 = vsel %vm1552, %v1754, 0
  %1779 = vmatprep.subr.bf16.mxu0 0
  %1780 = vmatpush1.bf16.xpose.msra.mxu0 0
  %1781 = vmatprep.subr.bf16.mxu0 0
  %1782 = vmatpush1.bf16.xpose.msra.mxu0 0
  %1783 = vmatprep.subr.bf16.mxu0 0
  %1784 = vmatpush1.bf16.xpose.msra.mxu0 0
  %1785 = vmatprep.subr.bf16.mxu0 0
  %1786 = vmatpush1.bf16.xpose.msra.mxu0 0
  %1787 = vmatprep.subr.bf16.mxu0 0
  %1788 = vmatpush1.bf16.xpose.msra.mxu0 %v1777
  %1789 = vmatprep.subr.bf16.mxu0 0
  %1790 = vmatpush1.bf16.xpose.msra.mxu0 %v1774
  %1791 = vmatprep.subr.bf16.mxu0 0
  %1792 = vmatpush1.bf16.xpose.msra.mxu0 %v1771
  %1793 = vmatprep.subr.bf16.mxu0 0
  %1794 = vmatpush1.bf16.xpose.msra.mxu0 %v1768
  %1795 = vmatprep.subr.bf16.mxu0 0
  %1796 = vmatpush2.bf16.xpose.msra.mxu0 0
  %1797 = vmatprep.subr.bf16.mxu0 0
  %1798 = vmatpush2.bf16.xpose.msra.mxu0 0
  %1799 = vmatprep.subr.bf16.mxu0 0
  %1800 = vmatpush2.bf16.xpose.msra.mxu0 0
  %1801 = vmatprep.subr.bf16.mxu0 0
  %1802 = vmatpush2.bf16.xpose.msra.mxu0 0
  %1803 = vmatprep.subr.bf16.mxu0 0
  %1804 = vmatpush2.bf16.xpose.msra.mxu0 0
  %1805 = vmatprep.subr.bf16.mxu0 0
  %1806 = vmatpush2.bf16.xpose.msra.mxu0 0
  %1807 = vmatprep.subr.bf16.mxu0 0
  %1808 = vmatpush2.bf16.xpose.msra.mxu0 0
  %1809 = vmatprep.subr.bf16.mxu0 0
  %1810 = vmatpush2.bf16.xpose.msra.mxu0 0
  %1811 = vmatprep.mubr.bf16.mxu0 0
  %1812 = vmatmul.mubr.bf16.gmra.mxu0 %v1756
  %v1813 = vpop.f32.mrf.mxu0
  %v1814 = vadd.f32 %v1532, %v1813
  %v1815 = vpop.f32.mrf.mxu0
  %v1816 = vpop.f32.mrf.mxu0
  %v1817 = vadd.f32 %v1533, %v1816
  %v1818 = vpop.f32.mrf.mxu0
  %1819 = vmatprep.mubr.bf16.mxu0 0
  %1820 = vmatmul.mubr.bf16.gmra.mxu0 %v1759
  %v1821 = vpop.f32.mrf.mxu0
  %v1822 = vadd.f32 %v1534, %v1821
  %v1823 = vpop.f32.mrf.mxu0
  %v1824 = vpop.f32.mrf.mxu0
  %v1825 = vadd.f32 %v1535, %v1824
  %v1826 = vpop.f32.mrf.mxu0
  %1827 = vmatprep.mubr.bf16.mxu0 0
  %1828 = vmatmul.mubr.bf16.gmra.mxu0 %v1762
  %v1829 = vpop.f32.mrf.mxu0
  %v1830 = vadd.f32 %v1536, %v1829
  %v1831 = vpop.f32.mrf.mxu0
  %v1832 = vpop.f32.mrf.mxu0
  %v1833 = vadd.f32 %v1537, %v1832
  %v1834 = vpop.f32.mrf.mxu0
  %1835 = vmatprep.mubr.bf16.mxu0 0
  %1836 = vmatmul.mubr.bf16.gmra.mxu0 %v1765
  %v1837 = vpop.f32.mrf.mxu0
  %v1838 = vadd.f32 %v1538, %v1837
  %v1839 = vpop.f32.mrf.mxu0
  %v1840 = vpop.f32.mrf.mxu0
  %v1841 = vadd.f32 %v1539, %v1840
  %v1842 = vpop.f32.mrf.mxu0
  %1843 = vdwg.mxu0
  %1848 = vrot.lane.b32.xlu0 %v1512, 96
  %v1849 = vpop.permute.xlu0 %1848
  %1850 = vrot.lane.b32.xlu0 %v1513, 96
  %v1851 = vpop.permute.xlu0 %1850
  %1852 = vrot.lane.b32.xlu0 %v1514, 96
  %v1853 = vpop.permute.xlu0 %1852
  %1854 = vrot.lane.b32.xlu0 %v1515, 96
  %v1855 = vpop.permute.xlu0 %1854
  %v1857 = vsel %vm1552, %v1512, 0
  %v1860 = vsel %vm1552, %v1513, 0
  %v1863 = vsel %vm1552, %v1514, 0
  %v1866 = vsel %vm1552, %v1515, 0
  %v1869 = vsel %vm1552, %v1849, 0
  %v1872 = vsel %vm1552, %v1851, 0
  %v1875 = vsel %vm1552, %v1853, 0
  %v1878 = vsel %vm1552, %v1855, 0
  %1880 = vmatprep.subr.bf16.mxu0 0
  %1881 = vmatpush1.bf16.xpose.msra.mxu0 0
  %1882 = vmatprep.subr.bf16.mxu0 0
  %1883 = vmatpush1.bf16.xpose.msra.mxu0 0
  %1884 = vmatprep.subr.bf16.mxu0 0
  %1885 = vmatpush1.bf16.xpose.msra.mxu0 0
  %1886 = vmatprep.subr.bf16.mxu0 0
  %1887 = vmatpush1.bf16.xpose.msra.mxu0 0
  %1888 = vmatprep.subr.bf16.mxu0 0
  %1889 = vmatpush1.bf16.xpose.msra.mxu0 %v1878
  %1890 = vmatprep.subr.bf16.mxu0 0
  %1891 = vmatpush1.bf16.xpose.msra.mxu0 %v1875
  %1892 = vmatprep.subr.bf16.mxu0 0
  %1893 = vmatpush1.bf16.xpose.msra.mxu0 %v1872
  %1894 = vmatprep.subr.bf16.mxu0 0
  %1895 = vmatpush1.bf16.xpose.msra.mxu0 %v1869
  %1896 = vmatprep.subr.bf16.mxu0 0
  %1897 = vmatpush2.bf16.xpose.msra.mxu0 0
  %1898 = vmatprep.subr.bf16.mxu0 0
  %1899 = vmatpush2.bf16.xpose.msra.mxu0 0
  %1900 = vmatprep.subr.bf16.mxu0 0
  %1901 = vmatpush2.bf16.xpose.msra.mxu0 0
  %1902 = vmatprep.subr.bf16.mxu0 0
  %1903 = vmatpush2.bf16.xpose.msra.mxu0 0
  %1904 = vmatprep.subr.bf16.mxu0 0
  %1905 = vmatpush2.bf16.xpose.msra.mxu0 0
  %1906 = vmatprep.subr.bf16.mxu0 0
  %1907 = vmatpush2.bf16.xpose.msra.mxu0 0
  %1908 = vmatprep.subr.bf16.mxu0 0
  %1909 = vmatpush2.bf16.xpose.msra.mxu0 0
  %1910 = vmatprep.subr.bf16.mxu0 0
  %1911 = vmatpush2.bf16.xpose.msra.mxu0 0
  %1912 = vmatprep.mubr.bf16.mxu0 0
  %1913 = vmatmul.mubr.bf16.gmra.mxu0 %v1857
  %v1914 = vpop.f32.mrf.mxu0
  %v1915 = vadd.f32 %v1532, %v1914
  %v1916 = vpop.f32.mrf.mxu0
  %v1917 = vpop.f32.mrf.mxu0
  %v1918 = vadd.f32 %v1533, %v1917
  %v1919 = vpop.f32.mrf.mxu0
  %1920 = vmatprep.mubr.bf16.mxu0 0
  %1921 = vmatmul.mubr.bf16.gmra.mxu0 %v1860
  %v1922 = vpop.f32.mrf.mxu0
  %v1923 = vadd.f32 %v1534, %v1922
  %v1924 = vpop.f32.mrf.mxu0
  %v1925 = vpop.f32.mrf.mxu0
  %v1926 = vadd.f32 %v1535, %v1925
  %v1927 = vpop.f32.mrf.mxu0
  %1928 = vmatprep.mubr.bf16.mxu0 0
  %1929 = vmatmul.mubr.bf16.gmra.mxu0 %v1863
  %v1930 = vpop.f32.mrf.mxu0
  %v1931 = vadd.f32 %v1536, %v1930
  %v1932 = vpop.f32.mrf.mxu0
  %v1933 = vpop.f32.mrf.mxu0
  %v1934 = vadd.f32 %v1537, %v1933
  %v1935 = vpop.f32.mrf.mxu0
  %1936 = vmatprep.mubr.bf16.mxu0 0
  %1937 = vmatmul.mubr.bf16.gmra.mxu0 %v1866
  %v1938 = vpop.f32.mrf.mxu0
  %v1939 = vadd.f32 %v1538, %v1938
  %v1940 = vpop.f32.mrf.mxu0
  %v1941 = vpop.f32.mrf.mxu0
  %v1942 = vadd.f32 %v1539, %v1941
  %v1943 = vpop.f32.mrf.mxu0
  %1944 = vdwg.mxu0
  %1949 = vrot.lane.b32.xlu0 %v1516, 96
  %v1950 = vpop.permute.xlu0 %1949
  %1951 = vrot.lane.b32.xlu0 %v1517, 96
  %v1952 = vpop.permute.xlu0 %1951
  %1953 = vrot.lane.b32.xlu0 %v1518, 96
  %v1954 = vpop.permute.xlu0 %1953
  %1955 = vrot.lane.b32.xlu0 %v1519, 96
  %v1956 = vpop.permute.xlu0 %1955
  %v1958 = vsel %vm1552, %v1516, 0
  %v1961 = vsel %vm1552, %v1517, 0
  %v1964 = vsel %vm1552, %v1518, 0
  %v1967 = vsel %vm1552, %v1519, 0
  %v1970 = vsel %vm1552, %v1950, 0
  %v1973 = vsel %vm1552, %v1952, 0
  %v1976 = vsel %vm1552, %v1954, 0
  %v1979 = vsel %vm1552, %v1956, 0
  %1981 = vmatprep.subr.bf16.mxu0 0
  %1982 = vmatpush1.bf16.xpose.msra.mxu0 0
  %1983 = vmatprep.subr.bf16.mxu0 0
  %1984 = vmatpush1.bf16.xpose.msra.mxu0 0
  %1985 = vmatprep.subr.bf16.mxu0 0
  %1986 = vmatpush1.bf16.xpose.msra.mxu0 0
  %1987 = vmatprep.subr.bf16.mxu0 0
  %1988 = vmatpush1.bf16.xpose.msra.mxu0 0
  %1989 = vmatprep.subr.bf16.mxu0 0
  %1990 = vmatpush1.bf16.xpose.msra.mxu0 %v1979
  %1991 = vmatprep.subr.bf16.mxu0 0
  %1992 = vmatpush1.bf16.xpose.msra.mxu0 %v1976
  %1993 = vmatprep.subr.bf16.mxu0 0
  %1994 = vmatpush1.bf16.xpose.msra.mxu0 %v1973
  %1995 = vmatprep.subr.bf16.mxu0 0
  %1996 = vmatpush1.bf16.xpose.msra.mxu0 %v1970
  %1997 = vmatprep.subr.bf16.mxu0 0
  %1998 = vmatpush2.bf16.xpose.msra.mxu0 0
  %1999 = vmatprep.subr.bf16.mxu0 0
  %2000 = vmatpush2.bf16.xpose.msra.mxu0 0
  %2001 = vmatprep.subr.bf16.mxu0 0
  %2002 = vmatpush2.bf16.xpose.msra.mxu0 0
  %2003 = vmatprep.subr.bf16.mxu0 0
  %2004 = vmatpush2.bf16.xpose.msra.mxu0 0
  %2005 = vmatprep.subr.bf16.mxu0 0
  %2006 = vmatpush2.bf16.xpose.msra.mxu0 0
  %2007 = vmatprep.subr.bf16.mxu0 0
  %2008 = vmatpush2.bf16.xpose.msra.mxu0 0
  %2009 = vmatprep.subr.bf16.mxu0 0
  %2010 = vmatpush2.bf16.xpose.msra.mxu0 0
  %2011 = vmatprep.subr.bf16.mxu0 0
  %2012 = vmatpush2.bf16.xpose.msra.mxu0 0
  %2013 = vmatprep.mubr.bf16.mxu0 0
  %2014 = vmatmul.mubr.bf16.gmra.mxu0 %v1958
  %v2015 = vpop.f32.mrf.mxu0
  %v2016 = vadd.f32 %v1532, %v2015
  %v2017 = vpop.f32.mrf.mxu0
  %v2018 = vpop.f32.mrf.mxu0
  %v2019 = vadd.f32 %v1533, %v2018
  %v2020 = vpop.f32.mrf.mxu0
  %2021 = vmatprep.mubr.bf16.mxu0 0
  %2022 = vmatmul.mubr.bf16.gmra.mxu0 %v1961
  %v2023 = vpop.f32.mrf.mxu0
  %v2024 = vadd.f32 %v1534, %v2023
  %v2025 = vpop.f32.mrf.mxu0
  %v2026 = vpop.f32.mrf.mxu0
  %v2027 = vadd.f32 %v1535, %v2026
  %v2028 = vpop.f32.mrf.mxu0
  %2029 = vmatprep.mubr.bf16.mxu0 0
  %2030 = vmatmul.mubr.bf16.gmra.mxu0 %v1964
  %v2031 = vpop.f32.mrf.mxu0
  %v2032 = vadd.f32 %v1536, %v2031
  %v2033 = vpop.f32.mrf.mxu0
  %v2034 = vpop.f32.mrf.mxu0
  %v2035 = vadd.f32 %v1537, %v2034
  %v2036 = vpop.f32.mrf.mxu0
  %2037 = vmatprep.mubr.bf16.mxu0 0
  %2038 = vmatmul.mubr.bf16.gmra.mxu0 %v1967
  %v2039 = vpop.f32.mrf.mxu0
  %v2040 = vadd.f32 %v1538, %v2039
  %v2041 = vpop.f32.mrf.mxu0
  %v2042 = vpop.f32.mrf.mxu0
  %v2043 = vadd.f32 %v1539, %v2042
  %v2044 = vpop.f32.mrf.mxu0
  %2045 = vdwg.mxu0
  %2050 = vrot.lane.b32.xlu0 %v1520, 96
  %v2051 = vpop.permute.xlu0 %2050
  %2052 = vrot.lane.b32.xlu0 %v1521, 96
  %v2053 = vpop.permute.xlu0 %2052
  %2054 = vrot.lane.b32.xlu0 %v1522, 96
  %v2055 = vpop.permute.xlu0 %2054
  %2056 = vrot.lane.b32.xlu0 %v1523, 96
  %v2057 = vpop.permute.xlu0 %2056
  %v2059 = vsel %vm1552, %v1520, 0
  %v2062 = vsel %vm1552, %v1521, 0
  %v2065 = vsel %vm1552, %v1522, 0
  %v2068 = vsel %vm1552, %v1523, 0
  %v2071 = vsel %vm1552, %v2051, 0
  %v2074 = vsel %vm1552, %v2053, 0
  %v2077 = vsel %vm1552, %v2055, 0
  %v2080 = vsel %vm1552, %v2057, 0
  %2082 = vmatprep.subr.bf16.mxu0 0
  %2083 = vmatpush1.bf16.xpose.msra.mxu0 0
  %2084 = vmatprep.subr.bf16.mxu0 0
  %2085 = vmatpush1.bf16.xpose.msra.mxu0 0
  %2086 = vmatprep.subr.bf16.mxu0 0
  %2087 = vmatpush1.bf16.xpose.msra.mxu0 0
  %2088 = vmatprep.subr.bf16.mxu0 0
  %2089 = vmatpush1.bf16.xpose.msra.mxu0 0
  %2090 = vmatprep.subr.bf16.mxu0 0
  %2091 = vmatpush1.bf16.xpose.msra.mxu0 %v2080
  %2092 = vmatprep.subr.bf16.mxu0 0
  %2093 = vmatpush1.bf16.xpose.msra.mxu0 %v2077
  %2094 = vmatprep.subr.bf16.mxu0 0
  %2095 = vmatpush1.bf16.xpose.msra.mxu0 %v2074
  %2096 = vmatprep.subr.bf16.mxu0 0
  %2097 = vmatpush1.bf16.xpose.msra.mxu0 %v2071
  %2098 = vmatprep.subr.bf16.mxu0 0
  %2099 = vmatpush2.bf16.xpose.msra.mxu0 0
  %2100 = vmatprep.subr.bf16.mxu0 0
  %2101 = vmatpush2.bf16.xpose.msra.mxu0 0
  %2102 = vmatprep.subr.bf16.mxu0 0
  %2103 = vmatpush2.bf16.xpose.msra.mxu0 0
  %2104 = vmatprep.subr.bf16.mxu0 0
  %2105 = vmatpush2.bf16.xpose.msra.mxu0 0
  %2106 = vmatprep.subr.bf16.mxu0 0
  %2107 = vmatpush2.bf16.xpose.msra.mxu0 0
  %2108 = vmatprep.subr.bf16.mxu0 0
  %2109 = vmatpush2.bf16.xpose.msra.mxu0 0
  %2110 = vmatprep.subr.bf16.mxu0 0
  %2111 = vmatpush2.bf16.xpose.msra.mxu0 0
  %2112 = vmatprep.subr.bf16.mxu0 0
  %2113 = vmatpush2.bf16.xpose.msra.mxu0 0
  %2114 = vmatprep.mubr.bf16.mxu0 0
  %2115 = vmatmul.mubr.bf16.gmra.mxu0 %v2059
  %v2116 = vpop.f32.mrf.mxu0
  %v2117 = vadd.f32 %v1532, %v2116
  %v2118 = vpop.f32.mrf.mxu0
  %v2119 = vpop.f32.mrf.mxu0
  %v2120 = vadd.f32 %v1533, %v2119
  %v2121 = vpop.f32.mrf.mxu0
  %2122 = vmatprep.mubr.bf16.mxu0 0
  %2123 = vmatmul.mubr.bf16.gmra.mxu0 %v2062
  %v2124 = vpop.f32.mrf.mxu0
  %v2125 = vadd.f32 %v1534, %v2124
  %v2126 = vpop.f32.mrf.mxu0
  %v2127 = vpop.f32.mrf.mxu0
  %v2128 = vadd.f32 %v1535, %v2127
  %v2129 = vpop.f32.mrf.mxu0
  %2130 = vmatprep.mubr.bf16.mxu0 0
  %2131 = vmatmul.mubr.bf16.gmra.mxu0 %v2065
  %v2132 = vpop.f32.mrf.mxu0
  %v2133 = vadd.f32 %v1536, %v2132
  %v2134 = vpop.f32.mrf.mxu0
  %v2135 = vpop.f32.mrf.mxu0
  %v2136 = vadd.f32 %v1537, %v2135
  %v2137 = vpop.f32.mrf.mxu0
  %2138 = vmatprep.mubr.bf16.mxu0 0
  %2139 = vmatmul.mubr.bf16.gmra.mxu0 %v2068
  %v2140 = vpop.f32.mrf.mxu0
  %v2141 = vadd.f32 %v1538, %v2140
  %v2142 = vpop.f32.mrf.mxu0
  %v2143 = vpop.f32.mrf.mxu0
  %v2144 = vadd.f32 %v1539, %v2143
  %v2145 = vpop.f32.mrf.mxu0
  %2146 = vdwg.mxu0
  %2151 = vrot.lane.b32.xlu0 %v1524, 96
  %v2152 = vpop.permute.xlu0 %2151
  %2153 = vrot.lane.b32.xlu0 %v1525, 96
  %v2154 = vpop.permute.xlu0 %2153
  %2155 = vrot.lane.b32.xlu0 %v1526, 96
  %v2156 = vpop.permute.xlu0 %2155
  %2157 = vrot.lane.b32.xlu0 %v1527, 96
  %v2158 = vpop.permute.xlu0 %2157
  %v2160 = vsel %vm1552, %v1524, 0
  %v2163 = vsel %vm1552, %v1525, 0
  %v2166 = vsel %vm1552, %v1526, 0
  %v2169 = vsel %vm1552, %v1527, 0
  %v2172 = vsel %vm1552, %v2152, 0
  %v2175 = vsel %vm1552, %v2154, 0
  %v2178 = vsel %vm1552, %v2156, 0
  %v2181 = vsel %vm1552, %v2158, 0
  %2183 = vmatprep.subr.bf16.mxu0 0
  %2184 = vmatpush1.bf16.xpose.msra.mxu0 0
  %2185 = vmatprep.subr.bf16.mxu0 0
  %2186 = vmatpush1.bf16.xpose.msra.mxu0 0
  %2187 = vmatprep.subr.bf16.mxu0 0
  %2188 = vmatpush1.bf16.xpose.msra.mxu0 0
  %2189 = vmatprep.subr.bf16.mxu0 0
  %2190 = vmatpush1.bf16.xpose.msra.mxu0 0
  %2191 = vmatprep.subr.bf16.mxu0 0
  %2192 = vmatpush1.bf16.xpose.msra.mxu0 %v2181
  %2193 = vmatprep.subr.bf16.mxu0 0
  %2194 = vmatpush1.bf16.xpose.msra.mxu0 %v2178
  %2195 = vmatprep.subr.bf16.mxu0 0
  %2196 = vmatpush1.bf16.xpose.msra.mxu0 %v2175
  %2197 = vmatprep.subr.bf16.mxu0 0
  %2198 = vmatpush1.bf16.xpose.msra.mxu0 %v2172
  %2199 = vmatprep.subr.bf16.mxu0 0
  %2200 = vmatpush2.bf16.xpose.msra.mxu0 0
  %2201 = vmatprep.subr.bf16.mxu0 0
  %2202 = vmatpush2.bf16.xpose.msra.mxu0 0
  %2203 = vmatprep.subr.bf16.mxu0 0
  %2204 = vmatpush2.bf16.xpose.msra.mxu0 0
  %2205 = vmatprep.subr.bf16.mxu0 0
  %2206 = vmatpush2.bf16.xpose.msra.mxu0 0
  %2207 = vmatprep.subr.bf16.mxu0 0
  %2208 = vmatpush2.bf16.xpose.msra.mxu0 0
  %2209 = vmatprep.subr.bf16.mxu0 0
  %2210 = vmatpush2.bf16.xpose.msra.mxu0 0
  %2211 = vmatprep.subr.bf16.mxu0 0
  %2212 = vmatpush2.bf16.xpose.msra.mxu0 0
  %2213 = vmatprep.subr.bf16.mxu0 0
  %2214 = vmatpush2.bf16.xpose.msra.mxu0 0
  %2215 = vmatprep.mubr.bf16.mxu0 0
  %2216 = vmatmul.mubr.bf16.gmra.mxu0 %v2160
  %v2217 = vpop.f32.mrf.mxu0
  %v2218 = vadd.f32 %v1532, %v2217
  %v2219 = vpop.f32.mrf.mxu0
  %v2220 = vpop.f32.mrf.mxu0
  %v2221 = vadd.f32 %v1533, %v2220
  %v2222 = vpop.f32.mrf.mxu0
  %2223 = vmatprep.mubr.bf16.mxu0 0
  %2224 = vmatmul.mubr.bf16.gmra.mxu0 %v2163
  %v2225 = vpop.f32.mrf.mxu0
  %v2226 = vadd.f32 %v1534, %v2225
  %v2227 = vpop.f32.mrf.mxu0
  %v2228 = vpop.f32.mrf.mxu0
  %v2229 = vadd.f32 %v1535, %v2228
  %v2230 = vpop.f32.mrf.mxu0
  %2231 = vmatprep.mubr.bf16.mxu0 0
  %2232 = vmatmul.mubr.bf16.gmra.mxu0 %v2166
  %v2233 = vpop.f32.mrf.mxu0
  %v2234 = vadd.f32 %v1536, %v2233
  %v2235 = vpop.f32.mrf.mxu0
  %v2236 = vpop.f32.mrf.mxu0
  %v2237 = vadd.f32 %v1537, %v2236
  %v2238 = vpop.f32.mrf.mxu0
  %2239 = vmatprep.mubr.bf16.mxu0 0
  %2240 = vmatmul.mubr.bf16.gmra.mxu0 %v2169
  %v2241 = vpop.f32.mrf.mxu0
  %v2242 = vadd.f32 %v1538, %v2241
  %v2243 = vpop.f32.mrf.mxu0
  %v2244 = vpop.f32.mrf.mxu0
  %v2245 = vadd.f32 %v1539, %v2244
  %v2246 = vpop.f32.mrf.mxu0
  %2247 = vdwg.mxu0
  %2252 = vrot.lane.b32.xlu0 %v1528, 96
  %v2253 = vpop.permute.xlu0 %2252
  %2254 = vrot.lane.b32.xlu0 %v1529, 96
  %v2255 = vpop.permute.xlu0 %2254
  %2256 = vrot.lane.b32.xlu0 %v1530, 96
  %v2257 = vpop.permute.xlu0 %2256
  %2258 = vrot.lane.b32.xlu0 %v1531, 96
  %v2259 = vpop.permute.xlu0 %2258
  %v2261 = vsel %vm1552, %v1528, 0
  %v2264 = vsel %vm1552, %v1529, 0
  %v2267 = vsel %vm1552, %v1530, 0
  %v2270 = vsel %vm1552, %v1531, 0
  %v2273 = vsel %vm1552, %v2253, 0
  %v2276 = vsel %vm1552, %v2255, 0
  %v2279 = vsel %vm1552, %v2257, 0
  %v2282 = vsel %vm1552, %v2259, 0
  %2284 = vmatprep.subr.bf16.mxu0 0
  %2285 = vmatpush1.bf16.xpose.msra.mxu0 0
  %2286 = vmatprep.subr.bf16.mxu0 0
  %2287 = vmatpush1.bf16.xpose.msra.mxu0 0
  %2288 = vmatprep.subr.bf16.mxu0 0
  %2289 = vmatpush1.bf16.xpose.msra.mxu0 0
  %2290 = vmatprep.subr.bf16.mxu0 0
  %2291 = vmatpush1.bf16.xpose.msra.mxu0 0
  %2292 = vmatprep.subr.bf16.mxu0 0
  %2293 = vmatpush1.bf16.xpose.msra.mxu0 %v2282
  %2294 = vmatprep.subr.bf16.mxu0 0
  %2295 = vmatpush1.bf16.xpose.msra.mxu0 %v2279
  %2296 = vmatprep.subr.bf16.mxu0 0
  %2297 = vmatpush1.bf16.xpose.msra.mxu0 %v2276
  %2298 = vmatprep.subr.bf16.mxu0 0
  %2299 = vmatpush1.bf16.xpose.msra.mxu0 %v2273
  %2300 = vmatprep.subr.bf16.mxu0 0
  %2301 = vmatpush2.bf16.xpose.msra.mxu0 0
  %2302 = vmatprep.subr.bf16.mxu0 0
  %2303 = vmatpush2.bf16.xpose.msra.mxu0 0
  %2304 = vmatprep.subr.bf16.mxu0 0
  %2305 = vmatpush2.bf16.xpose.msra.mxu0 0
  %2306 = vmatprep.subr.bf16.mxu0 0
  %2307 = vmatpush2.bf16.xpose.msra.mxu0 0
  %2308 = vmatprep.subr.bf16.mxu0 0
  %2309 = vmatpush2.bf16.xpose.msra.mxu0 0
  %2310 = vmatprep.subr.bf16.mxu0 0
  %2311 = vmatpush2.bf16.xpose.msra.mxu0 0
  %2312 = vmatprep.subr.bf16.mxu0 0
  %2313 = vmatpush2.bf16.xpose.msra.mxu0 0
  %2314 = vmatprep.subr.bf16.mxu0 0
  %2315 = vmatpush2.bf16.xpose.msra.mxu0 0
  %2316 = vmatprep.mubr.bf16.mxu0 0
  %2317 = vmatmul.mubr.bf16.gmra.mxu0 %v2261
  %v2318 = vpop.f32.mrf.mxu0
  %v2319 = vadd.f32 %v1532, %v2318
  %v2320 = vpop.f32.mrf.mxu0
  %v2321 = vpop.f32.mrf.mxu0
  %v2322 = vadd.f32 %v1533, %v2321
  %v2323 = vpop.f32.mrf.mxu0
  %2324 = vmatprep.mubr.bf16.mxu0 0
  %2325 = vmatmul.mubr.bf16.gmra.mxu0 %v2264
  %v2326 = vpop.f32.mrf.mxu0
  %v2327 = vadd.f32 %v1534, %v2326
  %v2328 = vpop.f32.mrf.mxu0
  %v2329 = vpop.f32.mrf.mxu0
  %v2330 = vadd.f32 %v1535, %v2329
  %v2331 = vpop.f32.mrf.mxu0
  %2332 = vmatprep.mubr.bf16.mxu0 0
  %2333 = vmatmul.mubr.bf16.gmra.mxu0 %v2267
  %v2334 = vpop.f32.mrf.mxu0
  %v2335 = vadd.f32 %v1536, %v2334
  %v2336 = vpop.f32.mrf.mxu0
  %v2337 = vpop.f32.mrf.mxu0
  %v2338 = vadd.f32 %v1537, %v2337
  %v2339 = vpop.f32.mrf.mxu0
  %2340 = vmatprep.mubr.bf16.mxu0 0
  %2341 = vmatmul.mubr.bf16.gmra.mxu0 %v2270
  %v2342 = vpop.f32.mrf.mxu0
  %v2343 = vadd.f32 %v1538, %v2342
  %v2344 = vpop.f32.mrf.mxu0
  %v2345 = vpop.f32.mrf.mxu0
  %v2346 = vadd.f32 %v1539, %v2345
  %v2347 = vpop.f32.mrf.mxu0
  %2348 = vdwg.mxu0
  %vm2349 = vcmask 523264
  %v2350 = vsel %vm2349, %v1612, -inf
  %2351 = vmax.xlane.f32.xlu0 %v2350
  %v2352 = vpop.xlane.xlu0 %2351
  %v2353 = vsel %vm2349, %v1615, -inf
  %2354 = vmax.xlane.f32.xlu0 %v2353
  %v2355 = vpop.xlane.xlu0 %2354
  %v2356 = vsel %vm2349, %v1620, -inf
  %2357 = vmax.xlane.f32.xlu0 %v2356
  %v2358 = vpop.xlane.xlu0 %2357
  %v2359 = vsel %vm2349, %v1623, -inf
  %2360 = vmax.xlane.f32.xlu0 %v2359
  %v2361 = vpop.xlane.xlu0 %2360
  %v2362 = vsel %vm2349, %v1628, -inf
  %2363 = vmax.xlane.f32.xlu0 %v2362
  %v2364 = vpop.xlane.xlu0 %2363
  %v2365 = vsel %vm2349, %v1631, -inf
  %2366 = vmax.xlane.f32.xlu0 %v2365
  %v2367 = vpop.xlane.xlu0 %2366
  %v2368 = vsel %vm2349, %v1636, -inf
  %2369 = vmax.xlane.f32.xlu0 %v2368
  %v2370 = vpop.xlane.xlu0 %2369
  %v2371 = vsel %vm2349, %v1639, -inf
  %2372 = vmax.xlane.f32.xlu0 %v2371
  %v2373 = vpop.xlane.xlu0 %2372
  %v2374 = vsel %vm2349, %v1713, -inf
  %2375 = vmax.xlane.f32.xlu0 %v2374
  %v2376 = vpop.xlane.xlu0 %2375
  %v2377 = vsel %vm2349, %v1716, -inf
  %2378 = vmax.xlane.f32.xlu0 %v2377
  %v2379 = vpop.xlane.xlu0 %2378
  %v2380 = vsel %vm2349, %v1721, -inf
  %2381 = vmax.xlane.f32.xlu0 %v2380
  %v2382 = vpop.xlane.xlu0 %2381
  %v2383 = vsel %vm2349, %v1724, -inf
  %2384 = vmax.xlane.f32.xlu0 %v2383
  %v2385 = vpop.xlane.xlu0 %2384
  %v2386 = vsel %vm2349, %v1729, -inf
  %2387 = vmax.xlane.f32.xlu0 %v2386
  %v2388 = vpop.xlane.xlu0 %2387
  %v2389 = vsel %vm2349, %v1732, -inf
  %2390 = vmax.xlane.f32.xlu0 %v2389
  %v2391 = vpop.xlane.xlu0 %2390
  %v2392 = vsel %vm2349, %v1737, -inf
  %2393 = vmax.xlane.f32.xlu0 %v2392
  %v2394 = vpop.xlane.xlu0 %2393
  %v2395 = vsel %vm2349, %v1740, -inf
  %2396 = vmax.xlane.f32.xlu0 %v2395
  %v2397 = vpop.xlane.xlu0 %2396
  %v2398 = vsel %vm2349, %v1814, -inf
  %2399 = vmax.xlane.f32.xlu0 %v2398
  %v2400 = vpop.xlane.xlu0 %2399
  %v2401 = vsel %vm2349, %v1817, -inf
  %2402 = vmax.xlane.f32.xlu0 %v2401
  %v2403 = vpop.xlane.xlu0 %2402
  %v2404 = vsel %vm2349, %v1822, -inf
  %2405 = vmax.xlane.f32.xlu0 %v2404
  %v2406 = vpop.xlane.xlu0 %2405
  %v2407 = vsel %vm2349, %v1825, -inf
  %2408 = vmax.xlane.f32.xlu0 %v2407
  %v2409 = vpop.xlane.xlu0 %2408
  %v2410 = vsel %vm2349, %v1830, -inf
  %2411 = vmax.xlane.f32.xlu0 %v2410
  %v2412 = vpop.xlane.xlu0 %2411
  %v2413 = vsel %vm2349, %v1833, -inf
  %2414 = vmax.xlane.f32.xlu0 %v2413
  %v2415 = vpop.xlane.xlu0 %2414
  %v2416 = vsel %vm2349, %v1838, -inf
  %2417 = vmax.xlane.f32.xlu0 %v2416
  %v2418 = vpop.xlane.xlu0 %2417
  %v2419 = vsel %vm2349, %v1841, -inf
  %2420 = vmax.xlane.f32.xlu0 %v2419
  %v2421 = vpop.xlane.xlu0 %2420
  %v2422 = vsel %vm2349, %v1915, -inf
  %2423 = vmax.xlane.f32.xlu0 %v2422
  %v2424 = vpop.xlane.xlu0 %2423
  %v2425 = vsel %vm2349, %v1918, -inf
  %2426 = vmax.xlane.f32.xlu0 %v2425
  %v2427 = vpop.xlane.xlu0 %2426
  %v2428 = vsel %vm2349, %v1923, -inf
  %2429 = vmax.xlane.f32.xlu0 %v2428
  %v2430 = vpop.xlane.xlu0 %2429
  %v2431 = vsel %vm2349, %v1926, -inf
  %2432 = vmax.xlane.f32.xlu0 %v2431
  %v2433 = vpop.xlane.xlu0 %2432
  %v2434 = vsel %vm2349, %v1931, -inf
  %2435 = vmax.xlane.f32.xlu0 %v2434
  %v2436 = vpop.xlane.xlu0 %2435
  %v2437 = vsel %vm2349, %v1934, -inf
  %2438 = vmax.xlane.f32.xlu0 %v2437
  %v2439 = vpop.xlane.xlu0 %2438
  %v2440 = vsel %vm2349, %v1939, -inf
  %2441 = vmax.xlane.f32.xlu0 %v2440
  %v2442 = vpop.xlane.xlu0 %2441
  %v2443 = vsel %vm2349, %v1942, -inf
  %2444 = vmax.xlane.f32.xlu0 %v2443
  %v2445 = vpop.xlane.xlu0 %2444
  %v2446 = vsel %vm2349, %v2016, -inf
  %2447 = vmax.xlane.f32.xlu0 %v2446
  %v2448 = vpop.xlane.xlu0 %2447
  %v2449 = vsel %vm2349, %v2019, -inf
  %2450 = vmax.xlane.f32.xlu0 %v2449
  %v2451 = vpop.xlane.xlu0 %2450
  %v2452 = vsel %vm2349, %v2024, -inf
  %2453 = vmax.xlane.f32.xlu0 %v2452
  %v2454 = vpop.xlane.xlu0 %2453
  %v2455 = vsel %vm2349, %v2027, -inf
  %2456 = vmax.xlane.f32.xlu0 %v2455
  %v2457 = vpop.xlane.xlu0 %2456
  %v2458 = vsel %vm2349, %v2032, -inf
  %2459 = vmax.xlane.f32.xlu0 %v2458
  %v2460 = vpop.xlane.xlu0 %2459
  %v2461 = vsel %vm2349, %v2035, -inf
  %2462 = vmax.xlane.f32.xlu0 %v2461
  %v2463 = vpop.xlane.xlu0 %2462
  %v2464 = vsel %vm2349, %v2040, -inf
  %2465 = vmax.xlane.f32.xlu0 %v2464
  %v2466 = vpop.xlane.xlu0 %2465
  %v2467 = vsel %vm2349, %v2043, -inf
  %2468 = vmax.xlane.f32.xlu0 %v2467
  %v2469 = vpop.xlane.xlu0 %2468
  %v2470 = vsel %vm2349, %v2117, -inf
  %2471 = vmax.xlane.f32.xlu0 %v2470
  %v2472 = vpop.xlane.xlu0 %2471
  %v2473 = vsel %vm2349, %v2120, -inf
  %2474 = vmax.xlane.f32.xlu0 %v2473
  %v2475 = vpop.xlane.xlu0 %2474
  %v2476 = vsel %vm2349, %v2125, -inf
  %2477 = vmax.xlane.f32.xlu0 %v2476
  %v2478 = vpop.xlane.xlu0 %2477
  %v2479 = vsel %vm2349, %v2128, -inf
  %2480 = vmax.xlane.f32.xlu0 %v2479
  %v2481 = vpop.xlane.xlu0 %2480
  %v2482 = vsel %vm2349, %v2133, -inf
  %2483 = vmax.xlane.f32.xlu0 %v2482
  %v2484 = vpop.xlane.xlu0 %2483
  %v2485 = vsel %vm2349, %v2136, -inf
  %2486 = vmax.xlane.f32.xlu0 %v2485
  %v2487 = vpop.xlane.xlu0 %2486
  %v2488 = vsel %vm2349, %v2141, -inf
  %2489 = vmax.xlane.f32.xlu0 %v2488
  %v2490 = vpop.xlane.xlu0 %2489
  %v2491 = vsel %vm2349, %v2144, -inf
  %2492 = vmax.xlane.f32.xlu0 %v2491
  %v2493 = vpop.xlane.xlu0 %2492
  %v2494 = vsel %vm2349, %v2218, -inf
  %2495 = vmax.xlane.f32.xlu0 %v2494
  %v2496 = vpop.xlane.xlu0 %2495
  %v2497 = vsel %vm2349, %v2221, -inf
  %2498 = vmax.xlane.f32.xlu0 %v2497
  %v2499 = vpop.xlane.xlu0 %2498
  %v2500 = vsel %vm2349, %v2226, -inf
  %2501 = vmax.xlane.f32.xlu0 %v2500
  %v2502 = vpop.xlane.xlu0 %2501
  %v2503 = vsel %vm2349, %v2229, -inf
  %2504 = vmax.xlane.f32.xlu0 %v2503
  %v2505 = vpop.xlane.xlu0 %2504
  %v2506 = vsel %vm2349, %v2234, -inf
  %2507 = vmax.xlane.f32.xlu0 %v2506
  %v2508 = vpop.xlane.xlu0 %2507
  %v2509 = vsel %vm2349, %v2237, -inf
  %2510 = vmax.xlane.f32.xlu0 %v2509
  %v2511 = vpop.xlane.xlu0 %2510
  %v2512 = vsel %vm2349, %v2242, -inf
  %2513 = vmax.xlane.f32.xlu0 %v2512
  %v2514 = vpop.xlane.xlu0 %2513
  %v2515 = vsel %vm2349, %v2245, -inf
  %2516 = vmax.xlane.f32.xlu0 %v2515
  %v2517 = vpop.xlane.xlu0 %2516
  %v2518 = vsel %vm2349, %v2319, -inf
  %2519 = vmax.xlane.f32.xlu0 %v2518
  %v2520 = vpop.xlane.xlu0 %2519
  %v2521 = vsel %vm2349, %v2322, -inf
  %2522 = vmax.xlane.f32.xlu0 %v2521
  %v2523 = vpop.xlane.xlu0 %2522
  %v2524 = vsel %vm2349, %v2327, -inf
  %2525 = vmax.xlane.f32.xlu0 %v2524
  %v2526 = vpop.xlane.xlu0 %2525
  %v2527 = vsel %vm2349, %v2330, -inf
  %2528 = vmax.xlane.f32.xlu0 %v2527
  %v2529 = vpop.xlane.xlu0 %2528
  %v2530 = vsel %vm2349, %v2335, -inf
  %2531 = vmax.xlane.f32.xlu0 %v2530
  %v2532 = vpop.xlane.xlu0 %2531
  %v2533 = vsel %vm2349, %v2338, -inf
  %2534 = vmax.xlane.f32.xlu0 %v2533
  %v2535 = vpop.xlane.xlu0 %2534
  %v2536 = vsel %vm2349, %v2343, -inf
  %2537 = vmax.xlane.f32.xlu0 %v2536
  %v2538 = vpop.xlane.xlu0 %2537
  %v2539 = vsel %vm2349, %v2346, -inf
  %2540 = vmax.xlane.f32.xlu0 %v2539
  %v2541 = vpop.xlane.xlu0 %2540
  %v2542 = vsub.f32 %v1612, %v2352
  %v2543 = vsub.f32 %v1615, %v2355
  %v2544 = vsub.f32 %v1620, %v2358
  %v2545 = vsub.f32 %v1623, %v2361
  %v2546 = vsub.f32 %v1628, %v2364
  %v2547 = vsub.f32 %v1631, %v2367
  %v2548 = vsub.f32 %v1636, %v2370
  %v2549 = vsub.f32 %v1639, %v2373
  %v2550 = vsub.f32 %v1713, %v2376
  %v2551 = vsub.f32 %v1716, %v2379
  %v2552 = vsub.f32 %v1721, %v2382
  %v2553 = vsub.f32 %v1724, %v2385
  %v2554 = vsub.f32 %v1729, %v2388
  %v2555 = vsub.f32 %v1732, %v2391
  %v2556 = vsub.f32 %v1737, %v2394
  %v2557 = vsub.f32 %v1740, %v2397
  %v2558 = vsub.f32 %v1814, %v2400
  %v2559 = vsub.f32 %v1817, %v2403
  %v2560 = vsub.f32 %v1822, %v2406
  %v2561 = vsub.f32 %v1825, %v2409
  %v2562 = vsub.f32 %v1830, %v2412
  %v2563 = vsub.f32 %v1833, %v2415
  %v2564 = vsub.f32 %v1838, %v2418
  %v2565 = vsub.f32 %v1841, %v2421
  %v2566 = vsub.f32 %v1915, %v2424
  %v2567 = vsub.f32 %v1918, %v2427
  %v2568 = vsub.f32 %v1923, %v2430
  %v2569 = vsub.f32 %v1926, %v2433
  %v2570 = vsub.f32 %v1931, %v2436
  %v2571 = vsub.f32 %v1934, %v2439
  %v2572 = vsub.f32 %v1939, %v2442
  %v2573 = vsub.f32 %v1942, %v2445
  %v2574 = vsub.f32 %v2016, %v2448
  %v2575 = vsub.f32 %v2019, %v2451
  %v2576 = vsub.f32 %v2024, %v2454
  %v2577 = vsub.f32 %v2027, %v2457
  %v2578 = vsub.f32 %v2032, %v2460
  %v2579 = vsub.f32 %v2035, %v2463
  %v2580 = vsub.f32 %v2040, %v2466
  %v2581 = vsub.f32 %v2043, %v2469
  %v2582 = vsub.f32 %v2117, %v2472
  %v2583 = vsub.f32 %v2120, %v2475
  %v2584 = vsub.f32 %v2125, %v2478
  %v2585 = vsub.f32 %v2128, %v2481
  %v2586 = vsub.f32 %v2133, %v2484
  %v2587 = vsub.f32 %v2136, %v2487
  %v2588 = vsub.f32 %v2141, %v2490
  %v2589 = vsub.f32 %v2144, %v2493
  %v2590 = vsub.f32 %v2218, %v2496
  %v2591 = vsub.f32 %v2221, %v2499
  %v2592 = vsub.f32 %v2226, %v2502
  %v2593 = vsub.f32 %v2229, %v2505
  %v2594 = vsub.f32 %v2234, %v2508
  %v2595 = vsub.f32 %v2237, %v2511
  %v2596 = vsub.f32 %v2242, %v2514
  %v2597 = vsub.f32 %v2245, %v2517
  %v2598 = vsub.f32 %v2319, %v2520
  %v2599 = vsub.f32 %v2322, %v2523
  %v2600 = vsub.f32 %v2327, %v2526
  %v2601 = vsub.f32 %v2330, %v2529
  %v2602 = vsub.f32 %v2335, %v2532
  %v2603 = vsub.f32 %v2338, %v2535
  %v2604 = vsub.f32 %v2343, %v2538
  %v2605 = vsub.f32 %v2346, %v2541
  %v2606 = vmul.f32 %v2542, 1.442695
  %v2607 = vpow.pop %v2606
  %v2608 = vmul.f32 %v2543, 1.442695
  %v2609 = vpow.pop %v2608
  %v2610 = vmul.f32 %v2544, 1.442695
  %v2611 = vpow.pop %v2610
  %v2612 = vmul.f32 %v2545, 1.442695
  %v2613 = vpow.pop %v2612
  %v2614 = vmul.f32 %v2546, 1.442695
  %v2615 = vpow.pop %v2614
  %v2616 = vmul.f32 %v2547, 1.442695
  %v2617 = vpow.pop %v2616
  %v2618 = vmul.f32 %v2548, 1.442695
  %v2619 = vpow.pop %v2618
  %v2620 = vmul.f32 %v2549, 1.442695
  %v2621 = vpow.pop %v2620
  %v2622 = vmul.f32 %v2550, 1.442695
  %v2623 = vpow.pop %v2622
  %v2624 = vmul.f32 %v2551, 1.442695
  %v2625 = vpow.pop %v2624
  %v2626 = vmul.f32 %v2552, 1.442695
  %v2627 = vpow.pop %v2626
  %v2628 = vmul.f32 %v2553, 1.442695
  %v2629 = vpow.pop %v2628
  %v2630 = vmul.f32 %v2554, 1.442695
  %v2631 = vpow.pop %v2630
  %v2632 = vmul.f32 %v2555, 1.442695
  %v2633 = vpow.pop %v2632
  %v2634 = vmul.f32 %v2556, 1.442695
  %v2635 = vpow.pop %v2634
  %v2636 = vmul.f32 %v2557, 1.442695
  %v2637 = vpow.pop %v2636
  %v2638 = vmul.f32 %v2558, 1.442695
  %v2639 = vpow.pop %v2638
  %v2640 = vmul.f32 %v2559, 1.442695
  %v2641 = vpow.pop %v2640
  %v2642 = vmul.f32 %v2560, 1.442695
  %v2643 = vpow.pop %v2642
  %v2644 = vmul.f32 %v2561, 1.442695
  %v2645 = vpow.pop %v2644
  %v2646 = vmul.f32 %v2562, 1.442695
  %v2647 = vpow.pop %v2646
  %v2648 = vmul.f32 %v2563, 1.442695
  %v2649 = vpow.pop %v2648
  %v2650 = vmul.f32 %v2564, 1.442695
  %v2651 = vpow.pop %v2650
  %v2652 = vmul.f32 %v2565, 1.442695
  %v2653 = vpow.pop %v2652
  %v2654 = vmul.f32 %v2566, 1.442695
  %v2655 = vpow.pop %v2654
  %v2656 = vmul.f32 %v2567, 1.442695
  %v2657 = vpow.pop %v2656
  %v2658 = vmul.f32 %v2568, 1.442695
  %v2659 = vpow.pop %v2658
  %v2660 = vmul.f32 %v2569, 1.442695
  %v2661 = vpow.pop %v2660
  %v2662 = vmul.f32 %v2570, 1.442695
  %v2663 = vpow.pop %v2662
  %v2664 = vmul.f32 %v2571, 1.442695
  %v2665 = vpow.pop %v2664
  %v2666 = vmul.f32 %v2572, 1.442695
  %v2667 = vpow.pop %v2666
  %v2668 = vmul.f32 %v2573, 1.442695
  %v2669 = vpow.pop %v2668
  %v2670 = vmul.f32 %v2574, 1.442695
  %v2671 = vpow.pop %v2670
  %v2672 = vmul.f32 %v2575, 1.442695
  %v2673 = vpow.pop %v2672
  %v2674 = vmul.f32 %v2576, 1.442695
  %v2675 = vpow.pop %v2674
  %v2676 = vmul.f32 %v2577, 1.442695
  %v2677 = vpow.pop %v2676
  %v2678 = vmul.f32 %v2578, 1.442695
  %v2679 = vpow.pop %v2678
  %v2680 = vmul.f32 %v2579, 1.442695
  %v2681 = vpow.pop %v2680
  %v2682 = vmul.f32 %v2580, 1.442695
  %v2683 = vpow.pop %v2682
  %v2684 = vmul.f32 %v2581, 1.442695
  %v2685 = vpow.pop %v2684
  %v2686 = vmul.f32 %v2582, 1.442695
  %v2687 = vpow.pop %v2686
  %v2688 = vmul.f32 %v2583, 1.442695
  %v2689 = vpow.pop %v2688
  %v2690 = vmul.f32 %v2584, 1.442695
  %v2691 = vpow.pop %v2690
  %v2692 = vmul.f32 %v2585, 1.442695
  %v2693 = vpow.pop %v2692
  %v2694 = vmul.f32 %v2586, 1.442695
  %v2695 = vpow.pop %v2694
  %v2696 = vmul.f32 %v2587, 1.442695
  %v2697 = vpow.pop %v2696
  %v2698 = vmul.f32 %v2588, 1.442695
  %v2699 = vpow.pop %v2698
  %v2700 = vmul.f32 %v2589, 1.442695
  %v2701 = vpow.pop %v2700
  %v2702 = vmul.f32 %v2590, 1.442695
  %v2703 = vpow.pop %v2702
  %v2704 = vmul.f32 %v2591, 1.442695
  %v2705 = vpow.pop %v2704
  %v2706 = vmul.f32 %v2592, 1.442695
  %v2707 = vpow.pop %v2706
  %v2708 = vmul.f32 %v2593, 1.442695
  %v2709 = vpow.pop %v2708
  %v2710 = vmul.f32 %v2594, 1.442695
  %v2711 = vpow.pop %v2710
  %v2712 = vmul.f32 %v2595, 1.442695
  %v2713 = vpow.pop %v2712
  %v2714 = vmul.f32 %v2596, 1.442695
  %v2715 = vpow.pop %v2714
  %v2716 = vmul.f32 %v2597, 1.442695
  %v2717 = vpow.pop %v2716
  %v2718 = vmul.f32 %v2598, 1.442695
  %v2719 = vpow.pop %v2718
  %v2720 = vmul.f32 %v2599, 1.442695
  %v2721 = vpow.pop %v2720
  %v2722 = vmul.f32 %v2600, 1.442695
  %v2723 = vpow.pop %v2722
  %v2724 = vmul.f32 %v2601, 1.442695
  %v2725 = vpow.pop %v2724
  %v2726 = vmul.f32 %v2602, 1.442695
  %v2727 = vpow.pop %v2726
  %v2728 = vmul.f32 %v2603, 1.442695
  %v2729 = vpow.pop %v2728
  %v2730 = vmul.f32 %v2604, 1.442695
  %v2731 = vpow.pop %v2730
  %v2732 = vmul.f32 %v2605, 1.442695
  %v2733 = vpow.pop %v2732
  %v2734 = vsel %vm2349, %v2607, 0.0
  %2735 = vadd.xlane.f32.xlu0 %v2734
  %v2736 = vpop.xlane.xlu0 %2735
  %v2737 = vsel %vm2349, %v2609, 0.0
  %2738 = vadd.xlane.f32.xlu0 %v2737
  %v2739 = vpop.xlane.xlu0 %2738
  %v2740 = vsel %vm2349, %v2611, 0.0
  %2741 = vadd.xlane.f32.xlu0 %v2740
  %v2742 = vpop.xlane.xlu0 %2741
  %v2743 = vsel %vm2349, %v2613, 0.0
  %2744 = vadd.xlane.f32.xlu0 %v2743
  %v2745 = vpop.xlane.xlu0 %2744
  %v2746 = vsel %vm2349, %v2615, 0.0
  %2747 = vadd.xlane.f32.xlu0 %v2746
  %v2748 = vpop.xlane.xlu0 %2747
  %v2749 = vsel %vm2349, %v2617, 0.0
  %2750 = vadd.xlane.f32.xlu0 %v2749
  %v2751 = vpop.xlane.xlu0 %2750
  %v2752 = vsel %vm2349, %v2619, 0.0
  %2753 = vadd.xlane.f32.xlu0 %v2752
  %v2754 = vpop.xlane.xlu0 %2753
  %v2755 = vsel %vm2349, %v2621, 0.0
  %2756 = vadd.xlane.f32.xlu0 %v2755
  %v2757 = vpop.xlane.xlu0 %2756
  %v2758 = vsel %vm2349, %v2623, 0.0
  %2759 = vadd.xlane.f32.xlu0 %v2758
  %v2760 = vpop.xlane.xlu0 %2759
  %v2761 = vsel %vm2349, %v2625, 0.0
  %2762 = vadd.xlane.f32.xlu0 %v2761
  %v2763 = vpop.xlane.xlu0 %2762
  %v2764 = vsel %vm2349, %v2627, 0.0
  %2765 = vadd.xlane.f32.xlu0 %v2764
  %v2766 = vpop.xlane.xlu0 %2765
  %v2767 = vsel %vm2349, %v2629, 0.0
  %2768 = vadd.xlane.f32.xlu0 %v2767
  %v2769 = vpop.xlane.xlu0 %2768
  %v2770 = vsel %vm2349, %v2631, 0.0
  %2771 = vadd.xlane.f32.xlu0 %v2770
  %v2772 = vpop.xlane.xlu0 %2771
  %v2773 = vsel %vm2349, %v2633, 0.0
  %2774 = vadd.xlane.f32.xlu0 %v2773
  %v2775 = vpop.xlane.xlu0 %2774
  %v2776 = vsel %vm2349, %v2635, 0.0
  %2777 = vadd.xlane.f32.xlu0 %v2776
  %v2778 = vpop.xlane.xlu0 %2777
  %v2779 = vsel %vm2349, %v2637, 0.0
  %2780 = vadd.xlane.f32.xlu0 %v2779
  %v2781 = vpop.xlane.xlu0 %2780
  %v2782 = vsel %vm2349, %v2639, 0.0
  %2783 = vadd.xlane.f32.xlu0 %v2782
  %v2784 = vpop.xlane.xlu0 %2783
  %v2785 = vsel %vm2349, %v2641, 0.0
  %2786 = vadd.xlane.f32.xlu0 %v2785
  %v2787 = vpop.xlane.xlu0 %2786
  %v2788 = vsel %vm2349, %v2643, 0.0
  %2789 = vadd.xlane.f32.xlu0 %v2788
  %v2790 = vpop.xlane.xlu0 %2789
  %v2791 = vsel %vm2349, %v2645, 0.0
  %2792 = vadd.xlane.f32.xlu0 %v2791
  %v2793 = vpop.xlane.xlu0 %2792
  %v2794 = vsel %vm2349, %v2647, 0.0
  %2795 = vadd.xlane.f32.xlu0 %v2794
  %v2796 = vpop.xlane.xlu0 %2795
  %v2797 = vsel %vm2349, %v2649, 0.0
  %2798 = vadd.xlane.f32.xlu0 %v2797
  %v2799 = vpop.xlane.xlu0 %2798
  %v2800 = vsel %vm2349, %v2651, 0.0
  %2801 = vadd.xlane.f32.xlu0 %v2800
  %v2802 = vpop.xlane.xlu0 %2801
  %v2803 = vsel %vm2349, %v2653, 0.0
  %2804 = vadd.xlane.f32.xlu0 %v2803
  %v2805 = vpop.xlane.xlu0 %2804
  %v2806 = vsel %vm2349, %v2655, 0.0
  %2807 = vadd.xlane.f32.xlu0 %v2806
  %v2808 = vpop.xlane.xlu0 %2807
  %v2809 = vsel %vm2349, %v2657, 0.0
  %2810 = vadd.xlane.f32.xlu0 %v2809
  %v2811 = vpop.xlane.xlu0 %2810
  %v2812 = vsel %vm2349, %v2659, 0.0
  %2813 = vadd.xlane.f32.xlu0 %v2812
  %v2814 = vpop.xlane.xlu0 %2813
  %v2815 = vsel %vm2349, %v2661, 0.0
  %2816 = vadd.xlane.f32.xlu0 %v2815
  %v2817 = vpop.xlane.xlu0 %2816
  %v2818 = vsel %vm2349, %v2663, 0.0
  %2819 = vadd.xlane.f32.xlu0 %v2818
  %v2820 = vpop.xlane.xlu0 %2819
  %v2821 = vsel %vm2349, %v2665, 0.0
  %2822 = vadd.xlane.f32.xlu0 %v2821
  %v2823 = vpop.xlane.xlu0 %2822
  %v2824 = vsel %vm2349, %v2667, 0.0
  %2825 = vadd.xlane.f32.xlu0 %v2824
  %v2826 = vpop.xlane.xlu0 %2825
  %v2827 = vsel %vm2349, %v2669, 0.0
  %2828 = vadd.xlane.f32.xlu0 %v2827
  %v2829 = vpop.xlane.xlu0 %2828
  %v2830 = vsel %vm2349, %v2671, 0.0
  %2831 = vadd.xlane.f32.xlu0 %v2830
  %v2832 = vpop.xlane.xlu0 %2831
  %v2833 = vsel %vm2349, %v2673, 0.0
  %2834 = vadd.xlane.f32.xlu0 %v2833
  %v2835 = vpop.xlane.xlu0 %2834
  %v2836 = vsel %vm2349, %v2675, 0.0
  %2837 = vadd.xlane.f32.xlu0 %v2836
  %v2838 = vpop.xlane.xlu0 %2837
  %v2839 = vsel %vm2349, %v2677, 0.0
  %2840 = vadd.xlane.f32.xlu0 %v2839
  %v2841 = vpop.xlane.xlu0 %2840
  %v2842 = vsel %vm2349, %v2679, 0.0
  %2843 = vadd.xlane.f32.xlu0 %v2842
  %v2844 = vpop.xlane.xlu0 %2843
  %v2845 = vsel %vm2349, %v2681, 0.0
  %2846 = vadd.xlane.f32.xlu0 %v2845
  %v2847 = vpop.xlane.xlu0 %2846
  %v2848 = vsel %vm2349, %v2683, 0.0
  %2849 = vadd.xlane.f32.xlu0 %v2848
  %v2850 = vpop.xlane.xlu0 %2849
  %v2851 = vsel %vm2349, %v2685, 0.0
  %2852 = vadd.xlane.f32.xlu0 %v2851
  %v2853 = vpop.xlane.xlu0 %2852
  %v2854 = vsel %vm2349, %v2687, 0.0
  %2855 = vadd.xlane.f32.xlu0 %v2854
  %v2856 = vpop.xlane.xlu0 %2855
  %v2857 = vsel %vm2349, %v2689, 0.0
  %2858 = vadd.xlane.f32.xlu0 %v2857
  %v2859 = vpop.xlane.xlu0 %2858
  %v2860 = vsel %vm2349, %v2691, 0.0
  %2861 = vadd.xlane.f32.xlu0 %v2860
  %v2862 = vpop.xlane.xlu0 %2861
  %v2863 = vsel %vm2349, %v2693, 0.0
  %2864 = vadd.xlane.f32.xlu0 %v2863
  %v2865 = vpop.xlane.xlu0 %2864
  %v2866 = vsel %vm2349, %v2695, 0.0
  %2867 = vadd.xlane.f32.xlu0 %v2866
  %v2868 = vpop.xlane.xlu0 %2867
  %v2869 = vsel %vm2349, %v2697, 0.0
  %2870 = vadd.xlane.f32.xlu0 %v2869
  %v2871 = vpop.xlane.xlu0 %2870
  %v2872 = vsel %vm2349, %v2699, 0.0
  %2873 = vadd.xlane.f32.xlu0 %v2872
  %v2874 = vpop.xlane.xlu0 %2873
  %v2875 = vsel %vm2349, %v2701, 0.0
  %2876 = vadd.xlane.f32.xlu0 %v2875
  %v2877 = vpop.xlane.xlu0 %2876
  %v2878 = vsel %vm2349, %v2703, 0.0
  %2879 = vadd.xlane.f32.xlu0 %v2878
  %v2880 = vpop.xlane.xlu0 %2879
  %v2881 = vsel %vm2349, %v2705, 0.0
  %2882 = vadd.xlane.f32.xlu0 %v2881
  %v2883 = vpop.xlane.xlu0 %2882
  %v2884 = vsel %vm2349, %v2707, 0.0
  %2885 = vadd.xlane.f32.xlu0 %v2884
  %v2886 = vpop.xlane.xlu0 %2885
  %v2887 = vsel %vm2349, %v2709, 0.0
  %2888 = vadd.xlane.f32.xlu0 %v2887
  %v2889 = vpop.xlane.xlu0 %2888
  %v2890 = vsel %vm2349, %v2711, 0.0
  %2891 = vadd.xlane.f32.xlu0 %v2890
  %v2892 = vpop.xlane.xlu0 %2891
  %v2893 = vsel %vm2349, %v2713, 0.0
  %2894 = vadd.xlane.f32.xlu0 %v2893
  %v2895 = vpop.xlane.xlu0 %2894
  %v2896 = vsel %vm2349, %v2715, 0.0
  %2897 = vadd.xlane.f32.xlu0 %v2896
  %v2898 = vpop.xlane.xlu0 %2897
  %v2899 = vsel %vm2349, %v2717, 0.0
  %2900 = vadd.xlane.f32.xlu0 %v2899
  %v2901 = vpop.xlane.xlu0 %2900
  %v2902 = vsel %vm2349, %v2719, 0.0
  %2903 = vadd.xlane.f32.xlu0 %v2902
  %v2904 = vpop.xlane.xlu0 %2903
  %v2905 = vsel %vm2349, %v2721, 0.0
  %2906 = vadd.xlane.f32.xlu0 %v2905
  %v2907 = vpop.xlane.xlu0 %2906
  %v2908 = vsel %vm2349, %v2723, 0.0
  %2909 = vadd.xlane.f32.xlu0 %v2908
  %v2910 = vpop.xlane.xlu0 %2909
  %v2911 = vsel %vm2349, %v2725, 0.0
  %2912 = vadd.xlane.f32.xlu0 %v2911
  %v2913 = vpop.xlane.xlu0 %2912
  %v2914 = vsel %vm2349, %v2727, 0.0
  %2915 = vadd.xlane.f32.xlu0 %v2914
  %v2916 = vpop.xlane.xlu0 %2915
  %v2917 = vsel %vm2349, %v2729, 0.0
  %2918 = vadd.xlane.f32.xlu0 %v2917
  %v2919 = vpop.xlane.xlu0 %2918
  %v2920 = vsel %vm2349, %v2731, 0.0
  %2921 = vadd.xlane.f32.xlu0 %v2920
  %v2922 = vpop.xlane.xlu0 %2921
  %v2923 = vsel %vm2349, %v2733, 0.0
  %2924 = vadd.xlane.f32.xlu0 %v2923
  %v2925 = vpop.xlane.xlu0 %2924
  %v2926 = vrcp.pop %v2736
  %v2927 = vmul.f32 %v2607, %v2926
  %v2928 = vrcp.pop %v2739
  %v2929 = vmul.f32 %v2609, %v2928
  %v2930 = vrcp.pop %v2742
  %v2931 = vmul.f32 %v2611, %v2930
  %v2932 = vrcp.pop %v2745
  %v2933 = vmul.f32 %v2613, %v2932
  %v2934 = vrcp.pop %v2748
  %v2935 = vmul.f32 %v2615, %v2934
  %v2936 = vrcp.pop %v2751
  %v2937 = vmul.f32 %v2617, %v2936
  %v2938 = vrcp.pop %v2754
  %v2939 = vmul.f32 %v2619, %v2938
  %v2940 = vrcp.pop %v2757
  %v2941 = vmul.f32 %v2621, %v2940
  %v2942 = vrcp.pop %v2760
  %v2943 = vmul.f32 %v2623, %v2942
  %v2944 = vrcp.pop %v2763
  %v2945 = vmul.f32 %v2625, %v2944
  %v2946 = vrcp.pop %v2766
  %v2947 = vmul.f32 %v2627, %v2946
  %v2948 = vrcp.pop %v2769
  %v2949 = vmul.f32 %v2629, %v2948
  %v2950 = vrcp.pop %v2772
  %v2951 = vmul.f32 %v2631, %v2950
  %v2952 = vrcp.pop %v2775
  %v2953 = vmul.f32 %v2633, %v2952
  %v2954 = vrcp.pop %v2778
  %v2955 = vmul.f32 %v2635, %v2954
  %v2956 = vrcp.pop %v2781
  %v2957 = vmul.f32 %v2637, %v2956
  %v2958 = vrcp.pop %v2784
  %v2959 = vmul.f32 %v2639, %v2958
  %v2960 = vrcp.pop %v2787
  %v2961 = vmul.f32 %v2641, %v2960
  %v2962 = vrcp.pop %v2790
  %v2963 = vmul.f32 %v2643, %v2962
  %v2964 = vrcp.pop %v2793
  %v2965 = vmul.f32 %v2645, %v2964
  %v2966 = vrcp.pop %v2796
  %v2967 = vmul.f32 %v2647, %v2966
  %v2968 = vrcp.pop %v2799
  %v2969 = vmul.f32 %v2649, %v2968
  %v2970 = vrcp.pop %v2802
  %v2971 = vmul.f32 %v2651, %v2970
  %v2972 = vrcp.pop %v2805
  %v2973 = vmul.f32 %v2653, %v2972
  %v2974 = vrcp.pop %v2808
  %v2975 = vmul.f32 %v2655, %v2974
  %v2976 = vrcp.pop %v2811
  %v2977 = vmul.f32 %v2657, %v2976
  %v2978 = vrcp.pop %v2814
  %v2979 = vmul.f32 %v2659, %v2978
  %v2980 = vrcp.pop %v2817
  %v2981 = vmul.f32 %v2661, %v2980
  %v2982 = vrcp.pop %v2820
  %v2983 = vmul.f32 %v2663, %v2982
  %v2984 = vrcp.pop %v2823
  %v2985 = vmul.f32 %v2665, %v2984
  %v2986 = vrcp.pop %v2826
  %v2987 = vmul.f32 %v2667, %v2986
  %v2988 = vrcp.pop %v2829
  %v2989 = vmul.f32 %v2669, %v2988
  %v2990 = vrcp.pop %v2832
  %v2991 = vmul.f32 %v2671, %v2990
  %v2992 = vrcp.pop %v2835
  %v2993 = vmul.f32 %v2673, %v2992
  %v2994 = vrcp.pop %v2838
  %v2995 = vmul.f32 %v2675, %v2994
  %v2996 = vrcp.pop %v2841
  %v2997 = vmul.f32 %v2677, %v2996
  %v2998 = vrcp.pop %v2844
  %v2999 = vmul.f32 %v2679, %v2998
  %v3000 = vrcp.pop %v2847
  %v3001 = vmul.f32 %v2681, %v3000
  %v3002 = vrcp.pop %v2850
  %v3003 = vmul.f32 %v2683, %v3002
  %v3004 = vrcp.pop %v2853
  %v3005 = vmul.f32 %v2685, %v3004
  %v3006 = vrcp.pop %v2856
  %v3007 = vmul.f32 %v2687, %v3006
  %v3008 = vrcp.pop %v2859
  %v3009 = vmul.f32 %v2689, %v3008
  %v3010 = vrcp.pop %v2862
  %v3011 = vmul.f32 %v2691, %v3010
  %v3012 = vrcp.pop %v2865
  %v3013 = vmul.f32 %v2693, %v3012
  %v3014 = vrcp.pop %v2868
  %v3015 = vmul.f32 %v2695, %v3014
  %v3016 = vrcp.pop %v2871
  %v3017 = vmul.f32 %v2697, %v3016
  %v3018 = vrcp.pop %v2874
  %v3019 = vmul.f32 %v2699, %v3018
  %v3020 = vrcp.pop %v2877
  %v3021 = vmul.f32 %v2701, %v3020
  %v3022 = vrcp.pop %v2880
  %v3023 = vmul.f32 %v2703, %v3022
  %v3024 = vrcp.pop %v2883
  %v3025 = vmul.f32 %v2705, %v3024
  %v3026 = vrcp.pop %v2886
  %v3027 = vmul.f32 %v2707, %v3026
  %v3028 = vrcp.pop %v2889
  %v3029 = vmul.f32 %v2709, %v3028
  %v3030 = vrcp.pop %v2892
  %v3031 = vmul.f32 %v2711, %v3030
  %v3032 = vrcp.pop %v2895
  %v3033 = vmul.f32 %v2713, %v3032
  %v3034 = vrcp.pop %v2898
  %v3035 = vmul.f32 %v2715, %v3034
  %v3036 = vrcp.pop %v2901
  %v3037 = vmul.f32 %v2717, %v3036
  %v3038 = vrcp.pop %v2904
  %v3039 = vmul.f32 %v2719, %v3038
  %v3040 = vrcp.pop %v2907
  %v3041 = vmul.f32 %v2721, %v3040
  %v3042 = vrcp.pop %v2910
  %v3043 = vmul.f32 %v2723, %v3042
  %v3044 = vrcp.pop %v2913
  %v3045 = vmul.f32 %v2725, %v3044
  %v3046 = vrcp.pop %v2916
  %v3047 = vmul.f32 %v2727, %v3046
  %v3048 = vrcp.pop %v2919
  %v3049 = vmul.f32 %v2729, %v3048
  %v3050 = vrcp.pop %v2922
  %v3051 = vmul.f32 %v2731, %v3050
  %v3052 = vrcp.pop %v2925
  %v3053 = vmul.f32 %v2733, %v3052
  %v3054 = vpack.c.bf16 %v2929, %v2927
  %v3055 = vpack.c.bf16 %v2933, %v2931
  %v3056 = vpack.c.bf16 %v2937, %v2935
  %v3057 = vpack.c.bf16 %v2941, %v2939
  %v3058 = vpack.c.bf16 %v2945, %v2943
  %v3059 = vpack.c.bf16 %v2949, %v2947
  %v3060 = vpack.c.bf16 %v2953, %v2951
  %v3061 = vpack.c.bf16 %v2957, %v2955
  %v3062 = vpack.c.bf16 %v2961, %v2959
  %v3063 = vpack.c.bf16 %v2965, %v2963
  %v3064 = vpack.c.bf16 %v2969, %v2967
  %v3065 = vpack.c.bf16 %v2973, %v2971
  %v3066 = vpack.c.bf16 %v2977, %v2975
  %v3067 = vpack.c.bf16 %v2981, %v2979
  %v3068 = vpack.c.bf16 %v2985, %v2983
  %v3069 = vpack.c.bf16 %v2989, %v2987
  %v3070 = vpack.c.bf16 %v2993, %v2991
  %v3071 = vpack.c.bf16 %v2997, %v2995
  %v3072 = vpack.c.bf16 %v3001, %v2999
  %v3073 = vpack.c.bf16 %v3005, %v3003
  %v3074 = vpack.c.bf16 %v3009, %v3007
  %v3075 = vpack.c.bf16 %v3013, %v3011
  %v3076 = vpack.c.bf16 %v3017, %v3015
  %v3077 = vpack.c.bf16 %v3021, %v3019
  %v3078 = vpack.c.bf16 %v3025, %v3023
  %v3079 = vpack.c.bf16 %v3029, %v3027
  %v3080 = vpack.c.bf16 %v3033, %v3031
  %v3081 = vpack.c.bf16 %v3037, %v3035
  %v3082 = vpack.c.bf16 %v3041, %v3039
  %v3083 = vpack.c.bf16 %v3045, %v3043
  %v3084 = vpack.c.bf16 %v3049, %v3047
  %v3085 = vpack.c.bf16 %v3053, %v3051
  %3086 = vrot.lane.b32.xlu0 %v1500, 64
  %v3087 = vpop.permute.xlu0 %3086
  %3088 = vrot.lane.b32.xlu0 %v1501, 64
  %v3089 = vpop.permute.xlu0 %3088
  %3090 = vrot.lane.b32.xlu0 %v1502, 64
  %v3091 = vpop.permute.xlu0 %3090
  %3092 = vrot.lane.b32.xlu0 %v1503, 64
  %v3093 = vpop.permute.xlu0 %3092
  %v3099 = vsel %vm2349, %v3054, 0
  %v3102 = vsel %vm2349, %v3055, 0
  %v3105 = vsel %vm2349, %v3056, 0
  %v3108 = vsel %vm2349, %v3057, 0
  %3110 = vmatprep.subr.bf16.mxu0 0
  %3111 = vmatpush1.bf16.msra.mxu0 0
  %3112 = vmatprep.subr.bf16.mxu0 0
  %3113 = vmatpush1.bf16.msra.mxu0 0
  %3114 = vmatprep.subr.bf16.mxu0 0
  %3115 = vmatpush1.bf16.msra.mxu0 0
  %3116 = vmatprep.subr.bf16.mxu0 0
  %3117 = vmatpush1.bf16.msra.mxu0 0
  %3118 = vmatprep.subr.bf16.mxu0 0
  %3119 = vmatpush1.bf16.msra.mxu0 %v3093
  %3120 = vmatprep.subr.bf16.mxu0 0
  %3121 = vmatpush1.bf16.msra.mxu0 %v3091
  %3122 = vmatprep.subr.bf16.mxu0 0
  %3123 = vmatpush1.bf16.msra.mxu0 %v3089
  %3124 = vmatprep.subr.bf16.mxu0 0
  %3125 = vmatpush1.bf16.msra.mxu0 %v3087
  %3126 = vmatprep.subr.bf16.mxu0 0
  %3127 = vmatpush2.bf16.msra.mxu0 0
  %3128 = vmatprep.subr.bf16.mxu0 0
  %3129 = vmatpush2.bf16.msra.mxu0 0
  %3130 = vmatprep.subr.bf16.mxu0 0
  %3131 = vmatpush2.bf16.msra.mxu0 0
  %3132 = vmatprep.subr.bf16.mxu0 0
  %3133 = vmatpush2.bf16.msra.mxu0 0
  %3134 = vmatprep.subr.bf16.mxu0 0
  %3135 = vmatpush2.bf16.msra.mxu0 0
  %3136 = vmatprep.subr.bf16.mxu0 0
  %3137 = vmatpush2.bf16.msra.mxu0 0
  %3138 = vmatprep.subr.bf16.mxu0 0
  %3139 = vmatpush2.bf16.msra.mxu0 0
  %3140 = vmatprep.subr.bf16.mxu0 0
  %3141 = vmatpush2.bf16.msra.mxu0 0
  %3142 = vmatprep.mubr.bf16.mxu0 0
  %3143 = vmatmul.mubr.bf16.gmra.mxu0 %v3099
  %v3144 = vpop.f32.mrf.mxu0
  %v3145 = vadd.f32 0.0, %v3144
  %v3146 = vpop.f32.mrf.mxu0
  %v3147 = vpop.f32.mrf.mxu0
  %v3148 = vadd.f32 0.0, %v3147
  %v3149 = vpop.f32.mrf.mxu0
  %3150 = vmatprep.mubr.bf16.mxu0 0
  %3151 = vmatmul.mubr.bf16.gmra.mxu0 %v3102
  %v3152 = vpop.f32.mrf.mxu0
  %v3153 = vadd.f32 0.0, %v3152
  %v3154 = vpop.f32.mrf.mxu0
  %v3155 = vpop.f32.mrf.mxu0
  %v3156 = vadd.f32 0.0, %v3155
  %v3157 = vpop.f32.mrf.mxu0
  %3158 = vmatprep.mubr.bf16.mxu0 0
  %3159 = vmatmul.mubr.bf16.gmra.mxu0 %v3105
  %v3160 = vpop.f32.mrf.mxu0
  %v3161 = vadd.f32 0.0, %v3160
  %v3162 = vpop.f32.mrf.mxu0
  %v3163 = vpop.f32.mrf.mxu0
  %v3164 = vadd.f32 0.0, %v3163
  %v3165 = vpop.f32.mrf.mxu0
  %3166 = vmatprep.mubr.bf16.mxu0 0
  %3167 = vmatmul.mubr.bf16.gmra.mxu0 %v3108
  %v3168 = vpop.f32.mrf.mxu0
  %v3169 = vadd.f32 0.0, %v3168
  %v3170 = vpop.f32.mrf.mxu0
  %v3171 = vpop.f32.mrf.mxu0
  %v3172 = vadd.f32 0.0, %v3171
  %v3173 = vpop.f32.mrf.mxu0
  %3174 = vdwg.mxu0
  %3175 = vrot.lane.b32.xlu0 %v1504, 64
  %v3176 = vpop.permute.xlu0 %3175
  %3177 = vrot.lane.b32.xlu0 %v1505, 64
  %v3178 = vpop.permute.xlu0 %3177
  %3179 = vrot.lane.b32.xlu0 %v1506, 64
  %v3180 = vpop.permute.xlu0 %3179
  %3181 = vrot.lane.b32.xlu0 %v1507, 64
  %v3182 = vpop.permute.xlu0 %3181
  %v3188 = vsel %vm2349, %v3058, 0
  %v3191 = vsel %vm2349, %v3059, 0
  %v3194 = vsel %vm2349, %v3060, 0
  %v3197 = vsel %vm2349, %v3061, 0
  %3199 = vmatprep.subr.bf16.mxu0 0
  %3200 = vmatpush1.bf16.msra.mxu0 0
  %3201 = vmatprep.subr.bf16.mxu0 0
  %3202 = vmatpush1.bf16.msra.mxu0 0
  %3203 = vmatprep.subr.bf16.mxu0 0
  %3204 = vmatpush1.bf16.msra.mxu0 0
  %3205 = vmatprep.subr.bf16.mxu0 0
  %3206 = vmatpush1.bf16.msra.mxu0 0
  %3207 = vmatprep.subr.bf16.mxu0 0
  %3208 = vmatpush1.bf16.msra.mxu0 %v3182
  %3209 = vmatprep.subr.bf16.mxu0 0
  %3210 = vmatpush1.bf16.msra.mxu0 %v3180
  %3211 = vmatprep.subr.bf16.mxu0 0
  %3212 = vmatpush1.bf16.msra.mxu0 %v3178
  %3213 = vmatprep.subr.bf16.mxu0 0
  %3214 = vmatpush1.bf16.msra.mxu0 %v3176
  %3215 = vmatprep.subr.bf16.mxu0 0
  %3216 = vmatpush2.bf16.msra.mxu0 0
  %3217 = vmatprep.subr.bf16.mxu0 0
  %3218 = vmatpush2.bf16.msra.mxu0 0
  %3219 = vmatprep.subr.bf16.mxu0 0
  %3220 = vmatpush2.bf16.msra.mxu0 0
  %3221 = vmatprep.subr.bf16.mxu0 0
  %3222 = vmatpush2.bf16.msra.mxu0 0
  %3223 = vmatprep.subr.bf16.mxu0 0
  %3224 = vmatpush2.bf16.msra.mxu0 0
  %3225 = vmatprep.subr.bf16.mxu0 0
  %3226 = vmatpush2.bf16.msra.mxu0 0
  %3227 = vmatprep.subr.bf16.mxu0 0
  %3228 = vmatpush2.bf16.msra.mxu0 0
  %3229 = vmatprep.subr.bf16.mxu0 0
  %3230 = vmatpush2.bf16.msra.mxu0 0
  %3231 = vmatprep.mubr.bf16.mxu0 0
  %3232 = vmatmul.mubr.bf16.gmra.mxu0 %v3188
  %v3233 = vpop.f32.mrf.mxu0
  %v3234 = vadd.f32 0.0, %v3233
  %v3235 = vpop.f32.mrf.mxu0
  %v3236 = vpop.f32.mrf.mxu0
  %v3237 = vadd.f32 0.0, %v3236
  %v3238 = vpop.f32.mrf.mxu0
  %3239 = vmatprep.mubr.bf16.mxu0 0
  %3240 = vmatmul.mubr.bf16.gmra.mxu0 %v3191
  %v3241 = vpop.f32.mrf.mxu0
  %v3242 = vadd.f32 0.0, %v3241
  %v3243 = vpop.f32.mrf.mxu0
  %v3244 = vpop.f32.mrf.mxu0
  %v3245 = vadd.f32 0.0, %v3244
  %v3246 = vpop.f32.mrf.mxu0
  %3247 = vmatprep.mubr.bf16.mxu0 0
  %3248 = vmatmul.mubr.bf16.gmra.mxu0 %v3194
  %v3249 = vpop.f32.mrf.mxu0
  %v3250 = vadd.f32 0.0, %v3249
  %v3251 = vpop.f32.mrf.mxu0
  %v3252 = vpop.f32.mrf.mxu0
  %v3253 = vadd.f32 0.0, %v3252
  %v3254 = vpop.f32.mrf.mxu0
  %3255 = vmatprep.mubr.bf16.mxu0 0
  %3256 = vmatmul.mubr.bf16.gmra.mxu0 %v3197
  %v3257 = vpop.f32.mrf.mxu0
  %v3258 = vadd.f32 0.0, %v3257
  %v3259 = vpop.f32.mrf.mxu0
  %v3260 = vpop.f32.mrf.mxu0
  %v3261 = vadd.f32 0.0, %v3260
  %v3262 = vpop.f32.mrf.mxu0
  %3263 = vdwg.mxu0
  %3264 = vrot.lane.b32.xlu0 %v1508, 64
  %v3265 = vpop.permute.xlu0 %3264
  %3266 = vrot.lane.b32.xlu0 %v1509, 64
  %v3267 = vpop.permute.xlu0 %3266
  %3268 = vrot.lane.b32.xlu0 %v1510, 64
  %v3269 = vpop.permute.xlu0 %3268
  %3270 = vrot.lane.b32.xlu0 %v1511, 64
  %v3271 = vpop.permute.xlu0 %3270
  %v3277 = vsel %vm2349, %v3062, 0
  %v3280 = vsel %vm2349, %v3063, 0
  %v3283 = vsel %vm2349, %v3064, 0
  %v3286 = vsel %vm2349, %v3065, 0
  %3288 = vmatprep.subr.bf16.mxu0 0
  %3289 = vmatpush1.bf16.msra.mxu0 0
  %3290 = vmatprep.subr.bf16.mxu0 0
  %3291 = vmatpush1.bf16.msra.mxu0 0
  %3292 = vmatprep.subr.bf16.mxu0 0
  %3293 = vmatpush1.bf16.msra.mxu0 0
  %3294 = vmatprep.subr.bf16.mxu0 0
  %3295 = vmatpush1.bf16.msra.mxu0 0
  %3296 = vmatprep.subr.bf16.mxu0 0
  %3297 = vmatpush1.bf16.msra.mxu0 %v3271
  %3298 = vmatprep.subr.bf16.mxu0 0
  %3299 = vmatpush1.bf16.msra.mxu0 %v3269
  %3300 = vmatprep.subr.bf16.mxu0 0
  %3301 = vmatpush1.bf16.msra.mxu0 %v3267
  %3302 = vmatprep.subr.bf16.mxu0 0
  %3303 = vmatpush1.bf16.msra.mxu0 %v3265
  %3304 = vmatprep.subr.bf16.mxu0 0
  %3305 = vmatpush2.bf16.msra.mxu0 0
  %3306 = vmatprep.subr.bf16.mxu0 0
  %3307 = vmatpush2.bf16.msra.mxu0 0
  %3308 = vmatprep.subr.bf16.mxu0 0
  %3309 = vmatpush2.bf16.msra.mxu0 0
  %3310 = vmatprep.subr.bf16.mxu0 0
  %3311 = vmatpush2.bf16.msra.mxu0 0
  %3312 = vmatprep.subr.bf16.mxu0 0
  %3313 = vmatpush2.bf16.msra.mxu0 0
  %3314 = vmatprep.subr.bf16.mxu0 0
  %3315 = vmatpush2.bf16.msra.mxu0 0
  %3316 = vmatprep.subr.bf16.mxu0 0
  %3317 = vmatpush2.bf16.msra.mxu0 0
  %3318 = vmatprep.subr.bf16.mxu0 0
  %3319 = vmatpush2.bf16.msra.mxu0 0
  %3320 = vmatprep.mubr.bf16.mxu0 0
  %3321 = vmatmul.mubr.bf16.gmra.mxu0 %v3277
  %v3322 = vpop.f32.mrf.mxu0
  %v3323 = vadd.f32 0.0, %v3322
  %v3324 = vpop.f32.mrf.mxu0
  %v3325 = vpop.f32.mrf.mxu0
  %v3326 = vadd.f32 0.0, %v3325
  %v3327 = vpop.f32.mrf.mxu0
  %3328 = vmatprep.mubr.bf16.mxu0 0
  %3329 = vmatmul.mubr.bf16.gmra.mxu0 %v3280
  %v3330 = vpop.f32.mrf.mxu0
  %v3331 = vadd.f32 0.0, %v3330
  %v3332 = vpop.f32.mrf.mxu0
  %v3333 = vpop.f32.mrf.mxu0
  %v3334 = vadd.f32 0.0, %v3333
  %v3335 = vpop.f32.mrf.mxu0
  %3336 = vmatprep.mubr.bf16.mxu0 0
  %3337 = vmatmul.mubr.bf16.gmra.mxu0 %v3283
  %v3338 = vpop.f32.mrf.mxu0
  %v3339 = vadd.f32 0.0, %v3338
  %v3340 = vpop.f32.mrf.mxu0
  %v3341 = vpop.f32.mrf.mxu0
  %v3342 = vadd.f32 0.0, %v3341
  %v3343 = vpop.f32.mrf.mxu0
  %3344 = vmatprep.mubr.bf16.mxu0 0
  %3345 = vmatmul.mubr.bf16.gmra.mxu0 %v3286
  %v3346 = vpop.f32.mrf.mxu0
  %v3347 = vadd.f32 0.0, %v3346
  %v3348 = vpop.f32.mrf.mxu0
  %v3349 = vpop.f32.mrf.mxu0
  %v3350 = vadd.f32 0.0, %v3349
  %v3351 = vpop.f32.mrf.mxu0
  %3352 = vdwg.mxu0
  %3353 = vrot.lane.b32.xlu0 %v1512, 64
  %v3354 = vpop.permute.xlu0 %3353
  %3355 = vrot.lane.b32.xlu0 %v1513, 64
  %v3356 = vpop.permute.xlu0 %3355
  %3357 = vrot.lane.b32.xlu0 %v1514, 64
  %v3358 = vpop.permute.xlu0 %3357
  %3359 = vrot.lane.b32.xlu0 %v1515, 64
  %v3360 = vpop.permute.xlu0 %3359
  %v3366 = vsel %vm2349, %v3066, 0
  %v3369 = vsel %vm2349, %v3067, 0
  %v3372 = vsel %vm2349, %v3068, 0
  %v3375 = vsel %vm2349, %v3069, 0
  %3377 = vmatprep.subr.bf16.mxu0 0
  %3378 = vmatpush1.bf16.msra.mxu0 0
  %3379 = vmatprep.subr.bf16.mxu0 0
  %3380 = vmatpush1.bf16.msra.mxu0 0
  %3381 = vmatprep.subr.bf16.mxu0 0
  %3382 = vmatpush1.bf16.msra.mxu0 0
  %3383 = vmatprep.subr.bf16.mxu0 0
  %3384 = vmatpush1.bf16.msra.mxu0 0
  %3385 = vmatprep.subr.bf16.mxu0 0
  %3386 = vmatpush1.bf16.msra.mxu0 %v3360
  %3387 = vmatprep.subr.bf16.mxu0 0
  %3388 = vmatpush1.bf16.msra.mxu0 %v3358
  %3389 = vmatprep.subr.bf16.mxu0 0
  %3390 = vmatpush1.bf16.msra.mxu0 %v3356
  %3391 = vmatprep.subr.bf16.mxu0 0
  %3392 = vmatpush1.bf16.msra.mxu0 %v3354
  %3393 = vmatprep.subr.bf16.mxu0 0
  %3394 = vmatpush2.bf16.msra.mxu0 0
  %3395 = vmatprep.subr.bf16.mxu0 0
  %3396 = vmatpush2.bf16.msra.mxu0 0
  %3397 = vmatprep.subr.bf16.mxu0 0
  %3398 = vmatpush2.bf16.msra.mxu0 0
  %3399 = vmatprep.subr.bf16.mxu0 0
  %3400 = vmatpush2.bf16.msra.mxu0 0
  %3401 = vmatprep.subr.bf16.mxu0 0
  %3402 = vmatpush2.bf16.msra.mxu0 0
  %3403 = vmatprep.subr.bf16.mxu0 0
  %3404 = vmatpush2.bf16.msra.mxu0 0
  %3405 = vmatprep.subr.bf16.mxu0 0
  %3406 = vmatpush2.bf16.msra.mxu0 0
  %3407 = vmatprep.subr.bf16.mxu0 0
  %3408 = vmatpush2.bf16.msra.mxu0 0
  %3409 = vmatprep.mubr.bf16.mxu0 0
  %3410 = vmatmul.mubr.bf16.gmra.mxu0 %v3366
  %v3411 = vpop.f32.mrf.mxu0
  %v3412 = vadd.f32 0.0, %v3411
  %v3413 = vpop.f32.mrf.mxu0
  %v3414 = vpop.f32.mrf.mxu0
  %v3415 = vadd.f32 0.0, %v3414
  %v3416 = vpop.f32.mrf.mxu0
  %3417 = vmatprep.mubr.bf16.mxu0 0
  %3418 = vmatmul.mubr.bf16.gmra.mxu0 %v3369
  %v3419 = vpop.f32.mrf.mxu0
  %v3420 = vadd.f32 0.0, %v3419
  %v3421 = vpop.f32.mrf.mxu0
  %v3422 = vpop.f32.mrf.mxu0
  %v3423 = vadd.f32 0.0, %v3422
  %v3424 = vpop.f32.mrf.mxu0
  %3425 = vmatprep.mubr.bf16.mxu0 0
  %3426 = vmatmul.mubr.bf16.gmra.mxu0 %v3372
  %v3427 = vpop.f32.mrf.mxu0
  %v3428 = vadd.f32 0.0, %v3427
  %v3429 = vpop.f32.mrf.mxu0
  %v3430 = vpop.f32.mrf.mxu0
  %v3431 = vadd.f32 0.0, %v3430
  %v3432 = vpop.f32.mrf.mxu0
  %3433 = vmatprep.mubr.bf16.mxu0 0
  %3434 = vmatmul.mubr.bf16.gmra.mxu0 %v3375
  %v3435 = vpop.f32.mrf.mxu0
  %v3436 = vadd.f32 0.0, %v3435
  %v3437 = vpop.f32.mrf.mxu0
  %v3438 = vpop.f32.mrf.mxu0
  %v3439 = vadd.f32 0.0, %v3438
  %v3440 = vpop.f32.mrf.mxu0
  %3441 = vdwg.mxu0
  %3442 = vrot.lane.b32.xlu0 %v1516, 64
  %v3443 = vpop.permute.xlu0 %3442
  %3444 = vrot.lane.b32.xlu0 %v1517, 64
  %v3445 = vpop.permute.xlu0 %3444
  %3446 = vrot.lane.b32.xlu0 %v1518, 64
  %v3447 = vpop.permute.xlu0 %3446
  %3448 = vrot.lane.b32.xlu0 %v1519, 64
  %v3449 = vpop.permute.xlu0 %3448
  %v3455 = vsel %vm2349, %v3070, 0
  %v3458 = vsel %vm2349, %v3071, 0
  %v3461 = vsel %vm2349, %v3072, 0
  %v3464 = vsel %vm2349, %v3073, 0
  %3466 = vmatprep.subr.bf16.mxu0 0
  %3467 = vmatpush1.bf16.msra.mxu0 0
  %3468 = vmatprep.subr.bf16.mxu0 0
  %3469 = vmatpush1.bf16.msra.mxu0 0
  %3470 = vmatprep.subr.bf16.mxu0 0
  %3471 = vmatpush1.bf16.msra.mxu0 0
  %3472 = vmatprep.subr.bf16.mxu0 0
  %3473 = vmatpush1.bf16.msra.mxu0 0
  %3474 = vmatprep.subr.bf16.mxu0 0
  %3475 = vmatpush1.bf16.msra.mxu0 %v3449
  %3476 = vmatprep.subr.bf16.mxu0 0
  %3477 = vmatpush1.bf16.msra.mxu0 %v3447
  %3478 = vmatprep.subr.bf16.mxu0 0
  %3479 = vmatpush1.bf16.msra.mxu0 %v3445
  %3480 = vmatprep.subr.bf16.mxu0 0
  %3481 = vmatpush1.bf16.msra.mxu0 %v3443
  %3482 = vmatprep.subr.bf16.mxu0 0
  %3483 = vmatpush2.bf16.msra.mxu0 0
  %3484 = vmatprep.subr.bf16.mxu0 0
  %3485 = vmatpush2.bf16.msra.mxu0 0
  %3486 = vmatprep.subr.bf16.mxu0 0
  %3487 = vmatpush2.bf16.msra.mxu0 0
  %3488 = vmatprep.subr.bf16.mxu0 0
  %3489 = vmatpush2.bf16.msra.mxu0 0
  %3490 = vmatprep.subr.bf16.mxu0 0
  %3491 = vmatpush2.bf16.msra.mxu0 0
  %3492 = vmatprep.subr.bf16.mxu0 0
  %3493 = vmatpush2.bf16.msra.mxu0 0
  %3494 = vmatprep.subr.bf16.mxu0 0
  %3495 = vmatpush2.bf16.msra.mxu0 0
  %3496 = vmatprep.subr.bf16.mxu0 0
  %3497 = vmatpush2.bf16.msra.mxu0 0
  %3498 = vmatprep.mubr.bf16.mxu0 0
  %3499 = vmatmul.mubr.bf16.gmra.mxu0 %v3455
  %v3500 = vpop.f32.mrf.mxu0
  %v3501 = vadd.f32 0.0, %v3500
  %v3502 = vpop.f32.mrf.mxu0
  %v3503 = vpop.f32.mrf.mxu0
  %v3504 = vadd.f32 0.0, %v3503
  %v3505 = vpop.f32.mrf.mxu0
  %3506 = vmatprep.mubr.bf16.mxu0 0
  %3507 = vmatmul.mubr.bf16.gmra.mxu0 %v3458
  %v3508 = vpop.f32.mrf.mxu0
  %v3509 = vadd.f32 0.0, %v3508
  %v3510 = vpop.f32.mrf.mxu0
  %v3511 = vpop.f32.mrf.mxu0
  %v3512 = vadd.f32 0.0, %v3511
  %v3513 = vpop.f32.mrf.mxu0
  %3514 = vmatprep.mubr.bf16.mxu0 0
  %3515 = vmatmul.mubr.bf16.gmra.mxu0 %v3461
  %v3516 = vpop.f32.mrf.mxu0
  %v3517 = vadd.f32 0.0, %v3516
  %v3518 = vpop.f32.mrf.mxu0
  %v3519 = vpop.f32.mrf.mxu0
  %v3520 = vadd.f32 0.0, %v3519
  %v3521 = vpop.f32.mrf.mxu0
  %3522 = vmatprep.mubr.bf16.mxu0 0
  %3523 = vmatmul.mubr.bf16.gmra.mxu0 %v3464
  %v3524 = vpop.f32.mrf.mxu0
  %v3525 = vadd.f32 0.0, %v3524
  %v3526 = vpop.f32.mrf.mxu0
  %v3527 = vpop.f32.mrf.mxu0
  %v3528 = vadd.f32 0.0, %v3527
  %v3529 = vpop.f32.mrf.mxu0
  %3530 = vdwg.mxu0
  %3531 = vrot.lane.b32.xlu0 %v1520, 64
  %v3532 = vpop.permute.xlu0 %3531
  %3533 = vrot.lane.b32.xlu0 %v1521, 64
  %v3534 = vpop.permute.xlu0 %3533
  %3535 = vrot.lane.b32.xlu0 %v1522, 64
  %v3536 = vpop.permute.xlu0 %3535
  %3537 = vrot.lane.b32.xlu0 %v1523, 64
  %v3538 = vpop.permute.xlu0 %3537
  %v3544 = vsel %vm2349, %v3074, 0
  %v3547 = vsel %vm2349, %v3075, 0
  %v3550 = vsel %vm2349, %v3076, 0
  %v3553 = vsel %vm2349, %v3077, 0
  %3555 = vmatprep.subr.bf16.mxu0 0
  %3556 = vmatpush1.bf16.msra.mxu0 0
  %3557 = vmatprep.subr.bf16.mxu0 0
  %3558 = vmatpush1.bf16.msra.mxu0 0
  %3559 = vmatprep.subr.bf16.mxu0 0
  %3560 = vmatpush1.bf16.msra.mxu0 0
  %3561 = vmatprep.subr.bf16.mxu0 0
  %3562 = vmatpush1.bf16.msra.mxu0 0
  %3563 = vmatprep.subr.bf16.mxu0 0
  %3564 = vmatpush1.bf16.msra.mxu0 %v3538
  %3565 = vmatprep.subr.bf16.mxu0 0
  %3566 = vmatpush1.bf16.msra.mxu0 %v3536
  %3567 = vmatprep.subr.bf16.mxu0 0
  %3568 = vmatpush1.bf16.msra.mxu0 %v3534
  %3569 = vmatprep.subr.bf16.mxu0 0
  %3570 = vmatpush1.bf16.msra.mxu0 %v3532
  %3571 = vmatprep.subr.bf16.mxu0 0
  %3572 = vmatpush2.bf16.msra.mxu0 0
  %3573 = vmatprep.subr.bf16.mxu0 0
  %3574 = vmatpush2.bf16.msra.mxu0 0
  %3575 = vmatprep.subr.bf16.mxu0 0
  %3576 = vmatpush2.bf16.msra.mxu0 0
  %3577 = vmatprep.subr.bf16.mxu0 0
  %3578 = vmatpush2.bf16.msra.mxu0 0
  %3579 = vmatprep.subr.bf16.mxu0 0
  %3580 = vmatpush2.bf16.msra.mxu0 0
  %3581 = vmatprep.subr.bf16.mxu0 0
  %3582 = vmatpush2.bf16.msra.mxu0 0
  %3583 = vmatprep.subr.bf16.mxu0 0
  %3584 = vmatpush2.bf16.msra.mxu0 0
  %3585 = vmatprep.subr.bf16.mxu0 0
  %3586 = vmatpush2.bf16.msra.mxu0 0
  %3587 = vmatprep.mubr.bf16.mxu0 0
  %3588 = vmatmul.mubr.bf16.gmra.mxu0 %v3544
  %v3589 = vpop.f32.mrf.mxu0
  %v3590 = vadd.f32 0.0, %v3589
  %v3591 = vpop.f32.mrf.mxu0
  %v3592 = vpop.f32.mrf.mxu0
  %v3593 = vadd.f32 0.0, %v3592
  %v3594 = vpop.f32.mrf.mxu0
  %3595 = vmatprep.mubr.bf16.mxu0 0
  %3596 = vmatmul.mubr.bf16.gmra.mxu0 %v3547
  %v3597 = vpop.f32.mrf.mxu0
  %v3598 = vadd.f32 0.0, %v3597
  %v3599 = vpop.f32.mrf.mxu0
  %v3600 = vpop.f32.mrf.mxu0
  %v3601 = vadd.f32 0.0, %v3600
  %v3602 = vpop.f32.mrf.mxu0
  %3603 = vmatprep.mubr.bf16.mxu0 0
  %3604 = vmatmul.mubr.bf16.gmra.mxu0 %v3550
  %v3605 = vpop.f32.mrf.mxu0
  %v3606 = vadd.f32 0.0, %v3605
  %v3607 = vpop.f32.mrf.mxu0
  %v3608 = vpop.f32.mrf.mxu0
  %v3609 = vadd.f32 0.0, %v3608
  %v3610 = vpop.f32.mrf.mxu0
  %3611 = vmatprep.mubr.bf16.mxu0 0
  %3612 = vmatmul.mubr.bf16.gmra.mxu0 %v3553
  %v3613 = vpop.f32.mrf.mxu0
  %v3614 = vadd.f32 0.0, %v3613
  %v3615 = vpop.f32.mrf.mxu0
  %v3616 = vpop.f32.mrf.mxu0
  %v3617 = vadd.f32 0.0, %v3616
  %v3618 = vpop.f32.mrf.mxu0
  %3619 = vdwg.mxu0
  %3620 = vrot.lane.b32.xlu0 %v1524, 64
  %v3621 = vpop.permute.xlu0 %3620
  %3622 = vrot.lane.b32.xlu0 %v1525, 64
  %v3623 = vpop.permute.xlu0 %3622
  %3624 = vrot.lane.b32.xlu0 %v1526, 64
  %v3625 = vpop.permute.xlu0 %3624
  %3626 = vrot.lane.b32.xlu0 %v1527, 64
  %v3627 = vpop.permute.xlu0 %3626
  %v3633 = vsel %vm2349, %v3078, 0
  %v3636 = vsel %vm2349, %v3079, 0
  %v3639 = vsel %vm2349, %v3080, 0
  %v3642 = vsel %vm2349, %v3081, 0
  %3644 = vmatprep.subr.bf16.mxu0 0
  %3645 = vmatpush1.bf16.msra.mxu0 0
  %3646 = vmatprep.subr.bf16.mxu0 0
  %3647 = vmatpush1.bf16.msra.mxu0 0
  %3648 = vmatprep.subr.bf16.mxu0 0
  %3649 = vmatpush1.bf16.msra.mxu0 0
  %3650 = vmatprep.subr.bf16.mxu0 0
  %3651 = vmatpush1.bf16.msra.mxu0 0
  %3652 = vmatprep.subr.bf16.mxu0 0
  %3653 = vmatpush1.bf16.msra.mxu0 %v3627
  %3654 = vmatprep.subr.bf16.mxu0 0
  %3655 = vmatpush1.bf16.msra.mxu0 %v3625
  %3656 = vmatprep.subr.bf16.mxu0 0
  %3657 = vmatpush1.bf16.msra.mxu0 %v3623
  %3658 = vmatprep.subr.bf16.mxu0 0
  %3659 = vmatpush1.bf16.msra.mxu0 %v3621
  %3660 = vmatprep.subr.bf16.mxu0 0
  %3661 = vmatpush2.bf16.msra.mxu0 0
  %3662 = vmatprep.subr.bf16.mxu0 0
  %3663 = vmatpush2.bf16.msra.mxu0 0
  %3664 = vmatprep.subr.bf16.mxu0 0
  %3665 = vmatpush2.bf16.msra.mxu0 0
  %3666 = vmatprep.subr.bf16.mxu0 0
  %3667 = vmatpush2.bf16.msra.mxu0 0
  %3668 = vmatprep.subr.bf16.mxu0 0
  %3669 = vmatpush2.bf16.msra.mxu0 0
  %3670 = vmatprep.subr.bf16.mxu0 0
  %3671 = vmatpush2.bf16.msra.mxu0 0
  %3672 = vmatprep.subr.bf16.mxu0 0
  %3673 = vmatpush2.bf16.msra.mxu0 0
  %3674 = vmatprep.subr.bf16.mxu0 0
  %3675 = vmatpush2.bf16.msra.mxu0 0
  %3676 = vmatprep.mubr.bf16.mxu0 0
  %3677 = vmatmul.mubr.bf16.gmra.mxu0 %v3633
  %v3678 = vpop.f32.mrf.mxu0
  %v3679 = vadd.f32 0.0, %v3678
  %v3680 = vpop.f32.mrf.mxu0
  %v3681 = vpop.f32.mrf.mxu0
  %v3682 = vadd.f32 0.0, %v3681
  %v3683 = vpop.f32.mrf.mxu0
  %3684 = vmatprep.mubr.bf16.mxu0 0
  %3685 = vmatmul.mubr.bf16.gmra.mxu0 %v3636
  %v3686 = vpop.f32.mrf.mxu0
  %v3687 = vadd.f32 0.0, %v3686
  %v3688 = vpop.f32.mrf.mxu0
  %v3689 = vpop.f32.mrf.mxu0
  %v3690 = vadd.f32 0.0, %v3689
  %v3691 = vpop.f32.mrf.mxu0
  %3692 = vmatprep.mubr.bf16.mxu0 0
  %3693 = vmatmul.mubr.bf16.gmra.mxu0 %v3639
  %v3694 = vpop.f32.mrf.mxu0
  %v3695 = vadd.f32 0.0, %v3694
  %v3696 = vpop.f32.mrf.mxu0
  %v3697 = vpop.f32.mrf.mxu0
  %v3698 = vadd.f32 0.0, %v3697
  %v3699 = vpop.f32.mrf.mxu0
  %3700 = vmatprep.mubr.bf16.mxu0 0
  %3701 = vmatmul.mubr.bf16.gmra.mxu0 %v3642
  %v3702 = vpop.f32.mrf.mxu0
  %v3703 = vadd.f32 0.0, %v3702
  %v3704 = vpop.f32.mrf.mxu0
  %v3705 = vpop.f32.mrf.mxu0
  %v3706 = vadd.f32 0.0, %v3705
  %v3707 = vpop.f32.mrf.mxu0
  %3708 = vdwg.mxu0
  %3709 = vrot.lane.b32.xlu0 %v1528, 64
  %v3710 = vpop.permute.xlu0 %3709
  %3711 = vrot.lane.b32.xlu0 %v1529, 64
  %v3712 = vpop.permute.xlu0 %3711
  %3713 = vrot.lane.b32.xlu0 %v1530, 64
  %v3714 = vpop.permute.xlu0 %3713
  %3715 = vrot.lane.b32.xlu0 %v1531, 64
  %v3716 = vpop.permute.xlu0 %3715
  %v3722 = vsel %vm2349, %v3082, 0
  %v3725 = vsel %vm2349, %v3083, 0
  %v3728 = vsel %vm2349, %v3084, 0
  %v3731 = vsel %vm2349, %v3085, 0
  %3733 = vmatprep.subr.bf16.mxu0 0
  %3734 = vmatpush1.bf16.msra.mxu0 0
  %3735 = vmatprep.subr.bf16.mxu0 0
  %3736 = vmatpush1.bf16.msra.mxu0 0
  %3737 = vmatprep.subr.bf16.mxu0 0
  %3738 = vmatpush1.bf16.msra.mxu0 0
  %3739 = vmatprep.subr.bf16.mxu0 0
  %3740 = vmatpush1.bf16.msra.mxu0 0
  %3741 = vmatprep.subr.bf16.mxu0 0
  %3742 = vmatpush1.bf16.msra.mxu0 %v3716
  %3743 = vmatprep.subr.bf16.mxu0 0
  %3744 = vmatpush1.bf16.msra.mxu0 %v3714
  %3745 = vmatprep.subr.bf16.mxu0 0
  %3746 = vmatpush1.bf16.msra.mxu0 %v3712
  %3747 = vmatprep.subr.bf16.mxu0 0
  %3748 = vmatpush1.bf16.msra.mxu0 %v3710
  %3749 = vmatprep.subr.bf16.mxu0 0
  %3750 = vmatpush2.bf16.msra.mxu0 0
  %3751 = vmatprep.subr.bf16.mxu0 0
  %3752 = vmatpush2.bf16.msra.mxu0 0
  %3753 = vmatprep.subr.bf16.mxu0 0
  %3754 = vmatpush2.bf16.msra.mxu0 0
  %3755 = vmatprep.subr.bf16.mxu0 0
  %3756 = vmatpush2.bf16.msra.mxu0 0
  %3757 = vmatprep.subr.bf16.mxu0 0
  %3758 = vmatpush2.bf16.msra.mxu0 0
  %3759 = vmatprep.subr.bf16.mxu0 0
  %3760 = vmatpush2.bf16.msra.mxu0 0
  %3761 = vmatprep.subr.bf16.mxu0 0
  %3762 = vmatpush2.bf16.msra.mxu0 0
  %3763 = vmatprep.subr.bf16.mxu0 0
  %3764 = vmatpush2.bf16.msra.mxu0 0
  %3765 = vmatprep.mubr.bf16.mxu0 0
  %3766 = vmatmul.mubr.bf16.gmra.mxu0 %v3722
  %v3767 = vpop.f32.mrf.mxu0
  %v3768 = vadd.f32 0.0, %v3767
  %v3769 = vpop.f32.mrf.mxu0
  %v3770 = vpop.f32.mrf.mxu0
  %v3771 = vadd.f32 0.0, %v3770
  %v3772 = vpop.f32.mrf.mxu0
  %3773 = vmatprep.mubr.bf16.mxu0 0
  %3774 = vmatmul.mubr.bf16.gmra.mxu0 %v3725
  %v3775 = vpop.f32.mrf.mxu0
  %v3776 = vadd.f32 0.0, %v3775
  %v3777 = vpop.f32.mrf.mxu0
  %v3778 = vpop.f32.mrf.mxu0
  %v3779 = vadd.f32 0.0, %v3778
  %v3780 = vpop.f32.mrf.mxu0
  %3781 = vmatprep.mubr.bf16.mxu0 0
  %3782 = vmatmul.mubr.bf16.gmra.mxu0 %v3728
  %v3783 = vpop.f32.mrf.mxu0
  %v3784 = vadd.f32 0.0, %v3783
  %v3785 = vpop.f32.mrf.mxu0
  %v3786 = vpop.f32.mrf.mxu0
  %v3787 = vadd.f32 0.0, %v3786
  %v3788 = vpop.f32.mrf.mxu0
  %3789 = vmatprep.mubr.bf16.mxu0 0
  %3790 = vmatmul.mubr.bf16.gmra.mxu0 %v3731
  %v3791 = vpop.f32.mrf.mxu0
  %v3792 = vadd.f32 0.0, %v3791
  %v3793 = vpop.f32.mrf.mxu0
  %v3794 = vpop.f32.mrf.mxu0
  %v3795 = vadd.f32 0.0, %v3794
  %v3796 = vpop.f32.mrf.mxu0
  %3797 = vdwg.mxu0
  %v3798 = vpack.c.bf16 %v3148, %v3145
  %v3799 = vpack.c.bf16 %v3156, %v3153
  %v3800 = vpack.c.bf16 %v3164, %v3161
  %v3801 = vpack.c.bf16 %v3172, %v3169
  %v3802 = vpack.c.bf16 %v3237, %v3234
  %v3803 = vpack.c.bf16 %v3245, %v3242
  %v3804 = vpack.c.bf16 %v3253, %v3250
  %v3805 = vpack.c.bf16 %v3261, %v3258
  %v3806 = vpack.c.bf16 %v3326, %v3323
  %v3807 = vpack.c.bf16 %v3334, %v3331
  %v3808 = vpack.c.bf16 %v3342, %v3339
  %v3809 = vpack.c.bf16 %v3350, %v3347
  %v3810 = vpack.c.bf16 %v3415, %v3412
  %v3811 = vpack.c.bf16 %v3423, %v3420
  %v3812 = vpack.c.bf16 %v3431, %v3428
  %v3813 = vpack.c.bf16 %v3439, %v3436
  %v3814 = vpack.c.bf16 %v3504, %v3501
  %v3815 = vpack.c.bf16 %v3512, %v3509
  %v3816 = vpack.c.bf16 %v3520, %v3517
  %v3817 = vpack.c.bf16 %v3528, %v3525
  %v3818 = vpack.c.bf16 %v3593, %v3590
  %v3819 = vpack.c.bf16 %v3601, %v3598
  %v3820 = vpack.c.bf16 %v3609, %v3606
  %v3821 = vpack.c.bf16 %v3617, %v3614
  %v3822 = vpack.c.bf16 %v3682, %v3679
  %v3823 = vpack.c.bf16 %v3690, %v3687
  %v3824 = vpack.c.bf16 %v3698, %v3695
  %v3825 = vpack.c.bf16 %v3706, %v3703
  %v3826 = vpack.c.bf16 %v3771, %v3768
  %v3827 = vpack.c.bf16 %v3779, %v3776
  %v3828 = vpack.c.bf16 %v3787, %v3784
  %v3829 = vpack.c.bf16 %v3795, %v3792
  %v3830 = vld [vmem:[%s6] sm:$0xff]
  %v3831 = vld [vmem:[%s6 + $0x8] sm:$0xff]
  %v3832 = vpack.c.bf16 %v3831, %v3830
  %s3833 = scalar_lea.vmem %s5, 64
  %v3834 = vld [vmem:[%s3833] sm:$0xff]
  %v3835 = vld [vmem:[%s3833 + $0x8] sm:$0xff]
  %v3836 = vld [vmem:[%s3833 + $0x10] sm:$0xff]
  %v3837 = vld [vmem:[%s3833 + $0x18] sm:$0xff]
  %v3838 = vld [vmem:[%s3833 + $0x20] sm:$0xff]
  %v3839 = vld [vmem:[%s3833 + $0x28] sm:$0xff]
  %v3840 = vld [vmem:[%s3833 + $0x30] sm:$0xff]
  %v3841 = vld [vmem:[%s3833 + $0x38] sm:$0xff]
  %3842 = vrot.lane.b32.xlu0 %v1500, 112
  %v3843 = vpop.permute.xlu0 %3842
  %3844 = vrot.lane.b32.xlu0 %v1501, 112
  %v3845 = vpop.permute.xlu0 %3844
  %3846 = vrot.lane.b32.xlu0 %v1502, 112
  %v3847 = vpop.permute.xlu0 %3846
  %3848 = vrot.lane.b32.xlu0 %v1503, 112
  %v3849 = vpop.permute.xlu0 %3848
  %3850 = vrot.lane.b32.xlu0 %v1500, 80
  %v3851 = vpop.permute.xlu0 %3850
  %3852 = vrot.lane.b32.xlu0 %v1501, 80
  %v3853 = vpop.permute.xlu0 %3852
  %3854 = vrot.lane.b32.xlu0 %v1502, 80
  %v3855 = vpop.permute.xlu0 %3854
  %3856 = vrot.lane.b32.xlu0 %v1503, 80
  %v3857 = vpop.permute.xlu0 %3856
  %v3859 = vsel %vm1552, %v3843, 0
  %v3862 = vsel %vm1552, %v3845, 0
  %v3865 = vsel %vm1552, %v3847, 0
  %v3868 = vsel %vm1552, %v3849, 0
  %v3871 = vsel %vm1552, %v3851, 0
  %v3874 = vsel %vm1552, %v3853, 0
  %v3877 = vsel %vm1552, %v3855, 0
  %v3880 = vsel %vm1552, %v3857, 0
  %3882 = vmatprep.subr.bf16.mxu0 0
  %3883 = vmatpush1.bf16.xpose.msra.mxu0 0
  %3884 = vmatprep.subr.bf16.mxu0 0
  %3885 = vmatpush1.bf16.xpose.msra.mxu0 0
  %3886 = vmatprep.subr.bf16.mxu0 0
  %3887 = vmatpush1.bf16.xpose.msra.mxu0 0
  %3888 = vmatprep.subr.bf16.mxu0 0
  %3889 = vmatpush1.bf16.xpose.msra.mxu0 0
  %3890 = vmatprep.subr.bf16.mxu0 0
  %3891 = vmatpush1.bf16.xpose.msra.mxu0 %v3880
  %3892 = vmatprep.subr.bf16.mxu0 0
  %3893 = vmatpush1.bf16.xpose.msra.mxu0 %v3877
  %3894 = vmatprep.subr.bf16.mxu0 0
  %3895 = vmatpush1.bf16.xpose.msra.mxu0 %v3874
  %3896 = vmatprep.subr.bf16.mxu0 0
  %3897 = vmatpush1.bf16.xpose.msra.mxu0 %v3871
  %3898 = vmatprep.subr.bf16.mxu0 0
  %3899 = vmatpush2.bf16.xpose.msra.mxu0 0
  %3900 = vmatprep.subr.bf16.mxu0 0
  %3901 = vmatpush2.bf16.xpose.msra.mxu0 0
  %3902 = vmatprep.subr.bf16.mxu0 0
  %3903 = vmatpush2.bf16.xpose.msra.mxu0 0
  %3904 = vmatprep.subr.bf16.mxu0 0
  %3905 = vmatpush2.bf16.xpose.msra.mxu0 0
  %3906 = vmatprep.subr.bf16.mxu0 0
  %3907 = vmatpush2.bf16.xpose.msra.mxu0 0
  %3908 = vmatprep.subr.bf16.mxu0 0
  %3909 = vmatpush2.bf16.xpose.msra.mxu0 0
  %3910 = vmatprep.subr.bf16.mxu0 0
  %3911 = vmatpush2.bf16.xpose.msra.mxu0 0
  %3912 = vmatprep.subr.bf16.mxu0 0
  %3913 = vmatpush2.bf16.xpose.msra.mxu0 0
  %3914 = vmatprep.mubr.bf16.mxu0 0
  %3915 = vmatmul.mubr.bf16.gmra.mxu0 %v3859
  %v3916 = vpop.f32.mrf.mxu0
  %v3917 = vadd.f32 %v3834, %v3916
  %v3918 = vpop.f32.mrf.mxu0
  %v3919 = vpop.f32.mrf.mxu0
  %v3920 = vadd.f32 %v3835, %v3919
  %v3921 = vpop.f32.mrf.mxu0
  %3922 = vmatprep.mubr.bf16.mxu0 0
  %3923 = vmatmul.mubr.bf16.gmra.mxu0 %v3862
  %v3924 = vpop.f32.mrf.mxu0
  %v3925 = vadd.f32 %v3836, %v3924
  %v3926 = vpop.f32.mrf.mxu0
  %v3927 = vpop.f32.mrf.mxu0
  %v3928 = vadd.f32 %v3837, %v3927
  %v3929 = vpop.f32.mrf.mxu0
  %3930 = vmatprep.mubr.bf16.mxu0 0
  %3931 = vmatmul.mubr.bf16.gmra.mxu0 %v3865
  %v3932 = vpop.f32.mrf.mxu0
  %v3933 = vadd.f32 %v3838, %v3932
  %v3934 = vpop.f32.mrf.mxu0
  %v3935 = vpop.f32.mrf.mxu0
  %v3936 = vadd.f32 %v3839, %v3935
  %v3937 = vpop.f32.mrf.mxu0
  %3938 = vmatprep.mubr.bf16.mxu0 0
  %3939 = vmatmul.mubr.bf16.gmra.mxu0 %v3868
  %v3940 = vpop.f32.mrf.mxu0
  %v3941 = vadd.f32 %v3840, %v3940
  %v3942 = vpop.f32.mrf.mxu0
  %v3943 = vpop.f32.mrf.mxu0
  %v3944 = vadd.f32 %v3841, %v3943
  %v3945 = vpop.f32.mrf.mxu0
  %3946 = vdwg.mxu0
  %3947 = vrot.lane.b32.xlu0 %v1504, 112
  %v3948 = vpop.permute.xlu0 %3947
  %3949 = vrot.lane.b32.xlu0 %v1505, 112
  %v3950 = vpop.permute.xlu0 %3949
  %3951 = vrot.lane.b32.xlu0 %v1506, 112
  %v3952 = vpop.permute.xlu0 %3951
  %3953 = vrot.lane.b32.xlu0 %v1507, 112
  %v3954 = vpop.permute.xlu0 %3953
  %3955 = vrot.lane.b32.xlu0 %v1504, 80
  %v3956 = vpop.permute.xlu0 %3955
  %3957 = vrot.lane.b32.xlu0 %v1505, 80
  %v3958 = vpop.permute.xlu0 %3957
  %3959 = vrot.lane.b32.xlu0 %v1506, 80
  %v3960 = vpop.permute.xlu0 %3959
  %3961 = vrot.lane.b32.xlu0 %v1507, 80
  %v3962 = vpop.permute.xlu0 %3961
  %v3964 = vsel %vm1552, %v3948, 0
  %v3967 = vsel %vm1552, %v3950, 0
  %v3970 = vsel %vm1552, %v3952, 0
  %v3973 = vsel %vm1552, %v3954, 0
  %v3976 = vsel %vm1552, %v3956, 0
  %v3979 = vsel %vm1552, %v3958, 0
  %v3982 = vsel %vm1552, %v3960, 0
  %v3985 = vsel %vm1552, %v3962, 0
  %3987 = vmatprep.subr.bf16.mxu0 0
  %3988 = vmatpush1.bf16.xpose.msra.mxu0 0
  %3989 = vmatprep.subr.bf16.mxu0 0
  %3990 = vmatpush1.bf16.xpose.msra.mxu0 0
  %3991 = vmatprep.subr.bf16.mxu0 0
  %3992 = vmatpush1.bf16.xpose.msra.mxu0 0
  %3993 = vmatprep.subr.bf16.mxu0 0
  %3994 = vmatpush1.bf16.xpose.msra.mxu0 0
  %3995 = vmatprep.subr.bf16.mxu0 0
  %3996 = vmatpush1.bf16.xpose.msra.mxu0 %v3985
  %3997 = vmatprep.subr.bf16.mxu0 0
  %3998 = vmatpush1.bf16.xpose.msra.mxu0 %v3982
  %3999 = vmatprep.subr.bf16.mxu0 0
  %4000 = vmatpush1.bf16.xpose.msra.mxu0 %v3979
  %4001 = vmatprep.subr.bf16.mxu0 0
  %4002 = vmatpush1.bf16.xpose.msra.mxu0 %v3976
  %4003 = vmatprep.subr.bf16.mxu0 0
  %4004 = vmatpush2.bf16.xpose.msra.mxu0 0
  %4005 = vmatprep.subr.bf16.mxu0 0
  %4006 = vmatpush2.bf16.xpose.msra.mxu0 0
  %4007 = vmatprep.subr.bf16.mxu0 0
  %4008 = vmatpush2.bf16.xpose.msra.mxu0 0
  %4009 = vmatprep.subr.bf16.mxu0 0
  %4010 = vmatpush2.bf16.xpose.msra.mxu0 0
  %4011 = vmatprep.subr.bf16.mxu0 0
  %4012 = vmatpush2.bf16.xpose.msra.mxu0 0
  %4013 = vmatprep.subr.bf16.mxu0 0
  %4014 = vmatpush2.bf16.xpose.msra.mxu0 0
  %4015 = vmatprep.subr.bf16.mxu0 0
  %4016 = vmatpush2.bf16.xpose.msra.mxu0 0
  %4017 = vmatprep.subr.bf16.mxu0 0
  %4018 = vmatpush2.bf16.xpose.msra.mxu0 0
  %4019 = vmatprep.mubr.bf16.mxu0 0
  %4020 = vmatmul.mubr.bf16.gmra.mxu0 %v3964
  %v4021 = vpop.f32.mrf.mxu0
  %v4022 = vadd.f32 %v3834, %v4021
  %v4023 = vpop.f32.mrf.mxu0
  %v4024 = vpop.f32.mrf.mxu0
  %v4025 = vadd.f32 %v3835, %v4024
  %v4026 = vpop.f32.mrf.mxu0
  %4027 = vmatprep.mubr.bf16.mxu0 0
  %4028 = vmatmul.mubr.bf16.gmra.mxu0 %v3967
  %v4029 = vpop.f32.mrf.mxu0
  %v4030 = vadd.f32 %v3836, %v4029
  %v4031 = vpop.f32.mrf.mxu0
  %v4032 = vpop.f32.mrf.mxu0
  %v4033 = vadd.f32 %v3837, %v4032
  %v4034 = vpop.f32.mrf.mxu0
  %4035 = vmatprep.mubr.bf16.mxu0 0
  %4036 = vmatmul.mubr.bf16.gmra.mxu0 %v3970
  %v4037 = vpop.f32.mrf.mxu0
  %v4038 = vadd.f32 %v3838, %v4037
  %v4039 = vpop.f32.mrf.mxu0
  %v4040 = vpop.f32.mrf.mxu0
  %v4041 = vadd.f32 %v3839, %v4040
  %v4042 = vpop.f32.mrf.mxu0
  %4043 = vmatprep.mubr.bf16.mxu0 0
  %4044 = vmatmul.mubr.bf16.gmra.mxu0 %v3973
  %v4045 = vpop.f32.mrf.mxu0
  %v4046 = vadd.f32 %v3840, %v4045
  %v4047 = vpop.f32.mrf.mxu0
  %v4048 = vpop.f32.mrf.mxu0
  %v4049 = vadd.f32 %v3841, %v4048
  %v4050 = vpop.f32.mrf.mxu0
  %4051 = vdwg.mxu0
  %4052 = vrot.lane.b32.xlu0 %v1508, 112
  %v4053 = vpop.permute.xlu0 %4052
  %4054 = vrot.lane.b32.xlu0 %v1509, 112
  %v4055 = vpop.permute.xlu0 %4054
  %4056 = vrot.lane.b32.xlu0 %v1510, 112
  %v4057 = vpop.permute.xlu0 %4056
  %4058 = vrot.lane.b32.xlu0 %v1511, 112
  %v4059 = vpop.permute.xlu0 %4058
  %4060 = vrot.lane.b32.xlu0 %v1508, 80
  %v4061 = vpop.permute.xlu0 %4060
  %4062 = vrot.lane.b32.xlu0 %v1509, 80
  %v4063 = vpop.permute.xlu0 %4062
  %4064 = vrot.lane.b32.xlu0 %v1510, 80
  %v4065 = vpop.permute.xlu0 %4064
  %4066 = vrot.lane.b32.xlu0 %v1511, 80
  %v4067 = vpop.permute.xlu0 %4066
  %v4069 = vsel %vm1552, %v4053, 0
  %v4072 = vsel %vm1552, %v4055, 0
  %v4075 = vsel %vm1552, %v4057, 0
  %v4078 = vsel %vm1552, %v4059, 0
  %v4081 = vsel %vm1552, %v4061, 0
  %v4084 = vsel %vm1552, %v4063, 0
  %v4087 = vsel %vm1552, %v4065, 0
  %v4090 = vsel %vm1552, %v4067, 0
  %4092 = vmatprep.subr.bf16.mxu0 0
  %4093 = vmatpush1.bf16.xpose.msra.mxu0 0
  %4094 = vmatprep.subr.bf16.mxu0 0
  %4095 = vmatpush1.bf16.xpose.msra.mxu0 0
  %4096 = vmatprep.subr.bf16.mxu0 0
  %4097 = vmatpush1.bf16.xpose.msra.mxu0 0
  %4098 = vmatprep.subr.bf16.mxu0 0
  %4099 = vmatpush1.bf16.xpose.msra.mxu0 0
  %4100 = vmatprep.subr.bf16.mxu0 0
  %4101 = vmatpush1.bf16.xpose.msra.mxu0 %v4090
  %4102 = vmatprep.subr.bf16.mxu0 0
  %4103 = vmatpush1.bf16.xpose.msra.mxu0 %v4087
  %4104 = vmatprep.subr.bf16.mxu0 0
  %4105 = vmatpush1.bf16.xpose.msra.mxu0 %v4084
  %4106 = vmatprep.subr.bf16.mxu0 0
  %4107 = vmatpush1.bf16.xpose.msra.mxu0 %v4081
  %4108 = vmatprep.subr.bf16.mxu0 0
  %4109 = vmatpush2.bf16.xpose.msra.mxu0 0
  %4110 = vmatprep.subr.bf16.mxu0 0
  %4111 = vmatpush2.bf16.xpose.msra.mxu0 0
  %4112 = vmatprep.subr.bf16.mxu0 0
  %4113 = vmatpush2.bf16.xpose.msra.mxu0 0
  %4114 = vmatprep.subr.bf16.mxu0 0
  %4115 = vmatpush2.bf16.xpose.msra.mxu0 0
  %4116 = vmatprep.subr.bf16.mxu0 0
  %4117 = vmatpush2.bf16.xpose.msra.mxu0 0
  %4118 = vmatprep.subr.bf16.mxu0 0
  %4119 = vmatpush2.bf16.xpose.msra.mxu0 0
  %4120 = vmatprep.subr.bf16.mxu0 0
  %4121 = vmatpush2.bf16.xpose.msra.mxu0 0
  %4122 = vmatprep.subr.bf16.mxu0 0
  %4123 = vmatpush2.bf16.xpose.msra.mxu0 0
  %4124 = vmatprep.mubr.bf16.mxu0 0
  %4125 = vmatmul.mubr.bf16.gmra.mxu0 %v4069
  %v4126 = vpop.f32.mrf.mxu0
  %v4127 = vadd.f32 %v3834, %v4126
  %v4128 = vpop.f32.mrf.mxu0
  %v4129 = vpop.f32.mrf.mxu0
  %v4130 = vadd.f32 %v3835, %v4129
  %v4131 = vpop.f32.mrf.mxu0
  %4132 = vmatprep.mubr.bf16.mxu0 0
  %4133 = vmatmul.mubr.bf16.gmra.mxu0 %v4072
  %v4134 = vpop.f32.mrf.mxu0
  %v4135 = vadd.f32 %v3836, %v4134
  %v4136 = vpop.f32.mrf.mxu0
  %v4137 = vpop.f32.mrf.mxu0
  %v4138 = vadd.f32 %v3837, %v4137
  %v4139 = vpop.f32.mrf.mxu0
  %4140 = vmatprep.mubr.bf16.mxu0 0
  %4141 = vmatmul.mubr.bf16.gmra.mxu0 %v4075
  %v4142 = vpop.f32.mrf.mxu0
  %v4143 = vadd.f32 %v3838, %v4142
  %v4144 = vpop.f32.mrf.mxu0
  %v4145 = vpop.f32.mrf.mxu0
  %v4146 = vadd.f32 %v3839, %v4145
  %v4147 = vpop.f32.mrf.mxu0
  %4148 = vmatprep.mubr.bf16.mxu0 0
  %4149 = vmatmul.mubr.bf16.gmra.mxu0 %v4078
  %v4150 = vpop.f32.mrf.mxu0
  %v4151 = vadd.f32 %v3840, %v4150
  %v4152 = vpop.f32.mrf.mxu0
  %v4153 = vpop.f32.mrf.mxu0
  %v4154 = vadd.f32 %v3841, %v4153
  %v4155 = vpop.f32.mrf.mxu0
  %4156 = vdwg.mxu0
  %4157 = vrot.lane.b32.xlu0 %v1512, 112
  %v4158 = vpop.permute.xlu0 %4157
  %4159 = vrot.lane.b32.xlu0 %v1513, 112
  %v4160 = vpop.permute.xlu0 %4159
  %4161 = vrot.lane.b32.xlu0 %v1514, 112
  %v4162 = vpop.permute.xlu0 %4161
  %4163 = vrot.lane.b32.xlu0 %v1515, 112
  %v4164 = vpop.permute.xlu0 %4163
  %4165 = vrot.lane.b32.xlu0 %v1512, 80
  %v4166 = vpop.permute.xlu0 %4165
  %4167 = vrot.lane.b32.xlu0 %v1513, 80
  %v4168 = vpop.permute.xlu0 %4167
  %4169 = vrot.lane.b32.xlu0 %v1514, 80
  %v4170 = vpop.permute.xlu0 %4169
  %4171 = vrot.lane.b32.xlu0 %v1515, 80
  %v4172 = vpop.permute.xlu0 %4171
  %v4174 = vsel %vm1552, %v4158, 0
  %v4177 = vsel %vm1552, %v4160, 0
  %v4180 = vsel %vm1552, %v4162, 0
  %v4183 = vsel %vm1552, %v4164, 0
  %v4186 = vsel %vm1552, %v4166, 0
  %v4189 = vsel %vm1552, %v4168, 0
  %v4192 = vsel %vm1552, %v4170, 0
  %v4195 = vsel %vm1552, %v4172, 0
  %4197 = vmatprep.subr.bf16.mxu0 0
  %4198 = vmatpush1.bf16.xpose.msra.mxu0 0
  %4199 = vmatprep.subr.bf16.mxu0 0
  %4200 = vmatpush1.bf16.xpose.msra.mxu0 0
  %4201 = vmatprep.subr.bf16.mxu0 0
  %4202 = vmatpush1.bf16.xpose.msra.mxu0 0
  %4203 = vmatprep.subr.bf16.mxu0 0
  %4204 = vmatpush1.bf16.xpose.msra.mxu0 0
  %4205 = vmatprep.subr.bf16.mxu0 0
  %4206 = vmatpush1.bf16.xpose.msra.mxu0 %v4195
  %4207 = vmatprep.subr.bf16.mxu0 0
  %4208 = vmatpush1.bf16.xpose.msra.mxu0 %v4192
  %4209 = vmatprep.subr.bf16.mxu0 0
  %4210 = vmatpush1.bf16.xpose.msra.mxu0 %v4189
  %4211 = vmatprep.subr.bf16.mxu0 0
  %4212 = vmatpush1.bf16.xpose.msra.mxu0 %v4186
  %4213 = vmatprep.subr.bf16.mxu0 0
  %4214 = vmatpush2.bf16.xpose.msra.mxu0 0
  %4215 = vmatprep.subr.bf16.mxu0 0
  %4216 = vmatpush2.bf16.xpose.msra.mxu0 0
  %4217 = vmatprep.subr.bf16.mxu0 0
  %4218 = vmatpush2.bf16.xpose.msra.mxu0 0
  %4219 = vmatprep.subr.bf16.mxu0 0
  %4220 = vmatpush2.bf16.xpose.msra.mxu0 0
  %4221 = vmatprep.subr.bf16.mxu0 0
  %4222 = vmatpush2.bf16.xpose.msra.mxu0 0
  %4223 = vmatprep.subr.bf16.mxu0 0
  %4224 = vmatpush2.bf16.xpose.msra.mxu0 0
  %4225 = vmatprep.subr.bf16.mxu0 0
  %4226 = vmatpush2.bf16.xpose.msra.mxu0 0
  %4227 = vmatprep.subr.bf16.mxu0 0
  %4228 = vmatpush2.bf16.xpose.msra.mxu0 0
  %4229 = vmatprep.mubr.bf16.mxu0 0
  %4230 = vmatmul.mubr.bf16.gmra.mxu0 %v4174
  %v4231 = vpop.f32.mrf.mxu0
  %v4232 = vadd.f32 %v3834, %v4231
  %v4233 = vpop.f32.mrf.mxu0
  %v4234 = vpop.f32.mrf.mxu0
  %v4235 = vadd.f32 %v3835, %v4234
  %v4236 = vpop.f32.mrf.mxu0
  %4237 = vmatprep.mubr.bf16.mxu0 0
  %4238 = vmatmul.mubr.bf16.gmra.mxu0 %v4177
  %v4239 = vpop.f32.mrf.mxu0
  %v4240 = vadd.f32 %v3836, %v4239
  %v4241 = vpop.f32.mrf.mxu0
  %v4242 = vpop.f32.mrf.mxu0
  %v4243 = vadd.f32 %v3837, %v4242
  %v4244 = vpop.f32.mrf.mxu0
  %4245 = vmatprep.mubr.bf16.mxu0 0
  %4246 = vmatmul.mubr.bf16.gmra.mxu0 %v4180
  %v4247 = vpop.f32.mrf.mxu0
  %v4248 = vadd.f32 %v3838, %v4247
  %v4249 = vpop.f32.mrf.mxu0
  %v4250 = vpop.f32.mrf.mxu0
  %v4251 = vadd.f32 %v3839, %v4250
  %v4252 = vpop.f32.mrf.mxu0
  %4253 = vmatprep.mubr.bf16.mxu0 0
  %4254 = vmatmul.mubr.bf16.gmra.mxu0 %v4183
  %v4255 = vpop.f32.mrf.mxu0
  %v4256 = vadd.f32 %v3840, %v4255
  %v4257 = vpop.f32.mrf.mxu0
  %v4258 = vpop.f32.mrf.mxu0
  %v4259 = vadd.f32 %v3841, %v4258
  %v4260 = vpop.f32.mrf.mxu0
  %4261 = vdwg.mxu0
  %4262 = vrot.lane.b32.xlu0 %v1516, 112
  %v4263 = vpop.permute.xlu0 %4262
  %4264 = vrot.lane.b32.xlu0 %v1517, 112
  %v4265 = vpop.permute.xlu0 %4264
  %4266 = vrot.lane.b32.xlu0 %v1518, 112
  %v4267 = vpop.permute.xlu0 %4266
  %4268 = vrot.lane.b32.xlu0 %v1519, 112
  %v4269 = vpop.permute.xlu0 %4268
  %4270 = vrot.lane.b32.xlu0 %v1516, 80
  %v4271 = vpop.permute.xlu0 %4270
  %4272 = vrot.lane.b32.xlu0 %v1517, 80
  %v4273 = vpop.permute.xlu0 %4272
  %4274 = vrot.lane.b32.xlu0 %v1518, 80
  %v4275 = vpop.permute.xlu0 %4274
  %4276 = vrot.lane.b32.xlu0 %v1519, 80
  %v4277 = vpop.permute.xlu0 %4276
  %v4279 = vsel %vm1552, %v4263, 0
  %v4282 = vsel %vm1552, %v4265, 0
  %v4285 = vsel %vm1552, %v4267, 0
  %v4288 = vsel %vm1552, %v4269, 0
  %v4291 = vsel %vm1552, %v4271, 0
  %v4294 = vsel %vm1552, %v4273, 0
  %v4297 = vsel %vm1552, %v4275, 0
  %v4300 = vsel %vm1552, %v4277, 0
  %4302 = vmatprep.subr.bf16.mxu0 0
  %4303 = vmatpush1.bf16.xpose.msra.mxu0 0
  %4304 = vmatprep.subr.bf16.mxu0 0
  %4305 = vmatpush1.bf16.xpose.msra.mxu0 0
  %4306 = vmatprep.subr.bf16.mxu0 0
  %4307 = vmatpush1.bf16.xpose.msra.mxu0 0
  %4308 = vmatprep.subr.bf16.mxu0 0
  %4309 = vmatpush1.bf16.xpose.msra.mxu0 0
  %4310 = vmatprep.subr.bf16.mxu0 0
  %4311 = vmatpush1.bf16.xpose.msra.mxu0 %v4300
  %4312 = vmatprep.subr.bf16.mxu0 0
  %4313 = vmatpush1.bf16.xpose.msra.mxu0 %v4297
  %4314 = vmatprep.subr.bf16.mxu0 0
  %4315 = vmatpush1.bf16.xpose.msra.mxu0 %v4294
  %4316 = vmatprep.subr.bf16.mxu0 0
  %4317 = vmatpush1.bf16.xpose.msra.mxu0 %v4291
  %4318 = vmatprep.subr.bf16.mxu0 0
  %4319 = vmatpush2.bf16.xpose.msra.mxu0 0
  %4320 = vmatprep.subr.bf16.mxu0 0
  %4321 = vmatpush2.bf16.xpose.msra.mxu0 0
  %4322 = vmatprep.subr.bf16.mxu0 0
  %4323 = vmatpush2.bf16.xpose.msra.mxu0 0
  %4324 = vmatprep.subr.bf16.mxu0 0
  %4325 = vmatpush2.bf16.xpose.msra.mxu0 0
  %4326 = vmatprep.subr.bf16.mxu0 0
  %4327 = vmatpush2.bf16.xpose.msra.mxu0 0
  %4328 = vmatprep.subr.bf16.mxu0 0
  %4329 = vmatpush2.bf16.xpose.msra.mxu0 0
  %4330 = vmatprep.subr.bf16.mxu0 0
  %4331 = vmatpush2.bf16.xpose.msra.mxu0 0
  %4332 = vmatprep.subr.bf16.mxu0 0
  %4333 = vmatpush2.bf16.xpose.msra.mxu0 0
  %4334 = vmatprep.mubr.bf16.mxu0 0
  %4335 = vmatmul.mubr.bf16.gmra.mxu0 %v4279
  %v4336 = vpop.f32.mrf.mxu0
  %v4337 = vadd.f32 %v3834, %v4336
  %v4338 = vpop.f32.mrf.mxu0
  %v4339 = vpop.f32.mrf.mxu0
  %v4340 = vadd.f32 %v3835, %v4339
  %v4341 = vpop.f32.mrf.mxu0
  %4342 = vmatprep.mubr.bf16.mxu0 0
  %4343 = vmatmul.mubr.bf16.gmra.mxu0 %v4282
  %v4344 = vpop.f32.mrf.mxu0
  %v4345 = vadd.f32 %v3836, %v4344
  %v4346 = vpop.f32.mrf.mxu0
  %v4347 = vpop.f32.mrf.mxu0
  %v4348 = vadd.f32 %v3837, %v4347
  %v4349 = vpop.f32.mrf.mxu0
  %4350 = vmatprep.mubr.bf16.mxu0 0
  %4351 = vmatmul.mubr.bf16.gmra.mxu0 %v4285
  %v4352 = vpop.f32.mrf.mxu0
  %v4353 = vadd.f32 %v3838, %v4352
  %v4354 = vpop.f32.mrf.mxu0
  %v4355 = vpop.f32.mrf.mxu0
  %v4356 = vadd.f32 %v3839, %v4355
  %v4357 = vpop.f32.mrf.mxu0
  %4358 = vmatprep.mubr.bf16.mxu0 0
  %4359 = vmatmul.mubr.bf16.gmra.mxu0 %v4288
  %v4360 = vpop.f32.mrf.mxu0
  %v4361 = vadd.f32 %v3840, %v4360
  %v4362 = vpop.f32.mrf.mxu0
  %v4363 = vpop.f32.mrf.mxu0
  %v4364 = vadd.f32 %v3841, %v4363
  %v4365 = vpop.f32.mrf.mxu0
  %4366 = vdwg.mxu0
  %4367 = vrot.lane.b32.xlu0 %v1520, 112
  %v4368 = vpop.permute.xlu0 %4367
  %4369 = vrot.lane.b32.xlu0 %v1521, 112
  %v4370 = vpop.permute.xlu0 %4369
  %4371 = vrot.lane.b32.xlu0 %v1522, 112
  %v4372 = vpop.permute.xlu0 %4371
  %4373 = vrot.lane.b32.xlu0 %v1523, 112
  %v4374 = vpop.permute.xlu0 %4373
  %4375 = vrot.lane.b32.xlu0 %v1520, 80
  %v4376 = vpop.permute.xlu0 %4375
  %4377 = vrot.lane.b32.xlu0 %v1521, 80
  %v4378 = vpop.permute.xlu0 %4377
  %4379 = vrot.lane.b32.xlu0 %v1522, 80
  %v4380 = vpop.permute.xlu0 %4379
  %4381 = vrot.lane.b32.xlu0 %v1523, 80
  %v4382 = vpop.permute.xlu0 %4381
  %v4384 = vsel %vm1552, %v4368, 0
  %v4387 = vsel %vm1552, %v4370, 0
  %v4390 = vsel %vm1552, %v4372, 0
  %v4393 = vsel %vm1552, %v4374, 0
  %v4396 = vsel %vm1552, %v4376, 0
  %v4399 = vsel %vm1552, %v4378, 0
  %v4402 = vsel %vm1552, %v4380, 0
  %v4405 = vsel %vm1552, %v4382, 0
  %4407 = vmatprep.subr.bf16.mxu0 0
  %4408 = vmatpush1.bf16.xpose.msra.mxu0 0
  %4409 = vmatprep.subr.bf16.mxu0 0
  %4410 = vmatpush1.bf16.xpose.msra.mxu0 0
  %4411 = vmatprep.subr.bf16.mxu0 0
  %4412 = vmatpush1.bf16.xpose.msra.mxu0 0
  %4413 = vmatprep.subr.bf16.mxu0 0
  %4414 = vmatpush1.bf16.xpose.msra.mxu0 0
  %4415 = vmatprep.subr.bf16.mxu0 0
  %4416 = vmatpush1.bf16.xpose.msra.mxu0 %v4405
  %4417 = vmatprep.subr.bf16.mxu0 0
  %4418 = vmatpush1.bf16.xpose.msra.mxu0 %v4402
  %4419 = vmatprep.subr.bf16.mxu0 0
  %4420 = vmatpush1.bf16.xpose.msra.mxu0 %v4399
  %4421 = vmatprep.subr.bf16.mxu0 0
  %4422 = vmatpush1.bf16.xpose.msra.mxu0 %v4396
  %4423 = vmatprep.subr.bf16.mxu0 0
  %4424 = vmatpush2.bf16.xpose.msra.mxu0 0
  %4425 = vmatprep.subr.bf16.mxu0 0
  %4426 = vmatpush2.bf16.xpose.msra.mxu0 0
  %4427 = vmatprep.subr.bf16.mxu0 0
  %4428 = vmatpush2.bf16.xpose.msra.mxu0 0
  %4429 = vmatprep.subr.bf16.mxu0 0
  %4430 = vmatpush2.bf16.xpose.msra.mxu0 0
  %4431 = vmatprep.subr.bf16.mxu0 0
  %4432 = vmatpush2.bf16.xpose.msra.mxu0 0
  %4433 = vmatprep.subr.bf16.mxu0 0
  %4434 = vmatpush2.bf16.xpose.msra.mxu0 0
  %4435 = vmatprep.subr.bf16.mxu0 0
  %4436 = vmatpush2.bf16.xpose.msra.mxu0 0
  %4437 = vmatprep.subr.bf16.mxu0 0
  %4438 = vmatpush2.bf16.xpose.msra.mxu0 0
  %4439 = vmatprep.mubr.bf16.mxu0 0
  %4440 = vmatmul.mubr.bf16.gmra.mxu0 %v4384
  %v4441 = vpop.f32.mrf.mxu0
  %v4442 = vadd.f32 %v3834, %v4441
  %v4443 = vpop.f32.mrf.mxu0
  %v4444 = vpop.f32.mrf.mxu0
  %v4445 = vadd.f32 %v3835, %v4444
  %v4446 = vpop.f32.mrf.mxu0
  %4447 = vmatprep.mubr.bf16.mxu0 0
  %4448 = vmatmul.mubr.bf16.gmra.mxu0 %v4387
  %v4449 = vpop.f32.mrf.mxu0
  %v4450 = vadd.f32 %v3836, %v4449
  %v4451 = vpop.f32.mrf.mxu0
  %v4452 = vpop.f32.mrf.mxu0
  %v4453 = vadd.f32 %v3837, %v4452
  %v4454 = vpop.f32.mrf.mxu0
  %4455 = vmatprep.mubr.bf16.mxu0 0
  %4456 = vmatmul.mubr.bf16.gmra.mxu0 %v4390
  %v4457 = vpop.f32.mrf.mxu0
  %v4458 = vadd.f32 %v3838, %v4457
  %v4459 = vpop.f32.mrf.mxu0
  %v4460 = vpop.f32.mrf.mxu0
  %v4461 = vadd.f32 %v3839, %v4460
  %v4462 = vpop.f32.mrf.mxu0
  %4463 = vmatprep.mubr.bf16.mxu0 0
  %4464 = vmatmul.mubr.bf16.gmra.mxu0 %v4393
  %v4465 = vpop.f32.mrf.mxu0
  %v4466 = vadd.f32 %v3840, %v4465
  %v4467 = vpop.f32.mrf.mxu0
  %v4468 = vpop.f32.mrf.mxu0
  %v4469 = vadd.f32 %v3841, %v4468
  %v4470 = vpop.f32.mrf.mxu0
  %4471 = vdwg.mxu0
  %4472 = vrot.lane.b32.xlu0 %v1524, 112
  %v4473 = vpop.permute.xlu0 %4472
  %4474 = vrot.lane.b32.xlu0 %v1525, 112
  %v4475 = vpop.permute.xlu0 %4474
  %4476 = vrot.lane.b32.xlu0 %v1526, 112
  %v4477 = vpop.permute.xlu0 %4476
  %4478 = vrot.lane.b32.xlu0 %v1527, 112
  %v4479 = vpop.permute.xlu0 %4478
  %4480 = vrot.lane.b32.xlu0 %v1524, 80
  %v4481 = vpop.permute.xlu0 %4480
  %4482 = vrot.lane.b32.xlu0 %v1525, 80
  %v4483 = vpop.permute.xlu0 %4482
  %4484 = vrot.lane.b32.xlu0 %v1526, 80
  %v4485 = vpop.permute.xlu0 %4484
  %4486 = vrot.lane.b32.xlu0 %v1527, 80
  %v4487 = vpop.permute.xlu0 %4486
  %v4489 = vsel %vm1552, %v4473, 0
  %v4492 = vsel %vm1552, %v4475, 0
  %v4495 = vsel %vm1552, %v4477, 0
  %v4498 = vsel %vm1552, %v4479, 0
  %v4501 = vsel %vm1552, %v4481, 0
  %v4504 = vsel %vm1552, %v4483, 0
  %v4507 = vsel %vm1552, %v4485, 0
  %v4510 = vsel %vm1552, %v4487, 0
  %4512 = vmatprep.subr.bf16.mxu0 0
  %4513 = vmatpush1.bf16.xpose.msra.mxu0 0
  %4514 = vmatprep.subr.bf16.mxu0 0
  %4515 = vmatpush1.bf16.xpose.msra.mxu0 0
  %4516 = vmatprep.subr.bf16.mxu0 0
  %4517 = vmatpush1.bf16.xpose.msra.mxu0 0
  %4518 = vmatprep.subr.bf16.mxu0 0
  %4519 = vmatpush1.bf16.xpose.msra.mxu0 0
  %4520 = vmatprep.subr.bf16.mxu0 0
  %4521 = vmatpush1.bf16.xpose.msra.mxu0 %v4510
  %4522 = vmatprep.subr.bf16.mxu0 0
  %4523 = vmatpush1.bf16.xpose.msra.mxu0 %v4507
  %4524 = vmatprep.subr.bf16.mxu0 0
  %4525 = vmatpush1.bf16.xpose.msra.mxu0 %v4504
  %4526 = vmatprep.subr.bf16.mxu0 0
  %4527 = vmatpush1.bf16.xpose.msra.mxu0 %v4501
  %4528 = vmatprep.subr.bf16.mxu0 0
  %4529 = vmatpush2.bf16.xpose.msra.mxu0 0
  %4530 = vmatprep.subr.bf16.mxu0 0
  %4531 = vmatpush2.bf16.xpose.msra.mxu0 0
  %4532 = vmatprep.subr.bf16.mxu0 0
  %4533 = vmatpush2.bf16.xpose.msra.mxu0 0
  %4534 = vmatprep.subr.bf16.mxu0 0
  %4535 = vmatpush2.bf16.xpose.msra.mxu0 0
  %4536 = vmatprep.subr.bf16.mxu0 0
  %4537 = vmatpush2.bf16.xpose.msra.mxu0 0
  %4538 = vmatprep.subr.bf16.mxu0 0
  %4539 = vmatpush2.bf16.xpose.msra.mxu0 0
  %4540 = vmatprep.subr.bf16.mxu0 0
  %4541 = vmatpush2.bf16.xpose.msra.mxu0 0
  %4542 = vmatprep.subr.bf16.mxu0 0
  %4543 = vmatpush2.bf16.xpose.msra.mxu0 0
  %4544 = vmatprep.mubr.bf16.mxu0 0
  %4545 = vmatmul.mubr.bf16.gmra.mxu0 %v4489
  %v4546 = vpop.f32.mrf.mxu0
  %v4547 = vadd.f32 %v3834, %v4546
  %v4548 = vpop.f32.mrf.mxu0
  %v4549 = vpop.f32.mrf.mxu0
  %v4550 = vadd.f32 %v3835, %v4549
  %v4551 = vpop.f32.mrf.mxu0
  %4552 = vmatprep.mubr.bf16.mxu0 0
  %4553 = vmatmul.mubr.bf16.gmra.mxu0 %v4492
  %v4554 = vpop.f32.mrf.mxu0
  %v4555 = vadd.f32 %v3836, %v4554
  %v4556 = vpop.f32.mrf.mxu0
  %v4557 = vpop.f32.mrf.mxu0
  %v4558 = vadd.f32 %v3837, %v4557
  %v4559 = vpop.f32.mrf.mxu0
  %4560 = vmatprep.mubr.bf16.mxu0 0
  %4561 = vmatmul.mubr.bf16.gmra.mxu0 %v4495
  %v4562 = vpop.f32.mrf.mxu0
  %v4563 = vadd.f32 %v3838, %v4562
  %v4564 = vpop.f32.mrf.mxu0
  %v4565 = vpop.f32.mrf.mxu0
  %v4566 = vadd.f32 %v3839, %v4565
  %v4567 = vpop.f32.mrf.mxu0
  %4568 = vmatprep.mubr.bf16.mxu0 0
  %4569 = vmatmul.mubr.bf16.gmra.mxu0 %v4498
  %v4570 = vpop.f32.mrf.mxu0
  %v4571 = vadd.f32 %v3840, %v4570
  %v4572 = vpop.f32.mrf.mxu0
  %v4573 = vpop.f32.mrf.mxu0
  %v4574 = vadd.f32 %v3841, %v4573
  %v4575 = vpop.f32.mrf.mxu0
  %4576 = vdwg.mxu0
  %4577 = vrot.lane.b32.xlu0 %v1528, 112
  %v4578 = vpop.permute.xlu0 %4577
  %4579 = vrot.lane.b32.xlu0 %v1529, 112
  %v4580 = vpop.permute.xlu0 %4579
  %4581 = vrot.lane.b32.xlu0 %v1530, 112
  %v4582 = vpop.permute.xlu0 %4581
  %4583 = vrot.lane.b32.xlu0 %v1531, 112
  %v4584 = vpop.permute.xlu0 %4583
  %4585 = vrot.lane.b32.xlu0 %v1528, 80
  %v4586 = vpop.permute.xlu0 %4585
  %4587 = vrot.lane.b32.xlu0 %v1529, 80
  %v4588 = vpop.permute.xlu0 %4587
  %4589 = vrot.lane.b32.xlu0 %v1530, 80
  %v4590 = vpop.permute.xlu0 %4589
  %4591 = vrot.lane.b32.xlu0 %v1531, 80
  %v4592 = vpop.permute.xlu0 %4591
  %v4594 = vsel %vm1552, %v4578, 0
  %v4597 = vsel %vm1552, %v4580, 0
  %v4600 = vsel %vm1552, %v4582, 0
  %v4603 = vsel %vm1552, %v4584, 0
  %v4606 = vsel %vm1552, %v4586, 0
  %v4609 = vsel %vm1552, %v4588, 0
  %v4612 = vsel %vm1552, %v4590, 0
  %v4615 = vsel %vm1552, %v4592, 0
  %4617 = vmatprep.subr.bf16.mxu0 0
  %4618 = vmatpush1.bf16.xpose.msra.mxu0 0
  %4619 = vmatprep.subr.bf16.mxu0 0
  %4620 = vmatpush1.bf16.xpose.msra.mxu0 0
  %4621 = vmatprep.subr.bf16.mxu0 0
  %4622 = vmatpush1.bf16.xpose.msra.mxu0 0
  %4623 = vmatprep.subr.bf16.mxu0 0
  %4624 = vmatpush1.bf16.xpose.msra.mxu0 0
  %4625 = vmatprep.subr.bf16.mxu0 0
  %4626 = vmatpush1.bf16.xpose.msra.mxu0 %v4615
  %4627 = vmatprep.subr.bf16.mxu0 0
  %4628 = vmatpush1.bf16.xpose.msra.mxu0 %v4612
  %4629 = vmatprep.subr.bf16.mxu0 0
  %4630 = vmatpush1.bf16.xpose.msra.mxu0 %v4609
  %4631 = vmatprep.subr.bf16.mxu0 0
  %4632 = vmatpush1.bf16.xpose.msra.mxu0 %v4606
  %4633 = vmatprep.subr.bf16.mxu0 0
  %4634 = vmatpush2.bf16.xpose.msra.mxu0 0
  %4635 = vmatprep.subr.bf16.mxu0 0
  %4636 = vmatpush2.bf16.xpose.msra.mxu0 0
  %4637 = vmatprep.subr.bf16.mxu0 0
  %4638 = vmatpush2.bf16.xpose.msra.mxu0 0
  %4639 = vmatprep.subr.bf16.mxu0 0
  %4640 = vmatpush2.bf16.xpose.msra.mxu0 0
  %4641 = vmatprep.subr.bf16.mxu0 0
  %4642 = vmatpush2.bf16.xpose.msra.mxu0 0
  %4643 = vmatprep.subr.bf16.mxu0 0
  %4644 = vmatpush2.bf16.xpose.msra.mxu0 0
  %4645 = vmatprep.subr.bf16.mxu0 0
  %4646 = vmatpush2.bf16.xpose.msra.mxu0 0
  %4647 = vmatprep.subr.bf16.mxu0 0
  %4648 = vmatpush2.bf16.xpose.msra.mxu0 0
  %4649 = vmatprep.mubr.bf16.mxu0 0
  %4650 = vmatmul.mubr.bf16.gmra.mxu0 %v4594
  %v4651 = vpop.f32.mrf.mxu0
  %v4652 = vadd.f32 %v3834, %v4651
  %v4653 = vpop.f32.mrf.mxu0
  %v4654 = vpop.f32.mrf.mxu0
  %v4655 = vadd.f32 %v3835, %v4654
  %v4656 = vpop.f32.mrf.mxu0
  %4657 = vmatprep.mubr.bf16.mxu0 0
  %4658 = vmatmul.mubr.bf16.gmra.mxu0 %v4597
  %v4659 = vpop.f32.mrf.mxu0
  %v4660 = vadd.f32 %v3836, %v4659
  %v4661 = vpop.f32.mrf.mxu0
  %v4662 = vpop.f32.mrf.mxu0
  %v4663 = vadd.f32 %v3837, %v4662
  %v4664 = vpop.f32.mrf.mxu0
  %4665 = vmatprep.mubr.bf16.mxu0 0
  %4666 = vmatmul.mubr.bf16.gmra.mxu0 %v4600
  %v4667 = vpop.f32.mrf.mxu0
  %v4668 = vadd.f32 %v3838, %v4667
  %v4669 = vpop.f32.mrf.mxu0
  %v4670 = vpop.f32.mrf.mxu0
  %v4671 = vadd.f32 %v3839, %v4670
  %v4672 = vpop.f32.mrf.mxu0
  %4673 = vmatprep.mubr.bf16.mxu0 0
  %4674 = vmatmul.mubr.bf16.gmra.mxu0 %v4603
  %v4675 = vpop.f32.mrf.mxu0
  %v4676 = vadd.f32 %v3840, %v4675
  %v4677 = vpop.f32.mrf.mxu0
  %v4678 = vpop.f32.mrf.mxu0
  %v4679 = vadd.f32 %v3841, %v4678
  %v4680 = vpop.f32.mrf.mxu0
  %4681 = vdwg.mxu0
  %v4682 = vsel %vm2349, %v3917, -inf
  %4683 = vmax.xlane.f32.xlu0 %v4682
  %v4684 = vpop.xlane.xlu0 %4683
  %v4685 = vsel %vm2349, %v3920, -inf
  %4686 = vmax.xlane.f32.xlu0 %v4685
  %v4687 = vpop.xlane.xlu0 %4686
  %v4688 = vsel %vm2349, %v3925, -inf
  %4689 = vmax.xlane.f32.xlu0 %v4688
  %v4690 = vpop.xlane.xlu0 %4689
  %v4691 = vsel %vm2349, %v3928, -inf
  %4692 = vmax.xlane.f32.xlu0 %v4691
  %v4693 = vpop.xlane.xlu0 %4692
  %v4694 = vsel %vm2349, %v3933, -inf
  %4695 = vmax.xlane.f32.xlu0 %v4694
  %v4696 = vpop.xlane.xlu0 %4695
  %v4697 = vsel %vm2349, %v3936, -inf
  %4698 = vmax.xlane.f32.xlu0 %v4697
  %v4699 = vpop.xlane.xlu0 %4698
  %v4700 = vsel %vm2349, %v3941, -inf
  %4701 = vmax.xlane.f32.xlu0 %v4700
  %v4702 = vpop.xlane.xlu0 %4701
  %v4703 = vsel %vm2349, %v3944, -inf
  %4704 = vmax.xlane.f32.xlu0 %v4703
  %v4705 = vpop.xlane.xlu0 %4704
  %v4706 = vsel %vm2349, %v4022, -inf
  %4707 = vmax.xlane.f32.xlu0 %v4706
  %v4708 = vpop.xlane.xlu0 %4707
  %v4709 = vsel %vm2349, %v4025, -inf
  %4710 = vmax.xlane.f32.xlu0 %v4709
  %v4711 = vpop.xlane.xlu0 %4710
  %v4712 = vsel %vm2349, %v4030, -inf
  %4713 = vmax.xlane.f32.xlu0 %v4712
  %v4714 = vpop.xlane.xlu0 %4713
  %v4715 = vsel %vm2349, %v4033, -inf
  %4716 = vmax.xlane.f32.xlu0 %v4715
  %v4717 = vpop.xlane.xlu0 %4716
  %v4718 = vsel %vm2349, %v4038, -inf
  %4719 = vmax.xlane.f32.xlu0 %v4718
  %v4720 = vpop.xlane.xlu0 %4719
  %v4721 = vsel %vm2349, %v4041, -inf
  %4722 = vmax.xlane.f32.xlu0 %v4721
  %v4723 = vpop.xlane.xlu0 %4722
  %v4724 = vsel %vm2349, %v4046, -inf
  %4725 = vmax.xlane.f32.xlu0 %v4724
  %v4726 = vpop.xlane.xlu0 %4725
  %v4727 = vsel %vm2349, %v4049, -inf
  %4728 = vmax.xlane.f32.xlu0 %v4727
  %v4729 = vpop.xlane.xlu0 %4728
  %v4730 = vsel %vm2349, %v4127, -inf
  %4731 = vmax.xlane.f32.xlu0 %v4730
  %v4732 = vpop.xlane.xlu0 %4731
  %v4733 = vsel %vm2349, %v4130, -inf
  %4734 = vmax.xlane.f32.xlu0 %v4733
  %v4735 = vpop.xlane.xlu0 %4734
  %v4736 = vsel %vm2349, %v4135, -inf
  %4737 = vmax.xlane.f32.xlu0 %v4736
  %v4738 = vpop.xlane.xlu0 %4737
  %v4739 = vsel %vm2349, %v4138, -inf
  %4740 = vmax.xlane.f32.xlu0 %v4739
  %v4741 = vpop.xlane.xlu0 %4740
  %v4742 = vsel %vm2349, %v4143, -inf
  %4743 = vmax.xlane.f32.xlu0 %v4742
  %v4744 = vpop.xlane.xlu0 %4743
  %v4745 = vsel %vm2349, %v4146, -inf
  %4746 = vmax.xlane.f32.xlu0 %v4745
  %v4747 = vpop.xlane.xlu0 %4746
  %v4748 = vsel %vm2349, %v4151, -inf
  %4749 = vmax.xlane.f32.xlu0 %v4748
  %v4750 = vpop.xlane.xlu0 %4749
  %v4751 = vsel %vm2349, %v4154, -inf
  %4752 = vmax.xlane.f32.xlu0 %v4751
  %v4753 = vpop.xlane.xlu0 %4752
  %v4754 = vsel %vm2349, %v4232, -inf
  %4755 = vmax.xlane.f32.xlu0 %v4754
  %v4756 = vpop.xlane.xlu0 %4755
  %v4757 = vsel %vm2349, %v4235, -inf
  %4758 = vmax.xlane.f32.xlu0 %v4757
  %v4759 = vpop.xlane.xlu0 %4758
  %v4760 = vsel %vm2349, %v4240, -inf
  %4761 = vmax.xlane.f32.xlu0 %v4760
  %v4762 = vpop.xlane.xlu0 %4761
  %v4763 = vsel %vm2349, %v4243, -inf
  %4764 = vmax.xlane.f32.xlu0 %v4763
  %v4765 = vpop.xlane.xlu0 %4764
  %v4766 = vsel %vm2349, %v4248, -inf
  %4767 = vmax.xlane.f32.xlu0 %v4766
  %v4768 = vpop.xlane.xlu0 %4767
  %v4769 = vsel %vm2349, %v4251, -inf
  %4770 = vmax.xlane.f32.xlu0 %v4769
  %v4771 = vpop.xlane.xlu0 %4770
  %v4772 = vsel %vm2349, %v4256, -inf
  %4773 = vmax.xlane.f32.xlu0 %v4772
  %v4774 = vpop.xlane.xlu0 %4773
  %v4775 = vsel %vm2349, %v4259, -inf
  %4776 = vmax.xlane.f32.xlu0 %v4775
  %v4777 = vpop.xlane.xlu0 %4776
  %v4778 = vsel %vm2349, %v4337, -inf
  %4779 = vmax.xlane.f32.xlu0 %v4778
  %v4780 = vpop.xlane.xlu0 %4779
  %v4781 = vsel %vm2349, %v4340, -inf
  %4782 = vmax.xlane.f32.xlu0 %v4781
  %v4783 = vpop.xlane.xlu0 %4782
  %v4784 = vsel %vm2349, %v4345, -inf
  %4785 = vmax.xlane.f32.xlu0 %v4784
  %v4786 = vpop.xlane.xlu0 %4785
  %v4787 = vsel %vm2349, %v4348, -inf
  %4788 = vmax.xlane.f32.xlu0 %v4787
  %v4789 = vpop.xlane.xlu0 %4788
  %v4790 = vsel %vm2349, %v4353, -inf
  %4791 = vmax.xlane.f32.xlu0 %v4790
  %v4792 = vpop.xlane.xlu0 %4791
  %v4793 = vsel %vm2349, %v4356, -inf
  %4794 = vmax.xlane.f32.xlu0 %v4793
  %v4795 = vpop.xlane.xlu0 %4794
  %v4796 = vsel %vm2349, %v4361, -inf
  %4797 = vmax.xlane.f32.xlu0 %v4796
  %v4798 = vpop.xlane.xlu0 %4797
  %v4799 = vsel %vm2349, %v4364, -inf
  %4800 = vmax.xlane.f32.xlu0 %v4799
  %v4801 = vpop.xlane.xlu0 %4800
  %v4802 = vsel %vm2349, %v4442, -inf
  %4803 = vmax.xlane.f32.xlu0 %v4802
  %v4804 = vpop.xlane.xlu0 %4803
  %v4805 = vsel %vm2349, %v4445, -inf
  %4806 = vmax.xlane.f32.xlu0 %v4805
  %v4807 = vpop.xlane.xlu0 %4806
  %v4808 = vsel %vm2349, %v4450, -inf
  %4809 = vmax.xlane.f32.xlu0 %v4808
  %v4810 = vpop.xlane.xlu0 %4809
  %v4811 = vsel %vm2349, %v4453, -inf
  %4812 = vmax.xlane.f32.xlu0 %v4811
  %v4813 = vpop.xlane.xlu0 %4812
  %v4814 = vsel %vm2349, %v4458, -inf
  %4815 = vmax.xlane.f32.xlu0 %v4814
  %v4816 = vpop.xlane.xlu0 %4815
  %v4817 = vsel %vm2349, %v4461, -inf
  %4818 = vmax.xlane.f32.xlu0 %v4817
  %v4819 = vpop.xlane.xlu0 %4818
  %v4820 = vsel %vm2349, %v4466, -inf
  %4821 = vmax.xlane.f32.xlu0 %v4820
  %v4822 = vpop.xlane.xlu0 %4821
  %v4823 = vsel %vm2349, %v4469, -inf
  %4824 = vmax.xlane.f32.xlu0 %v4823
  %v4825 = vpop.xlane.xlu0 %4824
  %v4826 = vsel %vm2349, %v4547, -inf
  %4827 = vmax.xlane.f32.xlu0 %v4826
  %v4828 = vpop.xlane.xlu0 %4827
  %v4829 = vsel %vm2349, %v4550, -inf
  %4830 = vmax.xlane.f32.xlu0 %v4829
  %v4831 = vpop.xlane.xlu0 %4830
  %v4832 = vsel %vm2349, %v4555, -inf
  %4833 = vmax.xlane.f32.xlu0 %v4832
  %v4834 = vpop.xlane.xlu0 %4833
  %v4835 = vsel %vm2349, %v4558, -inf
  %4836 = vmax.xlane.f32.xlu0 %v4835
  %v4837 = vpop.xlane.xlu0 %4836
  %v4838 = vsel %vm2349, %v4563, -inf
  %4839 = vmax.xlane.f32.xlu0 %v4838
  %v4840 = vpop.xlane.xlu0 %4839
  %v4841 = vsel %vm2349, %v4566, -inf
  %4842 = vmax.xlane.f32.xlu0 %v4841
  %v4843 = vpop.xlane.xlu0 %4842
  %v4844 = vsel %vm2349, %v4571, -inf
  %4845 = vmax.xlane.f32.xlu0 %v4844
  %v4846 = vpop.xlane.xlu0 %4845
  %v4847 = vsel %vm2349, %v4574, -inf
  %4848 = vmax.xlane.f32.xlu0 %v4847
  %v4849 = vpop.xlane.xlu0 %4848
  %v4850 = vsel %vm2349, %v4652, -inf
  %4851 = vmax.xlane.f32.xlu0 %v4850
  %v4852 = vpop.xlane.xlu0 %4851
  %v4853 = vsel %vm2349, %v4655, -inf
  %4854 = vmax.xlane.f32.xlu0 %v4853
  %v4855 = vpop.xlane.xlu0 %4854
  %v4856 = vsel %vm2349, %v4660, -inf
  %4857 = vmax.xlane.f32.xlu0 %v4856
  %v4858 = vpop.xlane.xlu0 %4857
  %v4859 = vsel %vm2349, %v4663, -inf
  %4860 = vmax.xlane.f32.xlu0 %v4859
  %v4861 = vpop.xlane.xlu0 %4860
  %v4862 = vsel %vm2349, %v4668, -inf
  %4863 = vmax.xlane.f32.xlu0 %v4862
  %v4864 = vpop.xlane.xlu0 %4863
  %v4865 = vsel %vm2349, %v4671, -inf
  %4866 = vmax.xlane.f32.xlu0 %v4865
  %v4867 = vpop.xlane.xlu0 %4866
  %v4868 = vsel %vm2349, %v4676, -inf
  %4869 = vmax.xlane.f32.xlu0 %v4868
  %v4870 = vpop.xlane.xlu0 %4869
  %v4871 = vsel %vm2349, %v4679, -inf
  %4872 = vmax.xlane.f32.xlu0 %v4871
  %v4873 = vpop.xlane.xlu0 %4872
  %v4874 = vsub.f32 %v3917, %v4684
  %v4875 = vsub.f32 %v3920, %v4687
  %v4876 = vsub.f32 %v3925, %v4690
  %v4877 = vsub.f32 %v3928, %v4693
  %v4878 = vsub.f32 %v3933, %v4696
  %v4879 = vsub.f32 %v3936, %v4699
  %v4880 = vsub.f32 %v3941, %v4702
  %v4881 = vsub.f32 %v3944, %v4705
  %v4882 = vsub.f32 %v4022, %v4708
  %v4883 = vsub.f32 %v4025, %v4711
  %v4884 = vsub.f32 %v4030, %v4714
  %v4885 = vsub.f32 %v4033, %v4717
  %v4886 = vsub.f32 %v4038, %v4720
  %v4887 = vsub.f32 %v4041, %v4723
  %v4888 = vsub.f32 %v4046, %v4726
  %v4889 = vsub.f32 %v4049, %v4729
  %v4890 = vsub.f32 %v4127, %v4732
  %v4891 = vsub.f32 %v4130, %v4735
  %v4892 = vsub.f32 %v4135, %v4738
  %v4893 = vsub.f32 %v4138, %v4741
  %v4894 = vsub.f32 %v4143, %v4744
  %v4895 = vsub.f32 %v4146, %v4747
  %v4896 = vsub.f32 %v4151, %v4750
  %v4897 = vsub.f32 %v4154, %v4753
  %v4898 = vsub.f32 %v4232, %v4756
  %v4899 = vsub.f32 %v4235, %v4759
  %v4900 = vsub.f32 %v4240, %v4762
  %v4901 = vsub.f32 %v4243, %v4765
  %v4902 = vsub.f32 %v4248, %v4768
  %v4903 = vsub.f32 %v4251, %v4771
  %v4904 = vsub.f32 %v4256, %v4774
  %v4905 = vsub.f32 %v4259, %v4777
  %v4906 = vsub.f32 %v4337, %v4780
  %v4907 = vsub.f32 %v4340, %v4783
  %v4908 = vsub.f32 %v4345, %v4786
  %v4909 = vsub.f32 %v4348, %v4789
  %v4910 = vsub.f32 %v4353, %v4792
  %v4911 = vsub.f32 %v4356, %v4795
  %v4912 = vsub.f32 %v4361, %v4798
  %v4913 = vsub.f32 %v4364, %v4801
  %v4914 = vsub.f32 %v4442, %v4804
  %v4915 = vsub.f32 %v4445, %v4807
  %v4916 = vsub.f32 %v4450, %v4810
  %v4917 = vsub.f32 %v4453, %v4813
  %v4918 = vsub.f32 %v4458, %v4816
  %v4919 = vsub.f32 %v4461, %v4819
  %v4920 = vsub.f32 %v4466, %v4822
  %v4921 = vsub.f32 %v4469, %v4825
  %v4922 = vsub.f32 %v4547, %v4828
  %v4923 = vsub.f32 %v4550, %v4831
  %v4924 = vsub.f32 %v4555, %v4834
  %v4925 = vsub.f32 %v4558, %v4837
  %v4926 = vsub.f32 %v4563, %v4840
  %v4927 = vsub.f32 %v4566, %v4843
  %v4928 = vsub.f32 %v4571, %v4846
  %v4929 = vsub.f32 %v4574, %v4849
  %v4930 = vsub.f32 %v4652, %v4852
  %v4931 = vsub.f32 %v4655, %v4855
  %v4932 = vsub.f32 %v4660, %v4858
  %v4933 = vsub.f32 %v4663, %v4861
  %v4934 = vsub.f32 %v4668, %v4864
  %v4935 = vsub.f32 %v4671, %v4867
  %v4936 = vsub.f32 %v4676, %v4870
  %v4937 = vsub.f32 %v4679, %v4873
  %v4938 = vmul.f32 %v4874, 1.442695
  %v4939 = vpow.pop %v4938
  %v4940 = vmul.f32 %v4875, 1.442695
  %v4941 = vpow.pop %v4940
  %v4942 = vmul.f32 %v4876, 1.442695
  %v4943 = vpow.pop %v4942
  %v4944 = vmul.f32 %v4877, 1.442695
  %v4945 = vpow.pop %v4944
  %v4946 = vmul.f32 %v4878, 1.442695
  %v4947 = vpow.pop %v4946
  %v4948 = vmul.f32 %v4879, 1.442695
  %v4949 = vpow.pop %v4948
  %v4950 = vmul.f32 %v4880, 1.442695
  %v4951 = vpow.pop %v4950
  %v4952 = vmul.f32 %v4881, 1.442695
  %v4953 = vpow.pop %v4952
  %v4954 = vmul.f32 %v4882, 1.442695
  %v4955 = vpow.pop %v4954
  %v4956 = vmul.f32 %v4883, 1.442695
  %v4957 = vpow.pop %v4956
  %v4958 = vmul.f32 %v4884, 1.442695
  %v4959 = vpow.pop %v4958
  %v4960 = vmul.f32 %v4885, 1.442695
  %v4961 = vpow.pop %v4960
  %v4962 = vmul.f32 %v4886, 1.442695
  %v4963 = vpow.pop %v4962
  %v4964 = vmul.f32 %v4887, 1.442695
  %v4965 = vpow.pop %v4964
  %v4966 = vmul.f32 %v4888, 1.442695
  %v4967 = vpow.pop %v4966
  %v4968 = vmul.f32 %v4889, 1.442695
  %v4969 = vpow.pop %v4968
  %v4970 = vmul.f32 %v4890, 1.442695
  %v4971 = vpow.pop %v4970
  %v4972 = vmul.f32 %v4891, 1.442695
  %v4973 = vpow.pop %v4972
  %v4974 = vmul.f32 %v4892, 1.442695
  %v4975 = vpow.pop %v4974
  %v4976 = vmul.f32 %v4893, 1.442695
  %v4977 = vpow.pop %v4976
  %v4978 = vmul.f32 %v4894, 1.442695
  %v4979 = vpow.pop %v4978
  %v4980 = vmul.f32 %v4895, 1.442695
  %v4981 = vpow.pop %v4980
  %v4982 = vmul.f32 %v4896, 1.442695
  %v4983 = vpow.pop %v4982
  %v4984 = vmul.f32 %v4897, 1.442695
  %v4985 = vpow.pop %v4984
  %v4986 = vmul.f32 %v4898, 1.442695
  %v4987 = vpow.pop %v4986
  %v4988 = vmul.f32 %v4899, 1.442695
  %v4989 = vpow.pop %v4988
  %v4990 = vmul.f32 %v4900, 1.442695
  %v4991 = vpow.pop %v4990
  %v4992 = vmul.f32 %v4901, 1.442695
  %v4993 = vpow.pop %v4992
  %v4994 = vmul.f32 %v4902, 1.442695
  %v4995 = vpow.pop %v4994
  %v4996 = vmul.f32 %v4903, 1.442695
  %v4997 = vpow.pop %v4996
  %v4998 = vmul.f32 %v4904, 1.442695
  %v4999 = vpow.pop %v4998
  %v5000 = vmul.f32 %v4905, 1.442695
  %v5001 = vpow.pop %v5000
  %v5002 = vmul.f32 %v4906, 1.442695
  %v5003 = vpow.pop %v5002
  %v5004 = vmul.f32 %v4907, 1.442695
  %v5005 = vpow.pop %v5004
  %v5006 = vmul.f32 %v4908, 1.442695
  %v5007 = vpow.pop %v5006
  %v5008 = vmul.f32 %v4909, 1.442695
  %v5009 = vpow.pop %v5008
  %v5010 = vmul.f32 %v4910, 1.442695
  %v5011 = vpow.pop %v5010
  %v5012 = vmul.f32 %v4911, 1.442695
  %v5013 = vpow.pop %v5012
  %v5014 = vmul.f32 %v4912, 1.442695
  %v5015 = vpow.pop %v5014
  %v5016 = vmul.f32 %v4913, 1.442695
  %v5017 = vpow.pop %v5016
  %v5018 = vmul.f32 %v4914, 1.442695
  %v5019 = vpow.pop %v5018
  %v5020 = vmul.f32 %v4915, 1.442695
  %v5021 = vpow.pop %v5020
  %v5022 = vmul.f32 %v4916, 1.442695
  %v5023 = vpow.pop %v5022
  %v5024 = vmul.f32 %v4917, 1.442695
  %v5025 = vpow.pop %v5024
  %v5026 = vmul.f32 %v4918, 1.442695
  %v5027 = vpow.pop %v5026
  %v5028 = vmul.f32 %v4919, 1.442695
  %v5029 = vpow.pop %v5028
  %v5030 = vmul.f32 %v4920, 1.442695
  %v5031 = vpow.pop %v5030
  %v5032 = vmul.f32 %v4921, 1.442695
  %v5033 = vpow.pop %v5032
  %v5034 = vmul.f32 %v4922, 1.442695
  %v5035 = vpow.pop %v5034
  %v5036 = vmul.f32 %v4923, 1.442695
  %v5037 = vpow.pop %v5036
  %v5038 = vmul.f32 %v4924, 1.442695
  %v5039 = vpow.pop %v5038
  %v5040 = vmul.f32 %v4925, 1.442695
  %v5041 = vpow.pop %v5040
  %v5042 = vmul.f32 %v4926, 1.442695
  %v5043 = vpow.pop %v5042
  %v5044 = vmul.f32 %v4927, 1.442695
  %v5045 = vpow.pop %v5044
  %v5046 = vmul.f32 %v4928, 1.442695
  %v5047 = vpow.pop %v5046
  %v5048 = vmul.f32 %v4929, 1.442695
  %v5049 = vpow.pop %v5048
  %v5050 = vmul.f32 %v4930, 1.442695
  %v5051 = vpow.pop %v5050
  %v5052 = vmul.f32 %v4931, 1.442695
  %v5053 = vpow.pop %v5052
  %v5054 = vmul.f32 %v4932, 1.442695
  %v5055 = vpow.pop %v5054
  %v5056 = vmul.f32 %v4933, 1.442695
  %v5057 = vpow.pop %v5056
  %v5058 = vmul.f32 %v4934, 1.442695
  %v5059 = vpow.pop %v5058
  %v5060 = vmul.f32 %v4935, 1.442695
  %v5061 = vpow.pop %v5060
  %v5062 = vmul.f32 %v4936, 1.442695
  %v5063 = vpow.pop %v5062
  %v5064 = vmul.f32 %v4937, 1.442695
  %v5065 = vpow.pop %v5064
  %v5066 = vsel %vm2349, %v4939, 0.0
  %5067 = vadd.xlane.f32.xlu0 %v5066
  %v5068 = vpop.xlane.xlu0 %5067
  %v5069 = vsel %vm2349, %v4941, 0.0
  %5070 = vadd.xlane.f32.xlu0 %v5069
  %v5071 = vpop.xlane.xlu0 %5070
  %v5072 = vsel %vm2349, %v4943, 0.0
  %5073 = vadd.xlane.f32.xlu0 %v5072
  %v5074 = vpop.xlane.xlu0 %5073
  %v5075 = vsel %vm2349, %v4945, 0.0
  %5076 = vadd.xlane.f32.xlu0 %v5075
  %v5077 = vpop.xlane.xlu0 %5076
  %v5078 = vsel %vm2349, %v4947, 0.0
  %5079 = vadd.xlane.f32.xlu0 %v5078
  %v5080 = vpop.xlane.xlu0 %5079
  %v5081 = vsel %vm2349, %v4949, 0.0
  %5082 = vadd.xlane.f32.xlu0 %v5081
  %v5083 = vpop.xlane.xlu0 %5082
  %v5084 = vsel %vm2349, %v4951, 0.0
  %5085 = vadd.xlane.f32.xlu0 %v5084
  %v5086 = vpop.xlane.xlu0 %5085
  %v5087 = vsel %vm2349, %v4953, 0.0
  %5088 = vadd.xlane.f32.xlu0 %v5087
  %v5089 = vpop.xlane.xlu0 %5088
  %v5090 = vsel %vm2349, %v4955, 0.0
  %5091 = vadd.xlane.f32.xlu0 %v5090
  %v5092 = vpop.xlane.xlu0 %5091
  %v5093 = vsel %vm2349, %v4957, 0.0
  %5094 = vadd.xlane.f32.xlu0 %v5093
  %v5095 = vpop.xlane.xlu0 %5094
  %v5096 = vsel %vm2349, %v4959, 0.0
  %5097 = vadd.xlane.f32.xlu0 %v5096
  %v5098 = vpop.xlane.xlu0 %5097
  %v5099 = vsel %vm2349, %v4961, 0.0
  %5100 = vadd.xlane.f32.xlu0 %v5099
  %v5101 = vpop.xlane.xlu0 %5100
  %v5102 = vsel %vm2349, %v4963, 0.0
  %5103 = vadd.xlane.f32.xlu0 %v5102
  %v5104 = vpop.xlane.xlu0 %5103
  %v5105 = vsel %vm2349, %v4965, 0.0
  %5106 = vadd.xlane.f32.xlu0 %v5105
  %v5107 = vpop.xlane.xlu0 %5106
  %v5108 = vsel %vm2349, %v4967, 0.0
  %5109 = vadd.xlane.f32.xlu0 %v5108
  %v5110 = vpop.xlane.xlu0 %5109
  %v5111 = vsel %vm2349, %v4969, 0.0
  %5112 = vadd.xlane.f32.xlu0 %v5111
  %v5113 = vpop.xlane.xlu0 %5112
  %v5114 = vsel %vm2349, %v4971, 0.0
  %5115 = vadd.xlane.f32.xlu0 %v5114
  %v5116 = vpop.xlane.xlu0 %5115
  %v5117 = vsel %vm2349, %v4973, 0.0
  %5118 = vadd.xlane.f32.xlu0 %v5117
  %v5119 = vpop.xlane.xlu0 %5118
  %v5120 = vsel %vm2349, %v4975, 0.0
  %5121 = vadd.xlane.f32.xlu0 %v5120
  %v5122 = vpop.xlane.xlu0 %5121
  %v5123 = vsel %vm2349, %v4977, 0.0
  %5124 = vadd.xlane.f32.xlu0 %v5123
  %v5125 = vpop.xlane.xlu0 %5124
  %v5126 = vsel %vm2349, %v4979, 0.0
  %5127 = vadd.xlane.f32.xlu0 %v5126
  %v5128 = vpop.xlane.xlu0 %5127
  %v5129 = vsel %vm2349, %v4981, 0.0
  %5130 = vadd.xlane.f32.xlu0 %v5129
  %v5131 = vpop.xlane.xlu0 %5130
  %v5132 = vsel %vm2349, %v4983, 0.0
  %5133 = vadd.xlane.f32.xlu0 %v5132
  %v5134 = vpop.xlane.xlu0 %5133
  %v5135 = vsel %vm2349, %v4985, 0.0
  %5136 = vadd.xlane.f32.xlu0 %v5135
  %v5137 = vpop.xlane.xlu0 %5136
  %v5138 = vsel %vm2349, %v4987, 0.0
  %5139 = vadd.xlane.f32.xlu0 %v5138
  %v5140 = vpop.xlane.xlu0 %5139
  %v5141 = vsel %vm2349, %v4989, 0.0
  %5142 = vadd.xlane.f32.xlu0 %v5141
  %v5143 = vpop.xlane.xlu0 %5142
  %v5144 = vsel %vm2349, %v4991, 0.0
  %5145 = vadd.xlane.f32.xlu0 %v5144
  %v5146 = vpop.xlane.xlu0 %5145
  %v5147 = vsel %vm2349, %v4993, 0.0
  %5148 = vadd.xlane.f32.xlu0 %v5147
  %v5149 = vpop.xlane.xlu0 %5148
  %v5150 = vsel %vm2349, %v4995, 0.0
  %5151 = vadd.xlane.f32.xlu0 %v5150
  %v5152 = vpop.xlane.xlu0 %5151
  %v5153 = vsel %vm2349, %v4997, 0.0
  %5154 = vadd.xlane.f32.xlu0 %v5153
  %v5155 = vpop.xlane.xlu0 %5154
  %v5156 = vsel %vm2349, %v4999, 0.0
  %5157 = vadd.xlane.f32.xlu0 %v5156
  %v5158 = vpop.xlane.xlu0 %5157
  %v5159 = vsel %vm2349, %v5001, 0.0
  %5160 = vadd.xlane.f32.xlu0 %v5159
  %v5161 = vpop.xlane.xlu0 %5160
  %v5162 = vsel %vm2349, %v5003, 0.0
  %5163 = vadd.xlane.f32.xlu0 %v5162
  %v5164 = vpop.xlane.xlu0 %5163
  %v5165 = vsel %vm2349, %v5005, 0.0
  %5166 = vadd.xlane.f32.xlu0 %v5165
  %v5167 = vpop.xlane.xlu0 %5166
  %v5168 = vsel %vm2349, %v5007, 0.0
  %5169 = vadd.xlane.f32.xlu0 %v5168
  %v5170 = vpop.xlane.xlu0 %5169
  %v5171 = vsel %vm2349, %v5009, 0.0
  %5172 = vadd.xlane.f32.xlu0 %v5171
  %v5173 = vpop.xlane.xlu0 %5172
  %v5174 = vsel %vm2349, %v5011, 0.0
  %5175 = vadd.xlane.f32.xlu0 %v5174
  %v5176 = vpop.xlane.xlu0 %5175
  %v5177 = vsel %vm2349, %v5013, 0.0
  %5178 = vadd.xlane.f32.xlu0 %v5177
  %v5179 = vpop.xlane.xlu0 %5178
  %v5180 = vsel %vm2349, %v5015, 0.0
  %5181 = vadd.xlane.f32.xlu0 %v5180
  %v5182 = vpop.xlane.xlu0 %5181
  %v5183 = vsel %vm2349, %v5017, 0.0
  %5184 = vadd.xlane.f32.xlu0 %v5183
  %v5185 = vpop.xlane.xlu0 %5184
  %v5186 = vsel %vm2349, %v5019, 0.0
  %5187 = vadd.xlane.f32.xlu0 %v5186
  %v5188 = vpop.xlane.xlu0 %5187
  %v5189 = vsel %vm2349, %v5021, 0.0
  %5190 = vadd.xlane.f32.xlu0 %v5189
  %v5191 = vpop.xlane.xlu0 %5190
  %v5192 = vsel %vm2349, %v5023, 0.0
  %5193 = vadd.xlane.f32.xlu0 %v5192
  %v5194 = vpop.xlane.xlu0 %5193
  %v5195 = vsel %vm2349, %v5025, 0.0
  %5196 = vadd.xlane.f32.xlu0 %v5195
  %v5197 = vpop.xlane.xlu0 %5196
  %v5198 = vsel %vm2349, %v5027, 0.0
  %5199 = vadd.xlane.f32.xlu0 %v5198
  %v5200 = vpop.xlane.xlu0 %5199
  %v5201 = vsel %vm2349, %v5029, 0.0
  %5202 = vadd.xlane.f32.xlu0 %v5201
  %v5203 = vpop.xlane.xlu0 %5202
  %v5204 = vsel %vm2349, %v5031, 0.0
  %5205 = vadd.xlane.f32.xlu0 %v5204
  %v5206 = vpop.xlane.xlu0 %5205
  %v5207 = vsel %vm2349, %v5033, 0.0
  %5208 = vadd.xlane.f32.xlu0 %v5207
  %v5209 = vpop.xlane.xlu0 %5208
  %v5210 = vsel %vm2349, %v5035, 0.0
  %5211 = vadd.xlane.f32.xlu0 %v5210
  %v5212 = vpop.xlane.xlu0 %5211
  %v5213 = vsel %vm2349, %v5037, 0.0
  %5214 = vadd.xlane.f32.xlu0 %v5213
  %v5215 = vpop.xlane.xlu0 %5214
  %v5216 = vsel %vm2349, %v5039, 0.0
  %5217 = vadd.xlane.f32.xlu0 %v5216
  %v5218 = vpop.xlane.xlu0 %5217
  %v5219 = vsel %vm2349, %v5041, 0.0
  %5220 = vadd.xlane.f32.xlu0 %v5219
  %v5221 = vpop.xlane.xlu0 %5220
  %v5222 = vsel %vm2349, %v5043, 0.0
  %5223 = vadd.xlane.f32.xlu0 %v5222
  %v5224 = vpop.xlane.xlu0 %5223
  %v5225 = vsel %vm2349, %v5045, 0.0
  %5226 = vadd.xlane.f32.xlu0 %v5225
  %v5227 = vpop.xlane.xlu0 %5226
  %v5228 = vsel %vm2349, %v5047, 0.0
  %5229 = vadd.xlane.f32.xlu0 %v5228
  %v5230 = vpop.xlane.xlu0 %5229
  %v5231 = vsel %vm2349, %v5049, 0.0
  %5232 = vadd.xlane.f32.xlu0 %v5231
  %v5233 = vpop.xlane.xlu0 %5232
  %v5234 = vsel %vm2349, %v5051, 0.0
  %5235 = vadd.xlane.f32.xlu0 %v5234
  %v5236 = vpop.xlane.xlu0 %5235
  %v5237 = vsel %vm2349, %v5053, 0.0
  %5238 = vadd.xlane.f32.xlu0 %v5237
  %v5239 = vpop.xlane.xlu0 %5238
  %v5240 = vsel %vm2349, %v5055, 0.0
  %5241 = vadd.xlane.f32.xlu0 %v5240
  %v5242 = vpop.xlane.xlu0 %5241
  %v5243 = vsel %vm2349, %v5057, 0.0
  %5244 = vadd.xlane.f32.xlu0 %v5243
  %v5245 = vpop.xlane.xlu0 %5244
  %v5246 = vsel %vm2349, %v5059, 0.0
  %5247 = vadd.xlane.f32.xlu0 %v5246
  %v5248 = vpop.xlane.xlu0 %5247
  %v5249 = vsel %vm2349, %v5061, 0.0
  %5250 = vadd.xlane.f32.xlu0 %v5249
  %v5251 = vpop.xlane.xlu0 %5250
  %v5252 = vsel %vm2349, %v5063, 0.0
  %5253 = vadd.xlane.f32.xlu0 %v5252
  %v5254 = vpop.xlane.xlu0 %5253
  %v5255 = vsel %vm2349, %v5065, 0.0
  %5256 = vadd.xlane.f32.xlu0 %v5255
  %v5257 = vpop.xlane.xlu0 %5256
  %v5258 = vrcp.pop %v5068
  %v5259 = vmul.f32 %v4939, %v5258
  %v5260 = vrcp.pop %v5071
  %v5261 = vmul.f32 %v4941, %v5260
  %v5262 = vrcp.pop %v5074
  %v5263 = vmul.f32 %v4943, %v5262
  %v5264 = vrcp.pop %v5077
  %v5265 = vmul.f32 %v4945, %v5264
  %v5266 = vrcp.pop %v5080
  %v5267 = vmul.f32 %v4947, %v5266
  %v5268 = vrcp.pop %v5083
  %v5269 = vmul.f32 %v4949, %v5268
  %v5270 = vrcp.pop %v5086
  %v5271 = vmul.f32 %v4951, %v5270
  %v5272 = vrcp.pop %v5089
  %v5273 = vmul.f32 %v4953, %v5272
  %v5274 = vrcp.pop %v5092
  %v5275 = vmul.f32 %v4955, %v5274
  %v5276 = vrcp.pop %v5095
  %v5277 = vmul.f32 %v4957, %v5276
  %v5278 = vrcp.pop %v5098
  %v5279 = vmul.f32 %v4959, %v5278
  %v5280 = vrcp.pop %v5101
  %v5281 = vmul.f32 %v4961, %v5280
  %v5282 = vrcp.pop %v5104
  %v5283 = vmul.f32 %v4963, %v5282
  %v5284 = vrcp.pop %v5107
  %v5285 = vmul.f32 %v4965, %v5284
  %v5286 = vrcp.pop %v5110
  %v5287 = vmul.f32 %v4967, %v5286
  %v5288 = vrcp.pop %v5113
  %v5289 = vmul.f32 %v4969, %v5288
  %v5290 = vrcp.pop %v5116
  %v5291 = vmul.f32 %v4971, %v5290
  %v5292 = vrcp.pop %v5119
  %v5293 = vmul.f32 %v4973, %v5292
  %v5294 = vrcp.pop %v5122
  %v5295 = vmul.f32 %v4975, %v5294
  %v5296 = vrcp.pop %v5125
  %v5297 = vmul.f32 %v4977, %v5296
  %v5298 = vrcp.pop %v5128
  %v5299 = vmul.f32 %v4979, %v5298
  %v5300 = vrcp.pop %v5131
  %v5301 = vmul.f32 %v4981, %v5300
  %v5302 = vrcp.pop %v5134
  %v5303 = vmul.f32 %v4983, %v5302
  %v5304 = vrcp.pop %v5137
  %v5305 = vmul.f32 %v4985, %v5304
  %v5306 = vrcp.pop %v5140
  %v5307 = vmul.f32 %v4987, %v5306
  %v5308 = vrcp.pop %v5143
  %v5309 = vmul.f32 %v4989, %v5308
  %v5310 = vrcp.pop %v5146
  %v5311 = vmul.f32 %v4991, %v5310
  %v5312 = vrcp.pop %v5149
  %v5313 = vmul.f32 %v4993, %v5312
  %v5314 = vrcp.pop %v5152
  %v5315 = vmul.f32 %v4995, %v5314
  %v5316 = vrcp.pop %v5155
  %v5317 = vmul.f32 %v4997, %v5316
  %v5318 = vrcp.pop %v5158
  %v5319 = vmul.f32 %v4999, %v5318
  %v5320 = vrcp.pop %v5161
  %v5321 = vmul.f32 %v5001, %v5320
  %v5322 = vrcp.pop %v5164
  %v5323 = vmul.f32 %v5003, %v5322
  %v5324 = vrcp.pop %v5167
  %v5325 = vmul.f32 %v5005, %v5324
  %v5326 = vrcp.pop %v5170
  %v5327 = vmul.f32 %v5007, %v5326
  %v5328 = vrcp.pop %v5173
  %v5329 = vmul.f32 %v5009, %v5328
  %v5330 = vrcp.pop %v5176
  %v5331 = vmul.f32 %v5011, %v5330
  %v5332 = vrcp.pop %v5179
  %v5333 = vmul.f32 %v5013, %v5332
  %v5334 = vrcp.pop %v5182
  %v5335 = vmul.f32 %v5015, %v5334
  %v5336 = vrcp.pop %v5185
  %v5337 = vmul.f32 %v5017, %v5336
  %v5338 = vrcp.pop %v5188
  %v5339 = vmul.f32 %v5019, %v5338
  %v5340 = vrcp.pop %v5191
  %v5341 = vmul.f32 %v5021, %v5340
  %v5342 = vrcp.pop %v5194
  %v5343 = vmul.f32 %v5023, %v5342
  %v5344 = vrcp.pop %v5197
  %v5345 = vmul.f32 %v5025, %v5344
  %v5346 = vrcp.pop %v5200
  %v5347 = vmul.f32 %v5027, %v5346
  %v5348 = vrcp.pop %v5203
  %v5349 = vmul.f32 %v5029, %v5348
  %v5350 = vrcp.pop %v5206
  %v5351 = vmul.f32 %v5031, %v5350
  %v5352 = vrcp.pop %v5209
  %v5353 = vmul.f32 %v5033, %v5352
  %v5354 = vrcp.pop %v5212
  %v5355 = vmul.f32 %v5035, %v5354
  %v5356 = vrcp.pop %v5215
  %v5357 = vmul.f32 %v5037, %v5356
  %v5358 = vrcp.pop %v5218
  %v5359 = vmul.f32 %v5039, %v5358
  %v5360 = vrcp.pop %v5221
  %v5361 = vmul.f32 %v5041, %v5360
  %v5362 = vrcp.pop %v5224
  %v5363 = vmul.f32 %v5043, %v5362
  %v5364 = vrcp.pop %v5227
  %v5365 = vmul.f32 %v5045, %v5364
  %v5366 = vrcp.pop %v5230
  %v5367 = vmul.f32 %v5047, %v5366
  %v5368 = vrcp.pop %v5233
  %v5369 = vmul.f32 %v5049, %v5368
  %v5370 = vrcp.pop %v5236
  %v5371 = vmul.f32 %v5051, %v5370
  %v5372 = vrcp.pop %v5239
  %v5373 = vmul.f32 %v5053, %v5372
  %v5374 = vrcp.pop %v5242
  %v5375 = vmul.f32 %v5055, %v5374
  %v5376 = vrcp.pop %v5245
  %v5377 = vmul.f32 %v5057, %v5376
  %v5378 = vrcp.pop %v5248
  %v5379 = vmul.f32 %v5059, %v5378
  %v5380 = vrcp.pop %v5251
  %v5381 = vmul.f32 %v5061, %v5380
  %v5382 = vrcp.pop %v5254
  %v5383 = vmul.f32 %v5063, %v5382
  %v5384 = vrcp.pop %v5257
  %v5385 = vmul.f32 %v5065, %v5384
  %v5386 = vpack.c.bf16 %v5261, %v5259
  %v5387 = vpack.c.bf16 %v5265, %v5263
  %v5388 = vpack.c.bf16 %v5269, %v5267
  %v5389 = vpack.c.bf16 %v5273, %v5271
  %v5390 = vpack.c.bf16 %v5277, %v5275
  %v5391 = vpack.c.bf16 %v5281, %v5279
  %v5392 = vpack.c.bf16 %v5285, %v5283
  %v5393 = vpack.c.bf16 %v5289, %v5287
  %v5394 = vpack.c.bf16 %v5293, %v5291
  %v5395 = vpack.c.bf16 %v5297, %v5295
  %v5396 = vpack.c.bf16 %v5301, %v5299
  %v5397 = vpack.c.bf16 %v5305, %v5303
  %v5398 = vpack.c.bf16 %v5309, %v5307
  %v5399 = vpack.c.bf16 %v5313, %v5311
  %v5400 = vpack.c.bf16 %v5317, %v5315
  %v5401 = vpack.c.bf16 %v5321, %v5319
  %v5402 = vpack.c.bf16 %v5325, %v5323
  %v5403 = vpack.c.bf16 %v5329, %v5327
  %v5404 = vpack.c.bf16 %v5333, %v5331
  %v5405 = vpack.c.bf16 %v5337, %v5335
  %v5406 = vpack.c.bf16 %v5341, %v5339
  %v5407 = vpack.c.bf16 %v5345, %v5343
  %v5408 = vpack.c.bf16 %v5349, %v5347
  %v5409 = vpack.c.bf16 %v5353, %v5351
  %v5410 = vpack.c.bf16 %v5357, %v5355
  %v5411 = vpack.c.bf16 %v5361, %v5359
  %v5412 = vpack.c.bf16 %v5365, %v5363
  %v5413 = vpack.c.bf16 %v5369, %v5367
  %v5414 = vpack.c.bf16 %v5373, %v5371
  %v5415 = vpack.c.bf16 %v5377, %v5375
  %v5416 = vpack.c.bf16 %v5381, %v5379
  %v5417 = vpack.c.bf16 %v5385, %v5383
  %5418 = vrot.lane.b32.xlu0 %v1500, 48
  %v5419 = vpop.permute.xlu0 %5418
  %5420 = vrot.lane.b32.xlu0 %v1501, 48
  %v5421 = vpop.permute.xlu0 %5420
  %5422 = vrot.lane.b32.xlu0 %v1502, 48
  %v5423 = vpop.permute.xlu0 %5422
  %5424 = vrot.lane.b32.xlu0 %v1503, 48
  %v5425 = vpop.permute.xlu0 %5424
  %v5431 = vsel %vm2349, %v5386, 0
  %v5434 = vsel %vm2349, %v5387, 0
  %v5437 = vsel %vm2349, %v5388, 0
  %v5440 = vsel %vm2349, %v5389, 0
  %5442 = vmatprep.subr.bf16.mxu0 0
  %5443 = vmatpush1.bf16.msra.mxu0 0
  %5444 = vmatprep.subr.bf16.mxu0 0
  %5445 = vmatpush1.bf16.msra.mxu0 0
  %5446 = vmatprep.subr.bf16.mxu0 0
  %5447 = vmatpush1.bf16.msra.mxu0 0
  %5448 = vmatprep.subr.bf16.mxu0 0
  %5449 = vmatpush1.bf16.msra.mxu0 0
  %5450 = vmatprep.subr.bf16.mxu0 0
  %5451 = vmatpush1.bf16.msra.mxu0 %v5425
  %5452 = vmatprep.subr.bf16.mxu0 0
  %5453 = vmatpush1.bf16.msra.mxu0 %v5423
  %5454 = vmatprep.subr.bf16.mxu0 0
  %5455 = vmatpush1.bf16.msra.mxu0 %v5421
  %5456 = vmatprep.subr.bf16.mxu0 0
  %5457 = vmatpush1.bf16.msra.mxu0 %v5419
  %5458 = vmatprep.subr.bf16.mxu0 0
  %5459 = vmatpush2.bf16.msra.mxu0 0
  %5460 = vmatprep.subr.bf16.mxu0 0
  %5461 = vmatpush2.bf16.msra.mxu0 0
  %5462 = vmatprep.subr.bf16.mxu0 0
  %5463 = vmatpush2.bf16.msra.mxu0 0
  %5464 = vmatprep.subr.bf16.mxu0 0
  %5465 = vmatpush2.bf16.msra.mxu0 0
  %5466 = vmatprep.subr.bf16.mxu0 0
  %5467 = vmatpush2.bf16.msra.mxu0 0
  %5468 = vmatprep.subr.bf16.mxu0 0
  %5469 = vmatpush2.bf16.msra.mxu0 0
  %5470 = vmatprep.subr.bf16.mxu0 0
  %5471 = vmatpush2.bf16.msra.mxu0 0
  %5472 = vmatprep.subr.bf16.mxu0 0
  %5473 = vmatpush2.bf16.msra.mxu0 0
  %5474 = vmatprep.mubr.bf16.mxu0 0
  %5475 = vmatmul.mubr.bf16.gmra.mxu0 %v5431
  %v5476 = vpop.f32.mrf.mxu0
  %v5477 = vadd.f32 0.0, %v5476
  %v5478 = vpop.f32.mrf.mxu0
  %v5479 = vpop.f32.mrf.mxu0
  %v5480 = vadd.f32 0.0, %v5479
  %v5481 = vpop.f32.mrf.mxu0
  %5482 = vmatprep.mubr.bf16.mxu0 0
  %5483 = vmatmul.mubr.bf16.gmra.mxu0 %v5434
  %v5484 = vpop.f32.mrf.mxu0
  %v5485 = vadd.f32 0.0, %v5484
  %v5486 = vpop.f32.mrf.mxu0
  %v5487 = vpop.f32.mrf.mxu0
  %v5488 = vadd.f32 0.0, %v5487
  %v5489 = vpop.f32.mrf.mxu0
  %5490 = vmatprep.mubr.bf16.mxu0 0
  %5491 = vmatmul.mubr.bf16.gmra.mxu0 %v5437
  %v5492 = vpop.f32.mrf.mxu0
  %v5493 = vadd.f32 0.0, %v5492
  %v5494 = vpop.f32.mrf.mxu0
  %v5495 = vpop.f32.mrf.mxu0
  %v5496 = vadd.f32 0.0, %v5495
  %v5497 = vpop.f32.mrf.mxu0
  %5498 = vmatprep.mubr.bf16.mxu0 0
  %5499 = vmatmul.mubr.bf16.gmra.mxu0 %v5440
  %v5500 = vpop.f32.mrf.mxu0
  %v5501 = vadd.f32 0.0, %v5500
  %v5502 = vpop.f32.mrf.mxu0
  %v5503 = vpop.f32.mrf.mxu0
  %v5504 = vadd.f32 0.0, %v5503
  %v5505 = vpop.f32.mrf.mxu0
  %5506 = vdwg.mxu0
  %5507 = vrot.lane.b32.xlu0 %v1504, 48
  %v5508 = vpop.permute.xlu0 %5507
  %5509 = vrot.lane.b32.xlu0 %v1505, 48
  %v5510 = vpop.permute.xlu0 %5509
  %5511 = vrot.lane.b32.xlu0 %v1506, 48
  %v5512 = vpop.permute.xlu0 %5511
  %5513 = vrot.lane.b32.xlu0 %v1507, 48
  %v5514 = vpop.permute.xlu0 %5513
  %v5520 = vsel %vm2349, %v5390, 0
  %v5523 = vsel %vm2349, %v5391, 0
  %v5526 = vsel %vm2349, %v5392, 0
  %v5529 = vsel %vm2349, %v5393, 0
  %5531 = vmatprep.subr.bf16.mxu0 0
  %5532 = vmatpush1.bf16.msra.mxu0 0
  %5533 = vmatprep.subr.bf16.mxu0 0
  %5534 = vmatpush1.bf16.msra.mxu0 0
  %5535 = vmatprep.subr.bf16.mxu0 0
  %5536 = vmatpush1.bf16.msra.mxu0 0
  %5537 = vmatprep.subr.bf16.mxu0 0
  %5538 = vmatpush1.bf16.msra.mxu0 0
  %5539 = vmatprep.subr.bf16.mxu0 0
  %5540 = vmatpush1.bf16.msra.mxu0 %v5514
  %5541 = vmatprep.subr.bf16.mxu0 0
  %5542 = vmatpush1.bf16.msra.mxu0 %v5512
  %5543 = vmatprep.subr.bf16.mxu0 0
  %5544 = vmatpush1.bf16.msra.mxu0 %v5510
  %5545 = vmatprep.subr.bf16.mxu0 0
  %5546 = vmatpush1.bf16.msra.mxu0 %v5508
  %5547 = vmatprep.subr.bf16.mxu0 0
  %5548 = vmatpush2.bf16.msra.mxu0 0
  %5549 = vmatprep.subr.bf16.mxu0 0
  %5550 = vmatpush2.bf16.msra.mxu0 0
  %5551 = vmatprep.subr.bf16.mxu0 0
  %5552 = vmatpush2.bf16.msra.mxu0 0
  %5553 = vmatprep.subr.bf16.mxu0 0
  %5554 = vmatpush2.bf16.msra.mxu0 0
  %5555 = vmatprep.subr.bf16.mxu0 0
  %5556 = vmatpush2.bf16.msra.mxu0 0
  %5557 = vmatprep.subr.bf16.mxu0 0
  %5558 = vmatpush2.bf16.msra.mxu0 0
  %5559 = vmatprep.subr.bf16.mxu0 0
  %5560 = vmatpush2.bf16.msra.mxu0 0
  %5561 = vmatprep.subr.bf16.mxu0 0
  %5562 = vmatpush2.bf16.msra.mxu0 0
  %5563 = vmatprep.mubr.bf16.mxu0 0
  %5564 = vmatmul.mubr.bf16.gmra.mxu0 %v5520
  %v5565 = vpop.f32.mrf.mxu0
  %v5566 = vadd.f32 0.0, %v5565
  %v5567 = vpop.f32.mrf.mxu0
  %v5568 = vpop.f32.mrf.mxu0
  %v5569 = vadd.f32 0.0, %v5568
  %v5570 = vpop.f32.mrf.mxu0
  %5571 = vmatprep.mubr.bf16.mxu0 0
  %5572 = vmatmul.mubr.bf16.gmra.mxu0 %v5523
  %v5573 = vpop.f32.mrf.mxu0
  %v5574 = vadd.f32 0.0, %v5573
  %v5575 = vpop.f32.mrf.mxu0
  %v5576 = vpop.f32.mrf.mxu0
  %v5577 = vadd.f32 0.0, %v5576
  %v5578 = vpop.f32.mrf.mxu0
  %5579 = vmatprep.mubr.bf16.mxu0 0
  %5580 = vmatmul.mubr.bf16.gmra.mxu0 %v5526
  %v5581 = vpop.f32.mrf.mxu0
  %v5582 = vadd.f32 0.0, %v5581
  %v5583 = vpop.f32.mrf.mxu0
  %v5584 = vpop.f32.mrf.mxu0
  %v5585 = vadd.f32 0.0, %v5584
  %v5586 = vpop.f32.mrf.mxu0
  %5587 = vmatprep.mubr.bf16.mxu0 0
  %5588 = vmatmul.mubr.bf16.gmra.mxu0 %v5529
  %v5589 = vpop.f32.mrf.mxu0
  %v5590 = vadd.f32 0.0, %v5589
  %v5591 = vpop.f32.mrf.mxu0
  %v5592 = vpop.f32.mrf.mxu0
  %v5593 = vadd.f32 0.0, %v5592
  %v5594 = vpop.f32.mrf.mxu0
  %5595 = vdwg.mxu0
  %5596 = vrot.lane.b32.xlu0 %v1508, 48
  %v5597 = vpop.permute.xlu0 %5596
  %5598 = vrot.lane.b32.xlu0 %v1509, 48
  %v5599 = vpop.permute.xlu0 %5598
  %5600 = vrot.lane.b32.xlu0 %v1510, 48
  %v5601 = vpop.permute.xlu0 %5600
  %5602 = vrot.lane.b32.xlu0 %v1511, 48
  %v5603 = vpop.permute.xlu0 %5602
  %v5609 = vsel %vm2349, %v5394, 0
  %v5612 = vsel %vm2349, %v5395, 0
  %v5615 = vsel %vm2349, %v5396, 0
  %v5618 = vsel %vm2349, %v5397, 0
  %5620 = vmatprep.subr.bf16.mxu0 0
  %5621 = vmatpush1.bf16.msra.mxu0 0
  %5622 = vmatprep.subr.bf16.mxu0 0
  %5623 = vmatpush1.bf16.msra.mxu0 0
  %5624 = vmatprep.subr.bf16.mxu0 0
  %5625 = vmatpush1.bf16.msra.mxu0 0
  %5626 = vmatprep.subr.bf16.mxu0 0
  %5627 = vmatpush1.bf16.msra.mxu0 0
  %5628 = vmatprep.subr.bf16.mxu0 0
  %5629 = vmatpush1.bf16.msra.mxu0 %v5603
  %5630 = vmatprep.subr.bf16.mxu0 0
  %5631 = vmatpush1.bf16.msra.mxu0 %v5601
  %5632 = vmatprep.subr.bf16.mxu0 0
  %5633 = vmatpush1.bf16.msra.mxu0 %v5599
  %5634 = vmatprep.subr.bf16.mxu0 0
  %5635 = vmatpush1.bf16.msra.mxu0 %v5597
  %5636 = vmatprep.subr.bf16.mxu0 0
  %5637 = vmatpush2.bf16.msra.mxu0 0
  %5638 = vmatprep.subr.bf16.mxu0 0
  %5639 = vmatpush2.bf16.msra.mxu0 0
  %5640 = vmatprep.subr.bf16.mxu0 0
  %5641 = vmatpush2.bf16.msra.mxu0 0
  %5642 = vmatprep.subr.bf16.mxu0 0
  %5643 = vmatpush2.bf16.msra.mxu0 0
  %5644 = vmatprep.subr.bf16.mxu0 0
  %5645 = vmatpush2.bf16.msra.mxu0 0
  %5646 = vmatprep.subr.bf16.mxu0 0
  %5647 = vmatpush2.bf16.msra.mxu0 0
  %5648 = vmatprep.subr.bf16.mxu0 0
  %5649 = vmatpush2.bf16.msra.mxu0 0
  %5650 = vmatprep.subr.bf16.mxu0 0
  %5651 = vmatpush2.bf16.msra.mxu0 0
  %5652 = vmatprep.mubr.bf16.mxu0 0
  %5653 = vmatmul.mubr.bf16.gmra.mxu0 %v5609
  %v5654 = vpop.f32.mrf.mxu0
  %v5655 = vadd.f32 0.0, %v5654
  %v5656 = vpop.f32.mrf.mxu0
  %v5657 = vpop.f32.mrf.mxu0
  %v5658 = vadd.f32 0.0, %v5657
  %v5659 = vpop.f32.mrf.mxu0
  %5660 = vmatprep.mubr.bf16.mxu0 0
  %5661 = vmatmul.mubr.bf16.gmra.mxu0 %v5612
  %v5662 = vpop.f32.mrf.mxu0
  %v5663 = vadd.f32 0.0, %v5662
  %v5664 = vpop.f32.mrf.mxu0
  %v5665 = vpop.f32.mrf.mxu0
  %v5666 = vadd.f32 0.0, %v5665
  %v5667 = vpop.f32.mrf.mxu0
  %5668 = vmatprep.mubr.bf16.mxu0 0
  %5669 = vmatmul.mubr.bf16.gmra.mxu0 %v5615
  %v5670 = vpop.f32.mrf.mxu0
  %v5671 = vadd.f32 0.0, %v5670
  %v5672 = vpop.f32.mrf.mxu0
  %v5673 = vpop.f32.mrf.mxu0
  %v5674 = vadd.f32 0.0, %v5673
  %v5675 = vpop.f32.mrf.mxu0
  %5676 = vmatprep.mubr.bf16.mxu0 0
  %5677 = vmatmul.mubr.bf16.gmra.mxu0 %v5618
  %v5678 = vpop.f32.mrf.mxu0
  %v5679 = vadd.f32 0.0, %v5678
  %v5680 = vpop.f32.mrf.mxu0
  %v5681 = vpop.f32.mrf.mxu0
  %v5682 = vadd.f32 0.0, %v5681
  %v5683 = vpop.f32.mrf.mxu0
  %5684 = vdwg.mxu0
  %5685 = vrot.lane.b32.xlu0 %v1512, 48
  %v5686 = vpop.permute.xlu0 %5685
  %5687 = vrot.lane.b32.xlu0 %v1513, 48
  %v5688 = vpop.permute.xlu0 %5687
  %5689 = vrot.lane.b32.xlu0 %v1514, 48
  %v5690 = vpop.permute.xlu0 %5689
  %5691 = vrot.lane.b32.xlu0 %v1515, 48
  %v5692 = vpop.permute.xlu0 %5691
  %v5698 = vsel %vm2349, %v5398, 0
  %v5701 = vsel %vm2349, %v5399, 0
  %v5704 = vsel %vm2349, %v5400, 0
  %v5707 = vsel %vm2349, %v5401, 0
  %5709 = vmatprep.subr.bf16.mxu0 0
  %5710 = vmatpush1.bf16.msra.mxu0 0
  %5711 = vmatprep.subr.bf16.mxu0 0
  %5712 = vmatpush1.bf16.msra.mxu0 0
  %5713 = vmatprep.subr.bf16.mxu0 0
  %5714 = vmatpush1.bf16.msra.mxu0 0
  %5715 = vmatprep.subr.bf16.mxu0 0
  %5716 = vmatpush1.bf16.msra.mxu0 0
  %5717 = vmatprep.subr.bf16.mxu0 0
  %5718 = vmatpush1.bf16.msra.mxu0 %v5692
  %5719 = vmatprep.subr.bf16.mxu0 0
  %5720 = vmatpush1.bf16.msra.mxu0 %v5690
  %5721 = vmatprep.subr.bf16.mxu0 0
  %5722 = vmatpush1.bf16.msra.mxu0 %v5688
  %5723 = vmatprep.subr.bf16.mxu0 0
  %5724 = vmatpush1.bf16.msra.mxu0 %v5686
  %5725 = vmatprep.subr.bf16.mxu0 0
  %5726 = vmatpush2.bf16.msra.mxu0 0
  %5727 = vmatprep.subr.bf16.mxu0 0
  %5728 = vmatpush2.bf16.msra.mxu0 0
  %5729 = vmatprep.subr.bf16.mxu0 0
  %5730 = vmatpush2.bf16.msra.mxu0 0
  %5731 = vmatprep.subr.bf16.mxu0 0
  %5732 = vmatpush2.bf16.msra.mxu0 0
  %5733 = vmatprep.subr.bf16.mxu0 0
  %5734 = vmatpush2.bf16.msra.mxu0 0
  %5735 = vmatprep.subr.bf16.mxu0 0
  %5736 = vmatpush2.bf16.msra.mxu0 0
  %5737 = vmatprep.subr.bf16.mxu0 0
  %5738 = vmatpush2.bf16.msra.mxu0 0
  %5739 = vmatprep.subr.bf16.mxu0 0
  %5740 = vmatpush2.bf16.msra.mxu0 0
  %5741 = vmatprep.mubr.bf16.mxu0 0
  %5742 = vmatmul.mubr.bf16.gmra.mxu0 %v5698
  %v5743 = vpop.f32.mrf.mxu0
  %v5744 = vadd.f32 0.0, %v5743
  %v5745 = vpop.f32.mrf.mxu0
  %v5746 = vpop.f32.mrf.mxu0
  %v5747 = vadd.f32 0.0, %v5746
  %v5748 = vpop.f32.mrf.mxu0
  %5749 = vmatprep.mubr.bf16.mxu0 0
  %5750 = vmatmul.mubr.bf16.gmra.mxu0 %v5701
  %v5751 = vpop.f32.mrf.mxu0
  %v5752 = vadd.f32 0.0, %v5751
  %v5753 = vpop.f32.mrf.mxu0
  %v5754 = vpop.f32.mrf.mxu0
  %v5755 = vadd.f32 0.0, %v5754
  %v5756 = vpop.f32.mrf.mxu0
  %5757 = vmatprep.mubr.bf16.mxu0 0
  %5758 = vmatmul.mubr.bf16.gmra.mxu0 %v5704
  %v5759 = vpop.f32.mrf.mxu0
  %v5760 = vadd.f32 0.0, %v5759
  %v5761 = vpop.f32.mrf.mxu0
  %v5762 = vpop.f32.mrf.mxu0
  %v5763 = vadd.f32 0.0, %v5762
  %v5764 = vpop.f32.mrf.mxu0
  %5765 = vmatprep.mubr.bf16.mxu0 0
  %5766 = vmatmul.mubr.bf16.gmra.mxu0 %v5707
  %v5767 = vpop.f32.mrf.mxu0
  %v5768 = vadd.f32 0.0, %v5767
  %v5769 = vpop.f32.mrf.mxu0
  %v5770 = vpop.f32.mrf.mxu0
  %v5771 = vadd.f32 0.0, %v5770
  %v5772 = vpop.f32.mrf.mxu0
  %5773 = vdwg.mxu0
  %5774 = vrot.lane.b32.xlu0 %v1516, 48
  %v5775 = vpop.permute.xlu0 %5774
  %5776 = vrot.lane.b32.xlu0 %v1517, 48
  %v5777 = vpop.permute.xlu0 %5776
  %5778 = vrot.lane.b32.xlu0 %v1518, 48
  %v5779 = vpop.permute.xlu0 %5778
  %5780 = vrot.lane.b32.xlu0 %v1519, 48
  %v5781 = vpop.permute.xlu0 %5780
  %v5787 = vsel %vm2349, %v5402, 0
  %v5790 = vsel %vm2349, %v5403, 0
  %v5793 = vsel %vm2349, %v5404, 0
  %v5796 = vsel %vm2349, %v5405, 0
  %5798 = vmatprep.subr.bf16.mxu0 0
  %5799 = vmatpush1.bf16.msra.mxu0 0
  %5800 = vmatprep.subr.bf16.mxu0 0
  %5801 = vmatpush1.bf16.msra.mxu0 0
  %5802 = vmatprep.subr.bf16.mxu0 0
  %5803 = vmatpush1.bf16.msra.mxu0 0
  %5804 = vmatprep.subr.bf16.mxu0 0
  %5805 = vmatpush1.bf16.msra.mxu0 0
  %5806 = vmatprep.subr.bf16.mxu0 0
  %5807 = vmatpush1.bf16.msra.mxu0 %v5781
  %5808 = vmatprep.subr.bf16.mxu0 0
  %5809 = vmatpush1.bf16.msra.mxu0 %v5779
  %5810 = vmatprep.subr.bf16.mxu0 0
  %5811 = vmatpush1.bf16.msra.mxu0 %v5777
  %5812 = vmatprep.subr.bf16.mxu0 0
  %5813 = vmatpush1.bf16.msra.mxu0 %v5775
  %5814 = vmatprep.subr.bf16.mxu0 0
  %5815 = vmatpush2.bf16.msra.mxu0 0
  %5816 = vmatprep.subr.bf16.mxu0 0
  %5817 = vmatpush2.bf16.msra.mxu0 0
  %5818 = vmatprep.subr.bf16.mxu0 0
  %5819 = vmatpush2.bf16.msra.mxu0 0
  %5820 = vmatprep.subr.bf16.mxu0 0
  %5821 = vmatpush2.bf16.msra.mxu0 0
  %5822 = vmatprep.subr.bf16.mxu0 0
  %5823 = vmatpush2.bf16.msra.mxu0 0
  %5824 = vmatprep.subr.bf16.mxu0 0
  %5825 = vmatpush2.bf16.msra.mxu0 0
  %5826 = vmatprep.subr.bf16.mxu0 0
  %5827 = vmatpush2.bf16.msra.mxu0 0
  %5828 = vmatprep.subr.bf16.mxu0 0
  %5829 = vmatpush2.bf16.msra.mxu0 0
  %5830 = vmatprep.mubr.bf16.mxu0 0
  %5831 = vmatmul.mubr.bf16.gmra.mxu0 %v5787
  %v5832 = vpop.f32.mrf.mxu0
  %v5833 = vadd.f32 0.0, %v5832
  %v5834 = vpop.f32.mrf.mxu0
  %v5835 = vpop.f32.mrf.mxu0
  %v5836 = vadd.f32 0.0, %v5835
  %v5837 = vpop.f32.mrf.mxu0
  %5838 = vmatprep.mubr.bf16.mxu0 0
  %5839 = vmatmul.mubr.bf16.gmra.mxu0 %v5790
  %v5840 = vpop.f32.mrf.mxu0
  %v5841 = vadd.f32 0.0, %v5840
  %v5842 = vpop.f32.mrf.mxu0
  %v5843 = vpop.f32.mrf.mxu0
  %v5844 = vadd.f32 0.0, %v5843
  %v5845 = vpop.f32.mrf.mxu0
  %5846 = vmatprep.mubr.bf16.mxu0 0
  %5847 = vmatmul.mubr.bf16.gmra.mxu0 %v5793
  %v5848 = vpop.f32.mrf.mxu0
  %v5849 = vadd.f32 0.0, %v5848
  %v5850 = vpop.f32.mrf.mxu0
  %v5851 = vpop.f32.mrf.mxu0
  %v5852 = vadd.f32 0.0, %v5851
  %v5853 = vpop.f32.mrf.mxu0
  %5854 = vmatprep.mubr.bf16.mxu0 0
  %5855 = vmatmul.mubr.bf16.gmra.mxu0 %v5796
  %v5856 = vpop.f32.mrf.mxu0
  %v5857 = vadd.f32 0.0, %v5856
  %v5858 = vpop.f32.mrf.mxu0
  %v5859 = vpop.f32.mrf.mxu0
  %v5860 = vadd.f32 0.0, %v5859
  %v5861 = vpop.f32.mrf.mxu0
  %5862 = vdwg.mxu0
  %5863 = vrot.lane.b32.xlu0 %v1520, 48
  %v5864 = vpop.permute.xlu0 %5863
  %5865 = vrot.lane.b32.xlu0 %v1521, 48
  %v5866 = vpop.permute.xlu0 %5865
  %5867 = vrot.lane.b32.xlu0 %v1522, 48
  %v5868 = vpop.permute.xlu0 %5867
  %5869 = vrot.lane.b32.xlu0 %v1523, 48
  %v5870 = vpop.permute.xlu0 %5869
  %v5876 = vsel %vm2349, %v5406, 0
  %v5879 = vsel %vm2349, %v5407, 0
  %v5882 = vsel %vm2349, %v5408, 0
  %v5885 = vsel %vm2349, %v5409, 0
  %5887 = vmatprep.subr.bf16.mxu0 0
  %5888 = vmatpush1.bf16.msra.mxu0 0
  %5889 = vmatprep.subr.bf16.mxu0 0
  %5890 = vmatpush1.bf16.msra.mxu0 0
  %5891 = vmatprep.subr.bf16.mxu0 0
  %5892 = vmatpush1.bf16.msra.mxu0 0
  %5893 = vmatprep.subr.bf16.mxu0 0
  %5894 = vmatpush1.bf16.msra.mxu0 0
  %5895 = vmatprep.subr.bf16.mxu0 0
  %5896 = vmatpush1.bf16.msra.mxu0 %v5870
  %5897 = vmatprep.subr.bf16.mxu0 0
  %5898 = vmatpush1.bf16.msra.mxu0 %v5868
  %5899 = vmatprep.subr.bf16.mxu0 0
  %5900 = vmatpush1.bf16.msra.mxu0 %v5866
  %5901 = vmatprep.subr.bf16.mxu0 0
  %5902 = vmatpush1.bf16.msra.mxu0 %v5864
  %5903 = vmatprep.subr.bf16.mxu0 0
  %5904 = vmatpush2.bf16.msra.mxu0 0
  %5905 = vmatprep.subr.bf16.mxu0 0
  %5906 = vmatpush2.bf16.msra.mxu0 0
  %5907 = vmatprep.subr.bf16.mxu0 0
  %5908 = vmatpush2.bf16.msra.mxu0 0
  %5909 = vmatprep.subr.bf16.mxu0 0
  %5910 = vmatpush2.bf16.msra.mxu0 0
  %5911 = vmatprep.subr.bf16.mxu0 0
  %5912 = vmatpush2.bf16.msra.mxu0 0
  %5913 = vmatprep.subr.bf16.mxu0 0
  %5914 = vmatpush2.bf16.msra.mxu0 0
  %5915 = vmatprep.subr.bf16.mxu0 0
  %5916 = vmatpush2.bf16.msra.mxu0 0
  %5917 = vmatprep.subr.bf16.mxu0 0
  %5918 = vmatpush2.bf16.msra.mxu0 0
  %5919 = vmatprep.mubr.bf16.mxu0 0
  %5920 = vmatmul.mubr.bf16.gmra.mxu0 %v5876
  %v5921 = vpop.f32.mrf.mxu0
  %v5922 = vadd.f32 0.0, %v5921
  %v5923 = vpop.f32.mrf.mxu0
  %v5924 = vpop.f32.mrf.mxu0
  %v5925 = vadd.f32 0.0, %v5924
  %v5926 = vpop.f32.mrf.mxu0
  %5927 = vmatprep.mubr.bf16.mxu0 0
  %5928 = vmatmul.mubr.bf16.gmra.mxu0 %v5879
  %v5929 = vpop.f32.mrf.mxu0
  %v5930 = vadd.f32 0.0, %v5929
  %v5931 = vpop.f32.mrf.mxu0
  %v5932 = vpop.f32.mrf.mxu0
  %v5933 = vadd.f32 0.0, %v5932
  %v5934 = vpop.f32.mrf.mxu0
  %5935 = vmatprep.mubr.bf16.mxu0 0
  %5936 = vmatmul.mubr.bf16.gmra.mxu0 %v5882
  %v5937 = vpop.f32.mrf.mxu0
  %v5938 = vadd.f32 0.0, %v5937
  %v5939 = vpop.f32.mrf.mxu0
  %v5940 = vpop.f32.mrf.mxu0
  %v5941 = vadd.f32 0.0, %v5940
  %v5942 = vpop.f32.mrf.mxu0
  %5943 = vmatprep.mubr.bf16.mxu0 0
  %5944 = vmatmul.mubr.bf16.gmra.mxu0 %v5885
  %v5945 = vpop.f32.mrf.mxu0
  %v5946 = vadd.f32 0.0, %v5945
  %v5947 = vpop.f32.mrf.mxu0
  %v5948 = vpop.f32.mrf.mxu0
  %v5949 = vadd.f32 0.0, %v5948
  %v5950 = vpop.f32.mrf.mxu0
  %5951 = vdwg.mxu0
  %5952 = vrot.lane.b32.xlu0 %v1524, 48
  %v5953 = vpop.permute.xlu0 %5952
  %5954 = vrot.lane.b32.xlu0 %v1525, 48
  %v5955 = vpop.permute.xlu0 %5954
  %5956 = vrot.lane.b32.xlu0 %v1526, 48
  %v5957 = vpop.permute.xlu0 %5956
  %5958 = vrot.lane.b32.xlu0 %v1527, 48
  %v5959 = vpop.permute.xlu0 %5958
  %v5965 = vsel %vm2349, %v5410, 0
  %v5968 = vsel %vm2349, %v5411, 0
  %v5971 = vsel %vm2349, %v5412, 0
  %v5974 = vsel %vm2349, %v5413, 0
  %5976 = vmatprep.subr.bf16.mxu0 0
  %5977 = vmatpush1.bf16.msra.mxu0 0
  %5978 = vmatprep.subr.bf16.mxu0 0
  %5979 = vmatpush1.bf16.msra.mxu0 0
  %5980 = vmatprep.subr.bf16.mxu0 0
  %5981 = vmatpush1.bf16.msra.mxu0 0
  %5982 = vmatprep.subr.bf16.mxu0 0
  %5983 = vmatpush1.bf16.msra.mxu0 0
  %5984 = vmatprep.subr.bf16.mxu0 0
  %5985 = vmatpush1.bf16.msra.mxu0 %v5959
  %5986 = vmatprep.subr.bf16.mxu0 0
  %5987 = vmatpush1.bf16.msra.mxu0 %v5957
  %5988 = vmatprep.subr.bf16.mxu0 0
  %5989 = vmatpush1.bf16.msra.mxu0 %v5955
  %5990 = vmatprep.subr.bf16.mxu0 0
  %5991 = vmatpush1.bf16.msra.mxu0 %v5953
  %5992 = vmatprep.subr.bf16.mxu0 0
  %5993 = vmatpush2.bf16.msra.mxu0 0
  %5994 = vmatprep.subr.bf16.mxu0 0
  %5995 = vmatpush2.bf16.msra.mxu0 0
  %5996 = vmatprep.subr.bf16.mxu0 0
  %5997 = vmatpush2.bf16.msra.mxu0 0
  %5998 = vmatprep.subr.bf16.mxu0 0
  %5999 = vmatpush2.bf16.msra.mxu0 0
  %6000 = vmatprep.subr.bf16.mxu0 0
  %6001 = vmatpush2.bf16.msra.mxu0 0
  %6002 = vmatprep.subr.bf16.mxu0 0
  %6003 = vmatpush2.bf16.msra.mxu0 0
  %6004 = vmatprep.subr.bf16.mxu0 0
  %6005 = vmatpush2.bf16.msra.mxu0 0
  %6006 = vmatprep.subr.bf16.mxu0 0
  %6007 = vmatpush2.bf16.msra.mxu0 0
  %6008 = vmatprep.mubr.bf16.mxu0 0
  %6009 = vmatmul.mubr.bf16.gmra.mxu0 %v5965
  %v6010 = vpop.f32.mrf.mxu0
  %v6011 = vadd.f32 0.0, %v6010
  %v6012 = vpop.f32.mrf.mxu0
  %v6013 = vpop.f32.mrf.mxu0
  %v6014 = vadd.f32 0.0, %v6013
  %v6015 = vpop.f32.mrf.mxu0
  %6016 = vmatprep.mubr.bf16.mxu0 0
  %6017 = vmatmul.mubr.bf16.gmra.mxu0 %v5968
  %v6018 = vpop.f32.mrf.mxu0
  %v6019 = vadd.f32 0.0, %v6018
  %v6020 = vpop.f32.mrf.mxu0
  %v6021 = vpop.f32.mrf.mxu0
  %v6022 = vadd.f32 0.0, %v6021
  %v6023 = vpop.f32.mrf.mxu0
  %6024 = vmatprep.mubr.bf16.mxu0 0
  %6025 = vmatmul.mubr.bf16.gmra.mxu0 %v5971
  %v6026 = vpop.f32.mrf.mxu0
  %v6027 = vadd.f32 0.0, %v6026
  %v6028 = vpop.f32.mrf.mxu0
  %v6029 = vpop.f32.mrf.mxu0
  %v6030 = vadd.f32 0.0, %v6029
  %v6031 = vpop.f32.mrf.mxu0
  %6032 = vmatprep.mubr.bf16.mxu0 0
  %6033 = vmatmul.mubr.bf16.gmra.mxu0 %v5974
  %v6034 = vpop.f32.mrf.mxu0
  %v6035 = vadd.f32 0.0, %v6034
  %v6036 = vpop.f32.mrf.mxu0
  %v6037 = vpop.f32.mrf.mxu0
  %v6038 = vadd.f32 0.0, %v6037
  %v6039 = vpop.f32.mrf.mxu0
  %6040 = vdwg.mxu0
  %6041 = vrot.lane.b32.xlu0 %v1528, 48
  %v6042 = vpop.permute.xlu0 %6041
  %6043 = vrot.lane.b32.xlu0 %v1529, 48
  %v6044 = vpop.permute.xlu0 %6043
  %6045 = vrot.lane.b32.xlu0 %v1530, 48
  %v6046 = vpop.permute.xlu0 %6045
  %6047 = vrot.lane.b32.xlu0 %v1531, 48
  %v6048 = vpop.permute.xlu0 %6047
  %v6054 = vsel %vm2349, %v5414, 0
  %v6057 = vsel %vm2349, %v5415, 0
  %v6060 = vsel %vm2349, %v5416, 0
  %v6063 = vsel %vm2349, %v5417, 0
  %6065 = vmatprep.subr.bf16.mxu0 0
  %6066 = vmatpush1.bf16.msra.mxu0 0
  %6067 = vmatprep.subr.bf16.mxu0 0
  %6068 = vmatpush1.bf16.msra.mxu0 0
  %6069 = vmatprep.subr.bf16.mxu0 0
  %6070 = vmatpush1.bf16.msra.mxu0 0
  %6071 = vmatprep.subr.bf16.mxu0 0
  %6072 = vmatpush1.bf16.msra.mxu0 0
  %6073 = vmatprep.subr.bf16.mxu0 0
  %6074 = vmatpush1.bf16.msra.mxu0 %v6048
  %6075 = vmatprep.subr.bf16.mxu0 0
  %6076 = vmatpush1.bf16.msra.mxu0 %v6046
  %6077 = vmatprep.subr.bf16.mxu0 0
  %6078 = vmatpush1.bf16.msra.mxu0 %v6044
  %6079 = vmatprep.subr.bf16.mxu0 0
  %6080 = vmatpush1.bf16.msra.mxu0 %v6042
  %6081 = vmatprep.subr.bf16.mxu0 0
  %6082 = vmatpush2.bf16.msra.mxu0 0
  %6083 = vmatprep.subr.bf16.mxu0 0
  %6084 = vmatpush2.bf16.msra.mxu0 0
  %6085 = vmatprep.subr.bf16.mxu0 0
  %6086 = vmatpush2.bf16.msra.mxu0 0
  %6087 = vmatprep.subr.bf16.mxu0 0
  %6088 = vmatpush2.bf16.msra.mxu0 0
  %6089 = vmatprep.subr.bf16.mxu0 0
  %6090 = vmatpush2.bf16.msra.mxu0 0
  %6091 = vmatprep.subr.bf16.mxu0 0
  %6092 = vmatpush2.bf16.msra.mxu0 0
  %6093 = vmatprep.subr.bf16.mxu0 0
  %6094 = vmatpush2.bf16.msra.mxu0 0
  %6095 = vmatprep.subr.bf16.mxu0 0
  %6096 = vmatpush2.bf16.msra.mxu0 0
  %6097 = vmatprep.mubr.bf16.mxu0 0
  %6098 = vmatmul.mubr.bf16.gmra.mxu0 %v6054
  %v6099 = vpop.f32.mrf.mxu0
  %v6100 = vadd.f32 0.0, %v6099
  %v6101 = vpop.f32.mrf.mxu0
  %v6102 = vpop.f32.mrf.mxu0
  %v6103 = vadd.f32 0.0, %v6102
  %v6104 = vpop.f32.mrf.mxu0
  %6105 = vmatprep.mubr.bf16.mxu0 0
  %6106 = vmatmul.mubr.bf16.gmra.mxu0 %v6057
  %v6107 = vpop.f32.mrf.mxu0
  %v6108 = vadd.f32 0.0, %v6107
  %v6109 = vpop.f32.mrf.mxu0
  %v6110 = vpop.f32.mrf.mxu0
  %v6111 = vadd.f32 0.0, %v6110
  %v6112 = vpop.f32.mrf.mxu0
  %6113 = vmatprep.mubr.bf16.mxu0 0
  %6114 = vmatmul.mubr.bf16.gmra.mxu0 %v6060
  %v6115 = vpop.f32.mrf.mxu0
  %v6116 = vadd.f32 0.0, %v6115
  %v6117 = vpop.f32.mrf.mxu0
  %v6118 = vpop.f32.mrf.mxu0
  %v6119 = vadd.f32 0.0, %v6118
  %v6120 = vpop.f32.mrf.mxu0
  %6121 = vmatprep.mubr.bf16.mxu0 0
  %6122 = vmatmul.mubr.bf16.gmra.mxu0 %v6063
  %v6123 = vpop.f32.mrf.mxu0
  %v6124 = vadd.f32 0.0, %v6123
  %v6125 = vpop.f32.mrf.mxu0
  %v6126 = vpop.f32.mrf.mxu0
  %v6127 = vadd.f32 0.0, %v6126
  %v6128 = vpop.f32.mrf.mxu0
  %6129 = vdwg.mxu0
  %v6130 = vpack.c.bf16 %v5480, %v5477
  %v6131 = vpack.c.bf16 %v5488, %v5485
  %v6132 = vpack.c.bf16 %v5496, %v5493
  %v6133 = vpack.c.bf16 %v5504, %v5501
  %v6134 = vpack.c.bf16 %v5569, %v5566
  %v6135 = vpack.c.bf16 %v5577, %v5574
  %v6136 = vpack.c.bf16 %v5585, %v5582
  %v6137 = vpack.c.bf16 %v5593, %v5590
  %v6138 = vpack.c.bf16 %v5658, %v5655
  %v6139 = vpack.c.bf16 %v5666, %v5663
  %v6140 = vpack.c.bf16 %v5674, %v5671
  %v6141 = vpack.c.bf16 %v5682, %v5679
  %v6142 = vpack.c.bf16 %v5747, %v5744
  %v6143 = vpack.c.bf16 %v5755, %v5752
  %v6144 = vpack.c.bf16 %v5763, %v5760
  %v6145 = vpack.c.bf16 %v5771, %v5768
  %v6146 = vpack.c.bf16 %v5836, %v5833
  %v6147 = vpack.c.bf16 %v5844, %v5841
  %v6148 = vpack.c.bf16 %v5852, %v5849
  %v6149 = vpack.c.bf16 %v5860, %v5857
  %v6150 = vpack.c.bf16 %v5925, %v5922
  %v6151 = vpack.c.bf16 %v5933, %v5930
  %v6152 = vpack.c.bf16 %v5941, %v5938
  %v6153 = vpack.c.bf16 %v5949, %v5946
  %v6154 = vpack.c.bf16 %v6014, %v6011
  %v6155 = vpack.c.bf16 %v6022, %v6019
  %v6156 = vpack.c.bf16 %v6030, %v6027
  %v6157 = vpack.c.bf16 %v6038, %v6035
  %v6158 = vpack.c.bf16 %v6103, %v6100
  %v6159 = vpack.c.bf16 %v6111, %v6108
  %v6160 = vpack.c.bf16 %v6119, %v6116
  %v6161 = vpack.c.bf16 %v6127, %v6124
  %s6162 = scalar_lea.vmem %s6, 16
  %v6163 = vld [vmem:[%s6162] sm:$0xff]
  %v6164 = vld [vmem:[%s6162 + $0x8] sm:$0xff]
  %v6165 = vpack.c.bf16 %v6164, %v6163
  %v6167 = vsel %vm1552, %v6130, 0
  %v6170 = vsel %vm1552, %v6131, 0
  %v6173 = vsel %vm1552, %v6132, 0
  %v6176 = vsel %vm1552, %v6133, 0
  %v6179 = vsel %vm1552, %v6134, 0
  %v6182 = vsel %vm1552, %v6135, 0
  %v6185 = vsel %vm1552, %v6136, 0
  %v6188 = vsel %vm1552, %v6137, 0
  %v6191 = vsel %vm1552, %v6138, 0
  %v6194 = vsel %vm1552, %v6139, 0
  %v6197 = vsel %vm1552, %v6140, 0
  %v6200 = vsel %vm1552, %v6141, 0
  %v6203 = vsel %vm1552, %v6142, 0
  %v6206 = vsel %vm1552, %v6143, 0
  %v6209 = vsel %vm1552, %v6144, 0
  %v6212 = vsel %vm1552, %v6145, 0
  %v6215 = vsel %vm1552, %v6146, 0
  %v6218 = vsel %vm1552, %v6147, 0
  %v6221 = vsel %vm1552, %v6148, 0
  %v6224 = vsel %vm1552, %v6149, 0
  %v6227 = vsel %vm1552, %v6150, 0
  %v6230 = vsel %vm1552, %v6151, 0
  %v6233 = vsel %vm1552, %v6152, 0
  %v6236 = vsel %vm1552, %v6153, 0
  %v6239 = vsel %vm1552, %v6154, 0
  %v6242 = vsel %vm1552, %v6155, 0
  %v6245 = vsel %vm1552, %v6156, 0
  %v6248 = vsel %vm1552, %v6157, 0
  %v6251 = vsel %vm1552, %v6158, 0
  %v6254 = vsel %vm1552, %v6159, 0
  %v6257 = vsel %vm1552, %v6160, 0
  %v6260 = vsel %vm1552, %v6161, 0
  %6262 = vmatprep.subr.bf16.mxu0 0
  %6263 = vmatpush1.bf16.msra.mxu0 0
  %6264 = vmatprep.subr.bf16.mxu0 0
  %6265 = vmatpush1.bf16.msra.mxu0 0
  %6266 = vmatprep.subr.bf16.mxu0 0
  %6267 = vmatpush1.bf16.msra.mxu0 0
  %6268 = vmatprep.subr.bf16.mxu0 0
  %6269 = vmatpush1.bf16.msra.mxu0 0
  %6270 = vmatprep.subr.bf16.mxu0 0
  %6271 = vmatpush1.bf16.msra.mxu0 0
  %6272 = vmatprep.subr.bf16.mxu0 0
  %6273 = vmatpush1.bf16.msra.mxu0 0
  %6274 = vmatprep.subr.bf16.mxu0 0
  %6275 = vmatpush1.bf16.msra.mxu0 0
  %6276 = vmatprep.subr.bf16.mxu0 0
  %6277 = vmatpush1.bf16.msra.mxu0 %v6165
  %6278 = vmatprep.subr.bf16.mxu0 0
  %6279 = vmatpush2.bf16.msra.mxu0 0
  %6280 = vmatprep.subr.bf16.mxu0 0
  %6281 = vmatpush2.bf16.msra.mxu0 0
  %6282 = vmatprep.subr.bf16.mxu0 0
  %6283 = vmatpush2.bf16.msra.mxu0 0
  %6284 = vmatprep.subr.bf16.mxu0 0
  %6285 = vmatpush2.bf16.msra.mxu0 0
  %6286 = vmatprep.subr.bf16.mxu0 0
  %6287 = vmatpush2.bf16.msra.mxu0 0
  %6288 = vmatprep.subr.bf16.mxu0 0
  %6289 = vmatpush2.bf16.msra.mxu0 0
  %6290 = vmatprep.subr.bf16.mxu0 0
  %6291 = vmatpush2.bf16.msra.mxu0 0
  %6292 = vmatprep.subr.bf16.mxu0 0
  %6293 = vmatpush2.bf16.msra.mxu0 0
  %6294 = vmatprep.mubr.bf16.mxu0 0
  %6295 = vmatmul.mubr.bf16.gmra.mxu0 %v6167
  %v6296 = vpop.f32.mrf.mxu0
  %v6297 = vadd.f32 0.0, %v6296
  %v6298 = vpop.f32.mrf.mxu0
  %v6299 = vpop.f32.mrf.mxu0
  %v6300 = vadd.f32 0.0, %v6299
  %v6301 = vpop.f32.mrf.mxu0
  %6302 = vmatprep.mubr.bf16.mxu0 0
  %6303 = vmatmul.mubr.bf16.gmra.mxu0 %v6170
  %v6304 = vpop.f32.mrf.mxu0
  %v6305 = vadd.f32 0.0, %v6304
  %v6306 = vpop.f32.mrf.mxu0
  %v6307 = vpop.f32.mrf.mxu0
  %v6308 = vadd.f32 0.0, %v6307
  %v6309 = vpop.f32.mrf.mxu0
  %6310 = vmatprep.mubr.bf16.mxu0 0
  %6311 = vmatmul.mubr.bf16.gmra.mxu0 %v6173
  %v6312 = vpop.f32.mrf.mxu0
  %v6313 = vadd.f32 0.0, %v6312
  %v6314 = vpop.f32.mrf.mxu0
  %v6315 = vpop.f32.mrf.mxu0
  %v6316 = vadd.f32 0.0, %v6315
  %v6317 = vpop.f32.mrf.mxu0
  %6318 = vmatprep.mubr.bf16.mxu0 0
  %6319 = vmatmul.mubr.bf16.gmra.mxu0 %v6176
  %v6320 = vpop.f32.mrf.mxu0
  %v6321 = vadd.f32 0.0, %v6320
  %v6322 = vpop.f32.mrf.mxu0
  %v6323 = vpop.f32.mrf.mxu0
  %v6324 = vadd.f32 0.0, %v6323
  %v6325 = vpop.f32.mrf.mxu0
  %6326 = vmatprep.mubr.bf16.mxu0 0
  %6327 = vmatmul.mubr.bf16.gmra.mxu0 %v6179
  %v6328 = vpop.f32.mrf.mxu0
  %v6329 = vadd.f32 0.0, %v6328
  %v6330 = vpop.f32.mrf.mxu0
  %v6331 = vpop.f32.mrf.mxu0
  %v6332 = vadd.f32 0.0, %v6331
  %v6333 = vpop.f32.mrf.mxu0
  %6334 = vmatprep.mubr.bf16.mxu0 0
  %6335 = vmatmul.mubr.bf16.gmra.mxu0 %v6182
  %v6336 = vpop.f32.mrf.mxu0
  %v6337 = vadd.f32 0.0, %v6336
  %v6338 = vpop.f32.mrf.mxu0
  %v6339 = vpop.f32.mrf.mxu0
  %v6340 = vadd.f32 0.0, %v6339
  %v6341 = vpop.f32.mrf.mxu0
  %6342 = vmatprep.mubr.bf16.mxu0 0
  %6343 = vmatmul.mubr.bf16.gmra.mxu0 %v6185
  %v6344 = vpop.f32.mrf.mxu0
  %v6345 = vadd.f32 0.0, %v6344
  %v6346 = vpop.f32.mrf.mxu0
  %v6347 = vpop.f32.mrf.mxu0
  %v6348 = vadd.f32 0.0, %v6347
  %v6349 = vpop.f32.mrf.mxu0
  %6350 = vmatprep.mubr.bf16.mxu0 0
  %6351 = vmatmul.mubr.bf16.gmra.mxu0 %v6188
  %v6352 = vpop.f32.mrf.mxu0
  %v6353 = vadd.f32 0.0, %v6352
  %v6354 = vpop.f32.mrf.mxu0
  %v6355 = vpop.f32.mrf.mxu0
  %v6356 = vadd.f32 0.0, %v6355
  %v6357 = vpop.f32.mrf.mxu0
  %6358 = vmatprep.mubr.bf16.mxu0 0
  %6359 = vmatmul.mubr.bf16.gmra.mxu0 %v6191
  %v6360 = vpop.f32.mrf.mxu0
  %v6361 = vadd.f32 0.0, %v6360
  %v6362 = vpop.f32.mrf.mxu0
  %v6363 = vpop.f32.mrf.mxu0
  %v6364 = vadd.f32 0.0, %v6363
  %v6365 = vpop.f32.mrf.mxu0
  %6366 = vmatprep.mubr.bf16.mxu0 0
  %6367 = vmatmul.mubr.bf16.gmra.mxu0 %v6194
  %v6368 = vpop.f32.mrf.mxu0
  %v6369 = vadd.f32 0.0, %v6368
  %v6370 = vpop.f32.mrf.mxu0
  %v6371 = vpop.f32.mrf.mxu0
  %v6372 = vadd.f32 0.0, %v6371
  %v6373 = vpop.f32.mrf.mxu0
  %6374 = vmatprep.mubr.bf16.mxu0 0
  %6375 = vmatmul.mubr.bf16.gmra.mxu0 %v6197
  %v6376 = vpop.f32.mrf.mxu0
  %v6377 = vadd.f32 0.0, %v6376
  %v6378 = vpop.f32.mrf.mxu0
  %v6379 = vpop.f32.mrf.mxu0
  %v6380 = vadd.f32 0.0, %v6379
  %v6381 = vpop.f32.mrf.mxu0
  %6382 = vmatprep.mubr.bf16.mxu0 0
  %6383 = vmatmul.mubr.bf16.gmra.mxu0 %v6200
  %v6384 = vpop.f32.mrf.mxu0
  %v6385 = vadd.f32 0.0, %v6384
  %v6386 = vpop.f32.mrf.mxu0
  %v6387 = vpop.f32.mrf.mxu0
  %v6388 = vadd.f32 0.0, %v6387
  %v6389 = vpop.f32.mrf.mxu0
  %6390 = vmatprep.mubr.bf16.mxu0 0
  %6391 = vmatmul.mubr.bf16.gmra.mxu0 %v6203
  %v6392 = vpop.f32.mrf.mxu0
  %v6393 = vadd.f32 0.0, %v6392
  %v6394 = vpop.f32.mrf.mxu0
  %v6395 = vpop.f32.mrf.mxu0
  %v6396 = vadd.f32 0.0, %v6395
  %v6397 = vpop.f32.mrf.mxu0
  %6398 = vmatprep.mubr.bf16.mxu0 0
  %6399 = vmatmul.mubr.bf16.gmra.mxu0 %v6206
  %v6400 = vpop.f32.mrf.mxu0
  %v6401 = vadd.f32 0.0, %v6400
  %v6402 = vpop.f32.mrf.mxu0
  %v6403 = vpop.f32.mrf.mxu0
  %v6404 = vadd.f32 0.0, %v6403
  %v6405 = vpop.f32.mrf.mxu0
  %6406 = vmatprep.mubr.bf16.mxu0 0
  %6407 = vmatmul.mubr.bf16.gmra.mxu0 %v6209
  %v6408 = vpop.f32.mrf.mxu0
  %v6409 = vadd.f32 0.0, %v6408
  %v6410 = vpop.f32.mrf.mxu0
  %v6411 = vpop.f32.mrf.mxu0
  %v6412 = vadd.f32 0.0, %v6411
  %v6413 = vpop.f32.mrf.mxu0
  %6414 = vmatprep.mubr.bf16.mxu0 0
  %6415 = vmatmul.mubr.bf16.gmra.mxu0 %v6212
  %v6416 = vpop.f32.mrf.mxu0
  %v6417 = vadd.f32 0.0, %v6416
  %v6418 = vpop.f32.mrf.mxu0
  %v6419 = vpop.f32.mrf.mxu0
  %v6420 = vadd.f32 0.0, %v6419
  %v6421 = vpop.f32.mrf.mxu0
  %6422 = vmatprep.mubr.bf16.mxu0 0
  %6423 = vmatmul.mubr.bf16.gmra.mxu0 %v6215
  %v6424 = vpop.f32.mrf.mxu0
  %v6425 = vadd.f32 0.0, %v6424
  %v6426 = vpop.f32.mrf.mxu0
  %v6427 = vpop.f32.mrf.mxu0
  %v6428 = vadd.f32 0.0, %v6427
  %v6429 = vpop.f32.mrf.mxu0
  %6430 = vmatprep.mubr.bf16.mxu0 0
  %6431 = vmatmul.mubr.bf16.gmra.mxu0 %v6218
  %v6432 = vpop.f32.mrf.mxu0
  %v6433 = vadd.f32 0.0, %v6432
  %v6434 = vpop.f32.mrf.mxu0
  %v6435 = vpop.f32.mrf.mxu0
  %v6436 = vadd.f32 0.0, %v6435
  %v6437 = vpop.f32.mrf.mxu0
  %6438 = vmatprep.mubr.bf16.mxu0 0
  %6439 = vmatmul.mubr.bf16.gmra.mxu0 %v6221
  %v6440 = vpop.f32.mrf.mxu0
  %v6441 = vadd.f32 0.0, %v6440
  %v6442 = vpop.f32.mrf.mxu0
  %v6443 = vpop.f32.mrf.mxu0
  %v6444 = vadd.f32 0.0, %v6443
  %v6445 = vpop.f32.mrf.mxu0
  %6446 = vmatprep.mubr.bf16.mxu0 0
  %6447 = vmatmul.mubr.bf16.gmra.mxu0 %v6224
  %v6448 = vpop.f32.mrf.mxu0
  %v6449 = vadd.f32 0.0, %v6448
  %v6450 = vpop.f32.mrf.mxu0
  %v6451 = vpop.f32.mrf.mxu0
  %v6452 = vadd.f32 0.0, %v6451
  %v6453 = vpop.f32.mrf.mxu0
  %6454 = vmatprep.mubr.bf16.mxu0 0
  %6455 = vmatmul.mubr.bf16.gmra.mxu0 %v6227
  %v6456 = vpop.f32.mrf.mxu0
  %v6457 = vadd.f32 0.0, %v6456
  %v6458 = vpop.f32.mrf.mxu0
  %v6459 = vpop.f32.mrf.mxu0
  %v6460 = vadd.f32 0.0, %v6459
  %v6461 = vpop.f32.mrf.mxu0
  %6462 = vmatprep.mubr.bf16.mxu0 0
  %6463 = vmatmul.mubr.bf16.gmra.mxu0 %v6230
  %v6464 = vpop.f32.mrf.mxu0
  %v6465 = vadd.f32 0.0, %v6464
  %v6466 = vpop.f32.mrf.mxu0
  %v6467 = vpop.f32.mrf.mxu0
  %v6468 = vadd.f32 0.0, %v6467
  %v6469 = vpop.f32.mrf.mxu0
  %6470 = vmatprep.mubr.bf16.mxu0 0
  %6471 = vmatmul.mubr.bf16.gmra.mxu0 %v6233
  %v6472 = vpop.f32.mrf.mxu0
  %v6473 = vadd.f32 0.0, %v6472
  %v6474 = vpop.f32.mrf.mxu0
  %v6475 = vpop.f32.mrf.mxu0
  %v6476 = vadd.f32 0.0, %v6475
  %v6477 = vpop.f32.mrf.mxu0
  %6478 = vmatprep.mubr.bf16.mxu0 0
  %6479 = vmatmul.mubr.bf16.gmra.mxu0 %v6236
  %v6480 = vpop.f32.mrf.mxu0
  %v6481 = vadd.f32 0.0, %v6480
  %v6482 = vpop.f32.mrf.mxu0
  %v6483 = vpop.f32.mrf.mxu0
  %v6484 = vadd.f32 0.0, %v6483
  %v6485 = vpop.f32.mrf.mxu0
  %6486 = vmatprep.mubr.bf16.mxu0 0
  %6487 = vmatmul.mubr.bf16.gmra.mxu0 %v6239
  %v6488 = vpop.f32.mrf.mxu0
  %v6489 = vadd.f32 0.0, %v6488
  %v6490 = vpop.f32.mrf.mxu0
  %v6491 = vpop.f32.mrf.mxu0
  %v6492 = vadd.f32 0.0, %v6491
  %v6493 = vpop.f32.mrf.mxu0
  %6494 = vmatprep.mubr.bf16.mxu0 0
  %6495 = vmatmul.mubr.bf16.gmra.mxu0 %v6242
  %v6496 = vpop.f32.mrf.mxu0
  %v6497 = vadd.f32 0.0, %v6496
  %v6498 = vpop.f32.mrf.mxu0
  %v6499 = vpop.f32.mrf.mxu0
  %v6500 = vadd.f32 0.0, %v6499
  %v6501 = vpop.f32.mrf.mxu0
  %6502 = vmatprep.mubr.bf16.mxu0 0
  %6503 = vmatmul.mubr.bf16.gmra.mxu0 %v6245
  %v6504 = vpop.f32.mrf.mxu0
  %v6505 = vadd.f32 0.0, %v6504
  %v6506 = vpop.f32.mrf.mxu0
  %v6507 = vpop.f32.mrf.mxu0
  %v6508 = vadd.f32 0.0, %v6507
  %v6509 = vpop.f32.mrf.mxu0
  %6510 = vmatprep.mubr.bf16.mxu0 0
  %6511 = vmatmul.mubr.bf16.gmra.mxu0 %v6248
  %v6512 = vpop.f32.mrf.mxu0
  %v6513 = vadd.f32 0.0, %v6512
  %v6514 = vpop.f32.mrf.mxu0
  %v6515 = vpop.f32.mrf.mxu0
  %v6516 = vadd.f32 0.0, %v6515
  %v6517 = vpop.f32.mrf.mxu0
  %6518 = vmatprep.mubr.bf16.mxu0 0
  %6519 = vmatmul.mubr.bf16.gmra.mxu0 %v6251
  %v6520 = vpop.f32.mrf.mxu0
  %v6521 = vadd.f32 0.0, %v6520
  %v6522 = vpop.f32.mrf.mxu0
  %v6523 = vpop.f32.mrf.mxu0
  %v6524 = vadd.f32 0.0, %v6523
  %v6525 = vpop.f32.mrf.mxu0
  %6526 = vmatprep.mubr.bf16.mxu0 0
  %6527 = vmatmul.mubr.bf16.gmra.mxu0 %v6254
  %v6528 = vpop.f32.mrf.mxu0
  %v6529 = vadd.f32 0.0, %v6528
  %v6530 = vpop.f32.mrf.mxu0
  %v6531 = vpop.f32.mrf.mxu0
  %v6532 = vadd.f32 0.0, %v6531
  %v6533 = vpop.f32.mrf.mxu0
  %6534 = vmatprep.mubr.bf16.mxu0 0
  %6535 = vmatmul.mubr.bf16.gmra.mxu0 %v6257
  %v6536 = vpop.f32.mrf.mxu0
  %v6537 = vadd.f32 0.0, %v6536
  %v6538 = vpop.f32.mrf.mxu0
  %v6539 = vpop.f32.mrf.mxu0
  %v6540 = vadd.f32 0.0, %v6539
  %v6541 = vpop.f32.mrf.mxu0
  %6542 = vmatprep.mubr.bf16.mxu0 0
  %6543 = vmatmul.mubr.bf16.gmra.mxu0 %v6260
  %v6544 = vpop.f32.mrf.mxu0
  %v6545 = vadd.f32 0.0, %v6544
  %v6546 = vpop.f32.mrf.mxu0
  %v6547 = vpop.f32.mrf.mxu0
  %v6548 = vadd.f32 0.0, %v6547
  %v6549 = vpop.f32.mrf.mxu0
  %6550 = vdwg.mxu0
  %v6552 = vsel %vm1552, %v3798, 0
  %v6555 = vsel %vm1552, %v3799, 0
  %v6558 = vsel %vm1552, %v3800, 0
  %v6561 = vsel %vm1552, %v3801, 0
  %v6564 = vsel %vm1552, %v3802, 0
  %v6567 = vsel %vm1552, %v3803, 0
  %v6570 = vsel %vm1552, %v3804, 0
  %v6573 = vsel %vm1552, %v3805, 0
  %v6576 = vsel %vm1552, %v3806, 0
  %v6579 = vsel %vm1552, %v3807, 0
  %v6582 = vsel %vm1552, %v3808, 0
  %v6585 = vsel %vm1552, %v3809, 0
  %v6588 = vsel %vm1552, %v3810, 0
  %v6591 = vsel %vm1552, %v3811, 0
  %v6594 = vsel %vm1552, %v3812, 0
  %v6597 = vsel %vm1552, %v3813, 0
  %v6600 = vsel %vm1552, %v3814, 0
  %v6603 = vsel %vm1552, %v3815, 0
  %v6606 = vsel %vm1552, %v3816, 0
  %v6609 = vsel %vm1552, %v3817, 0
  %v6612 = vsel %vm1552, %v3818, 0
  %v6615 = vsel %vm1552, %v3819, 0
  %v6618 = vsel %vm1552, %v3820, 0
  %v6621 = vsel %vm1552, %v3821, 0
  %v6624 = vsel %vm1552, %v3822, 0
  %v6627 = vsel %vm1552, %v3823, 0
  %v6630 = vsel %vm1552, %v3824, 0
  %v6633 = vsel %vm1552, %v3825, 0
  %v6636 = vsel %vm1552, %v3826, 0
  %v6639 = vsel %vm1552, %v3827, 0
  %v6642 = vsel %vm1552, %v3828, 0
  %v6645 = vsel %vm1552, %v3829, 0
  %6647 = vmatprep.subr.bf16.mxu0 0
  %6648 = vmatpush1.bf16.msra.mxu0 0
  %6649 = vmatprep.subr.bf16.mxu0 0
  %6650 = vmatpush1.bf16.msra.mxu0 0
  %6651 = vmatprep.subr.bf16.mxu0 0
  %6652 = vmatpush1.bf16.msra.mxu0 0
  %6653 = vmatprep.subr.bf16.mxu0 0
  %6654 = vmatpush1.bf16.msra.mxu0 0
  %6655 = vmatprep.subr.bf16.mxu0 0
  %6656 = vmatpush1.bf16.msra.mxu0 0
  %6657 = vmatprep.subr.bf16.mxu0 0
  %6658 = vmatpush1.bf16.msra.mxu0 0
  %6659 = vmatprep.subr.bf16.mxu0 0
  %6660 = vmatpush1.bf16.msra.mxu0 0
  %6661 = vmatprep.subr.bf16.mxu0 0
  %6662 = vmatpush1.bf16.msra.mxu0 %v3832
  %6663 = vmatprep.subr.bf16.mxu0 0
  %6664 = vmatpush2.bf16.msra.mxu0 0
  %6665 = vmatprep.subr.bf16.mxu0 0
  %6666 = vmatpush2.bf16.msra.mxu0 0
  %6667 = vmatprep.subr.bf16.mxu0 0
  %6668 = vmatpush2.bf16.msra.mxu0 0
  %6669 = vmatprep.subr.bf16.mxu0 0
  %6670 = vmatpush2.bf16.msra.mxu0 0
  %6671 = vmatprep.subr.bf16.mxu0 0
  %6672 = vmatpush2.bf16.msra.mxu0 0
  %6673 = vmatprep.subr.bf16.mxu0 0
  %6674 = vmatpush2.bf16.msra.mxu0 0
  %6675 = vmatprep.subr.bf16.mxu0 0
  %6676 = vmatpush2.bf16.msra.mxu0 0
  %6677 = vmatprep.subr.bf16.mxu0 0
  %6678 = vmatpush2.bf16.msra.mxu0 0
  %6679 = vmatprep.mubr.bf16.mxu0 0
  %6680 = vmatmul.mubr.bf16.gmra.mxu0 %v6552
  %v6681 = vpop.f32.mrf.mxu0
  %v6682 = vadd.f32 %v6297, %v6681
  %v6683 = vpop.f32.mrf.mxu0
  %v6684 = vpop.f32.mrf.mxu0
  %v6685 = vadd.f32 %v6300, %v6684
  %v6686 = vpop.f32.mrf.mxu0
  %6687 = vmatprep.mubr.bf16.mxu0 0
  %6688 = vmatmul.mubr.bf16.gmra.mxu0 %v6555
  %v6689 = vpop.f32.mrf.mxu0
  %v6690 = vadd.f32 %v6305, %v6689
  %v6691 = vpop.f32.mrf.mxu0
  %v6692 = vpop.f32.mrf.mxu0
  %v6693 = vadd.f32 %v6308, %v6692
  %v6694 = vpop.f32.mrf.mxu0
  %6695 = vmatprep.mubr.bf16.mxu0 0
  %6696 = vmatmul.mubr.bf16.gmra.mxu0 %v6558
  %v6697 = vpop.f32.mrf.mxu0
  %v6698 = vadd.f32 %v6313, %v6697
  %v6699 = vpop.f32.mrf.mxu0
  %v6700 = vpop.f32.mrf.mxu0
  %v6701 = vadd.f32 %v6316, %v6700
  %v6702 = vpop.f32.mrf.mxu0
  %6703 = vmatprep.mubr.bf16.mxu0 0
  %6704 = vmatmul.mubr.bf16.gmra.mxu0 %v6561
  %v6705 = vpop.f32.mrf.mxu0
  %v6706 = vadd.f32 %v6321, %v6705
  %v6707 = vpop.f32.mrf.mxu0
  %v6708 = vpop.f32.mrf.mxu0
  %v6709 = vadd.f32 %v6324, %v6708
  %v6710 = vpop.f32.mrf.mxu0
  %6711 = vmatprep.mubr.bf16.mxu0 0
  %6712 = vmatmul.mubr.bf16.gmra.mxu0 %v6564
  %v6713 = vpop.f32.mrf.mxu0
  %v6714 = vadd.f32 %v6329, %v6713
  %v6715 = vpop.f32.mrf.mxu0
  %v6716 = vpop.f32.mrf.mxu0
  %v6717 = vadd.f32 %v6332, %v6716
  %v6718 = vpop.f32.mrf.mxu0
  %6719 = vmatprep.mubr.bf16.mxu0 0
  %6720 = vmatmul.mubr.bf16.gmra.mxu0 %v6567
  %v6721 = vpop.f32.mrf.mxu0
  %v6722 = vadd.f32 %v6337, %v6721
  %v6723 = vpop.f32.mrf.mxu0
  %v6724 = vpop.f32.mrf.mxu0
  %v6725 = vadd.f32 %v6340, %v6724
  %v6726 = vpop.f32.mrf.mxu0
  %6727 = vmatprep.mubr.bf16.mxu0 0
  %6728 = vmatmul.mubr.bf16.gmra.mxu0 %v6570
  %v6729 = vpop.f32.mrf.mxu0
  %v6730 = vadd.f32 %v6345, %v6729
  %v6731 = vpop.f32.mrf.mxu0
  %v6732 = vpop.f32.mrf.mxu0
  %v6733 = vadd.f32 %v6348, %v6732
  %v6734 = vpop.f32.mrf.mxu0
  %6735 = vmatprep.mubr.bf16.mxu0 0
  %6736 = vmatmul.mubr.bf16.gmra.mxu0 %v6573
  %v6737 = vpop.f32.mrf.mxu0
  %v6738 = vadd.f32 %v6353, %v6737
  %v6739 = vpop.f32.mrf.mxu0
  %v6740 = vpop.f32.mrf.mxu0
  %v6741 = vadd.f32 %v6356, %v6740
  %v6742 = vpop.f32.mrf.mxu0
  %6743 = vmatprep.mubr.bf16.mxu0 0
  %6744 = vmatmul.mubr.bf16.gmra.mxu0 %v6576
  %v6745 = vpop.f32.mrf.mxu0
  %v6746 = vadd.f32 %v6361, %v6745
  %v6747 = vpop.f32.mrf.mxu0
  %v6748 = vpop.f32.mrf.mxu0
  %v6749 = vadd.f32 %v6364, %v6748
  %v6750 = vpop.f32.mrf.mxu0
  %6751 = vmatprep.mubr.bf16.mxu0 0
  %6752 = vmatmul.mubr.bf16.gmra.mxu0 %v6579
  %v6753 = vpop.f32.mrf.mxu0
  %v6754 = vadd.f32 %v6369, %v6753
  %v6755 = vpop.f32.mrf.mxu0
  %v6756 = vpop.f32.mrf.mxu0
  %v6757 = vadd.f32 %v6372, %v6756
  %v6758 = vpop.f32.mrf.mxu0
  %6759 = vmatprep.mubr.bf16.mxu0 0
  %6760 = vmatmul.mubr.bf16.gmra.mxu0 %v6582
  %v6761 = vpop.f32.mrf.mxu0
  %v6762 = vadd.f32 %v6377, %v6761
  %v6763 = vpop.f32.mrf.mxu0
  %v6764 = vpop.f32.mrf.mxu0
  %v6765 = vadd.f32 %v6380, %v6764
  %v6766 = vpop.f32.mrf.mxu0
  %6767 = vmatprep.mubr.bf16.mxu0 0
  %6768 = vmatmul.mubr.bf16.gmra.mxu0 %v6585
  %v6769 = vpop.f32.mrf.mxu0
  %v6770 = vadd.f32 %v6385, %v6769
  %v6771 = vpop.f32.mrf.mxu0
  %v6772 = vpop.f32.mrf.mxu0
  %v6773 = vadd.f32 %v6388, %v6772
  %v6774 = vpop.f32.mrf.mxu0
  %6775 = vmatprep.mubr.bf16.mxu0 0
  %6776 = vmatmul.mubr.bf16.gmra.mxu0 %v6588
  %v6777 = vpop.f32.mrf.mxu0
  %v6778 = vadd.f32 %v6393, %v6777
  %v6779 = vpop.f32.mrf.mxu0
  %v6780 = vpop.f32.mrf.mxu0
  %v6781 = vadd.f32 %v6396, %v6780
  %v6782 = vpop.f32.mrf.mxu0
  %6783 = vmatprep.mubr.bf16.mxu0 0
  %6784 = vmatmul.mubr.bf16.gmra.mxu0 %v6591
  %v6785 = vpop.f32.mrf.mxu0
  %v6786 = vadd.f32 %v6401, %v6785
  %v6787 = vpop.f32.mrf.mxu0
  %v6788 = vpop.f32.mrf.mxu0
  %v6789 = vadd.f32 %v6404, %v6788
  %v6790 = vpop.f32.mrf.mxu0
  %6791 = vmatprep.mubr.bf16.mxu0 0
  %6792 = vmatmul.mubr.bf16.gmra.mxu0 %v6594
  %v6793 = vpop.f32.mrf.mxu0
  %v6794 = vadd.f32 %v6409, %v6793
  %v6795 = vpop.f32.mrf.mxu0
  %v6796 = vpop.f32.mrf.mxu0
  %v6797 = vadd.f32 %v6412, %v6796
  %v6798 = vpop.f32.mrf.mxu0
  %6799 = vmatprep.mubr.bf16.mxu0 0
  %6800 = vmatmul.mubr.bf16.gmra.mxu0 %v6597
  %v6801 = vpop.f32.mrf.mxu0
  %v6802 = vadd.f32 %v6417, %v6801
  %v6803 = vpop.f32.mrf.mxu0
  %v6804 = vpop.f32.mrf.mxu0
  %v6805 = vadd.f32 %v6420, %v6804
  %v6806 = vpop.f32.mrf.mxu0
  %6807 = vmatprep.mubr.bf16.mxu0 0
  %6808 = vmatmul.mubr.bf16.gmra.mxu0 %v6600
  %v6809 = vpop.f32.mrf.mxu0
  %v6810 = vadd.f32 %v6425, %v6809
  %v6811 = vpop.f32.mrf.mxu0
  %v6812 = vpop.f32.mrf.mxu0
  %v6813 = vadd.f32 %v6428, %v6812
  %v6814 = vpop.f32.mrf.mxu0
  %6815 = vmatprep.mubr.bf16.mxu0 0
  %6816 = vmatmul.mubr.bf16.gmra.mxu0 %v6603
  %v6817 = vpop.f32.mrf.mxu0
  %v6818 = vadd.f32 %v6433, %v6817
  %v6819 = vpop.f32.mrf.mxu0
  %v6820 = vpop.f32.mrf.mxu0
  %v6821 = vadd.f32 %v6436, %v6820
  %v6822 = vpop.f32.mrf.mxu0
  %6823 = vmatprep.mubr.bf16.mxu0 0
  %6824 = vmatmul.mubr.bf16.gmra.mxu0 %v6606
  %v6825 = vpop.f32.mrf.mxu0
  %v6826 = vadd.f32 %v6441, %v6825
  %v6827 = vpop.f32.mrf.mxu0
  %v6828 = vpop.f32.mrf.mxu0
  %v6829 = vadd.f32 %v6444, %v6828
  %v6830 = vpop.f32.mrf.mxu0
  %6831 = vmatprep.mubr.bf16.mxu0 0
  %6832 = vmatmul.mubr.bf16.gmra.mxu0 %v6609
  %v6833 = vpop.f32.mrf.mxu0
  %v6834 = vadd.f32 %v6449, %v6833
  %v6835 = vpop.f32.mrf.mxu0
  %v6836 = vpop.f32.mrf.mxu0
  %v6837 = vadd.f32 %v6452, %v6836
  %v6838 = vpop.f32.mrf.mxu0
  %6839 = vmatprep.mubr.bf16.mxu0 0
  %6840 = vmatmul.mubr.bf16.gmra.mxu0 %v6612
  %v6841 = vpop.f32.mrf.mxu0
  %v6842 = vadd.f32 %v6457, %v6841
  %v6843 = vpop.f32.mrf.mxu0
  %v6844 = vpop.f32.mrf.mxu0
  %v6845 = vadd.f32 %v6460, %v6844
  %v6846 = vpop.f32.mrf.mxu0
  %6847 = vmatprep.mubr.bf16.mxu0 0
  %6848 = vmatmul.mubr.bf16.gmra.mxu0 %v6615
  %v6849 = vpop.f32.mrf.mxu0
  %v6850 = vadd.f32 %v6465, %v6849
  %v6851 = vpop.f32.mrf.mxu0
  %v6852 = vpop.f32.mrf.mxu0
  %v6853 = vadd.f32 %v6468, %v6852
  %v6854 = vpop.f32.mrf.mxu0
  %6855 = vmatprep.mubr.bf16.mxu0 0
  %6856 = vmatmul.mubr.bf16.gmra.mxu0 %v6618
  %v6857 = vpop.f32.mrf.mxu0
  %v6858 = vadd.f32 %v6473, %v6857
  %v6859 = vpop.f32.mrf.mxu0
  %v6860 = vpop.f32.mrf.mxu0
  %v6861 = vadd.f32 %v6476, %v6860
  %v6862 = vpop.f32.mrf.mxu0
  %6863 = vmatprep.mubr.bf16.mxu0 0
  %6864 = vmatmul.mubr.bf16.gmra.mxu0 %v6621
  %v6865 = vpop.f32.mrf.mxu0
  %v6866 = vadd.f32 %v6481, %v6865
  %v6867 = vpop.f32.mrf.mxu0
  %v6868 = vpop.f32.mrf.mxu0
  %v6869 = vadd.f32 %v6484, %v6868
  %v6870 = vpop.f32.mrf.mxu0
  %6871 = vmatprep.mubr.bf16.mxu0 0
  %6872 = vmatmul.mubr.bf16.gmra.mxu0 %v6624
  %v6873 = vpop.f32.mrf.mxu0
  %v6874 = vadd.f32 %v6489, %v6873
  %v6875 = vpop.f32.mrf.mxu0
  %v6876 = vpop.f32.mrf.mxu0
  %v6877 = vadd.f32 %v6492, %v6876
  %v6878 = vpop.f32.mrf.mxu0
  %6879 = vmatprep.mubr.bf16.mxu0 0
  %6880 = vmatmul.mubr.bf16.gmra.mxu0 %v6627
  %v6881 = vpop.f32.mrf.mxu0
  %v6882 = vadd.f32 %v6497, %v6881
  %v6883 = vpop.f32.mrf.mxu0
  %v6884 = vpop.f32.mrf.mxu0
  %v6885 = vadd.f32 %v6500, %v6884
  %v6886 = vpop.f32.mrf.mxu0
  %6887 = vmatprep.mubr.bf16.mxu0 0
  %6888 = vmatmul.mubr.bf16.gmra.mxu0 %v6630
  %v6889 = vpop.f32.mrf.mxu0
  %v6890 = vadd.f32 %v6505, %v6889
  %v6891 = vpop.f32.mrf.mxu0
  %v6892 = vpop.f32.mrf.mxu0
  %v6893 = vadd.f32 %v6508, %v6892
  %v6894 = vpop.f32.mrf.mxu0
  %6895 = vmatprep.mubr.bf16.mxu0 0
  %6896 = vmatmul.mubr.bf16.gmra.mxu0 %v6633
  %v6897 = vpop.f32.mrf.mxu0
  %v6898 = vadd.f32 %v6513, %v6897
  %v6899 = vpop.f32.mrf.mxu0
  %v6900 = vpop.f32.mrf.mxu0
  %v6901 = vadd.f32 %v6516, %v6900
  %v6902 = vpop.f32.mrf.mxu0
  %6903 = vmatprep.mubr.bf16.mxu0 0
  %6904 = vmatmul.mubr.bf16.gmra.mxu0 %v6636
  %v6905 = vpop.f32.mrf.mxu0
  %v6906 = vadd.f32 %v6521, %v6905
  %v6907 = vpop.f32.mrf.mxu0
  %v6908 = vpop.f32.mrf.mxu0
  %v6909 = vadd.f32 %v6524, %v6908
  %v6910 = vpop.f32.mrf.mxu0
  %6911 = vmatprep.mubr.bf16.mxu0 0
  %6912 = vmatmul.mubr.bf16.gmra.mxu0 %v6639
  %v6913 = vpop.f32.mrf.mxu0
  %v6914 = vadd.f32 %v6529, %v6913
  %v6915 = vpop.f32.mrf.mxu0
  %v6916 = vpop.f32.mrf.mxu0
  %v6917 = vadd.f32 %v6532, %v6916
  %v6918 = vpop.f32.mrf.mxu0
  %6919 = vmatprep.mubr.bf16.mxu0 0
  %6920 = vmatmul.mubr.bf16.gmra.mxu0 %v6642
  %v6921 = vpop.f32.mrf.mxu0
  %v6922 = vadd.f32 %v6537, %v6921
  %v6923 = vpop.f32.mrf.mxu0
  %v6924 = vpop.f32.mrf.mxu0
  %v6925 = vadd.f32 %v6540, %v6924
  %v6926 = vpop.f32.mrf.mxu0
  %6927 = vmatprep.mubr.bf16.mxu0 0
  %6928 = vmatmul.mubr.bf16.gmra.mxu0 %v6645
  %v6929 = vpop.f32.mrf.mxu0
  %v6930 = vadd.f32 %v6545, %v6929
  %v6931 = vpop.f32.mrf.mxu0
  %v6932 = vpop.f32.mrf.mxu0
  %v6933 = vadd.f32 %v6548, %v6932
  %v6934 = vpop.f32.mrf.mxu0
  %6935 = vdwg.mxu0
  %v6936 = vld [vmem:[%s7] sm:$0x1]
  %v6938 = vlaneseq
  %v6939 = vshrl.u32 %v6938, 7
  %v6940 = vsub.s32 0, %v6939
  %v6941 = vrot.slane %v6936, %v6940
  %v6943 = vadd.f32 %v6682, %v6941
  %v6944 = vadd.f32 %v6685, %v6941
  %v6945 = vadd.f32 %v6690, %v6941
  %v6946 = vadd.f32 %v6693, %v6941
  %v6947 = vadd.f32 %v6698, %v6941
  %v6948 = vadd.f32 %v6701, %v6941
  %v6949 = vadd.f32 %v6706, %v6941
  %v6950 = vadd.f32 %v6709, %v6941
  %v6951 = vadd.f32 %v6714, %v6941
  %v6952 = vadd.f32 %v6717, %v6941
  %v6953 = vadd.f32 %v6722, %v6941
  %v6954 = vadd.f32 %v6725, %v6941
  %v6955 = vadd.f32 %v6730, %v6941
  %v6956 = vadd.f32 %v6733, %v6941
  %v6957 = vadd.f32 %v6738, %v6941
  %v6958 = vadd.f32 %v6741, %v6941
  %v6959 = vadd.f32 %v6746, %v6941
  %v6960 = vadd.f32 %v6749, %v6941
  %v6961 = vadd.f32 %v6754, %v6941
  %v6962 = vadd.f32 %v6757, %v6941
  %v6963 = vadd.f32 %v6762, %v6941
  %v6964 = vadd.f32 %v6765, %v6941
  %v6965 = vadd.f32 %v6770, %v6941
  %v6966 = vadd.f32 %v6773, %v6941
  %v6967 = vadd.f32 %v6778, %v6941
  %v6968 = vadd.f32 %v6781, %v6941
  %v6969 = vadd.f32 %v6786, %v6941
  %v6970 = vadd.f32 %v6789, %v6941
  %v6971 = vadd.f32 %v6794, %v6941
  %v6972 = vadd.f32 %v6797, %v6941
  %v6973 = vadd.f32 %v6802, %v6941
  %v6974 = vadd.f32 %v6805, %v6941
  %v6975 = vadd.f32 %v6810, %v6941
  %v6976 = vadd.f32 %v6813, %v6941
  %v6977 = vadd.f32 %v6818, %v6941
  %v6978 = vadd.f32 %v6821, %v6941
  %v6979 = vadd.f32 %v6826, %v6941
  %v6980 = vadd.f32 %v6829, %v6941
  %v6981 = vadd.f32 %v6834, %v6941
  %v6982 = vadd.f32 %v6837, %v6941
  %v6983 = vadd.f32 %v6842, %v6941
  %v6984 = vadd.f32 %v6845, %v6941
  %v6985 = vadd.f32 %v6850, %v6941
  %v6986 = vadd.f32 %v6853, %v6941
  %v6987 = vadd.f32 %v6858, %v6941
  %v6988 = vadd.f32 %v6861, %v6941
  %v6989 = vadd.f32 %v6866, %v6941
  %v6990 = vadd.f32 %v6869, %v6941
  %v6991 = vadd.f32 %v6874, %v6941
  %v6992 = vadd.f32 %v6877, %v6941
  %v6993 = vadd.f32 %v6882, %v6941
  %v6994 = vadd.f32 %v6885, %v6941
  %v6995 = vadd.f32 %v6890, %v6941
  %v6996 = vadd.f32 %v6893, %v6941
  %v6997 = vadd.f32 %v6898, %v6941
  %v6998 = vadd.f32 %v6901, %v6941
  %v6999 = vadd.f32 %v6906, %v6941
  %v7000 = vadd.f32 %v6909, %v6941
  %v7001 = vadd.f32 %v6914, %v6941
  %v7002 = vadd.f32 %v6917, %v6941
  %v7003 = vadd.f32 %v6922, %v6941
  %v7004 = vadd.f32 %v6925, %v6941
  %v7005 = vadd.f32 %v6930, %v6941
  %v7006 = vadd.f32 %v6933, %v6941
  %v7007 = vadd.f32 %v6943, %v30
  %v7008 = vadd.f32 %v6944, %v31
  %v7009 = vadd.f32 %v6945, %v32
  %v7010 = vadd.f32 %v6946, %v33
  %v7011 = vadd.f32 %v6947, %v34
  %v7012 = vadd.f32 %v6948, %v35
  %v7013 = vadd.f32 %v6949, %v36
  %v7014 = vadd.f32 %v6950, %v37
  %v7015 = vadd.f32 %v6951, %v38
  %v7016 = vadd.f32 %v6952, %v39
  %v7017 = vadd.f32 %v6953, %v40
  %v7018 = vadd.f32 %v6954, %v41
  %v7019 = vadd.f32 %v6955, %v42
  %v7020 = vadd.f32 %v6956, %v43
  %v7021 = vadd.f32 %v6957, %v44
  %v7022 = vadd.f32 %v6958, %v45
  %v7023 = vadd.f32 %v6959, %v46
  %v7024 = vadd.f32 %v6960, %v47
  %v7025 = vadd.f32 %v6961, %v48
  %v7026 = vadd.f32 %v6962, %v49
  %v7027 = vadd.f32 %v6963, %v50
  %v7028 = vadd.f32 %v6964, %v51
  %v7029 = vadd.f32 %v6965, %v52
  %v7030 = vadd.f32 %v6966, %v53
  %v7031 = vadd.f32 %v6967, %v54
  %v7032 = vadd.f32 %v6968, %v55
  %v7033 = vadd.f32 %v6969, %v56
  %v7034 = vadd.f32 %v6970, %v57
  %v7035 = vadd.f32 %v6971, %v58
  %v7036 = vadd.f32 %v6972, %v59
  %v7037 = vadd.f32 %v6973, %v60
  %v7038 = vadd.f32 %v6974, %v61
  %v7039 = vadd.f32 %v6975, %v62
  %v7040 = vadd.f32 %v6976, %v63
  %v7041 = vadd.f32 %v6977, %v64
  %v7042 = vadd.f32 %v6978, %v65
  %v7043 = vadd.f32 %v6979, %v66
  %v7044 = vadd.f32 %v6980, %v67
  %v7045 = vadd.f32 %v6981, %v68
  %v7046 = vadd.f32 %v6982, %v69
  %v7047 = vadd.f32 %v6983, %v70
  %v7048 = vadd.f32 %v6984, %v71
  %v7049 = vadd.f32 %v6985, %v72
  %v7050 = vadd.f32 %v6986, %v73
  %v7051 = vadd.f32 %v6987, %v74
  %v7052 = vadd.f32 %v6988, %v75
  %v7053 = vadd.f32 %v6989, %v76
  %v7054 = vadd.f32 %v6990, %v77
  %v7055 = vadd.f32 %v6991, %v78
  %v7056 = vadd.f32 %v6992, %v79
  %v7057 = vadd.f32 %v6993, %v80
  %v7058 = vadd.f32 %v6994, %v81
  %v7059 = vadd.f32 %v6995, %v82
  %v7060 = vadd.f32 %v6996, %v83
  %v7061 = vadd.f32 %v6997, %v84
  %v7062 = vadd.f32 %v6998, %v85
  %v7063 = vadd.f32 %v6999, %v86
  %v7064 = vadd.f32 %v7000, %v87
  %v7065 = vadd.f32 %v7001, %v88
  %v7066 = vadd.f32 %v7002, %v89
  %v7067 = vadd.f32 %v7003, %v90
  %v7068 = vadd.f32 %v7004, %v91
  %v7069 = vadd.f32 %v7005, %v92
  %v7070 = vadd.f32 %v7006, %v93
  %7071 = vst.msk [vmem:[%s8] sm:$0xff] %vm94, %v7007
  %7072 = vst.msk [vmem:[%s8 + $0x8] sm:$0xff] %vm94, %v7008
  %7073 = vst.msk [vmem:[%s8 + $0x10] sm:$0xff] %vm94, %v7009
  %7074 = vst.msk [vmem:[%s8 + $0x18] sm:$0xff] %vm94, %v7010
  %7075 = vst.msk [vmem:[%s8 + $0x20] sm:$0xff] %vm94, %v7011
  %7076 = vst.msk [vmem:[%s8 + $0x28] sm:$0xff] %vm94, %v7012
  %7077 = vst.msk [vmem:[%s8 + $0x30] sm:$0xff] %vm94, %v7013
  %7078 = vst.msk [vmem:[%s8 + $0x38] sm:$0xff] %vm94, %v7014
  %7079 = vst.msk [vmem:[%s8 + $0x40] sm:$0xff] %vm94, %v7015
  %7080 = vst.msk [vmem:[%s8 + $0x48] sm:$0xff] %vm94, %v7016
  %7081 = vst.msk [vmem:[%s8 + $0x50] sm:$0xff] %vm94, %v7017
  %7082 = vst.msk [vmem:[%s8 + $0x58] sm:$0xff] %vm94, %v7018
  %7083 = vst.msk [vmem:[%s8 + $0x60] sm:$0xff] %vm94, %v7019
  %7084 = vst.msk [vmem:[%s8 + $0x68] sm:$0xff] %vm94, %v7020
  %7085 = vst.msk [vmem:[%s8 + $0x70] sm:$0xff] %vm94, %v7021
  %7086 = vst.msk [vmem:[%s8 + $0x78] sm:$0xff] %vm94, %v7022
  %7087 = vst.msk [vmem:[%s8 + $0x80] sm:$0xff] %vm94, %v7023
  %7088 = vst.msk [vmem:[%s8 + $0x88] sm:$0xff] %vm94, %v7024
  %7089 = vst.msk [vmem:[%s8 + $0x90] sm:$0xff] %vm94, %v7025
  %7090 = vst.msk [vmem:[%s8 + $0x98] sm:$0xff] %vm94, %v7026
  %7091 = vst.msk [vmem:[%s8 + $0xa0] sm:$0xff] %vm94, %v7027
  %7092 = vst.msk [vmem:[%s8 + $0xa8] sm:$0xff] %vm94, %v7028
  %7093 = vst.msk [vmem:[%s8 + $0xb0] sm:$0xff] %vm94, %v7029
  %7094 = vst.msk [vmem:[%s8 + $0xb8] sm:$0xff] %vm94, %v7030
  %7095 = vst.msk [vmem:[%s8 + $0xc0] sm:$0xff] %vm94, %v7031
  %7096 = vst.msk [vmem:[%s8 + $0xc8] sm:$0xff] %vm94, %v7032
  %7097 = vst.msk [vmem:[%s8 + $0xd0] sm:$0xff] %vm94, %v7033
  %7098 = vst.msk [vmem:[%s8 + $0xd8] sm:$0xff] %vm94, %v7034
  %7099 = vst.msk [vmem:[%s8 + $0xe0] sm:$0xff] %vm94, %v7035
  %7100 = vst.msk [vmem:[%s8 + $0xe8] sm:$0xff] %vm94, %v7036
  %7101 = vst.msk [vmem:[%s8 + $0xf0] sm:$0xff] %vm94, %v7037
  %7102 = vst.msk [vmem:[%s8 + $0xf8] sm:$0xff] %vm94, %v7038
  %7103 = vst.msk [vmem:[%s8 + $0x100] sm:$0xff] %vm94, %v7039
  %7104 = vst.msk [vmem:[%s8 + $0x108] sm:$0xff] %vm94, %v7040
  %7105 = vst.msk [vmem:[%s8 + $0x110] sm:$0xff] %vm94, %v7041
  %7106 = vst.msk [vmem:[%s8 + $0x118] sm:$0xff] %vm94, %v7042
  %7107 = vst.msk [vmem:[%s8 + $0x120] sm:$0xff] %vm94, %v7043
  %7108 = vst.msk [vmem:[%s8 + $0x128] sm:$0xff] %vm94, %v7044
  %7109 = vst.msk [vmem:[%s8 + $0x130] sm:$0xff] %vm94, %v7045
  %7110 = vst.msk [vmem:[%s8 + $0x138] sm:$0xff] %vm94, %v7046
  %7111 = vst.msk [vmem:[%s8 + $0x140] sm:$0xff] %vm94, %v7047
  %7112 = vst.msk [vmem:[%s8 + $0x148] sm:$0xff] %vm94, %v7048
  %7113 = vst.msk [vmem:[%s8 + $0x150] sm:$0xff] %vm94, %v7049
  %7114 = vst.msk [vmem:[%s8 + $0x158] sm:$0xff] %vm94, %v7050
  %7115 = vst.msk [vmem:[%s8 + $0x160] sm:$0xff] %vm94, %v7051
  %7116 = vst.msk [vmem:[%s8 + $0x168] sm:$0xff] %vm94, %v7052
  %7117 = vst.msk [vmem:[%s8 + $0x170] sm:$0xff] %vm94, %v7053
  %7118 = vst.msk [vmem:[%s8 + $0x178] sm:$0xff] %vm94, %v7054
  %7119 = vst.msk [vmem:[%s8 + $0x180] sm:$0xff] %vm94, %v7055
  %7120 = vst.msk [vmem:[%s8 + $0x188] sm:$0xff] %vm94, %v7056
  %7121 = vst.msk [vmem:[%s8 + $0x190] sm:$0xff] %vm94, %v7057
  %7122 = vst.msk [vmem:[%s8 + $0x198] sm:$0xff] %vm94, %v7058
  %7123 = vst.msk [vmem:[%s8 + $0x1a0] sm:$0xff] %vm94, %v7059
  %7124 = vst.msk [vmem:[%s8 + $0x1a8] sm:$0xff] %vm94, %v7060
  %7125 = vst.msk [vmem:[%s8 + $0x1b0] sm:$0xff] %vm94, %v7061
  %7126 = vst.msk [vmem:[%s8 + $0x1b8] sm:$0xff] %vm94, %v7062
  %7127 = vst.msk [vmem:[%s8 + $0x1c0] sm:$0xff] %vm94, %v7063
  %7128 = vst.msk [vmem:[%s8 + $0x1c8] sm:$0xff] %vm94, %v7064
  %7129 = vst.msk [vmem:[%s8 + $0x1d0] sm:$0xff] %vm94, %v7065
  %7130 = vst.msk [vmem:[%s8 + $0x1d8] sm:$0xff] %vm94, %v7066
  %7131 = vst.msk [vmem:[%s8 + $0x1e0] sm:$0xff] %vm94, %v7067
  %7132 = vst.msk [vmem:[%s8 + $0x1e8] sm:$0xff] %vm94, %v7068
  %7133 = vst.msk [vmem:[%s8 + $0x1f0] sm:$0xff] %vm94, %v7069
  %7134 = vst.msk [vmem:[%s8 + $0x1f8] sm:$0xff] %vm94, %v7070
  // Predicated region
  $region34: #{ssm_ab_forward.7} parent=0 // pred_check
    _
  $region35: #{ssm_ab_forward.7} parent=0 // pred_check_branch
    %7136 = sbr.rel (0) target = $region37
  $region36: #{ssm_ab_forward.7} parent=0 // pred_region
    _
  $region37: #{ssm_ab_forward.7} parent=0 // pred_fallthru
    _
  // Predicated region
  $region38: #{ssm_ab_forward.7} parent=0 // pred_check
    _
  $region39: #{ssm_ab_forward.7} parent=0 // pred_check_branch
    %7138 = sbr.rel (0) target = $region41
  $region40: #{ssm_ab_forward.7} parent=0 // pred_region
    _
  $region41: #{ssm_ab_forward.7} parent=0 // pred_fallthru
    _

// kernel: ssm_ab_forward.10
$region0: #{ssm_ab_forward.10}
  #allocation0 [shape = 'u32[]', space=smem, size = 0x4, offset = 0x4, fixed_abs, tag = 'smem constant byte address 0x4 - core index']
  #allocation1 [shape = 'u32[144,128]{1,0:T(1,128)}', space=vmem, size = 0x12000, scoped, tag = 'internal scratch']
  %s0 = inlined_call_operand.vmem [shape: f32[512,128], index: 0, kind: input, shape index: {}]
  %s1 = inlined_call_operand.vmem [shape: f32[128,32], index: 1, kind: input, shape index: {}]
  %s2 = inlined_call_operand.vmem [shape: f32[512,32], index: 2, kind: input, shape index: {}]
  %s3 = inlined_call_operand.vmem [shape: f32[512,32], index: 3, kind: output, shape index: {}]
  %s4 = sld [smem:[#allocation0]]
  $region22: #{ssm_ab_forward.10} parent=0
    _
  %s6 = ssub.s32 1, %s4
  %s7 = scalar_select 0, %s6, %s4
  // Predicated region
  $region2: #{ssm_ab_forward.10} parent=0 // pred_check
    _
  $region3: #{ssm_ab_forward.10} parent=0 // pred_check_branch
    %9 = sbr.rel (0) target = $region5
  $region4: #{ssm_ab_forward.10} parent=0 // pred_region
    _
  $region5: #{ssm_ab_forward.10} parent=0 // pred_fallthru
    _
  // Predicated region
  $region6: #{ssm_ab_forward.10} parent=0 // pred_check
    _
  $region7: #{ssm_ab_forward.10} parent=0 // pred_check_branch
    %11 = sbr.rel (0) target = $region9
  $region8: #{ssm_ab_forward.10} parent=0 // pred_region
    _
  $region9: #{ssm_ab_forward.10} parent=0 // pred_fallthru
    _
  // Predicated region
  $region10: #{ssm_ab_forward.10} parent=0 // pred_check
    _
  $region11: #{ssm_ab_forward.10} parent=0 // pred_check_branch
    %13 = sbr.rel (0) target = $region13
  $region12: #{ssm_ab_forward.10} parent=0 // pred_region
    _
  $region13: #{ssm_ab_forward.10} parent=0 // pred_fallthru
    _
  %v15 = vld [vmem:[%s0] sm:$0xff]
  %v16 = vld [vmem:[%s0 + $0x8] sm:$0xff]
  %v17 = vld [vmem:[%s0 + $0x10] sm:$0xff]
  %v18 = vld [vmem:[%s0 + $0x18] sm:$0xff]
  %v19 = vld [vmem:[%s0 + $0x20] sm:$0xff]
  %v20 = vld [vmem:[%s0 + $0x28] sm:$0xff]
  %v21 = vld [vmem:[%s0 + $0x30] sm:$0xff]
  %v22 = vld [vmem:[%s0 + $0x38] sm:$0xff]
  %v23 = vld [vmem:[%s0 + $0x40] sm:$0xff]
  %v24 = vld [vmem:[%s0 + $0x48] sm:$0xff]
  %v25 = vld [vmem:[%s0 + $0x50] sm:$0xff]
  %v26 = vld [vmem:[%s0 + $0x58] sm:$0xff]
  %v27 = vld [vmem:[%s0 + $0x60] sm:$0xff]
  %v28 = vld [vmem:[%s0 + $0x68] sm:$0xff]
  %v29 = vld [vmem:[%s0 + $0x70] sm:$0xff]
  %v30 = vld [vmem:[%s0 + $0x78] sm:$0xff]
  %v31 = vld [vmem:[%s0 + $0x80] sm:$0xff]
  %v32 = vld [vmem:[%s0 + $0x88] sm:$0xff]
  %v33 = vld [vmem:[%s0 + $0x90] sm:$0xff]
  %v34 = vld [vmem:[%s0 + $0x98] sm:$0xff]
  %v35 = vld [vmem:[%s0 + $0xa0] sm:$0xff]
  %v36 = vld [vmem:[%s0 + $0xa8] sm:$0xff]
  %v37 = vld [vmem:[%s0 + $0xb0] sm:$0xff]
  %v38 = vld [vmem:[%s0 + $0xb8] sm:$0xff]
  %v39 = vld [vmem:[%s0 + $0xc0] sm:$0xff]
  %v40 = vld [vmem:[%s0 + $0xc8] sm:$0xff]
  %v41 = vld [vmem:[%s0 + $0xd0] sm:$0xff]
  %v42 = vld [vmem:[%s0 + $0xd8] sm:$0xff]
  %v43 = vld [vmem:[%s0 + $0xe0] sm:$0xff]
  %v44 = vld [vmem:[%s0 + $0xe8] sm:$0xff]
  %v45 = vld [vmem:[%s0 + $0xf0] sm:$0xff]
  %v46 = vld [vmem:[%s0 + $0xf8] sm:$0xff]
  %v47 = vld [vmem:[%s0 + $0x100] sm:$0xff]
  %v48 = vld [vmem:[%s0 + $0x108] sm:$0xff]
  %v49 = vld [vmem:[%s0 + $0x110] sm:$0xff]
  %v50 = vld [vmem:[%s0 + $0x118] sm:$0xff]
  %v51 = vld [vmem:[%s0 + $0x120] sm:$0xff]
  %v52 = vld [vmem:[%s0 + $0x128] sm:$0xff]
  %v53 = vld [vmem:[%s0 + $0x130] sm:$0xff]
  %v54 = vld [vmem:[%s0 + $0x138] sm:$0xff]
  %v55 = vld [vmem:[%s0 + $0x140] sm:$0xff]
  %v56 = vld [vmem:[%s0 + $0x148] sm:$0xff]
  %v57 = vld [vmem:[%s0 + $0x150] sm:$0xff]
  %v58 = vld [vmem:[%s0 + $0x158] sm:$0xff]
  %v59 = vld [vmem:[%s0 + $0x160] sm:$0xff]
  %v60 = vld [vmem:[%s0 + $0x168] sm:$0xff]
  %v61 = vld [vmem:[%s0 + $0x170] sm:$0xff]
  %v62 = vld [vmem:[%s0 + $0x178] sm:$0xff]
  %v63 = vld [vmem:[%s0 + $0x180] sm:$0xff]
  %v64 = vld [vmem:[%s0 + $0x188] sm:$0xff]
  %v65 = vld [vmem:[%s0 + $0x190] sm:$0xff]
  %v66 = vld [vmem:[%s0 + $0x198] sm:$0xff]
  %v67 = vld [vmem:[%s0 + $0x1a0] sm:$0xff]
  %v68 = vld [vmem:[%s0 + $0x1a8] sm:$0xff]
  %v69 = vld [vmem:[%s0 + $0x1b0] sm:$0xff]
  %v70 = vld [vmem:[%s0 + $0x1b8] sm:$0xff]
  %v71 = vld [vmem:[%s0 + $0x1c0] sm:$0xff]
  %v72 = vld [vmem:[%s0 + $0x1c8] sm:$0xff]
  %v73 = vld [vmem:[%s0 + $0x1d0] sm:$0xff]
  %v74 = vld [vmem:[%s0 + $0x1d8] sm:$0xff]
  %v75 = vld [vmem:[%s0 + $0x1e0] sm:$0xff]
  %v76 = vld [vmem:[%s0 + $0x1e8] sm:$0xff]
  %v77 = vld [vmem:[%s0 + $0x1f0] sm:$0xff]
  %v78 = vld [vmem:[%s0 + $0x1f8] sm:$0xff]
  %v79 = vld [vmem:[%s1] sm:$0xff]
  %v80 = vld [vmem:[%s1 + $0x8] sm:$0xff]
  %v81 = vld [vmem:[%s1 + $0x10] sm:$0xff]
  %v82 = vld [vmem:[%s1 + $0x18] sm:$0xff]
  %v83 = vld [vmem:[%s1 + $0x20] sm:$0xff]
  %v84 = vld [vmem:[%s1 + $0x28] sm:$0xff]
  %v85 = vld [vmem:[%s1 + $0x30] sm:$0xff]
  %v86 = vld [vmem:[%s1 + $0x38] sm:$0xff]
  %v87 = vld [vmem:[%s1 + $0x40] sm:$0xff]
  %v88 = vld [vmem:[%s1 + $0x48] sm:$0xff]
  %v89 = vld [vmem:[%s1 + $0x50] sm:$0xff]
  %v90 = vld [vmem:[%s1 + $0x58] sm:$0xff]
  %v91 = vld [vmem:[%s1 + $0x60] sm:$0xff]
  %v92 = vld [vmem:[%s1 + $0x68] sm:$0xff]
  %v93 = vld [vmem:[%s1 + $0x70] sm:$0xff]
  %v94 = vld [vmem:[%s1 + $0x78] sm:$0xff]
  %v95 = vpack.c.bf16 %v16, %v15
  %v96 = vpack.c.bf16 %v18, %v17
  %v97 = vpack.c.bf16 %v20, %v19
  %v98 = vpack.c.bf16 %v22, %v21
  %v99 = vpack.c.bf16 %v24, %v23
  %v100 = vpack.c.bf16 %v26, %v25
  %v101 = vpack.c.bf16 %v28, %v27
  %v102 = vpack.c.bf16 %v30, %v29
  %v103 = vpack.c.bf16 %v32, %v31
  %v104 = vpack.c.bf16 %v34, %v33
  %v105 = vpack.c.bf16 %v36, %v35
  %v106 = vpack.c.bf16 %v38, %v37
  %v107 = vpack.c.bf16 %v40, %v39
  %v108 = vpack.c.bf16 %v42, %v41
  %v109 = vpack.c.bf16 %v44, %v43
  %v110 = vpack.c.bf16 %v46, %v45
  %v111 = vpack.c.bf16 %v48, %v47
  %v112 = vpack.c.bf16 %v50, %v49
  %v113 = vpack.c.bf16 %v52, %v51
  %v114 = vpack.c.bf16 %v54, %v53
  %v115 = vpack.c.bf16 %v56, %v55
  %v116 = vpack.c.bf16 %v58, %v57
  %v117 = vpack.c.bf16 %v60, %v59
  %v118 = vpack.c.bf16 %v62, %v61
  %v119 = vpack.c.bf16 %v64, %v63
  %v120 = vpack.c.bf16 %v66, %v65
  %v121 = vpack.c.bf16 %v68, %v67
  %v122 = vpack.c.bf16 %v70, %v69
  %v123 = vpack.c.bf16 %v72, %v71
  %v124 = vpack.c.bf16 %v74, %v73
  %v125 = vpack.c.bf16 %v76, %v75
  %v126 = vpack.c.bf16 %v78, %v77
  %v127 = vpack.c.bf16 %v80, %v79
  %v128 = vpack.c.bf16 %v82, %v81
  %v129 = vpack.c.bf16 %v84, %v83
  %v130 = vpack.c.bf16 %v86, %v85
  %v131 = vpack.c.bf16 %v88, %v87
  %v132 = vpack.c.bf16 %v90, %v89
  %v133 = vpack.c.bf16 %v92, %v91
  %v134 = vpack.c.bf16 %v94, %v93
  %v135 = vld [vmem:[%s2] sm:$0xff]
  %v136 = vld [vmem:[%s2 + $0x8] sm:$0xff]
  %v137 = vld [vmem:[%s2 + $0x10] sm:$0xff]
  %v138 = vld [vmem:[%s2 + $0x18] sm:$0xff]
  %v139 = vld [vmem:[%s2 + $0x20] sm:$0xff]
  %v140 = vld [vmem:[%s2 + $0x28] sm:$0xff]
  %v141 = vld [vmem:[%s2 + $0x30] sm:$0xff]
  %v142 = vld [vmem:[%s2 + $0x38] sm:$0xff]
  %v143 = vld [vmem:[%s2 + $0x40] sm:$0xff]
  %v144 = vld [vmem:[%s2 + $0x48] sm:$0xff]
  %v145 = vld [vmem:[%s2 + $0x50] sm:$0xff]
  %v146 = vld [vmem:[%s2 + $0x58] sm:$0xff]
  %v147 = vld [vmem:[%s2 + $0x60] sm:$0xff]
  %v148 = vld [vmem:[%s2 + $0x68] sm:$0xff]
  %v149 = vld [vmem:[%s2 + $0x70] sm:$0xff]
  %v150 = vld [vmem:[%s2 + $0x78] sm:$0xff]
  %v151 = vld [vmem:[%s2 + $0x80] sm:$0xff]
  %v152 = vld [vmem:[%s2 + $0x88] sm:$0xff]
  %v153 = vld [vmem:[%s2 + $0x90] sm:$0xff]
  %v154 = vld [vmem:[%s2 + $0x98] sm:$0xff]
  %v155 = vld [vmem:[%s2 + $0xa0] sm:$0xff]
  %v156 = vld [vmem:[%s2 + $0xa8] sm:$0xff]
  %v157 = vld [vmem:[%s2 + $0xb0] sm:$0xff]
  %v158 = vld [vmem:[%s2 + $0xb8] sm:$0xff]
  %v159 = vld [vmem:[%s2 + $0xc0] sm:$0xff]
  %v160 = vld [vmem:[%s2 + $0xc8] sm:$0xff]
  %v161 = vld [vmem:[%s2 + $0xd0] sm:$0xff]
  %v162 = vld [vmem:[%s2 + $0xd8] sm:$0xff]
  %v163 = vld [vmem:[%s2 + $0xe0] sm:$0xff]
  %v164 = vld [vmem:[%s2 + $0xe8] sm:$0xff]
  %v165 = vld [vmem:[%s2 + $0xf0] sm:$0xff]
  %v166 = vld [vmem:[%s2 + $0xf8] sm:$0xff]
  %v167 = vld [vmem:[%s2 + $0x100] sm:$0xff]
  %v168 = vld [vmem:[%s2 + $0x108] sm:$0xff]
  %v169 = vld [vmem:[%s2 + $0x110] sm:$0xff]
  %v170 = vld [vmem:[%s2 + $0x118] sm:$0xff]
  %v171 = vld [vmem:[%s2 + $0x120] sm:$0xff]
  %v172 = vld [vmem:[%s2 + $0x128] sm:$0xff]
  %v173 = vld [vmem:[%s2 + $0x130] sm:$0xff]
  %v174 = vld [vmem:[%s2 + $0x138] sm:$0xff]
  %v175 = vld [vmem:[%s2 + $0x140] sm:$0xff]
  %v176 = vld [vmem:[%s2 + $0x148] sm:$0xff]
  %v177 = vld [vmem:[%s2 + $0x150] sm:$0xff]
  %v178 = vld [vmem:[%s2 + $0x158] sm:$0xff]
  %v179 = vld [vmem:[%s2 + $0x160] sm:$0xff]
  %v180 = vld [vmem:[%s2 + $0x168] sm:$0xff]
  %v181 = vld [vmem:[%s2 + $0x170] sm:$0xff]
  %v182 = vld [vmem:[%s2 + $0x178] sm:$0xff]
  %v183 = vld [vmem:[%s2 + $0x180] sm:$0xff]
  %v184 = vld [vmem:[%s2 + $0x188] sm:$0xff]
  %v185 = vld [vmem:[%s2 + $0x190] sm:$0xff]
  %v186 = vld [vmem:[%s2 + $0x198] sm:$0xff]
  %v187 = vld [vmem:[%s2 + $0x1a0] sm:$0xff]
  %v188 = vld [vmem:[%s2 + $0x1a8] sm:$0xff]
  %v189 = vld [vmem:[%s2 + $0x1b0] sm:$0xff]
  %v190 = vld [vmem:[%s2 + $0x1b8] sm:$0xff]
  %v191 = vld [vmem:[%s2 + $0x1c0] sm:$0xff]
  %v192 = vld [vmem:[%s2 + $0x1c8] sm:$0xff]
  %v193 = vld [vmem:[%s2 + $0x1d0] sm:$0xff]
  %v194 = vld [vmem:[%s2 + $0x1d8] sm:$0xff]
  %v195 = vld [vmem:[%s2 + $0x1e0] sm:$0xff]
  %v196 = vld [vmem:[%s2 + $0x1e8] sm:$0xff]
  %v197 = vld [vmem:[%s2 + $0x1f0] sm:$0xff]
  %v198 = vld [vmem:[%s2 + $0x1f8] sm:$0xff]
  %199 = vmatprep.subr.bf16.mxu0 0
  %200 = vmatpush1.bf16.msra.mxu0 %v134
  %201 = vmatprep.subr.bf16.mxu0 0
  %202 = vmatpush1.bf16.msra.mxu0 %v133
  %203 = vmatprep.subr.bf16.mxu0 0
  %204 = vmatpush1.bf16.msra.mxu0 %v132
  %205 = vmatprep.subr.bf16.mxu0 0
  %206 = vmatpush1.bf16.msra.mxu0 %v131
  %207 = vmatprep.subr.bf16.mxu0 0
  %208 = vmatpush1.bf16.msra.mxu0 %v130
  %209 = vmatprep.subr.bf16.mxu0 0
  %210 = vmatpush1.bf16.msra.mxu0 %v129
  %211 = vmatprep.subr.bf16.mxu0 0
  %212 = vmatpush1.bf16.msra.mxu0 %v128
  %213 = vmatprep.subr.bf16.mxu0 0
  %214 = vmatpush1.bf16.msra.mxu0 %v127
  %215 = vmatprep.subr.bf16.mxu0 0
  %216 = vmatpush2.bf16.msra.mxu0 0
  %217 = vmatprep.subr.bf16.mxu0 0
  %218 = vmatpush2.bf16.msra.mxu0 0
  %219 = vmatprep.subr.bf16.mxu0 0
  %220 = vmatpush2.bf16.msra.mxu0 0
  %221 = vmatprep.subr.bf16.mxu0 0
  %222 = vmatpush2.bf16.msra.mxu0 0
  %223 = vmatprep.subr.bf16.mxu0 0
  %224 = vmatpush2.bf16.msra.mxu0 0
  %225 = vmatprep.subr.bf16.mxu0 0
  %226 = vmatpush2.bf16.msra.mxu0 0
  %227 = vmatprep.subr.bf16.mxu0 0
  %228 = vmatpush2.bf16.msra.mxu0 0
  %229 = vmatprep.subr.bf16.mxu0 0
  %230 = vmatpush2.bf16.msra.mxu0 0
  %231 = vmatprep.mubr.bf16.mxu0 0
  %232 = vmatmul.mubr.bf16.gmra.mxu0 %v95
  %v233 = vpop.f32.mrf.mxu0
  %v234 = vadd.f32 %v135, %v233
  %v235 = vpop.f32.mrf.mxu0
  %v236 = vpop.f32.mrf.mxu0
  %v237 = vadd.f32 %v136, %v236
  %v238 = vpop.f32.mrf.mxu0
  %239 = vmatprep.mubr.bf16.mxu0 0
  %240 = vmatmul.mubr.bf16.gmra.mxu0 %v96
  %v241 = vpop.f32.mrf.mxu0
  %v242 = vadd.f32 %v137, %v241
  %v243 = vpop.f32.mrf.mxu0
  %v244 = vpop.f32.mrf.mxu0
  %v245 = vadd.f32 %v138, %v244
  %v246 = vpop.f32.mrf.mxu0
  %247 = vmatprep.mubr.bf16.mxu0 0
  %248 = vmatmul.mubr.bf16.gmra.mxu0 %v97
  %v249 = vpop.f32.mrf.mxu0
  %v250 = vadd.f32 %v139, %v249
  %v251 = vpop.f32.mrf.mxu0
  %v252 = vpop.f32.mrf.mxu0
  %v253 = vadd.f32 %v140, %v252
  %v254 = vpop.f32.mrf.mxu0
  %255 = vmatprep.mubr.bf16.mxu0 0
  %256 = vmatmul.mubr.bf16.gmra.mxu0 %v98
  %v257 = vpop.f32.mrf.mxu0
  %v258 = vadd.f32 %v141, %v257
  %v259 = vpop.f32.mrf.mxu0
  %v260 = vpop.f32.mrf.mxu0
  %v261 = vadd.f32 %v142, %v260
  %v262 = vpop.f32.mrf.mxu0
  %263 = vmatprep.mubr.bf16.mxu0 0
  %264 = vmatmul.mubr.bf16.gmra.mxu0 %v99
  %v265 = vpop.f32.mrf.mxu0
  %v266 = vadd.f32 %v143, %v265
  %v267 = vpop.f32.mrf.mxu0
  %v268 = vpop.f32.mrf.mxu0
  %v269 = vadd.f32 %v144, %v268
  %v270 = vpop.f32.mrf.mxu0
  %271 = vmatprep.mubr.bf16.mxu0 0
  %272 = vmatmul.mubr.bf16.gmra.mxu0 %v100
  %v273 = vpop.f32.mrf.mxu0
  %v274 = vadd.f32 %v145, %v273
  %v275 = vpop.f32.mrf.mxu0
  %v276 = vpop.f32.mrf.mxu0
  %v277 = vadd.f32 %v146, %v276
  %v278 = vpop.f32.mrf.mxu0
  %279 = vmatprep.mubr.bf16.mxu0 0
  %280 = vmatmul.mubr.bf16.gmra.mxu0 %v101
  %v281 = vpop.f32.mrf.mxu0
  %v282 = vadd.f32 %v147, %v281
  %v283 = vpop.f32.mrf.mxu0
  %v284 = vpop.f32.mrf.mxu0
  %v285 = vadd.f32 %v148, %v284
  %v286 = vpop.f32.mrf.mxu0
  %287 = vmatprep.mubr.bf16.mxu0 0
  %288 = vmatmul.mubr.bf16.gmra.mxu0 %v102
  %v289 = vpop.f32.mrf.mxu0
  %v290 = vadd.f32 %v149, %v289
  %v291 = vpop.f32.mrf.mxu0
  %v292 = vpop.f32.mrf.mxu0
  %v293 = vadd.f32 %v150, %v292
  %v294 = vpop.f32.mrf.mxu0
  %295 = vmatprep.mubr.bf16.mxu0 0
  %296 = vmatmul.mubr.bf16.gmra.mxu0 %v103
  %v297 = vpop.f32.mrf.mxu0
  %v298 = vadd.f32 %v151, %v297
  %v299 = vpop.f32.mrf.mxu0
  %v300 = vpop.f32.mrf.mxu0
  %v301 = vadd.f32 %v152, %v300
  %v302 = vpop.f32.mrf.mxu0
  %303 = vmatprep.mubr.bf16.mxu0 0
  %304 = vmatmul.mubr.bf16.gmra.mxu0 %v104
  %v305 = vpop.f32.mrf.mxu0
  %v306 = vadd.f32 %v153, %v305
  %v307 = vpop.f32.mrf.mxu0
  %v308 = vpop.f32.mrf.mxu0
  %v309 = vadd.f32 %v154, %v308
  %v310 = vpop.f32.mrf.mxu0
  %311 = vmatprep.mubr.bf16.mxu0 0
  %312 = vmatmul.mubr.bf16.gmra.mxu0 %v105
  %v313 = vpop.f32.mrf.mxu0
  %v314 = vadd.f32 %v155, %v313
  %v315 = vpop.f32.mrf.mxu0
  %v316 = vpop.f32.mrf.mxu0
  %v317 = vadd.f32 %v156, %v316
  %v318 = vpop.f32.mrf.mxu0
  %319 = vmatprep.mubr.bf16.mxu0 0
  %320 = vmatmul.mubr.bf16.gmra.mxu0 %v106
  %v321 = vpop.f32.mrf.mxu0
  %v322 = vadd.f32 %v157, %v321
  %v323 = vpop.f32.mrf.mxu0
  %v324 = vpop.f32.mrf.mxu0
  %v325 = vadd.f32 %v158, %v324
  %v326 = vpop.f32.mrf.mxu0
  %327 = vmatprep.mubr.bf16.mxu0 0
  %328 = vmatmul.mubr.bf16.gmra.mxu0 %v107
  %v329 = vpop.f32.mrf.mxu0
  %v330 = vadd.f32 %v159, %v329
  %v331 = vpop.f32.mrf.mxu0
  %v332 = vpop.f32.mrf.mxu0
  %v333 = vadd.f32 %v160, %v332
  %v334 = vpop.f32.mrf.mxu0
  %335 = vmatprep.mubr.bf16.mxu0 0
  %336 = vmatmul.mubr.bf16.gmra.mxu0 %v108
  %v337 = vpop.f32.mrf.mxu0
  %v338 = vadd.f32 %v161, %v337
  %v339 = vpop.f32.mrf.mxu0
  %v340 = vpop.f32.mrf.mxu0
  %v341 = vadd.f32 %v162, %v340
  %v342 = vpop.f32.mrf.mxu0
  %343 = vmatprep.mubr.bf16.mxu0 0
  %344 = vmatmul.mubr.bf16.gmra.mxu0 %v109
  %v345 = vpop.f32.mrf.mxu0
  %v346 = vadd.f32 %v163, %v345
  %v347 = vpop.f32.mrf.mxu0
  %v348 = vpop.f32.mrf.mxu0
  %v349 = vadd.f32 %v164, %v348
  %v350 = vpop.f32.mrf.mxu0
  %351 = vmatprep.mubr.bf16.mxu0 0
  %352 = vmatmul.mubr.bf16.gmra.mxu0 %v110
  %v353 = vpop.f32.mrf.mxu0
  %v354 = vadd.f32 %v165, %v353
  %v355 = vpop.f32.mrf.mxu0
  %v356 = vpop.f32.mrf.mxu0
  %v357 = vadd.f32 %v166, %v356
  %v358 = vpop.f32.mrf.mxu0
  %359 = vmatprep.mubr.bf16.mxu0 0
  %360 = vmatmul.mubr.bf16.gmra.mxu0 %v111
  %v361 = vpop.f32.mrf.mxu0
  %v362 = vadd.f32 %v167, %v361
  %v363 = vpop.f32.mrf.mxu0
  %v364 = vpop.f32.mrf.mxu0
  %v365 = vadd.f32 %v168, %v364
  %v366 = vpop.f32.mrf.mxu0
  %367 = vmatprep.mubr.bf16.mxu0 0
  %368 = vmatmul.mubr.bf16.gmra.mxu0 %v112
  %v369 = vpop.f32.mrf.mxu0
  %v370 = vadd.f32 %v169, %v369
  %v371 = vpop.f32.mrf.mxu0
  %v372 = vpop.f32.mrf.mxu0
  %v373 = vadd.f32 %v170, %v372
  %v374 = vpop.f32.mrf.mxu0
  %375 = vmatprep.mubr.bf16.mxu0 0
  %376 = vmatmul.mubr.bf16.gmra.mxu0 %v113
  %v377 = vpop.f32.mrf.mxu0
  %v378 = vadd.f32 %v171, %v377
  %v379 = vpop.f32.mrf.mxu0
  %v380 = vpop.f32.mrf.mxu0
  %v381 = vadd.f32 %v172, %v380
  %v382 = vpop.f32.mrf.mxu0
  %383 = vmatprep.mubr.bf16.mxu0 0
  %384 = vmatmul.mubr.bf16.gmra.mxu0 %v114
  %v385 = vpop.f32.mrf.mxu0
  %v386 = vadd.f32 %v173, %v385
  %v387 = vpop.f32.mrf.mxu0
  %v388 = vpop.f32.mrf.mxu0
  %v389 = vadd.f32 %v174, %v388
  %v390 = vpop.f32.mrf.mxu0
  %391 = vmatprep.mubr.bf16.mxu0 0
  %392 = vmatmul.mubr.bf16.gmra.mxu0 %v115
  %v393 = vpop.f32.mrf.mxu0
  %v394 = vadd.f32 %v175, %v393
  %v395 = vpop.f32.mrf.mxu0
  %v396 = vpop.f32.mrf.mxu0
  %v397 = vadd.f32 %v176, %v396
  %v398 = vpop.f32.mrf.mxu0
  %399 = vmatprep.mubr.bf16.mxu0 0
  %400 = vmatmul.mubr.bf16.gmra.mxu0 %v116
  %v401 = vpop.f32.mrf.mxu0
  %v402 = vadd.f32 %v177, %v401
  %v403 = vpop.f32.mrf.mxu0
  %v404 = vpop.f32.mrf.mxu0
  %v405 = vadd.f32 %v178, %v404
  %v406 = vpop.f32.mrf.mxu0
  %407 = vmatprep.mubr.bf16.mxu0 0
  %408 = vmatmul.mubr.bf16.gmra.mxu0 %v117
  %v409 = vpop.f32.mrf.mxu0
  %v410 = vadd.f32 %v179, %v409
  %v411 = vpop.f32.mrf.mxu0
  %v412 = vpop.f32.mrf.mxu0
  %v413 = vadd.f32 %v180, %v412
  %v414 = vpop.f32.mrf.mxu0
  %415 = vmatprep.mubr.bf16.mxu0 0
  %416 = vmatmul.mubr.bf16.gmra.mxu0 %v118
  %v417 = vpop.f32.mrf.mxu0
  %v418 = vadd.f32 %v181, %v417
  %v419 = vpop.f32.mrf.mxu0
  %v420 = vpop.f32.mrf.mxu0
  %v421 = vadd.f32 %v182, %v420
  %v422 = vpop.f32.mrf.mxu0
  %423 = vmatprep.mubr.bf16.mxu0 0
  %424 = vmatmul.mubr.bf16.gmra.mxu0 %v119
  %v425 = vpop.f32.mrf.mxu0
  %v426 = vadd.f32 %v183, %v425
  %v427 = vpop.f32.mrf.mxu0
  %v428 = vpop.f32.mrf.mxu0
  %v429 = vadd.f32 %v184, %v428
  %v430 = vpop.f32.mrf.mxu0
  %431 = vmatprep.mubr.bf16.mxu0 0
  %432 = vmatmul.mubr.bf16.gmra.mxu0 %v120
  %v433 = vpop.f32.mrf.mxu0
  %v434 = vadd.f32 %v185, %v433
  %v435 = vpop.f32.mrf.mxu0
  %v436 = vpop.f32.mrf.mxu0
  %v437 = vadd.f32 %v186, %v436
  %v438 = vpop.f32.mrf.mxu0
  %439 = vmatprep.mubr.bf16.mxu0 0
  %440 = vmatmul.mubr.bf16.gmra.mxu0 %v121
  %v441 = vpop.f32.mrf.mxu0
  %v442 = vadd.f32 %v187, %v441
  %v443 = vpop.f32.mrf.mxu0
  %v444 = vpop.f32.mrf.mxu0
  %v445 = vadd.f32 %v188, %v444
  %v446 = vpop.f32.mrf.mxu0
  %447 = vmatprep.mubr.bf16.mxu0 0
  %448 = vmatmul.mubr.bf16.gmra.mxu0 %v122
  %v449 = vpop.f32.mrf.mxu0
  %v450 = vadd.f32 %v189, %v449
  %v451 = vpop.f32.mrf.mxu0
  %v452 = vpop.f32.mrf.mxu0
  %v453 = vadd.f32 %v190, %v452
  %v454 = vpop.f32.mrf.mxu0
  %455 = vmatprep.mubr.bf16.mxu0 0
  %456 = vmatmul.mubr.bf16.gmra.mxu0 %v123
  %v457 = vpop.f32.mrf.mxu0
  %v458 = vadd.f32 %v191, %v457
  %v459 = vpop.f32.mrf.mxu0
  %v460 = vpop.f32.mrf.mxu0
  %v461 = vadd.f32 %v192, %v460
  %v462 = vpop.f32.mrf.mxu0
  %463 = vmatprep.mubr.bf16.mxu0 0
  %464 = vmatmul.mubr.bf16.gmra.mxu0 %v124
  %v465 = vpop.f32.mrf.mxu0
  %v466 = vadd.f32 %v193, %v465
  %v467 = vpop.f32.mrf.mxu0
  %v468 = vpop.f32.mrf.mxu0
  %v469 = vadd.f32 %v194, %v468
  %v470 = vpop.f32.mrf.mxu0
  %471 = vmatprep.mubr.bf16.mxu0 0
  %472 = vmatmul.mubr.bf16.gmra.mxu0 %v125
  %v473 = vpop.f32.mrf.mxu0
  %v474 = vadd.f32 %v195, %v473
  %v475 = vpop.f32.mrf.mxu0
  %v476 = vpop.f32.mrf.mxu0
  %v477 = vadd.f32 %v196, %v476
  %v478 = vpop.f32.mrf.mxu0
  %479 = vmatprep.mubr.bf16.mxu0 0
  %480 = vmatmul.mubr.bf16.gmra.mxu0 %v126
  %v481 = vpop.f32.mrf.mxu0
  %v482 = vadd.f32 %v197, %v481
  %v483 = vpop.f32.mrf.mxu0
  %v484 = vpop.f32.mrf.mxu0
  %v485 = vadd.f32 %v198, %v484
  %v486 = vpop.f32.mrf.mxu0
  %487 = vdwg.mxu0
  %vm488 = vcmask 261120
  %489 = vst.msk [vmem:[%s3] sm:$0xff] %vm488, %v234
  %490 = vst.msk [vmem:[%s3 + $0x8] sm:$0xff] %vm488, %v237
  %491 = vst.msk [vmem:[%s3 + $0x10] sm:$0xff] %vm488, %v242
  %492 = vst.msk [vmem:[%s3 + $0x18] sm:$0xff] %vm488, %v245
  %493 = vst.msk [vmem:[%s3 + $0x20] sm:$0xff] %vm488, %v250
  %494 = vst.msk [vmem:[%s3 + $0x28] sm:$0xff] %vm488, %v253
  %495 = vst.msk [vmem:[%s3 + $0x30] sm:$0xff] %vm488, %v258
  %496 = vst.msk [vmem:[%s3 + $0x38] sm:$0xff] %vm488, %v261
  %497 = vst.msk [vmem:[%s3 + $0x40] sm:$0xff] %vm488, %v266
  %498 = vst.msk [vmem:[%s3 + $0x48] sm:$0xff] %vm488, %v269
  %499 = vst.msk [vmem:[%s3 + $0x50] sm:$0xff] %vm488, %v274
  %500 = vst.msk [vmem:[%s3 + $0x58] sm:$0xff] %vm488, %v277
  %501 = vst.msk [vmem:[%s3 + $0x60] sm:$0xff] %vm488, %v282
  %502 = vst.msk [vmem:[%s3 + $0x68] sm:$0xff] %vm488, %v285
  %503 = vst.msk [vmem:[%s3 + $0x70] sm:$0xff] %vm488, %v290
  %504 = vst.msk [vmem:[%s3 + $0x78] sm:$0xff] %vm488, %v293
  %505 = vst.msk [vmem:[%s3 + $0x80] sm:$0xff] %vm488, %v298
  %506 = vst.msk [vmem:[%s3 + $0x88] sm:$0xff] %vm488, %v301
  %507 = vst.msk [vmem:[%s3 + $0x90] sm:$0xff] %vm488, %v306
  %508 = vst.msk [vmem:[%s3 + $0x98] sm:$0xff] %vm488, %v309
  %509 = vst.msk [vmem:[%s3 + $0xa0] sm:$0xff] %vm488, %v314
  %510 = vst.msk [vmem:[%s3 + $0xa8] sm:$0xff] %vm488, %v317
  %511 = vst.msk [vmem:[%s3 + $0xb0] sm:$0xff] %vm488, %v322
  %512 = vst.msk [vmem:[%s3 + $0xb8] sm:$0xff] %vm488, %v325
  %513 = vst.msk [vmem:[%s3 + $0xc0] sm:$0xff] %vm488, %v330
  %514 = vst.msk [vmem:[%s3 + $0xc8] sm:$0xff] %vm488, %v333
  %515 = vst.msk [vmem:[%s3 + $0xd0] sm:$0xff] %vm488, %v338
  %516 = vst.msk [vmem:[%s3 + $0xd8] sm:$0xff] %vm488, %v341
  %517 = vst.msk [vmem:[%s3 + $0xe0] sm:$0xff] %vm488, %v346
  %518 = vst.msk [vmem:[%s3 + $0xe8] sm:$0xff] %vm488, %v349
  %519 = vst.msk [vmem:[%s3 + $0xf0] sm:$0xff] %vm488, %v354
  %520 = vst.msk [vmem:[%s3 + $0xf8] sm:$0xff] %vm488, %v357
  %521 = vst.msk [vmem:[%s3 + $0x100] sm:$0xff] %vm488, %v362
  %522 = vst.msk [vmem:[%s3 + $0x108] sm:$0xff] %vm488, %v365
  %523 = vst.msk [vmem:[%s3 + $0x110] sm:$0xff] %vm488, %v370
  %524 = vst.msk [vmem:[%s3 + $0x118] sm:$0xff] %vm488, %v373
  %525 = vst.msk [vmem:[%s3 + $0x120] sm:$0xff] %vm488, %v378
  %526 = vst.msk [vmem:[%s3 + $0x128] sm:$0xff] %vm488, %v381
  %527 = vst.msk [vmem:[%s3 + $0x130] sm:$0xff] %vm488, %v386
  %528 = vst.msk [vmem:[%s3 + $0x138] sm:$0xff] %vm488, %v389
  %529 = vst.msk [vmem:[%s3 + $0x140] sm:$0xff] %vm488, %v394
  %530 = vst.msk [vmem:[%s3 + $0x148] sm:$0xff] %vm488, %v397
  %531 = vst.msk [vmem:[%s3 + $0x150] sm:$0xff] %vm488, %v402
  %532 = vst.msk [vmem:[%s3 + $0x158] sm:$0xff] %vm488, %v405
  %533 = vst.msk [vmem:[%s3 + $0x160] sm:$0xff] %vm488, %v410
  %534 = vst.msk [vmem:[%s3 + $0x168] sm:$0xff] %vm488, %v413
  %535 = vst.msk [vmem:[%s3 + $0x170] sm:$0xff] %vm488, %v418
  %536 = vst.msk [vmem:[%s3 + $0x178] sm:$0xff] %vm488, %v421
  %537 = vst.msk [vmem:[%s3 + $0x180] sm:$0xff] %vm488, %v426
  %538 = vst.msk [vmem:[%s3 + $0x188] sm:$0xff] %vm488, %v429
  %539 = vst.msk [vmem:[%s3 + $0x190] sm:$0xff] %vm488, %v434
  %540 = vst.msk [vmem:[%s3 + $0x198] sm:$0xff] %vm488, %v437
  %541 = vst.msk [vmem:[%s3 + $0x1a0] sm:$0xff] %vm488, %v442
  %542 = vst.msk [vmem:[%s3 + $0x1a8] sm:$0xff] %vm488, %v445
  %543 = vst.msk [vmem:[%s3 + $0x1b0] sm:$0xff] %vm488, %v450
  %544 = vst.msk [vmem:[%s3 + $0x1b8] sm:$0xff] %vm488, %v453
  %545 = vst.msk [vmem:[%s3 + $0x1c0] sm:$0xff] %vm488, %v458
  %546 = vst.msk [vmem:[%s3 + $0x1c8] sm:$0xff] %vm488, %v461
  %547 = vst.msk [vmem:[%s3 + $0x1d0] sm:$0xff] %vm488, %v466
  %548 = vst.msk [vmem:[%s3 + $0x1d8] sm:$0xff] %vm488, %v469
  %549 = vst.msk [vmem:[%s3 + $0x1e0] sm:$0xff] %vm488, %v474
  %550 = vst.msk [vmem:[%s3 + $0x1e8] sm:$0xff] %vm488, %v477
  %551 = vst.msk [vmem:[%s3 + $0x1f0] sm:$0xff] %vm488, %v482
  %552 = vst.msk [vmem:[%s3 + $0x1f8] sm:$0xff] %vm488, %v485
  // Predicated region
  $region14: #{ssm_ab_forward.10} parent=0 // pred_check
    _
  $region15: #{ssm_ab_forward.10} parent=0 // pred_check_branch
    %554 = sbr.rel (0) target = $region17
  $region16: #{ssm_ab_forward.10} parent=0 // pred_region
    _
  $region17: #{ssm_ab_forward.10} parent=0 // pred_fallthru
    _
  // Predicated region
  $region18: #{ssm_ab_forward.10} parent=0 // pred_check
    _
  $region19: #{ssm_ab_forward.10} parent=0 // pred_check_branch
    %556 = sbr.rel (0) target = $region21
  $region20: #{ssm_ab_forward.10} parent=0 // pred_region
    _
  $region21: #{ssm_ab_forward.10} parent=0 // pred_fallthru
    _

// kernel: ssm_ab_forward.11
$region0: #{ssm_ab_forward.11}
  #allocation0 [shape = 'u32[]', space=smem, size = 0x4, offset = 0x4, fixed_abs, tag = 'smem constant byte address 0x4 - core index']
  #allocation1 [shape = 'u32[144,128]{1,0:T(1,128)}', space=vmem, size = 0x12000, scoped, tag = 'internal scratch']
  %s0 = inlined_call_operand.vmem [shape: f32[512,32], index: 0, kind: input, shape index: {}]
  %s1 = inlined_call_operand.vmem [shape: f32[512,32], index: 1, kind: input, shape index: {}]
  %s2 = inlined_call_operand.vmem [shape: f32[32,96], index: 2, kind: input, shape index: {}]
  %s3 = inlined_call_operand.vmem [shape: f32[512,96], index: 3, kind: output, shape index: {}]
  %s4 = sld [smem:[#allocation0]]
  $region22: #{ssm_ab_forward.11} parent=0
    _
  %s6 = ssub.s32 1, %s4
  %s7 = scalar_select 0, %s6, %s4
  // Predicated region
  $region2: #{ssm_ab_forward.11} parent=0 // pred_check
    _
  $region3: #{ssm_ab_forward.11} parent=0 // pred_check_branch
    %9 = sbr.rel (0) target = $region5
  $region4: #{ssm_ab_forward.11} parent=0 // pred_region
    _
  $region5: #{ssm_ab_forward.11} parent=0 // pred_fallthru
    _
  // Predicated region
  $region6: #{ssm_ab_forward.11} parent=0 // pred_check
    _
  $region7: #{ssm_ab_forward.11} parent=0 // pred_check_branch
    %11 = sbr.rel (0) target = $region9
  $region8: #{ssm_ab_forward.11} parent=0 // pred_region
    _
  $region9: #{ssm_ab_forward.11} parent=0 // pred_fallthru
    _
  // Predicated region
  $region10: #{ssm_ab_forward.11} parent=0 // pred_check
    _
  $region11: #{ssm_ab_forward.11} parent=0 // pred_check_branch
    %13 = sbr.rel (0) target = $region13
  $region12: #{ssm_ab_forward.11} parent=0 // pred_region
    _
  $region13: #{ssm_ab_forward.11} parent=0 // pred_fallthru
    _
  %v15 = vld [vmem:[%s0] sm:$0xff]
  %v16 = vld [vmem:[%s0 + $0x8] sm:$0xff]
  %v17 = vld [vmem:[%s0 + $0x10] sm:$0xff]
  %v18 = vld [vmem:[%s0 + $0x18] sm:$0xff]
  %v19 = vld [vmem:[%s0 + $0x20] sm:$0xff]
  %v20 = vld [vmem:[%s0 + $0x28] sm:$0xff]
  %v21 = vld [vmem:[%s0 + $0x30] sm:$0xff]
  %v22 = vld [vmem:[%s0 + $0x38] sm:$0xff]
  %v23 = vld [vmem:[%s0 + $0x40] sm:$0xff]
  %v24 = vld [vmem:[%s0 + $0x48] sm:$0xff]
  %v25 = vld [vmem:[%s0 + $0x50] sm:$0xff]
  %v26 = vld [vmem:[%s0 + $0x58] sm:$0xff]
  %v27 = vld [vmem:[%s0 + $0x60] sm:$0xff]
  %v28 = vld [vmem:[%s0 + $0x68] sm:$0xff]
  %v29 = vld [vmem:[%s0 + $0x70] sm:$0xff]
  %v30 = vld [vmem:[%s0 + $0x78] sm:$0xff]
  %v31 = vld [vmem:[%s0 + $0x80] sm:$0xff]
  %v32 = vld [vmem:[%s0 + $0x88] sm:$0xff]
  %v33 = vld [vmem:[%s0 + $0x90] sm:$0xff]
  %v34 = vld [vmem:[%s0 + $0x98] sm:$0xff]
  %v35 = vld [vmem:[%s0 + $0xa0] sm:$0xff]
  %v36 = vld [vmem:[%s0 + $0xa8] sm:$0xff]
  %v37 = vld [vmem:[%s0 + $0xb0] sm:$0xff]
  %v38 = vld [vmem:[%s0 + $0xb8] sm:$0xff]
  %v39 = vld [vmem:[%s0 + $0xc0] sm:$0xff]
  %v40 = vld [vmem:[%s0 + $0xc8] sm:$0xff]
  %v41 = vld [vmem:[%s0 + $0xd0] sm:$0xff]
  %v42 = vld [vmem:[%s0 + $0xd8] sm:$0xff]
  %v43 = vld [vmem:[%s0 + $0xe0] sm:$0xff]
  %v44 = vld [vmem:[%s0 + $0xe8] sm:$0xff]
  %v45 = vld [vmem:[%s0 + $0xf0] sm:$0xff]
  %v46 = vld [vmem:[%s0 + $0xf8] sm:$0xff]
  %v47 = vld [vmem:[%s0 + $0x100] sm:$0xff]
  %v48 = vld [vmem:[%s0 + $0x108] sm:$0xff]
  %v49 = vld [vmem:[%s0 + $0x110] sm:$0xff]
  %v50 = vld [vmem:[%s0 + $0x118] sm:$0xff]
  %v51 = vld [vmem:[%s0 + $0x120] sm:$0xff]
  %v52 = vld [vmem:[%s0 + $0x128] sm:$0xff]
  %v53 = vld [vmem:[%s0 + $0x130] sm:$0xff]
  %v54 = vld [vmem:[%s0 + $0x138] sm:$0xff]
  %v55 = vld [vmem:[%s0 + $0x140] sm:$0xff]
  %v56 = vld [vmem:[%s0 + $0x148] sm:$0xff]
  %v57 = vld [vmem:[%s0 + $0x150] sm:$0xff]
  %v58 = vld [vmem:[%s0 + $0x158] sm:$0xff]
  %v59 = vld [vmem:[%s0 + $0x160] sm:$0xff]
  %v60 = vld [vmem:[%s0 + $0x168] sm:$0xff]
  %v61 = vld [vmem:[%s0 + $0x170] sm:$0xff]
  %v62 = vld [vmem:[%s0 + $0x178] sm:$0xff]
  %v63 = vld [vmem:[%s0 + $0x180] sm:$0xff]
  %v64 = vld [vmem:[%s0 + $0x188] sm:$0xff]
  %v65 = vld [vmem:[%s0 + $0x190] sm:$0xff]
  %v66 = vld [vmem:[%s0 + $0x198] sm:$0xff]
  %v67 = vld [vmem:[%s0 + $0x1a0] sm:$0xff]
  %v68 = vld [vmem:[%s0 + $0x1a8] sm:$0xff]
  %v69 = vld [vmem:[%s0 + $0x1b0] sm:$0xff]
  %v70 = vld [vmem:[%s0 + $0x1b8] sm:$0xff]
  %v71 = vld [vmem:[%s0 + $0x1c0] sm:$0xff]
  %v72 = vld [vmem:[%s0 + $0x1c8] sm:$0xff]
  %v73 = vld [vmem:[%s0 + $0x1d0] sm:$0xff]
  %v74 = vld [vmem:[%s0 + $0x1d8] sm:$0xff]
  %v75 = vld [vmem:[%s0 + $0x1e0] sm:$0xff]
  %v76 = vld [vmem:[%s0 + $0x1e8] sm:$0xff]
  %v77 = vld [vmem:[%s0 + $0x1f0] sm:$0xff]
  %v78 = vld [vmem:[%s0 + $0x1f8] sm:$0xff]
  %v79 = vld [vmem:[%s1] sm:$0xff]
  %v80 = vld [vmem:[%s1 + $0x8] sm:$0xff]
  %v81 = vld [vmem:[%s1 + $0x10] sm:$0xff]
  %v82 = vld [vmem:[%s1 + $0x18] sm:$0xff]
  %v83 = vld [vmem:[%s1 + $0x20] sm:$0xff]
  %v84 = vld [vmem:[%s1 + $0x28] sm:$0xff]
  %v85 = vld [vmem:[%s1 + $0x30] sm:$0xff]
  %v86 = vld [vmem:[%s1 + $0x38] sm:$0xff]
  %v87 = vld [vmem:[%s1 + $0x40] sm:$0xff]
  %v88 = vld [vmem:[%s1 + $0x48] sm:$0xff]
  %v89 = vld [vmem:[%s1 + $0x50] sm:$0xff]
  %v90 = vld [vmem:[%s1 + $0x58] sm:$0xff]
  %v91 = vld [vmem:[%s1 + $0x60] sm:$0xff]
  %v92 = vld [vmem:[%s1 + $0x68] sm:$0xff]
  %v93 = vld [vmem:[%s1 + $0x70] sm:$0xff]
  %v94 = vld [vmem:[%s1 + $0x78] sm:$0xff]
  %v95 = vld [vmem:[%s1 + $0x80] sm:$0xff]
  %v96 = vld [vmem:[%s1 + $0x88] sm:$0xff]
  %v97 = vld [vmem:[%s1 + $0x90] sm:$0xff]
  %v98 = vld [vmem:[%s1 + $0x98] sm:$0xff]
  %v99 = vld [vmem:[%s1 + $0xa0] sm:$0xff]
  %v100 = vld [vmem:[%s1 + $0xa8] sm:$0xff]
  %v101 = vld [vmem:[%s1 + $0xb0] sm:$0xff]
  %v102 = vld [vmem:[%s1 + $0xb8] sm:$0xff]
  %v103 = vld [vmem:[%s1 + $0xc0] sm:$0xff]
  %v104 = vld [vmem:[%s1 + $0xc8] sm:$0xff]
  %v105 = vld [vmem:[%s1 + $0xd0] sm:$0xff]
  %v106 = vld [vmem:[%s1 + $0xd8] sm:$0xff]
  %v107 = vld [vmem:[%s1 + $0xe0] sm:$0xff]
  %v108 = vld [vmem:[%s1 + $0xe8] sm:$0xff]
  %v109 = vld [vmem:[%s1 + $0xf0] sm:$0xff]
  %v110 = vld [vmem:[%s1 + $0xf8] sm:$0xff]
  %v111 = vld [vmem:[%s1 + $0x100] sm:$0xff]
  %v112 = vld [vmem:[%s1 + $0x108] sm:$0xff]
  %v113 = vld [vmem:[%s1 + $0x110] sm:$0xff]
  %v114 = vld [vmem:[%s1 + $0x118] sm:$0xff]
  %v115 = vld [vmem:[%s1 + $0x120] sm:$0xff]
  %v116 = vld [vmem:[%s1 + $0x128] sm:$0xff]
  %v117 = vld [vmem:[%s1 + $0x130] sm:$0xff]
  %v118 = vld [vmem:[%s1 + $0x138] sm:$0xff]
  %v119 = vld [vmem:[%s1 + $0x140] sm:$0xff]
  %v120 = vld [vmem:[%s1 + $0x148] sm:$0xff]
  %v121 = vld [vmem:[%s1 + $0x150] sm:$0xff]
  %v122 = vld [vmem:[%s1 + $0x158] sm:$0xff]
  %v123 = vld [vmem:[%s1 + $0x160] sm:$0xff]
  %v124 = vld [vmem:[%s1 + $0x168] sm:$0xff]
  %v125 = vld [vmem:[%s1 + $0x170] sm:$0xff]
  %v126 = vld [vmem:[%s1 + $0x178] sm:$0xff]
  %v127 = vld [vmem:[%s1 + $0x180] sm:$0xff]
  %v128 = vld [vmem:[%s1 + $0x188] sm:$0xff]
  %v129 = vld [vmem:[%s1 + $0x190] sm:$0xff]
  %v130 = vld [vmem:[%s1 + $0x198] sm:$0xff]
  %v131 = vld [vmem:[%s1 + $0x1a0] sm:$0xff]
  %v132 = vld [vmem:[%s1 + $0x1a8] sm:$0xff]
  %v133 = vld [vmem:[%s1 + $0x1b0] sm:$0xff]
  %v134 = vld [vmem:[%s1 + $0x1b8] sm:$0xff]
  %v135 = vld [vmem:[%s1 + $0x1c0] sm:$0xff]
  %v136 = vld [vmem:[%s1 + $0x1c8] sm:$0xff]
  %v137 = vld [vmem:[%s1 + $0x1d0] sm:$0xff]
  %v138 = vld [vmem:[%s1 + $0x1d8] sm:$0xff]
  %v139 = vld [vmem:[%s1 + $0x1e0] sm:$0xff]
  %v140 = vld [vmem:[%s1 + $0x1e8] sm:$0xff]
  %v141 = vld [vmem:[%s1 + $0x1f0] sm:$0xff]
  %v142 = vld [vmem:[%s1 + $0x1f8] sm:$0xff]
  %v143 = vmul.f32 %v15, %v79
  %v144 = vmul.f32 %v16, %v80
  %v145 = vmul.f32 %v17, %v81
  %v146 = vmul.f32 %v18, %v82
  %v147 = vmul.f32 %v19, %v83
  %v148 = vmul.f32 %v20, %v84
  %v149 = vmul.f32 %v21, %v85
  %v150 = vmul.f32 %v22, %v86
  %v151 = vmul.f32 %v23, %v87
  %v152 = vmul.f32 %v24, %v88
  %v153 = vmul.f32 %v25, %v89
  %v154 = vmul.f32 %v26, %v90
  %v155 = vmul.f32 %v27, %v91
  %v156 = vmul.f32 %v28, %v92
  %v157 = vmul.f32 %v29, %v93
  %v158 = vmul.f32 %v30, %v94
  %v159 = vmul.f32 %v31, %v95
  %v160 = vmul.f32 %v32, %v96
  %v161 = vmul.f32 %v33, %v97
  %v162 = vmul.f32 %v34, %v98
  %v163 = vmul.f32 %v35, %v99
  %v164 = vmul.f32 %v36, %v100
  %v165 = vmul.f32 %v37, %v101
  %v166 = vmul.f32 %v38, %v102
  %v167 = vmul.f32 %v39, %v103
  %v168 = vmul.f32 %v40, %v104
  %v169 = vmul.f32 %v41, %v105
  %v170 = vmul.f32 %v42, %v106
  %v171 = vmul.f32 %v43, %v107
  %v172 = vmul.f32 %v44, %v108
  %v173 = vmul.f32 %v45, %v109
  %v174 = vmul.f32 %v46, %v110
  %v175 = vmul.f32 %v47, %v111
  %v176 = vmul.f32 %v48, %v112
  %v177 = vmul.f32 %v49, %v113
  %v178 = vmul.f32 %v50, %v114
  %v179 = vmul.f32 %v51, %v115
  %v180 = vmul.f32 %v52, %v116
  %v181 = vmul.f32 %v53, %v117
  %v182 = vmul.f32 %v54, %v118
  %v183 = vmul.f32 %v55, %v119
  %v184 = vmul.f32 %v56, %v120
  %v185 = vmul.f32 %v57, %v121
  %v186 = vmul.f32 %v58, %v122
  %v187 = vmul.f32 %v59, %v123
  %v188 = vmul.f32 %v60, %v124
  %v189 = vmul.f32 %v61, %v125
  %v190 = vmul.f32 %v62, %v126
  %v191 = vmul.f32 %v63, %v127
  %v192 = vmul.f32 %v64, %v128
  %v193 = vmul.f32 %v65, %v129
  %v194 = vmul.f32 %v66, %v130
  %v195 = vmul.f32 %v67, %v131
  %v196 = vmul.f32 %v68, %v132
  %v197 = vmul.f32 %v69, %v133
  %v198 = vmul.f32 %v70, %v134
  %v199 = vmul.f32 %v71, %v135
  %v200 = vmul.f32 %v72, %v136
  %v201 = vmul.f32 %v73, %v137
  %v202 = vmul.f32 %v74, %v138
  %v203 = vmul.f32 %v75, %v139
  %v204 = vmul.f32 %v76, %v140
  %v205 = vmul.f32 %v77, %v141
  %v206 = vmul.f32 %v78, %v142
  %v207 = vld [vmem:[%s2] sm:$0xff]
  %v208 = vld [vmem:[%s2 + $0x8] sm:$0xff]
  %v209 = vld [vmem:[%s2 + $0x10] sm:$0xff]
  %v210 = vld [vmem:[%s2 + $0x18] sm:$0xff]
  %v211 = vpack.c.bf16 %v144, %v143
  %v212 = vpack.c.bf16 %v146, %v145
  %v213 = vpack.c.bf16 %v148, %v147
  %v214 = vpack.c.bf16 %v150, %v149
  %v215 = vpack.c.bf16 %v152, %v151
  %v216 = vpack.c.bf16 %v154, %v153
  %v217 = vpack.c.bf16 %v156, %v155
  %v218 = vpack.c.bf16 %v158, %v157
  %v219 = vpack.c.bf16 %v160, %v159
  %v220 = vpack.c.bf16 %v162, %v161
  %v221 = vpack.c.bf16 %v164, %v163
  %v222 = vpack.c.bf16 %v166, %v165
  %v223 = vpack.c.bf16 %v168, %v167
  %v224 = vpack.c.bf16 %v170, %v169
  %v225 = vpack.c.bf16 %v172, %v171
  %v226 = vpack.c.bf16 %v174, %v173
  %v227 = vpack.c.bf16 %v176, %v175
  %v228 = vpack.c.bf16 %v178, %v177
  %v229 = vpack.c.bf16 %v180, %v179
  %v230 = vpack.c.bf16 %v182, %v181
  %v231 = vpack.c.bf16 %v184, %v183
  %v232 = vpack.c.bf16 %v186, %v185
  %v233 = vpack.c.bf16 %v188, %v187
  %v234 = vpack.c.bf16 %v190, %v189
  %v235 = vpack.c.bf16 %v192, %v191
  %v236 = vpack.c.bf16 %v194, %v193
  %v237 = vpack.c.bf16 %v196, %v195
  %v238 = vpack.c.bf16 %v198, %v197
  %v239 = vpack.c.bf16 %v200, %v199
  %v240 = vpack.c.bf16 %v202, %v201
  %v241 = vpack.c.bf16 %v204, %v203
  %v242 = vpack.c.bf16 %v206, %v205
  %v243 = vpack.c.bf16 %v208, %v207
  %v244 = vpack.c.bf16 %v210, %v209
  %vm245 = vcmask 261120
  %v247 = vsel %vm245, %v211, 0
  %v250 = vsel %vm245, %v212, 0
  %v253 = vsel %vm245, %v213, 0
  %v256 = vsel %vm245, %v214, 0
  %v259 = vsel %vm245, %v215, 0
  %v262 = vsel %vm245, %v216, 0
  %v265 = vsel %vm245, %v217, 0
  %v268 = vsel %vm245, %v218, 0
  %v271 = vsel %vm245, %v219, 0
  %v274 = vsel %vm245, %v220, 0
  %v277 = vsel %vm245, %v221, 0
  %v280 = vsel %vm245, %v222, 0
  %v283 = vsel %vm245, %v223, 0
  %v286 = vsel %vm245, %v224, 0
  %v289 = vsel %vm245, %v225, 0
  %v292 = vsel %vm245, %v226, 0
  %v295 = vsel %vm245, %v227, 0
  %v298 = vsel %vm245, %v228, 0
  %v301 = vsel %vm245, %v229, 0
  %v304 = vsel %vm245, %v230, 0
  %v307 = vsel %vm245, %v231, 0
  %v310 = vsel %vm245, %v232, 0
  %v313 = vsel %vm245, %v233, 0
  %v316 = vsel %vm245, %v234, 0
  %v319 = vsel %vm245, %v235, 0
  %v322 = vsel %vm245, %v236, 0
  %v325 = vsel %vm245, %v237, 0
  %v328 = vsel %vm245, %v238, 0
  %v331 = vsel %vm245, %v239, 0
  %v334 = vsel %vm245, %v240, 0
  %v337 = vsel %vm245, %v241, 0
  %v340 = vsel %vm245, %v242, 0
  %342 = vmatprep.subr.bf16.mxu0 0
  %343 = vmatpush1.bf16.msra.mxu0 0
  %344 = vmatprep.subr.bf16.mxu0 0
  %345 = vmatpush1.bf16.msra.mxu0 0
  %346 = vmatprep.subr.bf16.mxu0 0
  %347 = vmatpush1.bf16.msra.mxu0 0
  %348 = vmatprep.subr.bf16.mxu0 0
  %349 = vmatpush1.bf16.msra.mxu0 0
  %350 = vmatprep.subr.bf16.mxu0 0
  %351 = vmatpush1.bf16.msra.mxu0 0
  %352 = vmatprep.subr.bf16.mxu0 0
  %353 = vmatpush1.bf16.msra.mxu0 0
  %354 = vmatprep.subr.bf16.mxu0 0
  %355 = vmatpush1.bf16.msra.mxu0 %v244
  %356 = vmatprep.subr.bf16.mxu0 0
  %357 = vmatpush1.bf16.msra.mxu0 %v243
  %358 = vmatprep.subr.bf16.mxu0 0
  %359 = vmatpush2.bf16.msra.mxu0 0
  %360 = vmatprep.subr.bf16.mxu0 0
  %361 = vmatpush2.bf16.msra.mxu0 0
  %362 = vmatprep.subr.bf16.mxu0 0
  %363 = vmatpush2.bf16.msra.mxu0 0
  %364 = vmatprep.subr.bf16.mxu0 0
  %365 = vmatpush2.bf16.msra.mxu0 0
  %366 = vmatprep.subr.bf16.mxu0 0
  %367 = vmatpush2.bf16.msra.mxu0 0
  %368 = vmatprep.subr.bf16.mxu0 0
  %369 = vmatpush2.bf16.msra.mxu0 0
  %370 = vmatprep.subr.bf16.mxu0 0
  %371 = vmatpush2.bf16.msra.mxu0 0
  %372 = vmatprep.subr.bf16.mxu0 0
  %373 = vmatpush2.bf16.msra.mxu0 0
  %374 = vmatprep.mubr.bf16.mxu0 0
  %375 = vmatmul.mubr.bf16.gmra.mxu0 %v247
  %v376 = vpop.f32.mrf.mxu0
  %v377 = vadd.f32 0.0, %v376
  %v378 = vpop.f32.mrf.mxu0
  %v379 = vpop.f32.mrf.mxu0
  %v380 = vadd.f32 0.0, %v379
  %v381 = vpop.f32.mrf.mxu0
  %382 = vmatprep.mubr.bf16.mxu0 0
  %383 = vmatmul.mubr.bf16.gmra.mxu0 %v250
  %v384 = vpop.f32.mrf.mxu0
  %v385 = vadd.f32 0.0, %v384
  %v386 = vpop.f32.mrf.mxu0
  %v387 = vpop.f32.mrf.mxu0
  %v388 = vadd.f32 0.0, %v387
  %v389 = vpop.f32.mrf.mxu0
  %390 = vmatprep.mubr.bf16.mxu0 0
  %391 = vmatmul.mubr.bf16.gmra.mxu0 %v253
  %v392 = vpop.f32.mrf.mxu0
  %v393 = vadd.f32 0.0, %v392
  %v394 = vpop.f32.mrf.mxu0
  %v395 = vpop.f32.mrf.mxu0
  %v396 = vadd.f32 0.0, %v395
  %v397 = vpop.f32.mrf.mxu0
  %398 = vmatprep.mubr.bf16.mxu0 0
  %399 = vmatmul.mubr.bf16.gmra.mxu0 %v256
  %v400 = vpop.f32.mrf.mxu0
  %v401 = vadd.f32 0.0, %v400
  %v402 = vpop.f32.mrf.mxu0
  %v403 = vpop.f32.mrf.mxu0
  %v404 = vadd.f32 0.0, %v403
  %v405 = vpop.f32.mrf.mxu0
  %406 = vmatprep.mubr.bf16.mxu0 0
  %407 = vmatmul.mubr.bf16.gmra.mxu0 %v259
  %v408 = vpop.f32.mrf.mxu0
  %v409 = vadd.f32 0.0, %v408
  %v410 = vpop.f32.mrf.mxu0
  %v411 = vpop.f32.mrf.mxu0
  %v412 = vadd.f32 0.0, %v411
  %v413 = vpop.f32.mrf.mxu0
  %414 = vmatprep.mubr.bf16.mxu0 0
  %415 = vmatmul.mubr.bf16.gmra.mxu0 %v262
  %v416 = vpop.f32.mrf.mxu0
  %v417 = vadd.f32 0.0, %v416
  %v418 = vpop.f32.mrf.mxu0
  %v419 = vpop.f32.mrf.mxu0
  %v420 = vadd.f32 0.0, %v419
  %v421 = vpop.f32.mrf.mxu0
  %422 = vmatprep.mubr.bf16.mxu0 0
  %423 = vmatmul.mubr.bf16.gmra.mxu0 %v265
  %v424 = vpop.f32.mrf.mxu0
  %v425 = vadd.f32 0.0, %v424
  %v426 = vpop.f32.mrf.mxu0
  %v427 = vpop.f32.mrf.mxu0
  %v428 = vadd.f32 0.0, %v427
  %v429 = vpop.f32.mrf.mxu0
  %430 = vmatprep.mubr.bf16.mxu0 0
  %431 = vmatmul.mubr.bf16.gmra.mxu0 %v268
  %v432 = vpop.f32.mrf.mxu0
  %v433 = vadd.f32 0.0, %v432
  %v434 = vpop.f32.mrf.mxu0
  %v435 = vpop.f32.mrf.mxu0
  %v436 = vadd.f32 0.0, %v435
  %v437 = vpop.f32.mrf.mxu0
  %438 = vmatprep.mubr.bf16.mxu0 0
  %439 = vmatmul.mubr.bf16.gmra.mxu0 %v271
  %v440 = vpop.f32.mrf.mxu0
  %v441 = vadd.f32 0.0, %v440
  %v442 = vpop.f32.mrf.mxu0
  %v443 = vpop.f32.mrf.mxu0
  %v444 = vadd.f32 0.0, %v443
  %v445 = vpop.f32.mrf.mxu0
  %446 = vmatprep.mubr.bf16.mxu0 0
  %447 = vmatmul.mubr.bf16.gmra.mxu0 %v274
  %v448 = vpop.f32.mrf.mxu0
  %v449 = vadd.f32 0.0, %v448
  %v450 = vpop.f32.mrf.mxu0
  %v451 = vpop.f32.mrf.mxu0
  %v452 = vadd.f32 0.0, %v451
  %v453 = vpop.f32.mrf.mxu0
  %454 = vmatprep.mubr.bf16.mxu0 0
  %455 = vmatmul.mubr.bf16.gmra.mxu0 %v277
  %v456 = vpop.f32.mrf.mxu0
  %v457 = vadd.f32 0.0, %v456
  %v458 = vpop.f32.mrf.mxu0
  %v459 = vpop.f32.mrf.mxu0
  %v460 = vadd.f32 0.0, %v459
  %v461 = vpop.f32.mrf.mxu0
  %462 = vmatprep.mubr.bf16.mxu0 0
  %463 = vmatmul.mubr.bf16.gmra.mxu0 %v280
  %v464 = vpop.f32.mrf.mxu0
  %v465 = vadd.f32 0.0, %v464
  %v466 = vpop.f32.mrf.mxu0
  %v467 = vpop.f32.mrf.mxu0
  %v468 = vadd.f32 0.0, %v467
  %v469 = vpop.f32.mrf.mxu0
  %470 = vmatprep.mubr.bf16.mxu0 0
  %471 = vmatmul.mubr.bf16.gmra.mxu0 %v283
  %v472 = vpop.f32.mrf.mxu0
  %v473 = vadd.f32 0.0, %v472
  %v474 = vpop.f32.mrf.mxu0
  %v475 = vpop.f32.mrf.mxu0
  %v476 = vadd.f32 0.0, %v475
  %v477 = vpop.f32.mrf.mxu0
  %478 = vmatprep.mubr.bf16.mxu0 0
  %479 = vmatmul.mubr.bf16.gmra.mxu0 %v286
  %v480 = vpop.f32.mrf.mxu0
  %v481 = vadd.f32 0.0, %v480
  %v482 = vpop.f32.mrf.mxu0
  %v483 = vpop.f32.mrf.mxu0
  %v484 = vadd.f32 0.0, %v483
  %v485 = vpop.f32.mrf.mxu0
  %486 = vmatprep.mubr.bf16.mxu0 0
  %487 = vmatmul.mubr.bf16.gmra.mxu0 %v289
  %v488 = vpop.f32.mrf.mxu0
  %v489 = vadd.f32 0.0, %v488
  %v490 = vpop.f32.mrf.mxu0
  %v491 = vpop.f32.mrf.mxu0
  %v492 = vadd.f32 0.0, %v491
  %v493 = vpop.f32.mrf.mxu0
  %494 = vmatprep.mubr.bf16.mxu0 0
  %495 = vmatmul.mubr.bf16.gmra.mxu0 %v292
  %v496 = vpop.f32.mrf.mxu0
  %v497 = vadd.f32 0.0, %v496
  %v498 = vpop.f32.mrf.mxu0
  %v499 = vpop.f32.mrf.mxu0
  %v500 = vadd.f32 0.0, %v499
  %v501 = vpop.f32.mrf.mxu0
  %502 = vmatprep.mubr.bf16.mxu0 0
  %503 = vmatmul.mubr.bf16.gmra.mxu0 %v295
  %v504 = vpop.f32.mrf.mxu0
  %v505 = vadd.f32 0.0, %v504
  %v506 = vpop.f32.mrf.mxu0
  %v507 = vpop.f32.mrf.mxu0
  %v508 = vadd.f32 0.0, %v507
  %v509 = vpop.f32.mrf.mxu0
  %510 = vmatprep.mubr.bf16.mxu0 0
  %511 = vmatmul.mubr.bf16.gmra.mxu0 %v298
  %v512 = vpop.f32.mrf.mxu0
  %v513 = vadd.f32 0.0, %v512
  %v514 = vpop.f32.mrf.mxu0
  %v515 = vpop.f32.mrf.mxu0
  %v516 = vadd.f32 0.0, %v515
  %v517 = vpop.f32.mrf.mxu0
  %518 = vmatprep.mubr.bf16.mxu0 0
  %519 = vmatmul.mubr.bf16.gmra.mxu0 %v301
  %v520 = vpop.f32.mrf.mxu0
  %v521 = vadd.f32 0.0, %v520
  %v522 = vpop.f32.mrf.mxu0
  %v523 = vpop.f32.mrf.mxu0
  %v524 = vadd.f32 0.0, %v523
  %v525 = vpop.f32.mrf.mxu0
  %526 = vmatprep.mubr.bf16.mxu0 0
  %527 = vmatmul.mubr.bf16.gmra.mxu0 %v304
  %v528 = vpop.f32.mrf.mxu0
  %v529 = vadd.f32 0.0, %v528
  %v530 = vpop.f32.mrf.mxu0
  %v531 = vpop.f32.mrf.mxu0
  %v532 = vadd.f32 0.0, %v531
  %v533 = vpop.f32.mrf.mxu0
  %534 = vmatprep.mubr.bf16.mxu0 0
  %535 = vmatmul.mubr.bf16.gmra.mxu0 %v307
  %v536 = vpop.f32.mrf.mxu0
  %v537 = vadd.f32 0.0, %v536
  %v538 = vpop.f32.mrf.mxu0
  %v539 = vpop.f32.mrf.mxu0
  %v540 = vadd.f32 0.0, %v539
  %v541 = vpop.f32.mrf.mxu0
  %542 = vmatprep.mubr.bf16.mxu0 0
  %543 = vmatmul.mubr.bf16.gmra.mxu0 %v310
  %v544 = vpop.f32.mrf.mxu0
  %v545 = vadd.f32 0.0, %v544
  %v546 = vpop.f32.mrf.mxu0
  %v547 = vpop.f32.mrf.mxu0
  %v548 = vadd.f32 0.0, %v547
  %v549 = vpop.f32.mrf.mxu0
  %550 = vmatprep.mubr.bf16.mxu0 0
  %551 = vmatmul.mubr.bf16.gmra.mxu0 %v313
  %v552 = vpop.f32.mrf.mxu0
  %v553 = vadd.f32 0.0, %v552
  %v554 = vpop.f32.mrf.mxu0
  %v555 = vpop.f32.mrf.mxu0
  %v556 = vadd.f32 0.0, %v555
  %v557 = vpop.f32.mrf.mxu0
  %558 = vmatprep.mubr.bf16.mxu0 0
  %559 = vmatmul.mubr.bf16.gmra.mxu0 %v316
  %v560 = vpop.f32.mrf.mxu0
  %v561 = vadd.f32 0.0, %v560
  %v562 = vpop.f32.mrf.mxu0
  %v563 = vpop.f32.mrf.mxu0
  %v564 = vadd.f32 0.0, %v563
  %v565 = vpop.f32.mrf.mxu0
  %566 = vmatprep.mubr.bf16.mxu0 0
  %567 = vmatmul.mubr.bf16.gmra.mxu0 %v319
  %v568 = vpop.f32.mrf.mxu0
  %v569 = vadd.f32 0.0, %v568
  %v570 = vpop.f32.mrf.mxu0
  %v571 = vpop.f32.mrf.mxu0
  %v572 = vadd.f32 0.0, %v571
  %v573 = vpop.f32.mrf.mxu0
  %574 = vmatprep.mubr.bf16.mxu0 0
  %575 = vmatmul.mubr.bf16.gmra.mxu0 %v322
  %v576 = vpop.f32.mrf.mxu0
  %v577 = vadd.f32 0.0, %v576
  %v578 = vpop.f32.mrf.mxu0
  %v579 = vpop.f32.mrf.mxu0
  %v580 = vadd.f32 0.0, %v579
  %v581 = vpop.f32.mrf.mxu0
  %582 = vmatprep.mubr.bf16.mxu0 0
  %583 = vmatmul.mubr.bf16.gmra.mxu0 %v325
  %v584 = vpop.f32.mrf.mxu0
  %v585 = vadd.f32 0.0, %v584
  %v586 = vpop.f32.mrf.mxu0
  %v587 = vpop.f32.mrf.mxu0
  %v588 = vadd.f32 0.0, %v587
  %v589 = vpop.f32.mrf.mxu0
  %590 = vmatprep.mubr.bf16.mxu0 0
  %591 = vmatmul.mubr.bf16.gmra.mxu0 %v328
  %v592 = vpop.f32.mrf.mxu0
  %v593 = vadd.f32 0.0, %v592
  %v594 = vpop.f32.mrf.mxu0
  %v595 = vpop.f32.mrf.mxu0
  %v596 = vadd.f32 0.0, %v595
  %v597 = vpop.f32.mrf.mxu0
  %598 = vmatprep.mubr.bf16.mxu0 0
  %599 = vmatmul.mubr.bf16.gmra.mxu0 %v331
  %v600 = vpop.f32.mrf.mxu0
  %v601 = vadd.f32 0.0, %v600
  %v602 = vpop.f32.mrf.mxu0
  %v603 = vpop.f32.mrf.mxu0
  %v604 = vadd.f32 0.0, %v603
  %v605 = vpop.f32.mrf.mxu0
  %606 = vmatprep.mubr.bf16.mxu0 0
  %607 = vmatmul.mubr.bf16.gmra.mxu0 %v334
  %v608 = vpop.f32.mrf.mxu0
  %v609 = vadd.f32 0.0, %v608
  %v610 = vpop.f32.mrf.mxu0
  %v611 = vpop.f32.mrf.mxu0
  %v612 = vadd.f32 0.0, %v611
  %v613 = vpop.f32.mrf.mxu0
  %614 = vmatprep.mubr.bf16.mxu0 0
  %615 = vmatmul.mubr.bf16.gmra.mxu0 %v337
  %v616 = vpop.f32.mrf.mxu0
  %v617 = vadd.f32 0.0, %v616
  %v618 = vpop.f32.mrf.mxu0
  %v619 = vpop.f32.mrf.mxu0
  %v620 = vadd.f32 0.0, %v619
  %v621 = vpop.f32.mrf.mxu0
  %622 = vmatprep.mubr.bf16.mxu0 0
  %623 = vmatmul.mubr.bf16.gmra.mxu0 %v340
  %v624 = vpop.f32.mrf.mxu0
  %v625 = vadd.f32 0.0, %v624
  %v626 = vpop.f32.mrf.mxu0
  %v627 = vpop.f32.mrf.mxu0
  %v628 = vadd.f32 0.0, %v627
  %v629 = vpop.f32.mrf.mxu0
  %630 = vdwg.mxu0
  %vm631 = vcmask 785408
  %632 = vst.msk [vmem:[%s3] sm:$0xff] %vm631, %v377
  %633 = vst.msk [vmem:[%s3 + $0x8] sm:$0xff] %vm631, %v380
  %634 = vst.msk [vmem:[%s3 + $0x10] sm:$0xff] %vm631, %v385
  %635 = vst.msk [vmem:[%s3 + $0x18] sm:$0xff] %vm631, %v388
  %636 = vst.msk [vmem:[%s3 + $0x20] sm:$0xff] %vm631, %v393
  %637 = vst.msk [vmem:[%s3 + $0x28] sm:$0xff] %vm631, %v396
  %638 = vst.msk [vmem:[%s3 + $0x30] sm:$0xff] %vm631, %v401
  %639 = vst.msk [vmem:[%s3 + $0x38] sm:$0xff] %vm631, %v404
  %640 = vst.msk [vmem:[%s3 + $0x40] sm:$0xff] %vm631, %v409
  %641 = vst.msk [vmem:[%s3 + $0x48] sm:$0xff] %vm631, %v412
  %642 = vst.msk [vmem:[%s3 + $0x50] sm:$0xff] %vm631, %v417
  %643 = vst.msk [vmem:[%s3 + $0x58] sm:$0xff] %vm631, %v420
  %644 = vst.msk [vmem:[%s3 + $0x60] sm:$0xff] %vm631, %v425
  %645 = vst.msk [vmem:[%s3 + $0x68] sm:$0xff] %vm631, %v428
  %646 = vst.msk [vmem:[%s3 + $0x70] sm:$0xff] %vm631, %v433
  %647 = vst.msk [vmem:[%s3 + $0x78] sm:$0xff] %vm631, %v436
  %648 = vst.msk [vmem:[%s3 + $0x80] sm:$0xff] %vm631, %v441
  %649 = vst.msk [vmem:[%s3 + $0x88] sm:$0xff] %vm631, %v444
  %650 = vst.msk [vmem:[%s3 + $0x90] sm:$0xff] %vm631, %v449
  %651 = vst.msk [vmem:[%s3 + $0x98] sm:$0xff] %vm631, %v452
  %652 = vst.msk [vmem:[%s3 + $0xa0] sm:$0xff] %vm631, %v457
  %653 = vst.msk [vmem:[%s3 + $0xa8] sm:$0xff] %vm631, %v460
  %654 = vst.msk [vmem:[%s3 + $0xb0] sm:$0xff] %vm631, %v465
  %655 = vst.msk [vmem:[%s3 + $0xb8] sm:$0xff] %vm631, %v468
  %656 = vst.msk [vmem:[%s3 + $0xc0] sm:$0xff] %vm631, %v473
  %657 = vst.msk [vmem:[%s3 + $0xc8] sm:$0xff] %vm631, %v476
  %658 = vst.msk [vmem:[%s3 + $0xd0] sm:$0xff] %vm631, %v481
  %659 = vst.msk [vmem:[%s3 + $0xd8] sm:$0xff] %vm631, %v484
  %660 = vst.msk [vmem:[%s3 + $0xe0] sm:$0xff] %vm631, %v489
  %661 = vst.msk [vmem:[%s3 + $0xe8] sm:$0xff] %vm631, %v492
  %662 = vst.msk [vmem:[%s3 + $0xf0] sm:$0xff] %vm631, %v497
  %663 = vst.msk [vmem:[%s3 + $0xf8] sm:$0xff] %vm631, %v500
  %664 = vst.msk [vmem:[%s3 + $0x100] sm:$0xff] %vm631, %v505
  %665 = vst.msk [vmem:[%s3 + $0x108] sm:$0xff] %vm631, %v508
  %666 = vst.msk [vmem:[%s3 + $0x110] sm:$0xff] %vm631, %v513
  %667 = vst.msk [vmem:[%s3 + $0x118] sm:$0xff] %vm631, %v516
  %668 = vst.msk [vmem:[%s3 + $0x120] sm:$0xff] %vm631, %v521
  %669 = vst.msk [vmem:[%s3 + $0x128] sm:$0xff] %vm631, %v524
  %670 = vst.msk [vmem:[%s3 + $0x130] sm:$0xff] %vm631, %v529
  %671 = vst.msk [vmem:[%s3 + $0x138] sm:$0xff] %vm631, %v532
  %672 = vst.msk [vmem:[%s3 + $0x140] sm:$0xff] %vm631, %v537
  %673 = vst.msk [vmem:[%s3 + $0x148] sm:$0xff] %vm631, %v540
  %674 = vst.msk [vmem:[%s3 + $0x150] sm:$0xff] %vm631, %v545
  %675 = vst.msk [vmem:[%s3 + $0x158] sm:$0xff] %vm631, %v548
  %676 = vst.msk [vmem:[%s3 + $0x160] sm:$0xff] %vm631, %v553
  %677 = vst.msk [vmem:[%s3 + $0x168] sm:$0xff] %vm631, %v556
  %678 = vst.msk [vmem:[%s3 + $0x170] sm:$0xff] %vm631, %v561
  %679 = vst.msk [vmem:[%s3 + $0x178] sm:$0xff] %vm631, %v564
  %680 = vst.msk [vmem:[%s3 + $0x180] sm:$0xff] %vm631, %v569
  %681 = vst.msk [vmem:[%s3 + $0x188] sm:$0xff] %vm631, %v572
  %682 = vst.msk [vmem:[%s3 + $0x190] sm:$0xff] %vm631, %v577
  %683 = vst.msk [vmem:[%s3 + $0x198] sm:$0xff] %vm631, %v580
  %684 = vst.msk [vmem:[%s3 + $0x1a0] sm:$0xff] %vm631, %v585
  %685 = vst.msk [vmem:[%s3 + $0x1a8] sm:$0xff] %vm631, %v588
  %686 = vst.msk [vmem:[%s3 + $0x1b0] sm:$0xff] %vm631, %v593
  %687 = vst.msk [vmem:[%s3 + $0x1b8] sm:$0xff] %vm631, %v596
  %688 = vst.msk [vmem:[%s3 + $0x1c0] sm:$0xff] %vm631, %v601
  %689 = vst.msk [vmem:[%s3 + $0x1c8] sm:$0xff] %vm631, %v604
  %690 = vst.msk [vmem:[%s3 + $0x1d0] sm:$0xff] %vm631, %v609
  %691 = vst.msk [vmem:[%s3 + $0x1d8] sm:$0xff] %vm631, %v612
  %692 = vst.msk [vmem:[%s3 + $0x1e0] sm:$0xff] %vm631, %v617
  %693 = vst.msk [vmem:[%s3 + $0x1e8] sm:$0xff] %vm631, %v620
  %694 = vst.msk [vmem:[%s3 + $0x1f0] sm:$0xff] %vm631, %v625
  %695 = vst.msk [vmem:[%s3 + $0x1f8] sm:$0xff] %vm631, %v628
  // Predicated region
  $region14: #{ssm_ab_forward.11} parent=0 // pred_check
    _
  $region15: #{ssm_ab_forward.11} parent=0 // pred_check_branch
    %697 = sbr.rel (0) target = $region17
  $region16: #{ssm_ab_forward.11} parent=0 // pred_region
    _
  $region17: #{ssm_ab_forward.11} parent=0 // pred_fallthru
    _
  // Predicated region
  $region18: #{ssm_ab_forward.11} parent=0 // pred_check
    _
  $region19: #{ssm_ab_forward.11} parent=0 // pred_check_branch
    %699 = sbr.rel (0) target = $region21
  $region20: #{ssm_ab_forward.11} parent=0 // pred_region
    _
  $region21: #{ssm_ab_forward.11} parent=0 // pred_fallthru
    _

// kernel: ssm_ab_forward.12
$region0: #{ssm_ab_forward.12}
  #allocation0 [shape = 'u32[]', space=smem, size = 0x4, offset = 0x4, fixed_abs, tag = 'smem constant byte address 0x4 - core index']
  #allocation1 [shape = 'u32[144,128]{1,0:T(1,128)}', space=vmem, size = 0x12000, scoped, tag = 'internal scratch']
  %s0 = inlined_call_operand.vmem [shape: f32[2,256,96], index: 0, kind: input, shape index: {}]
  %s1 = inlined_call_operand.vmem [shape: f32[1,256,32], index: 1, kind: input, shape index: {}]
  %s2 = inlined_call_operand.vmem [shape: f32[1,256,32], index: 2, kind: input, shape index: {}]
  %s3 = inlined_call_operand.vmem [shape: f32[32,1], index: 3, kind: input, shape index: {}]
  %s4 = inlined_call_operand.vmem [shape: f32[2,256,32], index: 4, kind: output, shape index: {}]
  %s5 = sld [smem:[#allocation0]]
  $region49: #{ssm_ab_forward.12} parent=0
    _
  %s7 = ssub.s32 1, %s5
  %s8 = scalar_select 0, %s7, %s5
  loop: start=0, step=1, limit=4
  $region2: #{ssm_ab_forward.12} parent=0 // loop_pre_header
    _
  $region3: #{ssm_ab_forward.12} parent=0 // loop_header
    %s10 = sphi 0, %s14
    %p11 = scmp.ge.s32.totalorder %s10, 4
    %s20 = sphi 0, %s22
    %s23 = sphi 0, %s20
    %s24 = sphi 0, %s23
    %s40 = sphi 0, %s24
    %s44 = sphi 0, %s44
    %s46 = sphi 0, %s44
    %s47 = sphi 0, %s46
    %s61 = sphi 0, %s47
    %s65 = sphi 0, %s65
    %s67 = sphi 0, %s65
    %s68 = sphi 0, %s67
    %s82 = sphi 0, %s68
    %s86 = sphi 0, %s86
    %s88 = sphi 0, %s86
    %s89 = sphi 0, %s88
    %s103 = sphi 0, %s89
    %s109 = sphi 0, %s111
    %s112 = sphi 0, %s109
    %s113 = sphi 0, %s112
    %s129 = sphi 0, %s113
  $region4: #{ssm_ab_forward.12} parent=0 // loop_header_branch
    %13 = sbr.rel (%p11) target = $region8
  $region5: #{ssm_ab_forward.12} parent=0 // loop_body
    %s15 = ssub.s32 %s10, 1
    %s16 = ssub.s32 %s10, 2
    %s17 = sadd.s32 %s10, 1
    %s18 = ssub.s32 %s10, %s17
    %p19 = scmp.eq.s32.totalorder %s18, 0
    %s21 = sadd.s32 %s20, 1
    %s22 = scalar_select %p19, %s20, %s21
    %p25 = pneg %p19
    %p26 = scmp.eq.s32.totalorder %s10, 1
    %p27 = por %p25, %p26
    %p28 = scmp.ne.s32.totalorder %s20, %s23
    %p29 = scmp.eq.s32.totalorder %s10, 0
    %p30 = por %p28, %p29
    %p31 = scmp.ne.s32.totalorder %s20, %s23
    %p32 = scmp.eq.s32.totalorder %s15, 1
    %p33 = por %p31, %p32
    %p34 = scmp.ne.s32.totalorder %s23, %s24
    %p35 = scmp.eq.s32.totalorder %s15, 0
    %p36 = por %p34, %p35
    %p37 = scmp.ne.s32.totalorder %s23, %s24
    %p38 = scmp.eq.s32.totalorder %s16, 1
    %p39 = por %p37, %p38
    %p41 = scmp.ne.s32.totalorder %s24, %s40
    %p42 = scmp.eq.s32.totalorder %s16, 0
    %p43 = por %p41, %p42
    %s45 = sadd.s32 %s44, 1
    %p48 = scmp.eq.s32.totalorder %s10, 1
    %p49 = scmp.ne.s32.totalorder %s44, %s46
    %p50 = scmp.eq.s32.totalorder %s10, 0
    %p51 = por %p49, %p50
    %p52 = scmp.ne.s32.totalorder %s44, %s46
    %p53 = scmp.eq.s32.totalorder %s15, 1
    %p54 = por %p52, %p53
    %p55 = scmp.ne.s32.totalorder %s46, %s47
    %p56 = scmp.eq.s32.totalorder %s15, 0
    %p57 = por %p55, %p56
    %p58 = scmp.ne.s32.totalorder %s46, %s47
    %p59 = scmp.eq.s32.totalorder %s16, 1
    %p60 = por %p58, %p59
    %p62 = scmp.ne.s32.totalorder %s47, %s61
    %p63 = scmp.eq.s32.totalorder %s16, 0
    %p64 = por %p62, %p63
    %s66 = sadd.s32 %s65, 1
    %p69 = scmp.eq.s32.totalorder %s10, 1
    %p70 = scmp.ne.s32.totalorder %s65, %s67
    %p71 = scmp.eq.s32.totalorder %s10, 0
    %p72 = por %p70, %p71
    %p73 = scmp.ne.s32.totalorder %s65, %s67
    %p74 = scmp.eq.s32.totalorder %s15, 1
    %p75 = por %p73, %p74
    %p76 = scmp.ne.s32.totalorder %s67, %s68
    %p77 = scmp.eq.s32.totalorder %s15, 0
    %p78 = por %p76, %p77
    %p79 = scmp.ne.s32.totalorder %s67, %s68
    %p80 = scmp.eq.s32.totalorder %s16, 1
    %p81 = por %p79, %p80
    %p83 = scmp.ne.s32.totalorder %s68, %s82
    %p84 = scmp.eq.s32.totalorder %s16, 0
    %p85 = por %p83, %p84
    %s87 = sadd.s32 %s86, 1
    %p90 = scmp.eq.s32.totalorder %s10, 1
    %p91 = scmp.ne.s32.totalorder %s86, %s88
    %p92 = scmp.eq.s32.totalorder %s10, 0
    %p93 = por %p91, %p92
    %p94 = scmp.ne.s32.totalorder %s86, %s88
    %p95 = scmp.eq.s32.totalorder %s15, 1
    %p96 = por %p94, %p95
    %p97 = scmp.ne.s32.totalorder %s88, %s89
    %p98 = scmp.eq.s32.totalorder %s15, 0
    %p99 = por %p97, %p98
    %p100 = scmp.ne.s32.totalorder %s88, %s89
    %p101 = scmp.eq.s32.totalorder %s16, 1
    %p102 = por %p100, %p101
    %p104 = scmp.ne.s32.totalorder %s89, %s103
    %p105 = scmp.eq.s32.totalorder %s16, 0
    %p106 = por %p104, %p105
    %s107 = ssub.s32 %s10, %s17
    %p108 = scmp.eq.s32.totalorder %s107, 0
    %s110 = sadd.s32 %s109, 1
    %s111 = scalar_select %p108, %s109, %s110
    %p114 = pneg %p108
    %p115 = scmp.eq.s32.totalorder %s10, 1
    %p116 = por %p114, %p115
    %p117 = scmp.ne.s32.totalorder %s109, %s112
    %p118 = scmp.eq.s32.totalorder %s10, 0
    %p119 = por %p117, %p118
    %p120 = scmp.ne.s32.totalorder %s109, %s112
    %p121 = scmp.eq.s32.totalorder %s15, 1
    %p122 = por %p120, %p121
    %p123 = scmp.ne.s32.totalorder %s112, %s113
    %p124 = scmp.eq.s32.totalorder %s15, 0
    %p125 = por %p123, %p124
    %p126 = scmp.ne.s32.totalorder %s112, %s113
    %p127 = scmp.eq.s32.totalorder %s16, 1
    %p128 = por %p126, %p127
    %p130 = scmp.ne.s32.totalorder %s113, %s129
    %p131 = scmp.eq.s32.totalorder %s16, 0
    %p132 = por %p130, %p131
    %p133 = scmp.le.s32.totalorder 1, %s10
    %p134 = scmp.lt.s32.totalorder %s10, 3
    %p135 = pnand %p133, %p134
    %p136 = pneg %p135
    // Predicated region
    $region9: #{ssm_ab_forward.12} parent=5 // pred_check
      _
    $region10: #{ssm_ab_forward.12} parent=5 // pred_check_branch
      %138 = sbr.rel (%p135) target = $region12
    $region11: #{ssm_ab_forward.12} parent=5 // pred_region
      %s139 = ssub.s32 %s10, 1
      // Predicated region
      $region13: #{ssm_ab_forward.12} parent=11 // pred_check
        %p140 = pneg %p57
      $region14: #{ssm_ab_forward.12} parent=11 // pred_check_branch
        %142 = sbr.rel (%p140) target = $region16
      $region15: #{ssm_ab_forward.12} parent=11 // pred_region
        _
      $region16: #{ssm_ab_forward.12} parent=11 // pred_fallthru
        _
      // Predicated region
      $region17: #{ssm_ab_forward.12} parent=11 // pred_check
        %p143 = pneg %p78
      $region18: #{ssm_ab_forward.12} parent=11 // pred_check_branch
        %145 = sbr.rel (%p143) target = $region20
      $region19: #{ssm_ab_forward.12} parent=11 // pred_region
        _
      $region20: #{ssm_ab_forward.12} parent=11 // pred_fallthru
        _
      // Predicated region
      $region21: #{ssm_ab_forward.12} parent=11 // pred_check
        %p146 = pneg %p99
      $region22: #{ssm_ab_forward.12} parent=11 // pred_check_branch
        %148 = sbr.rel (%p146) target = $region24
      $region23: #{ssm_ab_forward.12} parent=11 // pred_region
        _
      $region24: #{ssm_ab_forward.12} parent=11 // pred_fallthru
        _
    $region12: #{ssm_ab_forward.12} parent=5 // pred_fallthru
      _
    %p149 = scmp.lt.s32.totalorder %s10, 2
    // Predicated region
    $region25: #{ssm_ab_forward.12} parent=5 // pred_check
      %p150 = pneg %p149
    $region26: #{ssm_ab_forward.12} parent=5 // pred_check_branch
      %152 = sbr.rel (%p150) target = $region28
    $region27: #{ssm_ab_forward.12} parent=5 // pred_region
      // Predicated region
      $region29: #{ssm_ab_forward.12} parent=27 // pred_check
        %p153 = pneg %p30
      $region30: #{ssm_ab_forward.12} parent=27 // pred_check_branch
        %155 = sbr.rel (%p153) target = $region32
      $region31: #{ssm_ab_forward.12} parent=27 // pred_region
        %p156 = scmp.lt.s32.totalorder %s10, 1
        %s157 = scalar_select %p156, %s10, 1
        %s158 = smul.addr %s157, 32
        %s159 = smul.addr %s158, 8
        %s160 = scalar_lea.vmem %s0, %s159
      $region32: #{ssm_ab_forward.12} parent=27 // pred_fallthru
        _
    $region28: #{ssm_ab_forward.12} parent=5 // pred_fallthru
      _
    %p161 = scmp.le.s32.totalorder 1, %s10
    %p162 = scmp.lt.s32.totalorder %s10, 3
    %p163 = pnand %p161, %p162
    %p164 = pneg %p163
    // Predicated region
    $region33: #{ssm_ab_forward.12} parent=5 // pred_check
      _
    $region34: #{ssm_ab_forward.12} parent=5 // pred_check_branch
      %166 = sbr.rel (%p163) target = $region36
    $region35: #{ssm_ab_forward.12} parent=5 // pred_region
      %s167 = ssub.s32 %s10, 1
      %p168 = scmp.lt.s32.totalorder %s15, 1
      %s169 = scalar_select %p168, %s15, 1
      %s170 = smul.addr %s169, 32
      %s171 = smul.addr %s170, 8
      %s172 = scalar_lea.vmem %s0, %s171
      %p173 = pneg %p36
      %p174 = pneg %p33
      %p175 = pneg %p57
      %p176 = pneg %p54
      %p177 = pneg %p78
      %p178 = pneg %p75
      %p179 = pneg %p99
      %p180 = pneg %p96
      %p181 = pneg %p125
      %p182 = pneg %p122
      %p183 = scmp.lt.s32.totalorder %s15, 1
      %s184 = scalar_select %p183, %s15, 1
      %s185 = smul.addr %s184, 32
      %s186 = smul.addr %s185, 8
      %s187 = scalar_lea.vmem %s4, %s186
      %p188 = scmp.lt.s32.totalorder %s15, 1
      %s189 = scalar_select %p188, %s15, 1
      %s190 = smul.addr %s189, 32
      %s191 = smul.addr %s190, 8
      %s192 = scalar_lea.vmem %s0, %s191
      %p193 = scmp.lt.s32.totalorder %s15, 1
      %s194 = scalar_select %p193, %s15, 1
      %s195 = smul.addr %s194, 32
      %s196 = smul.addr %s195, 8
      %s197 = scalar_lea.vmem %s4, %s196
      %v199 = vld [vmem:[%s192] sm:$0xff]
      %v200 = vld [vmem:[%s192 + $0x8] sm:$0xff]
      %v201 = vld [vmem:[%s192 + $0x10] sm:$0xff]
      %v202 = vld [vmem:[%s192 + $0x18] sm:$0xff]
      %v203 = vld [vmem:[%s192 + $0x20] sm:$0xff]
      %v204 = vld [vmem:[%s192 + $0x28] sm:$0xff]
      %v205 = vld [vmem:[%s192 + $0x30] sm:$0xff]
      %v206 = vld [vmem:[%s192 + $0x38] sm:$0xff]
      %v207 = vld [vmem:[%s192 + $0x40] sm:$0xff]
      %v208 = vld [vmem:[%s192 + $0x48] sm:$0xff]
      %v209 = vld [vmem:[%s192 + $0x50] sm:$0xff]
      %v210 = vld [vmem:[%s192 + $0x58] sm:$0xff]
      %v211 = vld [vmem:[%s192 + $0x60] sm:$0xff]
      %v212 = vld [vmem:[%s192 + $0x68] sm:$0xff]
      %v213 = vld [vmem:[%s192 + $0x70] sm:$0xff]
      %v214 = vld [vmem:[%s192 + $0x78] sm:$0xff]
      %v215 = vld [vmem:[%s192 + $0x80] sm:$0xff]
      %v216 = vld [vmem:[%s192 + $0x88] sm:$0xff]
      %v217 = vld [vmem:[%s192 + $0x90] sm:$0xff]
      %v218 = vld [vmem:[%s192 + $0x98] sm:$0xff]
      %v219 = vld [vmem:[%s192 + $0xa0] sm:$0xff]
      %v220 = vld [vmem:[%s192 + $0xa8] sm:$0xff]
      %v221 = vld [vmem:[%s192 + $0xb0] sm:$0xff]
      %v222 = vld [vmem:[%s192 + $0xb8] sm:$0xff]
      %v223 = vld [vmem:[%s192 + $0xc0] sm:$0xff]
      %v224 = vld [vmem:[%s192 + $0xc8] sm:$0xff]
      %v225 = vld [vmem:[%s192 + $0xd0] sm:$0xff]
      %v226 = vld [vmem:[%s192 + $0xd8] sm:$0xff]
      %v227 = vld [vmem:[%s192 + $0xe0] sm:$0xff]
      %v228 = vld [vmem:[%s192 + $0xe8] sm:$0xff]
      %v229 = vld [vmem:[%s192 + $0xf0] sm:$0xff]
      %v230 = vld [vmem:[%s192 + $0xf8] sm:$0xff]
      %v231 = vld [vmem:[%s1] sm:$0xff]
      %v232 = vld [vmem:[%s1 + $0x8] sm:$0xff]
      %v233 = vld [vmem:[%s1 + $0x10] sm:$0xff]
      %v234 = vld [vmem:[%s1 + $0x18] sm:$0xff]
      %v235 = vld [vmem:[%s1 + $0x20] sm:$0xff]
      %v236 = vld [vmem:[%s1 + $0x28] sm:$0xff]
      %v237 = vld [vmem:[%s1 + $0x30] sm:$0xff]
      %v238 = vld [vmem:[%s1 + $0x38] sm:$0xff]
      %v239 = vld [vmem:[%s1 + $0x40] sm:$0xff]
      %v240 = vld [vmem:[%s1 + $0x48] sm:$0xff]
      %v241 = vld [vmem:[%s1 + $0x50] sm:$0xff]
      %v242 = vld [vmem:[%s1 + $0x58] sm:$0xff]
      %v243 = vld [vmem:[%s1 + $0x60] sm:$0xff]
      %v244 = vld [vmem:[%s1 + $0x68] sm:$0xff]
      %v245 = vld [vmem:[%s1 + $0x70] sm:$0xff]
      %v246 = vld [vmem:[%s1 + $0x78] sm:$0xff]
      %v247 = vld [vmem:[%s1 + $0x80] sm:$0xff]
      %v248 = vld [vmem:[%s1 + $0x88] sm:$0xff]
      %v249 = vld [vmem:[%s1 + $0x90] sm:$0xff]
      %v250 = vld [vmem:[%s1 + $0x98] sm:$0xff]
      %v251 = vld [vmem:[%s1 + $0xa0] sm:$0xff]
      %v252 = vld [vmem:[%s1 + $0xa8] sm:$0xff]
      %v253 = vld [vmem:[%s1 + $0xb0] sm:$0xff]
      %v254 = vld [vmem:[%s1 + $0xb8] sm:$0xff]
      %v255 = vld [vmem:[%s1 + $0xc0] sm:$0xff]
      %v256 = vld [vmem:[%s1 + $0xc8] sm:$0xff]
      %v257 = vld [vmem:[%s1 + $0xd0] sm:$0xff]
      %v258 = vld [vmem:[%s1 + $0xd8] sm:$0xff]
      %v259 = vld [vmem:[%s1 + $0xe0] sm:$0xff]
      %v260 = vld [vmem:[%s1 + $0xe8] sm:$0xff]
      %v261 = vld [vmem:[%s1 + $0xf0] sm:$0xff]
      %v262 = vld [vmem:[%s1 + $0xf8] sm:$0xff]
      %v263 = vld [vmem:[%s2] sm:$0xff]
      %v264 = vld [vmem:[%s2 + $0x8] sm:$0xff]
      %v265 = vld [vmem:[%s2 + $0x10] sm:$0xff]
      %v266 = vld [vmem:[%s2 + $0x18] sm:$0xff]
      %v267 = vld [vmem:[%s2 + $0x20] sm:$0xff]
      %v268 = vld [vmem:[%s2 + $0x28] sm:$0xff]
      %v269 = vld [vmem:[%s2 + $0x30] sm:$0xff]
      %v270 = vld [vmem:[%s2 + $0x38] sm:$0xff]
      %v271 = vld [vmem:[%s2 + $0x40] sm:$0xff]
      %v272 = vld [vmem:[%s2 + $0x48] sm:$0xff]
      %v273 = vld [vmem:[%s2 + $0x50] sm:$0xff]
      %v274 = vld [vmem:[%s2 + $0x58] sm:$0xff]
      %v275 = vld [vmem:[%s2 + $0x60] sm:$0xff]
      %v276 = vld [vmem:[%s2 + $0x68] sm:$0xff]
      %v277 = vld [vmem:[%s2 + $0x70] sm:$0xff]
      %v278 = vld [vmem:[%s2 + $0x78] sm:$0xff]
      %v279 = vld [vmem:[%s2 + $0x80] sm:$0xff]
      %v280 = vld [vmem:[%s2 + $0x88] sm:$0xff]
      %v281 = vld [vmem:[%s2 + $0x90] sm:$0xff]
      %v282 = vld [vmem:[%s2 + $0x98] sm:$0xff]
      %v283 = vld [vmem:[%s2 + $0xa0] sm:$0xff]
      %v284 = vld [vmem:[%s2 + $0xa8] sm:$0xff]
      %v285 = vld [vmem:[%s2 + $0xb0] sm:$0xff]
      %v286 = vld [vmem:[%s2 + $0xb8] sm:$0xff]
      %v287 = vld [vmem:[%s2 + $0xc0] sm:$0xff]
      %v288 = vld [vmem:[%s2 + $0xc8] sm:$0xff]
      %v289 = vld [vmem:[%s2 + $0xd0] sm:$0xff]
      %v290 = vld [vmem:[%s2 + $0xd8] sm:$0xff]
      %v291 = vld [vmem:[%s2 + $0xe0] sm:$0xff]
      %v292 = vld [vmem:[%s2 + $0xe8] sm:$0xff]
      %v293 = vld [vmem:[%s2 + $0xf0] sm:$0xff]
      %v294 = vld [vmem:[%s2 + $0xf8] sm:$0xff]
      %v295 = vxor.u32 %v263, 2147483648
      %v296 = vxor.u32 %v264, 2147483648
      %v297 = vxor.u32 %v265, 2147483648
      %v298 = vxor.u32 %v266, 2147483648
      %v299 = vxor.u32 %v267, 2147483648
      %v300 = vxor.u32 %v268, 2147483648
      %v301 = vxor.u32 %v269, 2147483648
      %v302 = vxor.u32 %v270, 2147483648
      %v303 = vxor.u32 %v271, 2147483648
      %v304 = vxor.u32 %v272, 2147483648
      %v305 = vxor.u32 %v273, 2147483648
      %v306 = vxor.u32 %v274, 2147483648
      %v307 = vxor.u32 %v275, 2147483648
      %v308 = vxor.u32 %v276, 2147483648
      %v309 = vxor.u32 %v277, 2147483648
      %v310 = vxor.u32 %v278, 2147483648
      %v311 = vxor.u32 %v279, 2147483648
      %v312 = vxor.u32 %v280, 2147483648
      %v313 = vxor.u32 %v281, 2147483648
      %v314 = vxor.u32 %v282, 2147483648
      %v315 = vxor.u32 %v283, 2147483648
      %v316 = vxor.u32 %v284, 2147483648
      %v317 = vxor.u32 %v285, 2147483648
      %v318 = vxor.u32 %v286, 2147483648
      %v319 = vxor.u32 %v287, 2147483648
      %v320 = vxor.u32 %v288, 2147483648
      %v321 = vxor.u32 %v289, 2147483648
      %v322 = vxor.u32 %v290, 2147483648
      %v323 = vxor.u32 %v291, 2147483648
      %v324 = vxor.u32 %v292, 2147483648
      %v325 = vxor.u32 %v293, 2147483648
      %v326 = vxor.u32 %v294, 2147483648
      %v327 = vmul.f32 %v295, 1.442695
      %v328 = vpow.pop %v327
      %v329 = vmul.f32 %v296, 1.442695
      %v330 = vpow.pop %v329
      %v331 = vmul.f32 %v297, 1.442695
      %v332 = vpow.pop %v331
      %v333 = vmul.f32 %v298, 1.442695
      %v334 = vpow.pop %v333
      %v335 = vmul.f32 %v299, 1.442695
      %v336 = vpow.pop %v335
      %v337 = vmul.f32 %v300, 1.442695
      %v338 = vpow.pop %v337
      %v339 = vmul.f32 %v301, 1.442695
      %v340 = vpow.pop %v339
      %v341 = vmul.f32 %v302, 1.442695
      %v342 = vpow.pop %v341
      %v343 = vmul.f32 %v303, 1.442695
      %v344 = vpow.pop %v343
      %v345 = vmul.f32 %v304, 1.442695
      %v346 = vpow.pop %v345
      %v347 = vmul.f32 %v305, 1.442695
      %v348 = vpow.pop %v347
      %v349 = vmul.f32 %v306, 1.442695
      %v350 = vpow.pop %v349
      %v351 = vmul.f32 %v307, 1.442695
      %v352 = vpow.pop %v351
      %v353 = vmul.f32 %v308, 1.442695
      %v354 = vpow.pop %v353
      %v355 = vmul.f32 %v309, 1.442695
      %v356 = vpow.pop %v355
      %v357 = vmul.f32 %v310, 1.442695
      %v358 = vpow.pop %v357
      %v359 = vmul.f32 %v311, 1.442695
      %v360 = vpow.pop %v359
      %v361 = vmul.f32 %v312, 1.442695
      %v362 = vpow.pop %v361
      %v363 = vmul.f32 %v313, 1.442695
      %v364 = vpow.pop %v363
      %v365 = vmul.f32 %v314, 1.442695
      %v366 = vpow.pop %v365
      %v367 = vmul.f32 %v315, 1.442695
      %v368 = vpow.pop %v367
      %v369 = vmul.f32 %v316, 1.442695
      %v370 = vpow.pop %v369
      %v371 = vmul.f32 %v317, 1.442695
      %v372 = vpow.pop %v371
      %v373 = vmul.f32 %v318, 1.442695
      %v374 = vpow.pop %v373
      %v375 = vmul.f32 %v319, 1.442695
      %v376 = vpow.pop %v375
      %v377 = vmul.f32 %v320, 1.442695
      %v378 = vpow.pop %v377
      %v379 = vmul.f32 %v321, 1.442695
      %v380 = vpow.pop %v379
      %v381 = vmul.f32 %v322, 1.442695
      %v382 = vpow.pop %v381
      %v383 = vmul.f32 %v323, 1.442695
      %v384 = vpow.pop %v383
      %v385 = vmul.f32 %v324, 1.442695
      %v386 = vpow.pop %v385
      %v387 = vmul.f32 %v325, 1.442695
      %v388 = vpow.pop %v387
      %v389 = vmul.f32 %v326, 1.442695
      %v390 = vpow.pop %v389
      %v391 = vadd.f32 %v328, 1.0
      %v392 = vadd.f32 %v330, 1.0
      %v393 = vadd.f32 %v332, 1.0
      %v394 = vadd.f32 %v334, 1.0
      %v395 = vadd.f32 %v336, 1.0
      %v396 = vadd.f32 %v338, 1.0
      %v397 = vadd.f32 %v340, 1.0
      %v398 = vadd.f32 %v342, 1.0
      %v399 = vadd.f32 %v344, 1.0
      %v400 = vadd.f32 %v346, 1.0
      %v401 = vadd.f32 %v348, 1.0
      %v402 = vadd.f32 %v350, 1.0
      %v403 = vadd.f32 %v352, 1.0
      %v404 = vadd.f32 %v354, 1.0
      %v405 = vadd.f32 %v356, 1.0
      %v406 = vadd.f32 %v358, 1.0
      %v407 = vadd.f32 %v360, 1.0
      %v408 = vadd.f32 %v362, 1.0
      %v409 = vadd.f32 %v364, 1.0
      %v410 = vadd.f32 %v366, 1.0
      %v411 = vadd.f32 %v368, 1.0
      %v412 = vadd.f32 %v370, 1.0
      %v413 = vadd.f32 %v372, 1.0
      %v414 = vadd.f32 %v374, 1.0
      %v415 = vadd.f32 %v376, 1.0
      %v416 = vadd.f32 %v378, 1.0
      %v417 = vadd.f32 %v380, 1.0
      %v418 = vadd.f32 %v382, 1.0
      %v419 = vadd.f32 %v384, 1.0
      %v420 = vadd.f32 %v386, 1.0
      %v421 = vadd.f32 %v388, 1.0
      %v422 = vadd.f32 %v390, 1.0
      %v423 = vrcp.pop %v391
      %v424 = vmul.f32 1.0, %v423
      %v425 = vrcp.pop %v392
      %v426 = vmul.f32 1.0, %v425
      %v427 = vrcp.pop %v393
      %v428 = vmul.f32 1.0, %v427
      %v429 = vrcp.pop %v394
      %v430 = vmul.f32 1.0, %v429
      %v431 = vrcp.pop %v395
      %v432 = vmul.f32 1.0, %v431
      %v433 = vrcp.pop %v396
      %v434 = vmul.f32 1.0, %v433
      %v435 = vrcp.pop %v397
      %v436 = vmul.f32 1.0, %v435
      %v437 = vrcp.pop %v398
      %v438 = vmul.f32 1.0, %v437
      %v439 = vrcp.pop %v399
      %v440 = vmul.f32 1.0, %v439
      %v441 = vrcp.pop %v400
      %v442 = vmul.f32 1.0, %v441
      %v443 = vrcp.pop %v401
      %v444 = vmul.f32 1.0, %v443
      %v445 = vrcp.pop %v402
      %v446 = vmul.f32 1.0, %v445
      %v447 = vrcp.pop %v403
      %v448 = vmul.f32 1.0, %v447
      %v449 = vrcp.pop %v404
      %v450 = vmul.f32 1.0, %v449
      %v451 = vrcp.pop %v405
      %v452 = vmul.f32 1.0, %v451
      %v453 = vrcp.pop %v406
      %v454 = vmul.f32 1.0, %v453
      %v455 = vrcp.pop %v407
      %v456 = vmul.f32 1.0, %v455
      %v457 = vrcp.pop %v408
      %v458 = vmul.f32 1.0, %v457
      %v459 = vrcp.pop %v409
      %v460 = vmul.f32 1.0, %v459
      %v461 = vrcp.pop %v410
      %v462 = vmul.f32 1.0, %v461
      %v463 = vrcp.pop %v411
      %v464 = vmul.f32 1.0, %v463
      %v465 = vrcp.pop %v412
      %v466 = vmul.f32 1.0, %v465
      %v467 = vrcp.pop %v413
      %v468 = vmul.f32 1.0, %v467
      %v469 = vrcp.pop %v414
      %v470 = vmul.f32 1.0, %v469
      %v471 = vrcp.pop %v415
      %v472 = vmul.f32 1.0, %v471
      %v473 = vrcp.pop %v416
      %v474 = vmul.f32 1.0, %v473
      %v475 = vrcp.pop %v417
      %v476 = vmul.f32 1.0, %v475
      %v477 = vrcp.pop %v418
      %v478 = vmul.f32 1.0, %v477
      %v479 = vrcp.pop %v419
      %v480 = vmul.f32 1.0, %v479
      %v481 = vrcp.pop %v420
      %v482 = vmul.f32 1.0, %v481
      %v483 = vrcp.pop %v421
      %v484 = vmul.f32 1.0, %v483
      %v485 = vrcp.pop %v422
      %v486 = vmul.f32 1.0, %v485
      %v487 = vmul.f32 %v231, %v424
      %v488 = vmul.f32 %v232, %v426
      %v489 = vmul.f32 %v233, %v428
      %v490 = vmul.f32 %v234, %v430
      %v491 = vmul.f32 %v235, %v432
      %v492 = vmul.f32 %v236, %v434
      %v493 = vmul.f32 %v237, %v436
      %v494 = vmul.f32 %v238, %v438
      %v495 = vmul.f32 %v239, %v440
      %v496 = vmul.f32 %v240, %v442
      %v497 = vmul.f32 %v241, %v444
      %v498 = vmul.f32 %v242, %v446
      %v499 = vmul.f32 %v243, %v448
      %v500 = vmul.f32 %v244, %v450
      %v501 = vmul.f32 %v245, %v452
      %v502 = vmul.f32 %v246, %v454
      %v503 = vmul.f32 %v247, %v456
      %v504 = vmul.f32 %v248, %v458
      %v505 = vmul.f32 %v249, %v460
      %v506 = vmul.f32 %v250, %v462
      %v507 = vmul.f32 %v251, %v464
      %v508 = vmul.f32 %v252, %v466
      %v509 = vmul.f32 %v253, %v468
      %v510 = vmul.f32 %v254, %v470
      %v511 = vmul.f32 %v255, %v472
      %v512 = vmul.f32 %v256, %v474
      %v513 = vmul.f32 %v257, %v476
      %v514 = vmul.f32 %v258, %v478
      %v515 = vmul.f32 %v259, %v480
      %v516 = vmul.f32 %v260, %v482
      %v517 = vmul.f32 %v261, %v484
      %v518 = vmul.f32 %v262, %v486
      %v519 = vadd.f32 %v487, %v231
      %v520 = vadd.f32 %v488, %v232
      %v521 = vadd.f32 %v489, %v233
      %v522 = vadd.f32 %v490, %v234
      %v523 = vadd.f32 %v491, %v235
      %v524 = vadd.f32 %v492, %v236
      %v525 = vadd.f32 %v493, %v237
      %v526 = vadd.f32 %v494, %v238
      %v527 = vadd.f32 %v495, %v239
      %v528 = vadd.f32 %v496, %v240
      %v529 = vadd.f32 %v497, %v241
      %v530 = vadd.f32 %v498, %v242
      %v531 = vadd.f32 %v499, %v243
      %v532 = vadd.f32 %v500, %v244
      %v533 = vadd.f32 %v501, %v245
      %v534 = vadd.f32 %v502, %v246
      %v535 = vadd.f32 %v503, %v247
      %v536 = vadd.f32 %v504, %v248
      %v537 = vadd.f32 %v505, %v249
      %v538 = vadd.f32 %v506, %v250
      %v539 = vadd.f32 %v507, %v251
      %v540 = vadd.f32 %v508, %v252
      %v541 = vadd.f32 %v509, %v253
      %v542 = vadd.f32 %v510, %v254
      %v543 = vadd.f32 %v511, %v255
      %v544 = vadd.f32 %v512, %v256
      %v545 = vadd.f32 %v513, %v257
      %v546 = vadd.f32 %v514, %v258
      %v547 = vadd.f32 %v515, %v259
      %v548 = vadd.f32 %v516, %v260
      %v549 = vadd.f32 %v517, %v261
      %v550 = vadd.f32 %v518, %v262
      %551 = vxpose.xlu0.b32.start [1/16] %v199, 128
      %552 = vxpose.xlu0.b32.cont [2/16] %v200, 128
      %553 = vxpose.xlu0.b32.cont [3/16] %v201, 128
      %554 = vxpose.xlu0.b32.cont [4/16] %v202, 128
      %555 = vxpose.xlu0.b32.cont [5/16] %v203, 128
      %556 = vxpose.xlu0.b32.cont [6/16] %v204, 128
      %557 = vxpose.xlu0.b32.cont [7/16] %v205, 128
      %558 = vxpose.xlu0.b32.cont [8/16] %v206, 128
      %559 = vxpose.xlu0.b32.cont [9/16] %v207, 128
      %560 = vxpose.xlu0.b32.cont [10/16] %v208, 128
      %561 = vxpose.xlu0.b32.cont [11/16] %v209, 128
      %562 = vxpose.xlu0.b32.cont [12/16] %v210, 128
      %563 = vxpose.xlu0.b32.cont [13/16] %v211, 128
      %564 = vxpose.xlu0.b32.cont [14/16] %v212, 128
      %565 = vxpose.xlu0.b32.cont [15/16] %v213, 128
      %566 = vxpose.xlu0.b32.end [16/16] %v214, 128
      %v567 = vpop.trf.xlu0
      %v568 = vpop.trf.xlu0
      %v569 = vpop.trf.xlu0
      %v570 = vpop.trf.xlu0
      %v571 = vpop.trf.xlu0
      %v572 = vpop.trf.xlu0
      %v573 = vpop.trf.xlu0
      %v574 = vpop.trf.xlu0
      %v575 = vpop.trf.xlu0
      %v576 = vpop.trf.xlu0
      %v577 = vpop.trf.xlu0
      %v578 = vpop.trf.xlu0
      %v579 = vpop.trf.xlu0
      %v580 = vpop.trf.xlu0
      %v581 = vpop.trf.xlu0
      %v582 = vpop.trf.xlu0
      %583 = vxpose.xlu0.b32.start [1/16] %v215, 128
      %584 = vxpose.xlu0.b32.cont [2/16] %v216, 128
      %585 = vxpose.xlu0.b32.cont [3/16] %v217, 128
      %586 = vxpose.xlu0.b32.cont [4/16] %v218, 128
      %587 = vxpose.xlu0.b32.cont [5/16] %v219, 128
      %588 = vxpose.xlu0.b32.cont [6/16] %v220, 128
      %589 = vxpose.xlu0.b32.cont [7/16] %v221, 128
      %590 = vxpose.xlu0.b32.cont [8/16] %v222, 128
      %591 = vxpose.xlu0.b32.cont [9/16] %v223, 128
      %592 = vxpose.xlu0.b32.cont [10/16] %v224, 128
      %593 = vxpose.xlu0.b32.cont [11/16] %v225, 128
      %594 = vxpose.xlu0.b32.cont [12/16] %v226, 128
      %595 = vxpose.xlu0.b32.cont [13/16] %v227, 128
      %596 = vxpose.xlu0.b32.cont [14/16] %v228, 128
      %597 = vxpose.xlu0.b32.cont [15/16] %v229, 128
      %598 = vxpose.xlu0.b32.end [16/16] %v230, 128
      %v599 = vpop.trf.xlu0
      %v600 = vpop.trf.xlu0
      %v601 = vpop.trf.xlu0
      %v602 = vpop.trf.xlu0
      %v603 = vpop.trf.xlu0
      %v604 = vpop.trf.xlu0
      %v605 = vpop.trf.xlu0
      %v606 = vpop.trf.xlu0
      %v607 = vpop.trf.xlu0
      %v608 = vpop.trf.xlu0
      %v609 = vpop.trf.xlu0
      %v610 = vpop.trf.xlu0
      %v611 = vpop.trf.xlu0
      %v612 = vpop.trf.xlu0
      %v613 = vpop.trf.xlu0
      %v614 = vpop.trf.xlu0
      %647 = vrot.lane.b32.xlu0 %v519, 64
      %v648 = vpop.permute.xlu0 %647
      %649 = vrot.lane.b32.xlu0 %v520, 64
      %v650 = vpop.permute.xlu0 %649
      %651 = vrot.lane.b32.xlu0 %v521, 64
      %v652 = vpop.permute.xlu0 %651
      %653 = vrot.lane.b32.xlu0 %v522, 64
      %v654 = vpop.permute.xlu0 %653
      %655 = vrot.lane.b32.xlu0 %v523, 64
      %v656 = vpop.permute.xlu0 %655
      %657 = vrot.lane.b32.xlu0 %v524, 64
      %v658 = vpop.permute.xlu0 %657
      %659 = vrot.lane.b32.xlu0 %v525, 64
      %v660 = vpop.permute.xlu0 %659
      %661 = vrot.lane.b32.xlu0 %v526, 64
      %v662 = vpop.permute.xlu0 %661
      %663 = vrot.lane.b32.xlu0 %v527, 64
      %v664 = vpop.permute.xlu0 %663
      %665 = vrot.lane.b32.xlu0 %v528, 64
      %v666 = vpop.permute.xlu0 %665
      %667 = vrot.lane.b32.xlu0 %v529, 64
      %v668 = vpop.permute.xlu0 %667
      %669 = vrot.lane.b32.xlu0 %v530, 64
      %v670 = vpop.permute.xlu0 %669
      %671 = vrot.lane.b32.xlu0 %v531, 64
      %v672 = vpop.permute.xlu0 %671
      %673 = vrot.lane.b32.xlu0 %v532, 64
      %v674 = vpop.permute.xlu0 %673
      %675 = vrot.lane.b32.xlu0 %v533, 64
      %v676 = vpop.permute.xlu0 %675
      %677 = vrot.lane.b32.xlu0 %v534, 64
      %v678 = vpop.permute.xlu0 %677
      %679 = vrot.lane.b32.xlu0 %v535, 64
      %v680 = vpop.permute.xlu0 %679
      %681 = vrot.lane.b32.xlu0 %v536, 64
      %v682 = vpop.permute.xlu0 %681
      %683 = vrot.lane.b32.xlu0 %v537, 64
      %v684 = vpop.permute.xlu0 %683
      %685 = vrot.lane.b32.xlu0 %v538, 64
      %v686 = vpop.permute.xlu0 %685
      %687 = vrot.lane.b32.xlu0 %v539, 64
      %v688 = vpop.permute.xlu0 %687
      %689 = vrot.lane.b32.xlu0 %v540, 64
      %v690 = vpop.permute.xlu0 %689
      %691 = vrot.lane.b32.xlu0 %v541, 64
      %v692 = vpop.permute.xlu0 %691
      %693 = vrot.lane.b32.xlu0 %v542, 64
      %v694 = vpop.permute.xlu0 %693
      %695 = vrot.lane.b32.xlu0 %v543, 64
      %v696 = vpop.permute.xlu0 %695
      %697 = vrot.lane.b32.xlu0 %v544, 64
      %v698 = vpop.permute.xlu0 %697
      %699 = vrot.lane.b32.xlu0 %v545, 64
      %v700 = vpop.permute.xlu0 %699
      %701 = vrot.lane.b32.xlu0 %v546, 64
      %v702 = vpop.permute.xlu0 %701
      %703 = vrot.lane.b32.xlu0 %v547, 64
      %v704 = vpop.permute.xlu0 %703
      %705 = vrot.lane.b32.xlu0 %v548, 64
      %v706 = vpop.permute.xlu0 %705
      %707 = vrot.lane.b32.xlu0 %v549, 64
      %v708 = vpop.permute.xlu0 %707
      %709 = vrot.lane.b32.xlu0 %v550, 64
      %v710 = vpop.permute.xlu0 %709
      %v743 = vmul.f32 %v199, %v648
      %v744 = vmul.f32 %v200, %v650
      %v745 = vmul.f32 %v201, %v652
      %v746 = vmul.f32 %v202, %v654
      %v747 = vmul.f32 %v203, %v656
      %v748 = vmul.f32 %v204, %v658
      %v749 = vmul.f32 %v205, %v660
      %v750 = vmul.f32 %v206, %v662
      %v751 = vmul.f32 %v207, %v664
      %v752 = vmul.f32 %v208, %v666
      %v753 = vmul.f32 %v209, %v668
      %v754 = vmul.f32 %v210, %v670
      %v755 = vmul.f32 %v211, %v672
      %v756 = vmul.f32 %v212, %v674
      %v757 = vmul.f32 %v213, %v676
      %v758 = vmul.f32 %v214, %v678
      %v759 = vmul.f32 %v215, %v680
      %v760 = vmul.f32 %v216, %v682
      %v761 = vmul.f32 %v217, %v684
      %v762 = vmul.f32 %v218, %v686
      %v763 = vmul.f32 %v219, %v688
      %v764 = vmul.f32 %v220, %v690
      %v765 = vmul.f32 %v221, %v692
      %v766 = vmul.f32 %v222, %v694
      %v767 = vmul.f32 %v223, %v696
      %v768 = vmul.f32 %v224, %v698
      %v769 = vmul.f32 %v225, %v700
      %v770 = vmul.f32 %v226, %v702
      %v771 = vmul.f32 %v227, %v704
      %v772 = vmul.f32 %v228, %v706
      %v773 = vmul.f32 %v229, %v708
      %v774 = vmul.f32 %v230, %v710
      %v775 = vmul.f32 %v567, %v567
      %v776 = vmul.f32 %v599, %v599
      %v777 = vmul.f32 %v568, %v568
      %v778 = vmul.f32 %v600, %v600
      %v779 = vadd.f32 %v775, %v776
      %780 = vadd.xlane.f32.xlu0 %v779
      %v781 = vpop.xlane.xlu0 %780
      %v782 = vadd.f32 %v777, %v778
      %783 = vadd.xlane.f32.xlu0 %v782
      %v784 = vpop.xlane.xlu0 %783
      %v785 = vmax.f32 %v781, 1e-24
      %v786 = vmax.f32 %v784, 1e-24
      %v787 = vrsqrt.pop %v785
      %v788 = vrsqrt.pop %v786
      %v789 = vmul.f32 %v571, %v571
      %v790 = vmul.f32 %v603, %v603
      %v791 = vmul.f32 %v572, %v572
      %v792 = vmul.f32 %v604, %v604
      %v793 = vadd.f32 %v789, %v790
      %794 = vadd.xlane.f32.xlu0 %v793
      %v795 = vpop.xlane.xlu0 %794
      %v796 = vadd.f32 %v791, %v792
      %797 = vadd.xlane.f32.xlu0 %v796
      %v798 = vpop.xlane.xlu0 %797
      %v799 = vmax.f32 %v795, 1e-24
      %v800 = vmax.f32 %v798, 1e-24
      %v801 = vrsqrt.pop %v799
      %v802 = vrsqrt.pop %v800
      %v803 = vld [vmem:[%s3] sm:$0xff]
      %v804 = vld [vmem:[%s3 + $0x8] sm:$0xff]
      %v805 = vmul.f32 %v787, %v803
      %v806 = vmul.f32 %v788, %v804
      %808 = vset.pattern.permute.xlu0 0
      %809 = vperm.xlu0 %808, %v805
      %v810 = vpop.permute.xlu0 %809
      %813 = vset.pattern.permute.xlu0 0
      %814 = vperm.xlu0 %813, %v806
      %v815 = vpop.permute.xlu0 %814
      %v817 = vmul.f32 %v567, %v810
      %v818 = vmul.f32 %v599, %v810
      %v819 = vmul.f32 %v568, %v815
      %v820 = vmul.f32 %v600, %v815
      %v821 = vmul.f32 %v571, %v801
      %v822 = vmul.f32 %v603, %v801
      %v823 = vmul.f32 %v572, %v802
      %v824 = vmul.f32 %v604, %v802
      %v825 = vpack.c.bf16 %v823, %v821
      %v826 = vpack.c.bf16 %v824, %v822
      %v827 = vpack.c.bf16 %v819, %v817
      %v828 = vpack.c.bf16 %v820, %v818
      %829 = vmatprep.subr.bf16.mxu0 0
      %830 = vmatpush1.bf16.xpose.msra.mxu0 0
      %831 = vmatprep.subr.bf16.mxu0 0
      %832 = vmatpush1.bf16.xpose.msra.mxu0 0
      %833 = vmatprep.subr.bf16.mxu0 0
      %834 = vmatpush1.bf16.xpose.msra.mxu0 0
      %835 = vmatprep.subr.bf16.mxu0 0
      %836 = vmatpush1.bf16.xpose.msra.mxu0 0
      %837 = vmatprep.subr.bf16.mxu0 0
      %838 = vmatpush1.bf16.xpose.msra.mxu0 0
      %839 = vmatprep.subr.bf16.mxu0 0
      %840 = vmatpush1.bf16.xpose.msra.mxu0 0
      %841 = vmatprep.subr.bf16.mxu0 0
      %842 = vmatpush1.bf16.xpose.msra.mxu0 0
      %843 = vmatprep.subr.bf16.mxu0 %v828
      %844 = vmatpush1.bf16.xpose.msra.mxu0 %v827
      %845 = vmatprep.subr.bf16.mxu0 0
      %846 = vmatpush2.bf16.xpose.msra.mxu0 0
      %847 = vmatprep.subr.bf16.mxu0 0
      %848 = vmatpush2.bf16.xpose.msra.mxu0 0
      %849 = vmatprep.subr.bf16.mxu0 0
      %850 = vmatpush2.bf16.xpose.msra.mxu0 0
      %851 = vmatprep.subr.bf16.mxu0 0
      %852 = vmatpush2.bf16.xpose.msra.mxu0 0
      %853 = vmatprep.subr.bf16.mxu0 0
      %854 = vmatpush2.bf16.xpose.msra.mxu0 0
      %855 = vmatprep.subr.bf16.mxu0 0
      %856 = vmatpush2.bf16.xpose.msra.mxu0 0
      %857 = vmatprep.subr.bf16.mxu0 0
      %858 = vmatpush2.bf16.xpose.msra.mxu0 0
      %859 = vmatprep.subr.bf16.mxu0 0
      %860 = vmatpush2.bf16.xpose.msra.mxu0 0
      %861 = vmatprep.mubr.bf16.mxu0 %v826
      %862 = vmatmul.mubr.bf16.gmra.mxu0 %v825
      %v863 = vpop.f32.mrf.mxu0
      %v864 = vadd.f32 0.0, %v863
      %v865 = vpop.f32.mrf.mxu0
      %v866 = vpop.f32.mrf.mxu0
      %v867 = vadd.f32 0.0, %v866
      %v868 = vpop.f32.mrf.mxu0
      %869 = vdwg.mxu0
      %vm870 = vcmask 130048
      %v871 = vsel %vm870, %v864, -inf
      %872 = vmax.xlane.f32.xlu0 %v871
      %v873 = vpop.xlane.xlu0 %872
      %v874 = vsel %vm870, %v867, -inf
      %875 = vmax.xlane.f32.xlu0 %v874
      %v876 = vpop.xlane.xlu0 %875
      %v877 = vsub.f32 %v864, %v873
      %v878 = vsub.f32 %v867, %v876
      %v879 = vmul.f32 %v877, 1.442695
      %v880 = vpow.pop %v879
      %v881 = vmul.f32 %v878, 1.442695
      %v882 = vpow.pop %v881
      %v883 = vsel %vm870, %v880, 0.0
      %884 = vadd.xlane.f32.xlu0 %v883
      %v885 = vpop.xlane.xlu0 %884
      %v886 = vsel %vm870, %v882, 0.0
      %887 = vadd.xlane.f32.xlu0 %v886
      %v888 = vpop.xlane.xlu0 %887
      %v889 = vrcp.pop %v885
      %v890 = vmul.f32 %v880, %v889
      %v891 = vrcp.pop %v888
      %v892 = vmul.f32 %v882, %v891
      %v893 = vpack.c.bf16 %v744, %v743
      %v894 = vpack.c.bf16 %v746, %v745
      %v895 = vpack.c.bf16 %v748, %v747
      %v896 = vpack.c.bf16 %v750, %v749
      %v897 = vpack.c.bf16 %v752, %v751
      %v898 = vpack.c.bf16 %v754, %v753
      %v899 = vpack.c.bf16 %v756, %v755
      %v900 = vpack.c.bf16 %v758, %v757
      %v901 = vpack.c.bf16 %v760, %v759
      %v902 = vpack.c.bf16 %v762, %v761
      %v903 = vpack.c.bf16 %v764, %v763
      %v904 = vpack.c.bf16 %v766, %v765
      %v905 = vpack.c.bf16 %v768, %v767
      %v906 = vpack.c.bf16 %v770, %v769
      %v907 = vpack.c.bf16 %v772, %v771
      %v908 = vpack.c.bf16 %v774, %v773
      %v909 = vpack.c.bf16 %v892, %v890
      %926 = vrot.lane.b32.xlu0 %v893, 64
      %v927 = vpop.permute.xlu0 %926
      %928 = vrot.lane.b32.xlu0 %v894, 64
      %v929 = vpop.permute.xlu0 %928
      %930 = vrot.lane.b32.xlu0 %v895, 64
      %v931 = vpop.permute.xlu0 %930
      %932 = vrot.lane.b32.xlu0 %v896, 64
      %v933 = vpop.permute.xlu0 %932
      %934 = vrot.lane.b32.xlu0 %v897, 64
      %v935 = vpop.permute.xlu0 %934
      %936 = vrot.lane.b32.xlu0 %v898, 64
      %v937 = vpop.permute.xlu0 %936
      %938 = vrot.lane.b32.xlu0 %v899, 64
      %v939 = vpop.permute.xlu0 %938
      %940 = vrot.lane.b32.xlu0 %v900, 64
      %v941 = vpop.permute.xlu0 %940
      %942 = vrot.lane.b32.xlu0 %v901, 64
      %v943 = vpop.permute.xlu0 %942
      %944 = vrot.lane.b32.xlu0 %v902, 64
      %v945 = vpop.permute.xlu0 %944
      %946 = vrot.lane.b32.xlu0 %v903, 64
      %v947 = vpop.permute.xlu0 %946
      %948 = vrot.lane.b32.xlu0 %v904, 64
      %v949 = vpop.permute.xlu0 %948
      %950 = vrot.lane.b32.xlu0 %v905, 64
      %v951 = vpop.permute.xlu0 %950
      %952 = vrot.lane.b32.xlu0 %v906, 64
      %v953 = vpop.permute.xlu0 %952
      %954 = vrot.lane.b32.xlu0 %v907, 64
      %v955 = vpop.permute.xlu0 %954
      %956 = vrot.lane.b32.xlu0 %v908, 64
      %v957 = vpop.permute.xlu0 %956
      %v959 = vsel %vm870, %v927, 0
      %v962 = vsel %vm870, %v929, 0
      %v965 = vsel %vm870, %v931, 0
      %v968 = vsel %vm870, %v933, 0
      %v971 = vsel %vm870, %v935, 0
      %v974 = vsel %vm870, %v937, 0
      %v977 = vsel %vm870, %v939, 0
      %v980 = vsel %vm870, %v941, 0
      %v983 = vsel %vm870, %v943, 0
      %v986 = vsel %vm870, %v945, 0
      %v989 = vsel %vm870, %v947, 0
      %v992 = vsel %vm870, %v949, 0
      %v995 = vsel %vm870, %v951, 0
      %v998 = vsel %vm870, %v953, 0
      %v1001 = vsel %vm870, %v955, 0
      %v1004 = vsel %vm870, %v957, 0
      %v1007 = vsel %vm870, %v909, 0
      %1009 = vmatprep.subr.bf16.mxu0 0
      %1010 = vmatpush1.bf16.xpose.msra.mxu0 0
      %1011 = vmatprep.subr.bf16.mxu0 0
      %1012 = vmatpush1.bf16.xpose.msra.mxu0 0
      %1013 = vmatprep.subr.bf16.mxu0 0
      %1014 = vmatpush1.bf16.xpose.msra.mxu0 0
      %1015 = vmatprep.subr.bf16.mxu0 0
      %1016 = vmatpush1.bf16.xpose.msra.mxu0 0
      %1017 = vmatprep.subr.bf16.mxu0 0
      %1018 = vmatpush1.bf16.xpose.msra.mxu0 0
      %1019 = vmatprep.subr.bf16.mxu0 0
      %1020 = vmatpush1.bf16.xpose.msra.mxu0 0
      %1021 = vmatprep.subr.bf16.mxu0 0
      %1022 = vmatpush1.bf16.xpose.msra.mxu0 0
      %1023 = vmatprep.subr.bf16.mxu0 0
      %1024 = vmatpush1.bf16.xpose.msra.mxu0 %v1007
      %1025 = vmatprep.subr.bf16.mxu0 0
      %1026 = vmatpush2.bf16.xpose.msra.mxu0 0
      %1027 = vmatprep.subr.bf16.mxu0 0
      %1028 = vmatpush2.bf16.xpose.msra.mxu0 0
      %1029 = vmatprep.subr.bf16.mxu0 0
      %1030 = vmatpush2.bf16.xpose.msra.mxu0 0
      %1031 = vmatprep.subr.bf16.mxu0 0
      %1032 = vmatpush2.bf16.xpose.msra.mxu0 0
      %1033 = vmatprep.subr.bf16.mxu0 0
      %1034 = vmatpush2.bf16.xpose.msra.mxu0 0
      %1035 = vmatprep.subr.bf16.mxu0 0
      %1036 = vmatpush2.bf16.xpose.msra.mxu0 0
      %1037 = vmatprep.subr.bf16.mxu0 0
      %1038 = vmatpush2.bf16.xpose.msra.mxu0 0
      %1039 = vmatprep.subr.bf16.mxu0 0
      %1040 = vmatpush2.bf16.xpose.msra.mxu0 0
      %1041 = vmatprep.mubr.bf16.mxu0 0
      %1042 = vmatmul.mubr.bf16.gmra.mxu0 %v959
      %v1043 = vpop.f32.mrf.mxu0
      %v1044 = vadd.f32 0.0, %v1043
      %v1045 = vpop.f32.mrf.mxu0
      %v1046 = vpop.f32.mrf.mxu0
      %v1047 = vadd.f32 0.0, %v1046
      %v1048 = vpop.f32.mrf.mxu0
      %1049 = vmatprep.mubr.bf16.mxu0 0
      %1050 = vmatmul.mubr.bf16.gmra.mxu0 %v962
      %v1051 = vpop.f32.mrf.mxu0
      %v1052 = vadd.f32 0.0, %v1051
      %v1053 = vpop.f32.mrf.mxu0
      %v1054 = vpop.f32.mrf.mxu0
      %v1055 = vadd.f32 0.0, %v1054
      %v1056 = vpop.f32.mrf.mxu0
      %1057 = vmatprep.mubr.bf16.mxu0 0
      %1058 = vmatmul.mubr.bf16.gmra.mxu0 %v965
      %v1059 = vpop.f32.mrf.mxu0
      %v1060 = vadd.f32 0.0, %v1059
      %v1061 = vpop.f32.mrf.mxu0
      %v1062 = vpop.f32.mrf.mxu0
      %v1063 = vadd.f32 0.0, %v1062
      %v1064 = vpop.f32.mrf.mxu0
      %1065 = vmatprep.mubr.bf16.mxu0 0
      %1066 = vmatmul.mubr.bf16.gmra.mxu0 %v968
      %v1067 = vpop.f32.mrf.mxu0
      %v1068 = vadd.f32 0.0, %v1067
      %v1069 = vpop.f32.mrf.mxu0
      %v1070 = vpop.f32.mrf.mxu0
      %v1071 = vadd.f32 0.0, %v1070
      %v1072 = vpop.f32.mrf.mxu0
      %1073 = vmatprep.mubr.bf16.mxu0 0
      %1074 = vmatmul.mubr.bf16.gmra.mxu0 %v971
      %v1075 = vpop.f32.mrf.mxu0
      %v1076 = vadd.f32 0.0, %v1075
      %v1077 = vpop.f32.mrf.mxu0
      %v1078 = vpop.f32.mrf.mxu0
      %v1079 = vadd.f32 0.0, %v1078
      %v1080 = vpop.f32.mrf.mxu0
      %1081 = vmatprep.mubr.bf16.mxu0 0
      %1082 = vmatmul.mubr.bf16.gmra.mxu0 %v974
      %v1083 = vpop.f32.mrf.mxu0
      %v1084 = vadd.f32 0.0, %v1083
      %v1085 = vpop.f32.mrf.mxu0
      %v1086 = vpop.f32.mrf.mxu0
      %v1087 = vadd.f32 0.0, %v1086
      %v1088 = vpop.f32.mrf.mxu0
      %1089 = vmatprep.mubr.bf16.mxu0 0
      %1090 = vmatmul.mubr.bf16.gmra.mxu0 %v977
      %v1091 = vpop.f32.mrf.mxu0
      %v1092 = vadd.f32 0.0, %v1091
      %v1093 = vpop.f32.mrf.mxu0
      %v1094 = vpop.f32.mrf.mxu0
      %v1095 = vadd.f32 0.0, %v1094
      %v1096 = vpop.f32.mrf.mxu0
      %1097 = vmatprep.mubr.bf16.mxu0 0
      %1098 = vmatmul.mubr.bf16.gmra.mxu0 %v980
      %v1099 = vpop.f32.mrf.mxu0
      %v1100 = vadd.f32 0.0, %v1099
      %v1101 = vpop.f32.mrf.mxu0
      %v1102 = vpop.f32.mrf.mxu0
      %v1103 = vadd.f32 0.0, %v1102
      %v1104 = vpop.f32.mrf.mxu0
      %1105 = vmatprep.mubr.bf16.mxu0 0
      %1106 = vmatmul.mubr.bf16.gmra.mxu0 %v983
      %v1107 = vpop.f32.mrf.mxu0
      %v1108 = vadd.f32 0.0, %v1107
      %v1109 = vpop.f32.mrf.mxu0
      %v1110 = vpop.f32.mrf.mxu0
      %v1111 = vadd.f32 0.0, %v1110
      %v1112 = vpop.f32.mrf.mxu0
      %1113 = vmatprep.mubr.bf16.mxu0 0
      %1114 = vmatmul.mubr.bf16.gmra.mxu0 %v986
      %v1115 = vpop.f32.mrf.mxu0
      %v1116 = vadd.f32 0.0, %v1115
      %v1117 = vpop.f32.mrf.mxu0
      %v1118 = vpop.f32.mrf.mxu0
      %v1119 = vadd.f32 0.0, %v1118
      %v1120 = vpop.f32.mrf.mxu0
      %1121 = vmatprep.mubr.bf16.mxu0 0
      %1122 = vmatmul.mubr.bf16.gmra.mxu0 %v989
      %v1123 = vpop.f32.mrf.mxu0
      %v1124 = vadd.f32 0.0, %v1123
      %v1125 = vpop.f32.mrf.mxu0
      %v1126 = vpop.f32.mrf.mxu0
      %v1127 = vadd.f32 0.0, %v1126
      %v1128 = vpop.f32.mrf.mxu0
      %1129 = vmatprep.mubr.bf16.mxu0 0
      %1130 = vmatmul.mubr.bf16.gmra.mxu0 %v992
      %v1131 = vpop.f32.mrf.mxu0
      %v1132 = vadd.f32 0.0, %v1131
      %v1133 = vpop.f32.mrf.mxu0
      %v1134 = vpop.f32.mrf.mxu0
      %v1135 = vadd.f32 0.0, %v1134
      %v1136 = vpop.f32.mrf.mxu0
      %1137 = vmatprep.mubr.bf16.mxu0 0
      %1138 = vmatmul.mubr.bf16.gmra.mxu0 %v995
      %v1139 = vpop.f32.mrf.mxu0
      %v1140 = vadd.f32 0.0, %v1139
      %v1141 = vpop.f32.mrf.mxu0
      %v1142 = vpop.f32.mrf.mxu0
      %v1143 = vadd.f32 0.0, %v1142
      %v1144 = vpop.f32.mrf.mxu0
      %1145 = vmatprep.mubr.bf16.mxu0 0
      %1146 = vmatmul.mubr.bf16.gmra.mxu0 %v998
      %v1147 = vpop.f32.mrf.mxu0
      %v1148 = vadd.f32 0.0, %v1147
      %v1149 = vpop.f32.mrf.mxu0
      %v1150 = vpop.f32.mrf.mxu0
      %v1151 = vadd.f32 0.0, %v1150
      %v1152 = vpop.f32.mrf.mxu0
      %1153 = vmatprep.mubr.bf16.mxu0 0
      %1154 = vmatmul.mubr.bf16.gmra.mxu0 %v1001
      %v1155 = vpop.f32.mrf.mxu0
      %v1156 = vadd.f32 0.0, %v1155
      %v1157 = vpop.f32.mrf.mxu0
      %v1158 = vpop.f32.mrf.mxu0
      %v1159 = vadd.f32 0.0, %v1158
      %v1160 = vpop.f32.mrf.mxu0
      %1161 = vmatprep.mubr.bf16.mxu0 0
      %1162 = vmatmul.mubr.bf16.gmra.mxu0 %v1004
      %v1163 = vpop.f32.mrf.mxu0
      %v1164 = vadd.f32 0.0, %v1163
      %v1165 = vpop.f32.mrf.mxu0
      %v1166 = vpop.f32.mrf.mxu0
      %v1167 = vadd.f32 0.0, %v1166
      %v1168 = vpop.f32.mrf.mxu0
      %1169 = vdwg.mxu0
      %v1170 = vmul.f32 %v569, %v569
      %v1171 = vmul.f32 %v601, %v601
      %v1172 = vmul.f32 %v570, %v570
      %v1173 = vmul.f32 %v602, %v602
      %v1174 = vadd.f32 %v1170, %v1171
      %1175 = vadd.xlane.f32.xlu0 %v1174
      %v1176 = vpop.xlane.xlu0 %1175
      %v1177 = vadd.f32 %v1172, %v1173
      %1178 = vadd.xlane.f32.xlu0 %v1177
      %v1179 = vpop.xlane.xlu0 %1178
      %v1180 = vmax.f32 %v1176, 1e-24
      %v1181 = vmax.f32 %v1179, 1e-24
      %v1182 = vrsqrt.pop %v1180
      %v1183 = vrsqrt.pop %v1181
      %v1184 = vmul.f32 %v573, %v573
      %v1185 = vmul.f32 %v605, %v605
      %v1186 = vmul.f32 %v574, %v574
      %v1187 = vmul.f32 %v606, %v606
      %v1188 = vadd.f32 %v1184, %v1185
      %1189 = vadd.xlane.f32.xlu0 %v1188
      %v1190 = vpop.xlane.xlu0 %1189
      %v1191 = vadd.f32 %v1186, %v1187
      %1192 = vadd.xlane.f32.xlu0 %v1191
      %v1193 = vpop.xlane.xlu0 %1192
      %v1194 = vmax.f32 %v1190, 1e-24
      %v1195 = vmax.f32 %v1193, 1e-24
      %v1196 = vrsqrt.pop %v1194
      %v1197 = vrsqrt.pop %v1195
      %v1198 = vld [vmem:[%s3 + $0x10] sm:$0xff]
      %v1199 = vld [vmem:[%s3 + $0x18] sm:$0xff]
      %v1200 = vmul.f32 %v1182, %v1198
      %v1201 = vmul.f32 %v1183, %v1199
      %1203 = vset.pattern.permute.xlu0 0
      %1204 = vperm.xlu0 %1203, %v1200
      %v1205 = vpop.permute.xlu0 %1204
      %1208 = vset.pattern.permute.xlu0 0
      %1209 = vperm.xlu0 %1208, %v1201
      %v1210 = vpop.permute.xlu0 %1209
      %v1212 = vmul.f32 %v569, %v1205
      %v1213 = vmul.f32 %v601, %v1205
      %v1214 = vmul.f32 %v570, %v1210
      %v1215 = vmul.f32 %v602, %v1210
      %v1216 = vmul.f32 %v573, %v1196
      %v1217 = vmul.f32 %v605, %v1196
      %v1218 = vmul.f32 %v574, %v1197
      %v1219 = vmul.f32 %v606, %v1197
      %v1220 = vpack.c.bf16 %v1218, %v1216
      %v1221 = vpack.c.bf16 %v1219, %v1217
      %v1222 = vpack.c.bf16 %v1214, %v1212
      %v1223 = vpack.c.bf16 %v1215, %v1213
      %1224 = vmatprep.subr.bf16.mxu0 0
      %1225 = vmatpush1.bf16.xpose.msra.mxu0 0
      %1226 = vmatprep.subr.bf16.mxu0 0
      %1227 = vmatpush1.bf16.xpose.msra.mxu0 0
      %1228 = vmatprep.subr.bf16.mxu0 0
      %1229 = vmatpush1.bf16.xpose.msra.mxu0 0
      %1230 = vmatprep.subr.bf16.mxu0 0
      %1231 = vmatpush1.bf16.xpose.msra.mxu0 0
      %1232 = vmatprep.subr.bf16.mxu0 0
      %1233 = vmatpush1.bf16.xpose.msra.mxu0 0
      %1234 = vmatprep.subr.bf16.mxu0 0
      %1235 = vmatpush1.bf16.xpose.msra.mxu0 0
      %1236 = vmatprep.subr.bf16.mxu0 0
      %1237 = vmatpush1.bf16.xpose.msra.mxu0 0
      %1238 = vmatprep.subr.bf16.mxu0 %v1223
      %1239 = vmatpush1.bf16.xpose.msra.mxu0 %v1222
      %1240 = vmatprep.subr.bf16.mxu0 0
      %1241 = vmatpush2.bf16.xpose.msra.mxu0 0
      %1242 = vmatprep.subr.bf16.mxu0 0
      %1243 = vmatpush2.bf16.xpose.msra.mxu0 0
      %1244 = vmatprep.subr.bf16.mxu0 0
      %1245 = vmatpush2.bf16.xpose.msra.mxu0 0
      %1246 = vmatprep.subr.bf16.mxu0 0
      %1247 = vmatpush2.bf16.xpose.msra.mxu0 0
      %1248 = vmatprep.subr.bf16.mxu0 0
      %1249 = vmatpush2.bf16.xpose.msra.mxu0 0
      %1250 = vmatprep.subr.bf16.mxu0 0
      %1251 = vmatpush2.bf16.xpose.msra.mxu0 0
      %1252 = vmatprep.subr.bf16.mxu0 0
      %1253 = vmatpush2.bf16.xpose.msra.mxu0 0
      %1254 = vmatprep.subr.bf16.mxu0 0
      %1255 = vmatpush2.bf16.xpose.msra.mxu0 0
      %1256 = vmatprep.mubr.bf16.mxu0 %v1221
      %1257 = vmatmul.mubr.bf16.gmra.mxu0 %v1220
      %v1258 = vpop.f32.mrf.mxu0
      %v1259 = vadd.f32 0.0, %v1258
      %v1260 = vpop.f32.mrf.mxu0
      %v1261 = vpop.f32.mrf.mxu0
      %v1262 = vadd.f32 0.0, %v1261
      %v1263 = vpop.f32.mrf.mxu0
      %1264 = vdwg.mxu0
      %v1265 = vsel %vm870, %v1259, -inf
      %1266 = vmax.xlane.f32.xlu0 %v1265
      %v1267 = vpop.xlane.xlu0 %1266
      %v1268 = vsel %vm870, %v1262, -inf
      %1269 = vmax.xlane.f32.xlu0 %v1268
      %v1270 = vpop.xlane.xlu0 %1269
      %v1271 = vsub.f32 %v1259, %v1267
      %v1272 = vsub.f32 %v1262, %v1270
      %v1273 = vmul.f32 %v1271, 1.442695
      %v1274 = vpow.pop %v1273
      %v1275 = vmul.f32 %v1272, 1.442695
      %v1276 = vpow.pop %v1275
      %v1277 = vsel %vm870, %v1274, 0.0
      %1278 = vadd.xlane.f32.xlu0 %v1277
      %v1279 = vpop.xlane.xlu0 %1278
      %v1280 = vsel %vm870, %v1276, 0.0
      %1281 = vadd.xlane.f32.xlu0 %v1280
      %v1282 = vpop.xlane.xlu0 %1281
      %v1283 = vrcp.pop %v1279
      %v1284 = vmul.f32 %v1274, %v1283
      %v1285 = vrcp.pop %v1282
      %v1286 = vmul.f32 %v1276, %v1285
      %v1287 = vpack.c.bf16 %v1286, %v1284
      %1288 = vrot.lane.b32.xlu0 %v893, 48
      %v1289 = vpop.permute.xlu0 %1288
      %1290 = vrot.lane.b32.xlu0 %v894, 48
      %v1291 = vpop.permute.xlu0 %1290
      %1292 = vrot.lane.b32.xlu0 %v895, 48
      %v1293 = vpop.permute.xlu0 %1292
      %1294 = vrot.lane.b32.xlu0 %v896, 48
      %v1295 = vpop.permute.xlu0 %1294
      %1296 = vrot.lane.b32.xlu0 %v897, 48
      %v1297 = vpop.permute.xlu0 %1296
      %1298 = vrot.lane.b32.xlu0 %v898, 48
      %v1299 = vpop.permute.xlu0 %1298
      %1300 = vrot.lane.b32.xlu0 %v899, 48
      %v1301 = vpop.permute.xlu0 %1300
      %1302 = vrot.lane.b32.xlu0 %v900, 48
      %v1303 = vpop.permute.xlu0 %1302
      %1304 = vrot.lane.b32.xlu0 %v901, 48
      %v1305 = vpop.permute.xlu0 %1304
      %1306 = vrot.lane.b32.xlu0 %v902, 48
      %v1307 = vpop.permute.xlu0 %1306
      %1308 = vrot.lane.b32.xlu0 %v903, 48
      %v1309 = vpop.permute.xlu0 %1308
      %1310 = vrot.lane.b32.xlu0 %v904, 48
      %v1311 = vpop.permute.xlu0 %1310
      %1312 = vrot.lane.b32.xlu0 %v905, 48
      %v1313 = vpop.permute.xlu0 %1312
      %1314 = vrot.lane.b32.xlu0 %v906, 48
      %v1315 = vpop.permute.xlu0 %1314
      %1316 = vrot.lane.b32.xlu0 %v907, 48
      %v1317 = vpop.permute.xlu0 %1316
      %1318 = vrot.lane.b32.xlu0 %v908, 48
      %v1319 = vpop.permute.xlu0 %1318
      %v1321 = vsel %vm870, %v1289, 0
      %v1324 = vsel %vm870, %v1291, 0
      %v1327 = vsel %vm870, %v1293, 0
      %v1330 = vsel %vm870, %v1295, 0
      %v1333 = vsel %vm870, %v1297, 0
      %v1336 = vsel %vm870, %v1299, 0
      %v1339 = vsel %vm870, %v1301, 0
      %v1342 = vsel %vm870, %v1303, 0
      %v1345 = vsel %vm870, %v1305, 0
      %v1348 = vsel %vm870, %v1307, 0
      %v1351 = vsel %vm870, %v1309, 0
      %v1354 = vsel %vm870, %v1311, 0
      %v1357 = vsel %vm870, %v1313, 0
      %v1360 = vsel %vm870, %v1315, 0
      %v1363 = vsel %vm870, %v1317, 0
      %v1366 = vsel %vm870, %v1319, 0
      %v1369 = vsel %vm870, %v1287, 0
      %1371 = vmatprep.subr.bf16.mxu0 0
      %1372 = vmatpush1.bf16.xpose.msra.mxu0 0
      %1373 = vmatprep.subr.bf16.mxu0 0
      %1374 = vmatpush1.bf16.xpose.msra.mxu0 0
      %1375 = vmatprep.subr.bf16.mxu0 0
      %1376 = vmatpush1.bf16.xpose.msra.mxu0 0
      %1377 = vmatprep.subr.bf16.mxu0 0
      %1378 = vmatpush1.bf16.xpose.msra.mxu0 0
      %1379 = vmatprep.subr.bf16.mxu0 0
      %1380 = vmatpush1.bf16.xpose.msra.mxu0 0
      %1381 = vmatprep.subr.bf16.mxu0 0
      %1382 = vmatpush1.bf16.xpose.msra.mxu0 0
      %1383 = vmatprep.subr.bf16.mxu0 0
      %1384 = vmatpush1.bf16.xpose.msra.mxu0 0
      %1385 = vmatprep.subr.bf16.mxu0 0
      %1386 = vmatpush1.bf16.xpose.msra.mxu0 %v1369
      %1387 = vmatprep.subr.bf16.mxu0 0
      %1388 = vmatpush2.bf16.xpose.msra.mxu0 0
      %1389 = vmatprep.subr.bf16.mxu0 0
      %1390 = vmatpush2.bf16.xpose.msra.mxu0 0
      %1391 = vmatprep.subr.bf16.mxu0 0
      %1392 = vmatpush2.bf16.xpose.msra.mxu0 0
      %1393 = vmatprep.subr.bf16.mxu0 0
      %1394 = vmatpush2.bf16.xpose.msra.mxu0 0
      %1395 = vmatprep.subr.bf16.mxu0 0
      %1396 = vmatpush2.bf16.xpose.msra.mxu0 0
      %1397 = vmatprep.subr.bf16.mxu0 0
      %1398 = vmatpush2.bf16.xpose.msra.mxu0 0
      %1399 = vmatprep.subr.bf16.mxu0 0
      %1400 = vmatpush2.bf16.xpose.msra.mxu0 0
      %1401 = vmatprep.subr.bf16.mxu0 0
      %1402 = vmatpush2.bf16.xpose.msra.mxu0 0
      %1403 = vmatprep.mubr.bf16.mxu0 0
      %1404 = vmatmul.mubr.bf16.gmra.mxu0 %v1321
      %v1405 = vpop.f32.mrf.mxu0
      %v1406 = vadd.f32 0.0, %v1405
      %v1407 = vpop.f32.mrf.mxu0
      %v1408 = vpop.f32.mrf.mxu0
      %v1409 = vadd.f32 0.0, %v1408
      %v1410 = vpop.f32.mrf.mxu0
      %1411 = vmatprep.mubr.bf16.mxu0 0
      %1412 = vmatmul.mubr.bf16.gmra.mxu0 %v1324
      %v1413 = vpop.f32.mrf.mxu0
      %v1414 = vadd.f32 0.0, %v1413
      %v1415 = vpop.f32.mrf.mxu0
      %v1416 = vpop.f32.mrf.mxu0
      %v1417 = vadd.f32 0.0, %v1416
      %v1418 = vpop.f32.mrf.mxu0
      %1419 = vmatprep.mubr.bf16.mxu0 0
      %1420 = vmatmul.mubr.bf16.gmra.mxu0 %v1327
      %v1421 = vpop.f32.mrf.mxu0
      %v1422 = vadd.f32 0.0, %v1421
      %v1423 = vpop.f32.mrf.mxu0
      %v1424 = vpop.f32.mrf.mxu0
      %v1425 = vadd.f32 0.0, %v1424
      %v1426 = vpop.f32.mrf.mxu0
      %1427 = vmatprep.mubr.bf16.mxu0 0
      %1428 = vmatmul.mubr.bf16.gmra.mxu0 %v1330
      %v1429 = vpop.f32.mrf.mxu0
      %v1430 = vadd.f32 0.0, %v1429
      %v1431 = vpop.f32.mrf.mxu0
      %v1432 = vpop.f32.mrf.mxu0
      %v1433 = vadd.f32 0.0, %v1432
      %v1434 = vpop.f32.mrf.mxu0
      %1435 = vmatprep.mubr.bf16.mxu0 0
      %1436 = vmatmul.mubr.bf16.gmra.mxu0 %v1333
      %v1437 = vpop.f32.mrf.mxu0
      %v1438 = vadd.f32 0.0, %v1437
      %v1439 = vpop.f32.mrf.mxu0
      %v1440 = vpop.f32.mrf.mxu0
      %v1441 = vadd.f32 0.0, %v1440
      %v1442 = vpop.f32.mrf.mxu0
      %1443 = vmatprep.mubr.bf16.mxu0 0
      %1444 = vmatmul.mubr.bf16.gmra.mxu0 %v1336
      %v1445 = vpop.f32.mrf.mxu0
      %v1446 = vadd.f32 0.0, %v1445
      %v1447 = vpop.f32.mrf.mxu0
      %v1448 = vpop.f32.mrf.mxu0
      %v1449 = vadd.f32 0.0, %v1448
      %v1450 = vpop.f32.mrf.mxu0
      %1451 = vmatprep.mubr.bf16.mxu0 0
      %1452 = vmatmul.mubr.bf16.gmra.mxu0 %v1339
      %v1453 = vpop.f32.mrf.mxu0
      %v1454 = vadd.f32 0.0, %v1453
      %v1455 = vpop.f32.mrf.mxu0
      %v1456 = vpop.f32.mrf.mxu0
      %v1457 = vadd.f32 0.0, %v1456
      %v1458 = vpop.f32.mrf.mxu0
      %1459 = vmatprep.mubr.bf16.mxu0 0
      %1460 = vmatmul.mubr.bf16.gmra.mxu0 %v1342
      %v1461 = vpop.f32.mrf.mxu0
      %v1462 = vadd.f32 0.0, %v1461
      %v1463 = vpop.f32.mrf.mxu0
      %v1464 = vpop.f32.mrf.mxu0
      %v1465 = vadd.f32 0.0, %v1464
      %v1466 = vpop.f32.mrf.mxu0
      %1467 = vmatprep.mubr.bf16.mxu0 0
      %1468 = vmatmul.mubr.bf16.gmra.mxu0 %v1345
      %v1469 = vpop.f32.mrf.mxu0
      %v1470 = vadd.f32 0.0, %v1469
      %v1471 = vpop.f32.mrf.mxu0
      %v1472 = vpop.f32.mrf.mxu0
      %v1473 = vadd.f32 0.0, %v1472
      %v1474 = vpop.f32.mrf.mxu0
      %1475 = vmatprep.mubr.bf16.mxu0 0
      %1476 = vmatmul.mubr.bf16.gmra.mxu0 %v1348
      %v1477 = vpop.f32.mrf.mxu0
      %v1478 = vadd.f32 0.0, %v1477
      %v1479 = vpop.f32.mrf.mxu0
      %v1480 = vpop.f32.mrf.mxu0
      %v1481 = vadd.f32 0.0, %v1480
      %v1482 = vpop.f32.mrf.mxu0
      %1483 = vmatprep.mubr.bf16.mxu0 0
      %1484 = vmatmul.mubr.bf16.gmra.mxu0 %v1351
      %v1485 = vpop.f32.mrf.mxu0
      %v1486 = vadd.f32 0.0, %v1485
      %v1487 = vpop.f32.mrf.mxu0
      %v1488 = vpop.f32.mrf.mxu0
      %v1489 = vadd.f32 0.0, %v1488
      %v1490 = vpop.f32.mrf.mxu0
      %1491 = vmatprep.mubr.bf16.mxu0 0
      %1492 = vmatmul.mubr.bf16.gmra.mxu0 %v1354
      %v1493 = vpop.f32.mrf.mxu0
      %v1494 = vadd.f32 0.0, %v1493
      %v1495 = vpop.f32.mrf.mxu0
      %v1496 = vpop.f32.mrf.mxu0
      %v1497 = vadd.f32 0.0, %v1496
      %v1498 = vpop.f32.mrf.mxu0
      %1499 = vmatprep.mubr.bf16.mxu0 0
      %1500 = vmatmul.mubr.bf16.gmra.mxu0 %v1357
      %v1501 = vpop.f32.mrf.mxu0
      %v1502 = vadd.f32 0.0, %v1501
      %v1503 = vpop.f32.mrf.mxu0
      %v1504 = vpop.f32.mrf.mxu0
      %v1505 = vadd.f32 0.0, %v1504
      %v1506 = vpop.f32.mrf.mxu0
      %1507 = vmatprep.mubr.bf16.mxu0 0
      %1508 = vmatmul.mubr.bf16.gmra.mxu0 %v1360
      %v1509 = vpop.f32.mrf.mxu0
      %v1510 = vadd.f32 0.0, %v1509
      %v1511 = vpop.f32.mrf.mxu0
      %v1512 = vpop.f32.mrf.mxu0
      %v1513 = vadd.f32 0.0, %v1512
      %v1514 = vpop.f32.mrf.mxu0
      %1515 = vmatprep.mubr.bf16.mxu0 0
      %1516 = vmatmul.mubr.bf16.gmra.mxu0 %v1363
      %v1517 = vpop.f32.mrf.mxu0
      %v1518 = vadd.f32 0.0, %v1517
      %v1519 = vpop.f32.mrf.mxu0
      %v1520 = vpop.f32.mrf.mxu0
      %v1521 = vadd.f32 0.0, %v1520
      %v1522 = vpop.f32.mrf.mxu0
      %1523 = vmatprep.mubr.bf16.mxu0 0
      %1524 = vmatmul.mubr.bf16.gmra.mxu0 %v1366
      %v1525 = vpop.f32.mrf.mxu0
      %v1526 = vadd.f32 0.0, %v1525
      %v1527 = vpop.f32.mrf.mxu0
      %v1528 = vpop.f32.mrf.mxu0
      %v1529 = vadd.f32 0.0, %v1528
      %v1530 = vpop.f32.mrf.mxu0
      %1531 = vdwg.mxu0
      %1564 = vrot.lane.b32.xlu0 %v1406, 16
      %v1565 = vpop.permute.xlu0 %1564
      %1566 = vrot.lane.b32.xlu0 %v1409, 16
      %v1567 = vpop.permute.xlu0 %1566
      %1568 = vrot.lane.b32.xlu0 %v1414, 16
      %v1569 = vpop.permute.xlu0 %1568
      %1570 = vrot.lane.b32.xlu0 %v1417, 16
      %v1571 = vpop.permute.xlu0 %1570
      %1572 = vrot.lane.b32.xlu0 %v1422, 16
      %v1573 = vpop.permute.xlu0 %1572
      %1574 = vrot.lane.b32.xlu0 %v1425, 16
      %v1575 = vpop.permute.xlu0 %1574
      %1576 = vrot.lane.b32.xlu0 %v1430, 16
      %v1577 = vpop.permute.xlu0 %1576
      %1578 = vrot.lane.b32.xlu0 %v1433, 16
      %v1579 = vpop.permute.xlu0 %1578
      %1580 = vrot.lane.b32.xlu0 %v1438, 16
      %v1581 = vpop.permute.xlu0 %1580
      %1582 = vrot.lane.b32.xlu0 %v1441, 16
      %v1583 = vpop.permute.xlu0 %1582
      %1584 = vrot.lane.b32.xlu0 %v1446, 16
      %v1585 = vpop.permute.xlu0 %1584
      %1586 = vrot.lane.b32.xlu0 %v1449, 16
      %v1587 = vpop.permute.xlu0 %1586
      %1588 = vrot.lane.b32.xlu0 %v1454, 16
      %v1589 = vpop.permute.xlu0 %1588
      %1590 = vrot.lane.b32.xlu0 %v1457, 16
      %v1591 = vpop.permute.xlu0 %1590
      %1592 = vrot.lane.b32.xlu0 %v1462, 16
      %v1593 = vpop.permute.xlu0 %1592
      %1594 = vrot.lane.b32.xlu0 %v1465, 16
      %v1595 = vpop.permute.xlu0 %1594
      %1596 = vrot.lane.b32.xlu0 %v1470, 16
      %v1597 = vpop.permute.xlu0 %1596
      %1598 = vrot.lane.b32.xlu0 %v1473, 16
      %v1599 = vpop.permute.xlu0 %1598
      %1600 = vrot.lane.b32.xlu0 %v1478, 16
      %v1601 = vpop.permute.xlu0 %1600
      %1602 = vrot.lane.b32.xlu0 %v1481, 16
      %v1603 = vpop.permute.xlu0 %1602
      %1604 = vrot.lane.b32.xlu0 %v1486, 16
      %v1605 = vpop.permute.xlu0 %1604
      %1606 = vrot.lane.b32.xlu0 %v1489, 16
      %v1607 = vpop.permute.xlu0 %1606
      %1608 = vrot.lane.b32.xlu0 %v1494, 16
      %v1609 = vpop.permute.xlu0 %1608
      %1610 = vrot.lane.b32.xlu0 %v1497, 16
      %v1611 = vpop.permute.xlu0 %1610
      %1612 = vrot.lane.b32.xlu0 %v1502, 16
      %v1613 = vpop.permute.xlu0 %1612
      %1614 = vrot.lane.b32.xlu0 %v1505, 16
      %v1615 = vpop.permute.xlu0 %1614
      %1616 = vrot.lane.b32.xlu0 %v1510, 16
      %v1617 = vpop.permute.xlu0 %1616
      %1618 = vrot.lane.b32.xlu0 %v1513, 16
      %v1619 = vpop.permute.xlu0 %1618
      %1620 = vrot.lane.b32.xlu0 %v1518, 16
      %v1621 = vpop.permute.xlu0 %1620
      %1622 = vrot.lane.b32.xlu0 %v1521, 16
      %v1623 = vpop.permute.xlu0 %1622
      %1624 = vrot.lane.b32.xlu0 %v1526, 16
      %v1625 = vpop.permute.xlu0 %1624
      %1626 = vrot.lane.b32.xlu0 %v1529, 16
      %v1627 = vpop.permute.xlu0 %1626
      %v1660 = vsel %vm870, %v1044, %v1565
      %v1661 = vsel %vm870, %v1047, %v1567
      %v1662 = vsel %vm870, %v1052, %v1569
      %v1663 = vsel %vm870, %v1055, %v1571
      %v1664 = vsel %vm870, %v1060, %v1573
      %v1665 = vsel %vm870, %v1063, %v1575
      %v1666 = vsel %vm870, %v1068, %v1577
      %v1667 = vsel %vm870, %v1071, %v1579
      %v1668 = vsel %vm870, %v1076, %v1581
      %v1669 = vsel %vm870, %v1079, %v1583
      %v1670 = vsel %vm870, %v1084, %v1585
      %v1671 = vsel %vm870, %v1087, %v1587
      %v1672 = vsel %vm870, %v1092, %v1589
      %v1673 = vsel %vm870, %v1095, %v1591
      %v1674 = vsel %vm870, %v1100, %v1593
      %v1675 = vsel %vm870, %v1103, %v1595
      %v1676 = vsel %vm870, %v1108, %v1597
      %v1677 = vsel %vm870, %v1111, %v1599
      %v1678 = vsel %vm870, %v1116, %v1601
      %v1679 = vsel %vm870, %v1119, %v1603
      %v1680 = vsel %vm870, %v1124, %v1605
      %v1681 = vsel %vm870, %v1127, %v1607
      %v1682 = vsel %vm870, %v1132, %v1609
      %v1683 = vsel %vm870, %v1135, %v1611
      %v1684 = vsel %vm870, %v1140, %v1613
      %v1685 = vsel %vm870, %v1143, %v1615
      %v1686 = vsel %vm870, %v1148, %v1617
      %v1687 = vsel %vm870, %v1151, %v1619
      %v1688 = vsel %vm870, %v1156, %v1621
      %v1689 = vsel %vm870, %v1159, %v1623
      %v1690 = vsel %vm870, %v1164, %v1625
      %v1691 = vsel %vm870, %v1167, %v1627
      %vm1692 = vcmask 261120
      %1693 = vst.msk [vmem:[%s197] sm:$0xff] %vm1692, %v1660
      %1694 = vst.msk [vmem:[%s197 + $0x8] sm:$0xff] %vm1692, %v1661
      %1695 = vst.msk [vmem:[%s197 + $0x10] sm:$0xff] %vm1692, %v1662
      %1696 = vst.msk [vmem:[%s197 + $0x18] sm:$0xff] %vm1692, %v1663
      %1697 = vst.msk [vmem:[%s197 + $0x20] sm:$0xff] %vm1692, %v1664
      %1698 = vst.msk [vmem:[%s197 + $0x28] sm:$0xff] %vm1692, %v1665
      %1699 = vst.msk [vmem:[%s197 + $0x30] sm:$0xff] %vm1692, %v1666
      %1700 = vst.msk [vmem:[%s197 + $0x38] sm:$0xff] %vm1692, %v1667
      %1701 = vst.msk [vmem:[%s197 + $0x40] sm:$0xff] %vm1692, %v1668
      %1702 = vst.msk [vmem:[%s197 + $0x48] sm:$0xff] %vm1692, %v1669
      %1703 = vst.msk [vmem:[%s197 + $0x50] sm:$0xff] %vm1692, %v1670
      %1704 = vst.msk [vmem:[%s197 + $0x58] sm:$0xff] %vm1692, %v1671
      %1705 = vst.msk [vmem:[%s197 + $0x60] sm:$0xff] %vm1692, %v1672
      %1706 = vst.msk [vmem:[%s197 + $0x68] sm:$0xff] %vm1692, %v1673
      %1707 = vst.msk [vmem:[%s197 + $0x70] sm:$0xff] %vm1692, %v1674
      %1708 = vst.msk [vmem:[%s197 + $0x78] sm:$0xff] %vm1692, %v1675
      %1709 = vst.msk [vmem:[%s197 + $0x80] sm:$0xff] %vm1692, %v1676
      %1710 = vst.msk [vmem:[%s197 + $0x88] sm:$0xff] %vm1692, %v1677
      %1711 = vst.msk [vmem:[%s197 + $0x90] sm:$0xff] %vm1692, %v1678
      %1712 = vst.msk [vmem:[%s197 + $0x98] sm:$0xff] %vm1692, %v1679
      %1713 = vst.msk [vmem:[%s197 + $0xa0] sm:$0xff] %vm1692, %v1680
      %1714 = vst.msk [vmem:[%s197 + $0xa8] sm:$0xff] %vm1692, %v1681
      %1715 = vst.msk [vmem:[%s197 + $0xb0] sm:$0xff] %vm1692, %v1682
      %1716 = vst.msk [vmem:[%s197 + $0xb8] sm:$0xff] %vm1692, %v1683
      %1717 = vst.msk [vmem:[%s197 + $0xc0] sm:$0xff] %vm1692, %v1684
      %1718 = vst.msk [vmem:[%s197 + $0xc8] sm:$0xff] %vm1692, %v1685
      %1719 = vst.msk [vmem:[%s197 + $0xd0] sm:$0xff] %vm1692, %v1686
      %1720 = vst.msk [vmem:[%s197 + $0xd8] sm:$0xff] %vm1692, %v1687
      %1721 = vst.msk [vmem:[%s197 + $0xe0] sm:$0xff] %vm1692, %v1688
      %1722 = vst.msk [vmem:[%s197 + $0xe8] sm:$0xff] %vm1692, %v1689
      %1723 = vst.msk [vmem:[%s197 + $0xf0] sm:$0xff] %vm1692, %v1690
      %1724 = vst.msk [vmem:[%s197 + $0xf8] sm:$0xff] %vm1692, %v1691
      %p1725 = scmp.lt.s32.totalorder %s15, 1
      %s1726 = scalar_select %p1725, %s15, 1
      %s1727 = smul.addr %s1726, 32
      %s1728 = smul.addr %s1727, 8
      %s1729 = scalar_lea.vmem %s4, %s1728
      // Predicated region
      $region37: #{ssm_ab_forward.12} parent=35 // pred_check
        %p1730 = pneg %p122
      $region38: #{ssm_ab_forward.12} parent=35 // pred_check_branch
        %1732 = sbr.rel (%p1730) target = $region40
      $region39: #{ssm_ab_forward.12} parent=35 // pred_region
        _
      $region40: #{ssm_ab_forward.12} parent=35 // pred_fallthru
        _
    $region36: #{ssm_ab_forward.12} parent=5 // pred_fallthru
      _
    %p1733 = scmp.le.s32.totalorder 2, %s10
    // Predicated region
    $region41: #{ssm_ab_forward.12} parent=5 // pred_check
      %p1734 = pneg %p1733
    $region42: #{ssm_ab_forward.12} parent=5 // pred_check_branch
      %1736 = sbr.rel (%p1734) target = $region44
    $region43: #{ssm_ab_forward.12} parent=5 // pred_region
      %s1737 = ssub.s32 %s10, 2
      // Predicated region
      $region45: #{ssm_ab_forward.12} parent=43 // pred_check
        %p1738 = pneg %p128
      $region46: #{ssm_ab_forward.12} parent=43 // pred_check_branch
        %1740 = sbr.rel (%p1738) target = $region48
      $region47: #{ssm_ab_forward.12} parent=43 // pred_region
        %p1741 = scmp.lt.s32.totalorder %s16, 1
        %s1742 = scalar_select %p1741, %s16, 1
        %s1743 = smul.addr %s1742, 32
        %s1744 = smul.addr %s1743, 8
        %s1745 = scalar_lea.vmem %s4, %s1744
      $region48: #{ssm_ab_forward.12} parent=43 // pred_fallthru
        _
    $region44: #{ssm_ab_forward.12} parent=5 // pred_fallthru
      _
  $region6: #{ssm_ab_forward.12} parent=0 // loop_footer
    %s14 = sadd.s32 1, %s10
  $region7: #{ssm_ab_forward.12} parent=0 // loop_footer_branch
    %9 = sbr.rel target = $region3
  $region8: #{ssm_ab_forward.12} parent=0 // loop_exit
    _

// kernel: ssm_ab_forward.13
$region0: #{ssm_ab_forward.13}
  #allocation0 [shape = 'u32[]', space=smem, size = 0x4, offset = 0x4, fixed_abs, tag = 'smem constant byte address 0x4 - core index']
  #allocation1 [shape = 'u32[144,128]{1,0:T(1,128)}', space=vmem, size = 0x12000, scoped, tag = 'internal scratch']
  %s0 = inlined_call_operand.vmem [shape: f32[512,32], index: 0, kind: input, shape index: {}]
  %s1 = inlined_call_operand.vmem [shape: f32[32,32], index: 1, kind: input, shape index: {}]
  %s2 = inlined_call_operand.vmem [shape: f32[1,32], index: 2, kind: input, shape index: {}]
  %s3 = inlined_call_operand.vmem [shape: f32[512,32], index: 3, kind: input, shape index: {}]
  %s4 = inlined_call_operand.hbm [shape: f32[512,32], index: 4, kind: output, shape index: {}]
  %s5 = sld [smem:[#allocation0]]
  $region26: #{ssm_ab_forward.13} parent=0
    _
  %s7 = ssub.s32 1, %s5
  %s8 = scalar_select 0, %s7, %s5
  $region1: #{ssm_ab_forward.13} parent=0
    #allocation2 [shape = 'u8[262144]{0}', space=vmem, size = 0x40000, scoped, tag = 'output window, operand 0, single buffered']
    #allocation3 [shape = 's32[1]{0}', space=sflag, size = 0x4, scoped, tag = 'scoped memory for ssm_ab_forward.13']
    %9 = vsyncpa [#allocation3], 0
    // Predicated region
    $region2: #{ssm_ab_forward.13} parent=1 // pred_check
      _
    $region3: #{ssm_ab_forward.13} parent=1 // pred_check_branch
      %11 = sbr.rel (0) target = $region5
    $region4: #{ssm_ab_forward.13} parent=1 // pred_region
      _
    $region5: #{ssm_ab_forward.13} parent=1 // pred_fallthru
      _
    // Predicated region
    $region6: #{ssm_ab_forward.13} parent=1 // pred_check
      _
    $region7: #{ssm_ab_forward.13} parent=1 // pred_check_branch
      %13 = sbr.rel (0) target = $region9
    $region8: #{ssm_ab_forward.13} parent=1 // pred_region
      _
    $region9: #{ssm_ab_forward.13} parent=1 // pred_fallthru
      _
    // Predicated region
    $region10: #{ssm_ab_forward.13} parent=1 // pred_check
      _
    $region11: #{ssm_ab_forward.13} parent=1 // pred_check_branch
      %15 = sbr.rel (0) target = $region13
    $region12: #{ssm_ab_forward.13} parent=1 // pred_region
      _
    $region13: #{ssm_ab_forward.13} parent=1 // pred_fallthru
      _
    // Predicated region
    $region14: #{ssm_ab_forward.13} parent=1 // pred_check
      _
    $region15: #{ssm_ab_forward.13} parent=1 // pred_check_branch
      %17 = sbr.rel (0) target = $region17
    $region16: #{ssm_ab_forward.13} parent=1 // pred_region
      _
    $region17: #{ssm_ab_forward.13} parent=1 // pred_fallthru
      _
    %v19 = vld [vmem:[%s0] sm:$0xff]
    %v20 = vld [vmem:[%s0 + $0x8] sm:$0xff]
    %v21 = vld [vmem:[%s0 + $0x10] sm:$0xff]
    %v22 = vld [vmem:[%s0 + $0x18] sm:$0xff]
    %v23 = vld [vmem:[%s0 + $0x20] sm:$0xff]
    %v24 = vld [vmem:[%s0 + $0x28] sm:$0xff]
    %v25 = vld [vmem:[%s0 + $0x30] sm:$0xff]
    %v26 = vld [vmem:[%s0 + $0x38] sm:$0xff]
    %v27 = vld [vmem:[%s0 + $0x40] sm:$0xff]
    %v28 = vld [vmem:[%s0 + $0x48] sm:$0xff]
    %v29 = vld [vmem:[%s0 + $0x50] sm:$0xff]
    %v30 = vld [vmem:[%s0 + $0x58] sm:$0xff]
    %v31 = vld [vmem:[%s0 + $0x60] sm:$0xff]
    %v32 = vld [vmem:[%s0 + $0x68] sm:$0xff]
    %v33 = vld [vmem:[%s0 + $0x70] sm:$0xff]
    %v34 = vld [vmem:[%s0 + $0x78] sm:$0xff]
    %v35 = vld [vmem:[%s0 + $0x80] sm:$0xff]
    %v36 = vld [vmem:[%s0 + $0x88] sm:$0xff]
    %v37 = vld [vmem:[%s0 + $0x90] sm:$0xff]
    %v38 = vld [vmem:[%s0 + $0x98] sm:$0xff]
    %v39 = vld [vmem:[%s0 + $0xa0] sm:$0xff]
    %v40 = vld [vmem:[%s0 + $0xa8] sm:$0xff]
    %v41 = vld [vmem:[%s0 + $0xb0] sm:$0xff]
    %v42 = vld [vmem:[%s0 + $0xb8] sm:$0xff]
    %v43 = vld [vmem:[%s0 + $0xc0] sm:$0xff]
    %v44 = vld [vmem:[%s0 + $0xc8] sm:$0xff]
    %v45 = vld [vmem:[%s0 + $0xd0] sm:$0xff]
    %v46 = vld [vmem:[%s0 + $0xd8] sm:$0xff]
    %v47 = vld [vmem:[%s0 + $0xe0] sm:$0xff]
    %v48 = vld [vmem:[%s0 + $0xe8] sm:$0xff]
    %v49 = vld [vmem:[%s0 + $0xf0] sm:$0xff]
    %v50 = vld [vmem:[%s0 + $0xf8] sm:$0xff]
    %v51 = vld [vmem:[%s0 + $0x100] sm:$0xff]
    %v52 = vld [vmem:[%s0 + $0x108] sm:$0xff]
    %v53 = vld [vmem:[%s0 + $0x110] sm:$0xff]
    %v54 = vld [vmem:[%s0 + $0x118] sm:$0xff]
    %v55 = vld [vmem:[%s0 + $0x120] sm:$0xff]
    %v56 = vld [vmem:[%s0 + $0x128] sm:$0xff]
    %v57 = vld [vmem:[%s0 + $0x130] sm:$0xff]
    %v58 = vld [vmem:[%s0 + $0x138] sm:$0xff]
    %v59 = vld [vmem:[%s0 + $0x140] sm:$0xff]
    %v60 = vld [vmem:[%s0 + $0x148] sm:$0xff]
    %v61 = vld [vmem:[%s0 + $0x150] sm:$0xff]
    %v62 = vld [vmem:[%s0 + $0x158] sm:$0xff]
    %v63 = vld [vmem:[%s0 + $0x160] sm:$0xff]
    %v64 = vld [vmem:[%s0 + $0x168] sm:$0xff]
    %v65 = vld [vmem:[%s0 + $0x170] sm:$0xff]
    %v66 = vld [vmem:[%s0 + $0x178] sm:$0xff]
    %v67 = vld [vmem:[%s0 + $0x180] sm:$0xff]
    %v68 = vld [vmem:[%s0 + $0x188] sm:$0xff]
    %v69 = vld [vmem:[%s0 + $0x190] sm:$0xff]
    %v70 = vld [vmem:[%s0 + $0x198] sm:$0xff]
    %v71 = vld [vmem:[%s0 + $0x1a0] sm:$0xff]
    %v72 = vld [vmem:[%s0 + $0x1a8] sm:$0xff]
    %v73 = vld [vmem:[%s0 + $0x1b0] sm:$0xff]
    %v74 = vld [vmem:[%s0 + $0x1b8] sm:$0xff]
    %v75 = vld [vmem:[%s0 + $0x1c0] sm:$0xff]
    %v76 = vld [vmem:[%s0 + $0x1c8] sm:$0xff]
    %v77 = vld [vmem:[%s0 + $0x1d0] sm:$0xff]
    %v78 = vld [vmem:[%s0 + $0x1d8] sm:$0xff]
    %v79 = vld [vmem:[%s0 + $0x1e0] sm:$0xff]
    %v80 = vld [vmem:[%s0 + $0x1e8] sm:$0xff]
    %v81 = vld [vmem:[%s0 + $0x1f0] sm:$0xff]
    %v82 = vld [vmem:[%s0 + $0x1f8] sm:$0xff]
    %v83 = vld [vmem:[%s1] sm:$0xff]
    %v84 = vld [vmem:[%s1 + $0x8] sm:$0xff]
    %v85 = vld [vmem:[%s1 + $0x10] sm:$0xff]
    %v86 = vld [vmem:[%s1 + $0x18] sm:$0xff]
    %v87 = vpack.c.bf16 %v20, %v19
    %v88 = vpack.c.bf16 %v22, %v21
    %v89 = vpack.c.bf16 %v24, %v23
    %v90 = vpack.c.bf16 %v26, %v25
    %v91 = vpack.c.bf16 %v28, %v27
    %v92 = vpack.c.bf16 %v30, %v29
    %v93 = vpack.c.bf16 %v32, %v31
    %v94 = vpack.c.bf16 %v34, %v33
    %v95 = vpack.c.bf16 %v36, %v35
    %v96 = vpack.c.bf16 %v38, %v37
    %v97 = vpack.c.bf16 %v40, %v39
    %v98 = vpack.c.bf16 %v42, %v41
    %v99 = vpack.c.bf16 %v44, %v43
    %v100 = vpack.c.bf16 %v46, %v45
    %v101 = vpack.c.bf16 %v48, %v47
    %v102 = vpack.c.bf16 %v50, %v49
    %v103 = vpack.c.bf16 %v52, %v51
    %v104 = vpack.c.bf16 %v54, %v53
    %v105 = vpack.c.bf16 %v56, %v55
    %v106 = vpack.c.bf16 %v58, %v57
    %v107 = vpack.c.bf16 %v60, %v59
    %v108 = vpack.c.bf16 %v62, %v61
    %v109 = vpack.c.bf16 %v64, %v63
    %v110 = vpack.c.bf16 %v66, %v65
    %v111 = vpack.c.bf16 %v68, %v67
    %v112 = vpack.c.bf16 %v70, %v69
    %v113 = vpack.c.bf16 %v72, %v71
    %v114 = vpack.c.bf16 %v74, %v73
    %v115 = vpack.c.bf16 %v76, %v75
    %v116 = vpack.c.bf16 %v78, %v77
    %v117 = vpack.c.bf16 %v80, %v79
    %v118 = vpack.c.bf16 %v82, %v81
    %v119 = vpack.c.bf16 %v84, %v83
    %v120 = vpack.c.bf16 %v86, %v85
    %v121 = vld [vmem:[%s2] sm:$0x1]
    %v123 = vlaneseq
    %v124 = vshrl.u32 %v123, 7
    %v125 = vsub.s32 0, %v124
    %v126 = vrot.slane %v121, %v125
    %vm128 = vcmask 261120
    %v130 = vsel %vm128, %v87, 0
    %v133 = vsel %vm128, %v88, 0
    %v136 = vsel %vm128, %v89, 0
    %v139 = vsel %vm128, %v90, 0
    %v142 = vsel %vm128, %v91, 0
    %v145 = vsel %vm128, %v92, 0
    %v148 = vsel %vm128, %v93, 0
    %v151 = vsel %vm128, %v94, 0
    %v154 = vsel %vm128, %v95, 0
    %v157 = vsel %vm128, %v96, 0
    %v160 = vsel %vm128, %v97, 0
    %v163 = vsel %vm128, %v98, 0
    %v166 = vsel %vm128, %v99, 0
    %v169 = vsel %vm128, %v100, 0
    %v172 = vsel %vm128, %v101, 0
    %v175 = vsel %vm128, %v102, 0
    %v178 = vsel %vm128, %v103, 0
    %v181 = vsel %vm128, %v104, 0
    %v184 = vsel %vm128, %v105, 0
    %v187 = vsel %vm128, %v106, 0
    %v190 = vsel %vm128, %v107, 0
    %v193 = vsel %vm128, %v108, 0
    %v196 = vsel %vm128, %v109, 0
    %v199 = vsel %vm128, %v110, 0
    %v202 = vsel %vm128, %v111, 0
    %v205 = vsel %vm128, %v112, 0
    %v208 = vsel %vm128, %v113, 0
    %v211 = vsel %vm128, %v114, 0
    %v214 = vsel %vm128, %v115, 0
    %v217 = vsel %vm128, %v116, 0
    %v220 = vsel %vm128, %v117, 0
    %v223 = vsel %vm128, %v118, 0
    %225 = vmatprep.subr.bf16.mxu0 0
    %226 = vmatpush1.bf16.msra.mxu0 0
    %227 = vmatprep.subr.bf16.mxu0 0
    %228 = vmatpush1.bf16.msra.mxu0 0
    %229 = vmatprep.subr.bf16.mxu0 0
    %230 = vmatpush1.bf16.msra.mxu0 0
    %231 = vmatprep.subr.bf16.mxu0 0
    %232 = vmatpush1.bf16.msra.mxu0 0
    %233 = vmatprep.subr.bf16.mxu0 0
    %234 = vmatpush1.bf16.msra.mxu0 0
    %235 = vmatprep.subr.bf16.mxu0 0
    %236 = vmatpush1.bf16.msra.mxu0 0
    %237 = vmatprep.subr.bf16.mxu0 0
    %238 = vmatpush1.bf16.msra.mxu0 %v120
    %239 = vmatprep.subr.bf16.mxu0 0
    %240 = vmatpush1.bf16.msra.mxu0 %v119
    %241 = vmatprep.subr.bf16.mxu0 0
    %242 = vmatpush2.bf16.msra.mxu0 0
    %243 = vmatprep.subr.bf16.mxu0 0
    %244 = vmatpush2.bf16.msra.mxu0 0
    %245 = vmatprep.subr.bf16.mxu0 0
    %246 = vmatpush2.bf16.msra.mxu0 0
    %247 = vmatprep.subr.bf16.mxu0 0
    %248 = vmatpush2.bf16.msra.mxu0 0
    %249 = vmatprep.subr.bf16.mxu0 0
    %250 = vmatpush2.bf16.msra.mxu0 0
    %251 = vmatprep.subr.bf16.mxu0 0
    %252 = vmatpush2.bf16.msra.mxu0 0
    %253 = vmatprep.subr.bf16.mxu0 0
    %254 = vmatpush2.bf16.msra.mxu0 0
    %255 = vmatprep.subr.bf16.mxu0 0
    %256 = vmatpush2.bf16.msra.mxu0 0
    %257 = vmatprep.mubr.bf16.mxu0 0
    %258 = vmatmul.mubr.bf16.gmra.mxu0 %v130
    %v259 = vpop.f32.mrf.mxu0
    %v260 = vadd.f32 %v126, %v259
    %v261 = vpop.f32.mrf.mxu0
    %v262 = vpop.f32.mrf.mxu0
    %v263 = vadd.f32 %v126, %v262
    %v264 = vpop.f32.mrf.mxu0
    %265 = vmatprep.mubr.bf16.mxu0 0
    %266 = vmatmul.mubr.bf16.gmra.mxu0 %v133
    %v267 = vpop.f32.mrf.mxu0
    %v268 = vadd.f32 %v126, %v267
    %v269 = vpop.f32.mrf.mxu0
    %v270 = vpop.f32.mrf.mxu0
    %v271 = vadd.f32 %v126, %v270
    %v272 = vpop.f32.mrf.mxu0
    %273 = vmatprep.mubr.bf16.mxu0 0
    %274 = vmatmul.mubr.bf16.gmra.mxu0 %v136
    %v275 = vpop.f32.mrf.mxu0
    %v276 = vadd.f32 %v126, %v275
    %v277 = vpop.f32.mrf.mxu0
    %v278 = vpop.f32.mrf.mxu0
    %v279 = vadd.f32 %v126, %v278
    %v280 = vpop.f32.mrf.mxu0
    %281 = vmatprep.mubr.bf16.mxu0 0
    %282 = vmatmul.mubr.bf16.gmra.mxu0 %v139
    %v283 = vpop.f32.mrf.mxu0
    %v284 = vadd.f32 %v126, %v283
    %v285 = vpop.f32.mrf.mxu0
    %v286 = vpop.f32.mrf.mxu0
    %v287 = vadd.f32 %v126, %v286
    %v288 = vpop.f32.mrf.mxu0
    %289 = vmatprep.mubr.bf16.mxu0 0
    %290 = vmatmul.mubr.bf16.gmra.mxu0 %v142
    %v291 = vpop.f32.mrf.mxu0
    %v292 = vadd.f32 %v126, %v291
    %v293 = vpop.f32.mrf.mxu0
    %v294 = vpop.f32.mrf.mxu0
    %v295 = vadd.f32 %v126, %v294
    %v296 = vpop.f32.mrf.mxu0
    %297 = vmatprep.mubr.bf16.mxu0 0
    %298 = vmatmul.mubr.bf16.gmra.mxu0 %v145
    %v299 = vpop.f32.mrf.mxu0
    %v300 = vadd.f32 %v126, %v299
    %v301 = vpop.f32.mrf.mxu0
    %v302 = vpop.f32.mrf.mxu0
    %v303 = vadd.f32 %v126, %v302
    %v304 = vpop.f32.mrf.mxu0
    %305 = vmatprep.mubr.bf16.mxu0 0
    %306 = vmatmul.mubr.bf16.gmra.mxu0 %v148
    %v307 = vpop.f32.mrf.mxu0
    %v308 = vadd.f32 %v126, %v307
    %v309 = vpop.f32.mrf.mxu0
    %v310 = vpop.f32.mrf.mxu0
    %v311 = vadd.f32 %v126, %v310
    %v312 = vpop.f32.mrf.mxu0
    %313 = vmatprep.mubr.bf16.mxu0 0
    %314 = vmatmul.mubr.bf16.gmra.mxu0 %v151
    %v315 = vpop.f32.mrf.mxu0
    %v316 = vadd.f32 %v126, %v315
    %v317 = vpop.f32.mrf.mxu0
    %v318 = vpop.f32.mrf.mxu0
    %v319 = vadd.f32 %v126, %v318
    %v320 = vpop.f32.mrf.mxu0
    %321 = vmatprep.mubr.bf16.mxu0 0
    %322 = vmatmul.mubr.bf16.gmra.mxu0 %v154
    %v323 = vpop.f32.mrf.mxu0
    %v324 = vadd.f32 %v126, %v323
    %v325 = vpop.f32.mrf.mxu0
    %v326 = vpop.f32.mrf.mxu0
    %v327 = vadd.f32 %v126, %v326
    %v328 = vpop.f32.mrf.mxu0
    %329 = vmatprep.mubr.bf16.mxu0 0
    %330 = vmatmul.mubr.bf16.gmra.mxu0 %v157
    %v331 = vpop.f32.mrf.mxu0
    %v332 = vadd.f32 %v126, %v331
    %v333 = vpop.f32.mrf.mxu0
    %v334 = vpop.f32.mrf.mxu0
    %v335 = vadd.f32 %v126, %v334
    %v336 = vpop.f32.mrf.mxu0
    %337 = vmatprep.mubr.bf16.mxu0 0
    %338 = vmatmul.mubr.bf16.gmra.mxu0 %v160
    %v339 = vpop.f32.mrf.mxu0
    %v340 = vadd.f32 %v126, %v339
    %v341 = vpop.f32.mrf.mxu0
    %v342 = vpop.f32.mrf.mxu0
    %v343 = vadd.f32 %v126, %v342
    %v344 = vpop.f32.mrf.mxu0
    %345 = vmatprep.mubr.bf16.mxu0 0
    %346 = vmatmul.mubr.bf16.gmra.mxu0 %v163
    %v347 = vpop.f32.mrf.mxu0
    %v348 = vadd.f32 %v126, %v347
    %v349 = vpop.f32.mrf.mxu0
    %v350 = vpop.f32.mrf.mxu0
    %v351 = vadd.f32 %v126, %v350
    %v352 = vpop.f32.mrf.mxu0
    %353 = vmatprep.mubr.bf16.mxu0 0
    %354 = vmatmul.mubr.bf16.gmra.mxu0 %v166
    %v355 = vpop.f32.mrf.mxu0
    %v356 = vadd.f32 %v126, %v355
    %v357 = vpop.f32.mrf.mxu0
    %v358 = vpop.f32.mrf.mxu0
    %v359 = vadd.f32 %v126, %v358
    %v360 = vpop.f32.mrf.mxu0
    %361 = vmatprep.mubr.bf16.mxu0 0
    %362 = vmatmul.mubr.bf16.gmra.mxu0 %v169
    %v363 = vpop.f32.mrf.mxu0
    %v364 = vadd.f32 %v126, %v363
    %v365 = vpop.f32.mrf.mxu0
    %v366 = vpop.f32.mrf.mxu0
    %v367 = vadd.f32 %v126, %v366
    %v368 = vpop.f32.mrf.mxu0
    %369 = vmatprep.mubr.bf16.mxu0 0
    %370 = vmatmul.mubr.bf16.gmra.mxu0 %v172
    %v371 = vpop.f32.mrf.mxu0
    %v372 = vadd.f32 %v126, %v371
    %v373 = vpop.f32.mrf.mxu0
    %v374 = vpop.f32.mrf.mxu0
    %v375 = vadd.f32 %v126, %v374
    %v376 = vpop.f32.mrf.mxu0
    %377 = vmatprep.mubr.bf16.mxu0 0
    %378 = vmatmul.mubr.bf16.gmra.mxu0 %v175
    %v379 = vpop.f32.mrf.mxu0
    %v380 = vadd.f32 %v126, %v379
    %v381 = vpop.f32.mrf.mxu0
    %v382 = vpop.f32.mrf.mxu0
    %v383 = vadd.f32 %v126, %v382
    %v384 = vpop.f32.mrf.mxu0
    %385 = vmatprep.mubr.bf16.mxu0 0
    %386 = vmatmul.mubr.bf16.gmra.mxu0 %v178
    %v387 = vpop.f32.mrf.mxu0
    %v388 = vadd.f32 %v126, %v387
    %v389 = vpop.f32.mrf.mxu0
    %v390 = vpop.f32.mrf.mxu0
    %v391 = vadd.f32 %v126, %v390
    %v392 = vpop.f32.mrf.mxu0
    %393 = vmatprep.mubr.bf16.mxu0 0
    %394 = vmatmul.mubr.bf16.gmra.mxu0 %v181
    %v395 = vpop.f32.mrf.mxu0
    %v396 = vadd.f32 %v126, %v395
    %v397 = vpop.f32.mrf.mxu0
    %v398 = vpop.f32.mrf.mxu0
    %v399 = vadd.f32 %v126, %v398
    %v400 = vpop.f32.mrf.mxu0
    %401 = vmatprep.mubr.bf16.mxu0 0
    %402 = vmatmul.mubr.bf16.gmra.mxu0 %v184
    %v403 = vpop.f32.mrf.mxu0
    %v404 = vadd.f32 %v126, %v403
    %v405 = vpop.f32.mrf.mxu0
    %v406 = vpop.f32.mrf.mxu0
    %v407 = vadd.f32 %v126, %v406
    %v408 = vpop.f32.mrf.mxu0
    %409 = vmatprep.mubr.bf16.mxu0 0
    %410 = vmatmul.mubr.bf16.gmra.mxu0 %v187
    %v411 = vpop.f32.mrf.mxu0
    %v412 = vadd.f32 %v126, %v411
    %v413 = vpop.f32.mrf.mxu0
    %v414 = vpop.f32.mrf.mxu0
    %v415 = vadd.f32 %v126, %v414
    %v416 = vpop.f32.mrf.mxu0
    %417 = vmatprep.mubr.bf16.mxu0 0
    %418 = vmatmul.mubr.bf16.gmra.mxu0 %v190
    %v419 = vpop.f32.mrf.mxu0
    %v420 = vadd.f32 %v126, %v419
    %v421 = vpop.f32.mrf.mxu0
    %v422 = vpop.f32.mrf.mxu0
    %v423 = vadd.f32 %v126, %v422
    %v424 = vpop.f32.mrf.mxu0
    %425 = vmatprep.mubr.bf16.mxu0 0
    %426 = vmatmul.mubr.bf16.gmra.mxu0 %v193
    %v427 = vpop.f32.mrf.mxu0
    %v428 = vadd.f32 %v126, %v427
    %v429 = vpop.f32.mrf.mxu0
    %v430 = vpop.f32.mrf.mxu0
    %v431 = vadd.f32 %v126, %v430
    %v432 = vpop.f32.mrf.mxu0
    %433 = vmatprep.mubr.bf16.mxu0 0
    %434 = vmatmul.mubr.bf16.gmra.mxu0 %v196
    %v435 = vpop.f32.mrf.mxu0
    %v436 = vadd.f32 %v126, %v435
    %v437 = vpop.f32.mrf.mxu0
    %v438 = vpop.f32.mrf.mxu0
    %v439 = vadd.f32 %v126, %v438
    %v440 = vpop.f32.mrf.mxu0
    %441 = vmatprep.mubr.bf16.mxu0 0
    %442 = vmatmul.mubr.bf16.gmra.mxu0 %v199
    %v443 = vpop.f32.mrf.mxu0
    %v444 = vadd.f32 %v126, %v443
    %v445 = vpop.f32.mrf.mxu0
    %v446 = vpop.f32.mrf.mxu0
    %v447 = vadd.f32 %v126, %v446
    %v448 = vpop.f32.mrf.mxu0
    %449 = vmatprep.mubr.bf16.mxu0 0
    %450 = vmatmul.mubr.bf16.gmra.mxu0 %v202
    %v451 = vpop.f32.mrf.mxu0
    %v452 = vadd.f32 %v126, %v451
    %v453 = vpop.f32.mrf.mxu0
    %v454 = vpop.f32.mrf.mxu0
    %v455 = vadd.f32 %v126, %v454
    %v456 = vpop.f32.mrf.mxu0
    %457 = vmatprep.mubr.bf16.mxu0 0
    %458 = vmatmul.mubr.bf16.gmra.mxu0 %v205
    %v459 = vpop.f32.mrf.mxu0
    %v460 = vadd.f32 %v126, %v459
    %v461 = vpop.f32.mrf.mxu0
    %v462 = vpop.f32.mrf.mxu0
    %v463 = vadd.f32 %v126, %v462
    %v464 = vpop.f32.mrf.mxu0
    %465 = vmatprep.mubr.bf16.mxu0 0
    %466 = vmatmul.mubr.bf16.gmra.mxu0 %v208
    %v467 = vpop.f32.mrf.mxu0
    %v468 = vadd.f32 %v126, %v467
    %v469 = vpop.f32.mrf.mxu0
    %v470 = vpop.f32.mrf.mxu0
    %v471 = vadd.f32 %v126, %v470
    %v472 = vpop.f32.mrf.mxu0
    %473 = vmatprep.mubr.bf16.mxu0 0
    %474 = vmatmul.mubr.bf16.gmra.mxu0 %v211
    %v475 = vpop.f32.mrf.mxu0
    %v476 = vadd.f32 %v126, %v475
    %v477 = vpop.f32.mrf.mxu0
    %v478 = vpop.f32.mrf.mxu0
    %v479 = vadd.f32 %v126, %v478
    %v480 = vpop.f32.mrf.mxu0
    %481 = vmatprep.mubr.bf16.mxu0 0
    %482 = vmatmul.mubr.bf16.gmra.mxu0 %v214
    %v483 = vpop.f32.mrf.mxu0
    %v484 = vadd.f32 %v126, %v483
    %v485 = vpop.f32.mrf.mxu0
    %v486 = vpop.f32.mrf.mxu0
    %v487 = vadd.f32 %v126, %v486
    %v488 = vpop.f32.mrf.mxu0
    %489 = vmatprep.mubr.bf16.mxu0 0
    %490 = vmatmul.mubr.bf16.gmra.mxu0 %v217
    %v491 = vpop.f32.mrf.mxu0
    %v492 = vadd.f32 %v126, %v491
    %v493 = vpop.f32.mrf.mxu0
    %v494 = vpop.f32.mrf.mxu0
    %v495 = vadd.f32 %v126, %v494
    %v496 = vpop.f32.mrf.mxu0
    %497 = vmatprep.mubr.bf16.mxu0 0
    %498 = vmatmul.mubr.bf16.gmra.mxu0 %v220
    %v499 = vpop.f32.mrf.mxu0
    %v500 = vadd.f32 %v126, %v499
    %v501 = vpop.f32.mrf.mxu0
    %v502 = vpop.f32.mrf.mxu0
    %v503 = vadd.f32 %v126, %v502
    %v504 = vpop.f32.mrf.mxu0
    %505 = vmatprep.mubr.bf16.mxu0 0
    %506 = vmatmul.mubr.bf16.gmra.mxu0 %v223
    %v507 = vpop.f32.mrf.mxu0
    %v508 = vadd.f32 %v126, %v507
    %v509 = vpop.f32.mrf.mxu0
    %v510 = vpop.f32.mrf.mxu0
    %v511 = vadd.f32 %v126, %v510
    %v512 = vpop.f32.mrf.mxu0
    %513 = vdwg.mxu0
    %v514 = vld [vmem:[%s3] sm:$0xff]
    %v515 = vld [vmem:[%s3 + $0x8] sm:$0xff]
    %v516 = vld [vmem:[%s3 + $0x10] sm:$0xff]
    %v517 = vld [vmem:[%s3 + $0x18] sm:$0xff]
    %v518 = vld [vmem:[%s3 + $0x20] sm:$0xff]
    %v519 = vld [vmem:[%s3 + $0x28] sm:$0xff]
    %v520 = vld [vmem:[%s3 + $0x30] sm:$0xff]
    %v521 = vld [vmem:[%s3 + $0x38] sm:$0xff]
    %v522 = vld [vmem:[%s3 + $0x40] sm:$0xff]
    %v523 = vld [vmem:[%s3 + $0x48] sm:$0xff]
    %v524 = vld [vmem:[%s3 + $0x50] sm:$0xff]
    %v525 = vld [vmem:[%s3 + $0x58] sm:$0xff]
    %v526 = vld [vmem:[%s3 + $0x60] sm:$0xff]
    %v527 = vld [vmem:[%s3 + $0x68] sm:$0xff]
    %v528 = vld [vmem:[%s3 + $0x70] sm:$0xff]
    %v529 = vld [vmem:[%s3 + $0x78] sm:$0xff]
    %v530 = vld [vmem:[%s3 + $0x80] sm:$0xff]
    %v531 = vld [vmem:[%s3 + $0x88] sm:$0xff]
    %v532 = vld [vmem:[%s3 + $0x90] sm:$0xff]
    %v533 = vld [vmem:[%s3 + $0x98] sm:$0xff]
    %v534 = vld [vmem:[%s3 + $0xa0] sm:$0xff]
    %v535 = vld [vmem:[%s3 + $0xa8] sm:$0xff]
    %v536 = vld [vmem:[%s3 + $0xb0] sm:$0xff]
    %v537 = vld [vmem:[%s3 + $0xb8] sm:$0xff]
    %v538 = vld [vmem:[%s3 + $0xc0] sm:$0xff]
    %v539 = vld [vmem:[%s3 + $0xc8] sm:$0xff]
    %v540 = vld [vmem:[%s3 + $0xd0] sm:$0xff]
    %v541 = vld [vmem:[%s3 + $0xd8] sm:$0xff]
    %v542 = vld [vmem:[%s3 + $0xe0] sm:$0xff]
    %v543 = vld [vmem:[%s3 + $0xe8] sm:$0xff]
    %v544 = vld [vmem:[%s3 + $0xf0] sm:$0xff]
    %v545 = vld [vmem:[%s3 + $0xf8] sm:$0xff]
    %v546 = vld [vmem:[%s3 + $0x100] sm:$0xff]
    %v547 = vld [vmem:[%s3 + $0x108] sm:$0xff]
    %v548 = vld [vmem:[%s3 + $0x110] sm:$0xff]
    %v549 = vld [vmem:[%s3 + $0x118] sm:$0xff]
    %v550 = vld [vmem:[%s3 + $0x120] sm:$0xff]
    %v551 = vld [vmem:[%s3 + $0x128] sm:$0xff]
    %v552 = vld [vmem:[%s3 + $0x130] sm:$0xff]
    %v553 = vld [vmem:[%s3 + $0x138] sm:$0xff]
    %v554 = vld [vmem:[%s3 + $0x140] sm:$0xff]
    %v555 = vld [vmem:[%s3 + $0x148] sm:$0xff]
    %v556 = vld [vmem:[%s3 + $0x150] sm:$0xff]
    %v557 = vld [vmem:[%s3 + $0x158] sm:$0xff]
    %v558 = vld [vmem:[%s3 + $0x160] sm:$0xff]
    %v559 = vld [vmem:[%s3 + $0x168] sm:$0xff]
    %v560 = vld [vmem:[%s3 + $0x170] sm:$0xff]
    %v561 = vld [vmem:[%s3 + $0x178] sm:$0xff]
    %v562 = vld [vmem:[%s3 + $0x180] sm:$0xff]
    %v563 = vld [vmem:[%s3 + $0x188] sm:$0xff]
    %v564 = vld [vmem:[%s3 + $0x190] sm:$0xff]
    %v565 = vld [vmem:[%s3 + $0x198] sm:$0xff]
    %v566 = vld [vmem:[%s3 + $0x1a0] sm:$0xff]
    %v567 = vld [vmem:[%s3 + $0x1a8] sm:$0xff]
    %v568 = vld [vmem:[%s3 + $0x1b0] sm:$0xff]
    %v569 = vld [vmem:[%s3 + $0x1b8] sm:$0xff]
    %v570 = vld [vmem:[%s3 + $0x1c0] sm:$0xff]
    %v571 = vld [vmem:[%s3 + $0x1c8] sm:$0xff]
    %v572 = vld [vmem:[%s3 + $0x1d0] sm:$0xff]
    %v573 = vld [vmem:[%s3 + $0x1d8] sm:$0xff]
    %v574 = vld [vmem:[%s3 + $0x1e0] sm:$0xff]
    %v575 = vld [vmem:[%s3 + $0x1e8] sm:$0xff]
    %v576 = vld [vmem:[%s3 + $0x1f0] sm:$0xff]
    %v577 = vld [vmem:[%s3 + $0x1f8] sm:$0xff]
    %v578 = vadd.f32 %v260, %v514
    %v579 = vadd.f32 %v263, %v515
    %v580 = vadd.f32 %v268, %v516
    %v581 = vadd.f32 %v271, %v517
    %v582 = vadd.f32 %v276, %v518
    %v583 = vadd.f32 %v279, %v519
    %v584 = vadd.f32 %v284, %v520
    %v585 = vadd.f32 %v287, %v521
    %v586 = vadd.f32 %v292, %v522
    %v587 = vadd.f32 %v295, %v523
    %v588 = vadd.f32 %v300, %v524
    %v589 = vadd.f32 %v303, %v525
    %v590 = vadd.f32 %v308, %v526
    %v591 = vadd.f32 %v311, %v527
    %v592 = vadd.f32 %v316, %v528
    %v593 = vadd.f32 %v319, %v529
    %v594 = vadd.f32 %v324, %v530
    %v595 = vadd.f32 %v327, %v531
    %v596 = vadd.f32 %v332, %v532
    %v597 = vadd.f32 %v335, %v533
    %v598 = vadd.f32 %v340, %v534
    %v599 = vadd.f32 %v343, %v535
    %v600 = vadd.f32 %v348, %v536
    %v601 = vadd.f32 %v351, %v537
    %v602 = vadd.f32 %v356, %v538
    %v603 = vadd.f32 %v359, %v539
    %v604 = vadd.f32 %v364, %v540
    %v605 = vadd.f32 %v367, %v541
    %v606 = vadd.f32 %v372, %v542
    %v607 = vadd.f32 %v375, %v543
    %v608 = vadd.f32 %v380, %v544
    %v609 = vadd.f32 %v383, %v545
    %v610 = vadd.f32 %v388, %v546
    %v611 = vadd.f32 %v391, %v547
    %v612 = vadd.f32 %v396, %v548
    %v613 = vadd.f32 %v399, %v549
    %v614 = vadd.f32 %v404, %v550
    %v615 = vadd.f32 %v407, %v551
    %v616 = vadd.f32 %v412, %v552
    %v617 = vadd.f32 %v415, %v553
    %v618 = vadd.f32 %v420, %v554
    %v619 = vadd.f32 %v423, %v555
    %v620 = vadd.f32 %v428, %v556
    %v621 = vadd.f32 %v431, %v557
    %v622 = vadd.f32 %v436, %v558
    %v623 = vadd.f32 %v439, %v559
    %v624 = vadd.f32 %v444, %v560
    %v625 = vadd.f32 %v447, %v561
    %v626 = vadd.f32 %v452, %v562
    %v627 = vadd.f32 %v455, %v563
    %v628 = vadd.f32 %v460, %v564
    %v629 = vadd.f32 %v463, %v565
    %v630 = vadd.f32 %v468, %v566
    %v631 = vadd.f32 %v471, %v567
    %v632 = vadd.f32 %v476, %v568
    %v633 = vadd.f32 %v479, %v569
    %v634 = vadd.f32 %v484, %v570
    %v635 = vadd.f32 %v487, %v571
    %v636 = vadd.f32 %v492, %v572
    %v637 = vadd.f32 %v495, %v573
    %v638 = vadd.f32 %v500, %v574
    %v639 = vadd.f32 %v503, %v575
    %v640 = vadd.f32 %v508, %v576
    %v641 = vadd.f32 %v511, %v577
    %642 = vst.msk [vmem:[#allocation2] sm:$0xff] %vm128, %v578
    %643 = vst.msk [vmem:[#allocation2 + $0x8] sm:$0xff] %vm128, %v579
    %644 = vst.msk [vmem:[#allocation2 + $0x10] sm:$0xff] %vm128, %v580
    %645 = vst.msk [vmem:[#allocation2 + $0x18] sm:$0xff] %vm128, %v581
    %646 = vst.msk [vmem:[#allocation2 + $0x20] sm:$0xff] %vm128, %v582
    %647 = vst.msk [vmem:[#allocation2 + $0x28] sm:$0xff] %vm128, %v583
    %648 = vst.msk [vmem:[#allocation2 + $0x30] sm:$0xff] %vm128, %v584
    %649 = vst.msk [vmem:[#allocation2 + $0x38] sm:$0xff] %vm128, %v585
    %650 = vst.msk [vmem:[#allocation2 + $0x40] sm:$0xff] %vm128, %v586
    %651 = vst.msk [vmem:[#allocation2 + $0x48] sm:$0xff] %vm128, %v587
    %652 = vst.msk [vmem:[#allocation2 + $0x50] sm:$0xff] %vm128, %v588
    %653 = vst.msk [vmem:[#allocation2 + $0x58] sm:$0xff] %vm128, %v589
    %654 = vst.msk [vmem:[#allocation2 + $0x60] sm:$0xff] %vm128, %v590
    %655 = vst.msk [vmem:[#allocation2 + $0x68] sm:$0xff] %vm128, %v591
    %656 = vst.msk [vmem:[#allocation2 + $0x70] sm:$0xff] %vm128, %v592
    %657 = vst.msk [vmem:[#allocation2 + $0x78] sm:$0xff] %vm128, %v593
    %658 = vst.msk [vmem:[#allocation2 + $0x80] sm:$0xff] %vm128, %v594
    %659 = vst.msk [vmem:[#allocation2 + $0x88] sm:$0xff] %vm128, %v595
    %660 = vst.msk [vmem:[#allocation2 + $0x90] sm:$0xff] %vm128, %v596
    %661 = vst.msk [vmem:[#allocation2 + $0x98] sm:$0xff] %vm128, %v597
    %662 = vst.msk [vmem:[#allocation2 + $0xa0] sm:$0xff] %vm128, %v598
    %663 = vst.msk [vmem:[#allocation2 + $0xa8] sm:$0xff] %vm128, %v599
    %664 = vst.msk [vmem:[#allocation2 + $0xb0] sm:$0xff] %vm128, %v600
    %665 = vst.msk [vmem:[#allocation2 + $0xb8] sm:$0xff] %vm128, %v601
    %666 = vst.msk [vmem:[#allocation2 + $0xc0] sm:$0xff] %vm128, %v602
    %667 = vst.msk [vmem:[#allocation2 + $0xc8] sm:$0xff] %vm128, %v603
    %668 = vst.msk [vmem:[#allocation2 + $0xd0] sm:$0xff] %vm128, %v604
    %669 = vst.msk [vmem:[#allocation2 + $0xd8] sm:$0xff] %vm128, %v605
    %670 = vst.msk [vmem:[#allocation2 + $0xe0] sm:$0xff] %vm128, %v606
    %671 = vst.msk [vmem:[#allocation2 + $0xe8] sm:$0xff] %vm128, %v607
    %672 = vst.msk [vmem:[#allocation2 + $0xf0] sm:$0xff] %vm128, %v608
    %673 = vst.msk [vmem:[#allocation2 + $0xf8] sm:$0xff] %vm128, %v609
    %674 = vst.msk [vmem:[#allocation2 + $0x100] sm:$0xff] %vm128, %v610
    %675 = vst.msk [vmem:[#allocation2 + $0x108] sm:$0xff] %vm128, %v611
    %676 = vst.msk [vmem:[#allocation2 + $0x110] sm:$0xff] %vm128, %v612
    %677 = vst.msk [vmem:[#allocation2 + $0x118] sm:$0xff] %vm128, %v613
    %678 = vst.msk [vmem:[#allocation2 + $0x120] sm:$0xff] %vm128, %v614
    %679 = vst.msk [vmem:[#allocation2 + $0x128] sm:$0xff] %vm128, %v615
    %680 = vst.msk [vmem:[#allocation2 + $0x130] sm:$0xff] %vm128, %v616
    %681 = vst.msk [vmem:[#allocation2 + $0x138] sm:$0xff] %vm128, %v617
    %682 = vst.msk [vmem:[#allocation2 + $0x140] sm:$0xff] %vm128, %v618
    %683 = vst.msk [vmem:[#allocation2 + $0x148] sm:$0xff] %vm128, %v619
    %684 = vst.msk [vmem:[#allocation2 + $0x150] sm:$0xff] %vm128, %v620
    %685 = vst.msk [vmem:[#allocation2 + $0x158] sm:$0xff] %vm128, %v621
    %686 = vst.msk [vmem:[#allocation2 + $0x160] sm:$0xff] %vm128, %v622
    %687 = vst.msk [vmem:[#allocation2 + $0x168] sm:$0xff] %vm128, %v623
    %688 = vst.msk [vmem:[#allocation2 + $0x170] sm:$0xff] %vm128, %v624
    %689 = vst.msk [vmem:[#allocation2 + $0x178] sm:$0xff] %vm128, %v625
    %690 = vst.msk [vmem:[#allocation2 + $0x180] sm:$0xff] %vm128, %v626
    %691 = vst.msk [vmem:[#allocation2 + $0x188] sm:$0xff] %vm128, %v627
    %692 = vst.msk [vmem:[#allocation2 + $0x190] sm:$0xff] %vm128, %v628
    %693 = vst.msk [vmem:[#allocation2 + $0x198] sm:$0xff] %vm128, %v629
    %694 = vst.msk [vmem:[#allocation2 + $0x1a0] sm:$0xff] %vm128, %v630
    %695 = vst.msk [vmem:[#allocation2 + $0x1a8] sm:$0xff] %vm128, %v631
    %696 = vst.msk [vmem:[#allocation2 + $0x1b0] sm:$0xff] %vm128, %v632
    %697 = vst.msk [vmem:[#allocation2 + $0x1b8] sm:$0xff] %vm128, %v633
    %698 = vst.msk [vmem:[#allocation2 + $0x1c0] sm:$0xff] %vm128, %v634
    %699 = vst.msk [vmem:[#allocation2 + $0x1c8] sm:$0xff] %vm128, %v635
    %700 = vst.msk [vmem:[#allocation2 + $0x1d0] sm:$0xff] %vm128, %v636
    %701 = vst.msk [vmem:[#allocation2 + $0x1d8] sm:$0xff] %vm128, %v637
    %702 = vst.msk [vmem:[#allocation2 + $0x1e0] sm:$0xff] %vm128, %v638
    %703 = vst.msk [vmem:[#allocation2 + $0x1e8] sm:$0xff] %vm128, %v639
    %704 = vst.msk [vmem:[#allocation2 + $0x1f0] sm:$0xff] %vm128, %v640
    %705 = vst.msk [vmem:[#allocation2 + $0x1f8] sm:$0xff] %vm128, %v641
    // Predicated region
    $region18: #{ssm_ab_forward.13} parent=1 // pred_check
      _
    $region19: #{ssm_ab_forward.13} parent=1 // pred_check_branch
      %707 = sbr.rel (0) target = $region21
    $region20: #{ssm_ab_forward.13} parent=1 // pred_region
      %s709 = ssub.s32 8192, 8192
      %710 = vsyncadd [#allocation3], %s709
      %s711 = sshll.u32 [#allocation2], 4
      %s712 = int_to_ptr.vmem [resolvable:$true] %s711
      %717 = dma.vmem_to_hbm [thread:$0]  %s712, 8192, %s4, [#allocation3], 128, 128, 8
    $region21: #{ssm_ab_forward.13} parent=1 // pred_fallthru
      _
    // Predicated region
    $region22: #{ssm_ab_forward.13} parent=1 // pred_check
      _
    $region23: #{ssm_ab_forward.13} parent=1 // pred_check_branch
      %719 = sbr.rel (0) target = $region25
    $region24: #{ssm_ab_forward.13} parent=1 // pred_region
      %720 = dma.done [#allocation3], 8192
    $region25: #{ssm_ab_forward.13} parent=1 // pred_fallthru
      _
    %721 = vsyncpa [#allocation3], 1

</llo_original>
